<compile_context>
chip_gen: v7x
topology: tpu7x:2x2x1
jax: 0.10.0
libtpu: 0.0.40
codegen_flags: <defaults>
</compile_context>

<pallas_src>
import jax
import jax.numpy as jnp
from jax import lax
from jax.experimental import pallas as pl
from jax.experimental.pallas import tpu as pltpu

_DILATIONS = (1, 2, 3, 5)
# Sub-pixel decomposition of ConvTranspose2d(kernel=4, stride=2, padding=1):
# output row 2p+a reads input rows p+di with kernel tap kh, for (di, kh) below.
_PHASE_TAPS = {0: ((0, 1), (-1, 3)), 1: ((0, 2), (1, 0))}

_VMEM_LIMIT = 32 * 1024 * 1024  # fits v5e/v6e (128 MiB) and v7x (64 MiB) budgets
_BN_EPS = 1e-5


def _pick_row_target():
    """Row-tile target: large single blocks on single-TC chips (v5e/v6e), else
    keep >=2 tiles so a parallel M-grid can feed both v7x TensorCores."""
    try:
        kind = jax.devices()[0].device_kind.lower()
    except Exception:
        return 256
    if any(t in kind for t in ("v5 lite", "v5e", "v5lite", "v6 lite", "v6e")):
        return 1024
    return 256


_ROW_TARGET = _pick_row_target()


def _row_tile(m):
    """Largest row tile <= _ROW_TARGET that evenly divides m (else one block)."""
    if m <= _ROW_TARGET:
        return m
    t = _ROW_TARGET
    while t > 8 and m % t:
        t //= 2
    return t if (t >= 8 and m % t == 0) else m


def _full_spec(shape):
    nd = len(shape)
    return pl.BlockSpec(tuple(shape), lambda *_, _nd=nd: (0,) * _nd)


def _cost(flops, byts):
    return pl.CostEstimate(flops=int(flops), transcendentals=0,
                           bytes_accessed=int(byts))


# --------------------------------------------------------------------------
# Pallas kernels
# --------------------------------------------------------------------------
def _bsa_kernel(p_ref, wdil_ref, bdil_ref, wpost_ref, bpost_ref, o_ref):
    """Fused BSA module: block-diag 4-dilation 3x3 conv + bias, then 1x1 post
    conv + bias.  Exactly two MXU matmuls and one full-width store.

    p_ref    : (TM, 4*9*cin_mix) bf16  four im2col patch groups, lane-concat
    wdil_ref : (4*9*cin_mix, 4*ch) bf16 block-diagonal
    bdil_ref : (1, 4*ch) f32
    wpost_ref: (4*ch, ch) bf16
    bpost_ref: (1, ch) f32
    o_ref    : (TM, ch) f32
    """
    f = jnp.dot(p_ref[...], wdil_ref[...],
                preferred_element_type=jnp.float32) + bdil_ref[...]
    o_ref[...] = jnp.dot(f.astype(jnp.bfloat16), wpost_ref[...],
                         preferred_element_type=jnp.float32) + bpost_ref[...]


def _dil_group_kernel(p_ref, w_ref, b_ref, f_ref):
    """Block-diag 4-dilation 3x3 conv + bias -> lane-packed bf16 tile.

    p_ref: (TM, 4*9*cin) bf16, w_ref: (4*9*cin, 4*cin) bf16 block-diagonal,
    b_ref: (1, 4*cin) f32, f_ref: (TM, 4*cin) bf16.
    """
    f = jnp.dot(p_ref[...], w_ref[...],
                preferred_element_type=jnp.float32) + b_ref[...]
    f_ref[...] = f.astype(jnp.bfloat16)


def _up_bn_relu_kernel(pp_ref, w_ref, b_ref, gamma_ref, beta_ref, o_ref):
    """Single-tile fused sub-pixel ConvTranspose2d(4,2,1) + bias + training-mode
    BatchNorm + ReLU.  One block-diag matmul, one full-width store.

    pp_ref : (M, 16*ct) bf16   four phase patch groups, lane-concat
    w_ref  : (16*ct, 4*cout) bf16 block-diagonal (one block per output phase)
    b_ref  : (1, 4*cout) f32   bias tiled over phases
    gamma/beta: (1, cout) f32
    o_ref  : (M, 4*cout) f32   phase-packed output
    """
    cout = gamma_ref.shape[1]
    y = jnp.dot(pp_ref[...], w_ref[...],
                preferred_element_type=jnp.float32) + b_ref[...]
    cnt = 4.0 * y.shape[0]               # N*2H*2W pixels == rows x 4 phases
    s = jnp.sum(y, axis=0, keepdims=True)
    sq = jnp.sum(y * y, axis=0, keepdims=True)
    s_c = (s[:, 0:cout] + s[:, cout:2 * cout]
           + s[:, 2 * cout:3 * cout] + s[:, 3 * cout:4 * cout])
    sq_c = (sq[:, 0:cout] + sq[:, cout:2 * cout]
            + sq[:, 2 * cout:3 * cout] + sq[:, 3 * cout:4 * cout])
    mean = s_c / cnt
    var = sq_c / cnt - mean * mean       # biased variance, like torch BN train
    scale = gamma_ref[...] * lax.rsqrt(var + _BN_EPS)
    shift = beta_ref[...] - mean * scale
    scale_p = jnp.concatenate([scale] * 4, axis=-1)
    shift_p = jnp.concatenate([shift] * 4, axis=-1)
    o_ref[...] = jnp.maximum(y * scale_p + shift_p, 0.0)


def _up_phase_kernel(pp_ref, w_ref, b_ref, y_ref, stat_ref):
    """Tiled pass 1 of the upsample: block-diag phase matmul + bias, plus
    per-tile channel sum / sum-of-squares for the global BatchNorm reduction.

    y_ref   : (TM, 4*cout) f32 phase-packed pre-BN output
    stat_ref: (1, 2, 4*cout) f32 per-tile [sum; sumsq]
    """
    y = jnp.dot(pp_ref[...], w_ref[...],
                preferred_element_type=jnp.float32) + b_ref[...]
    y_ref[...] = y
    stat_ref[0, 0:1, :] = jnp.sum(y, axis=0, keepdims=True)
    stat_ref[0, 1:2, :] = jnp.sum(y * y, axis=0, keepdims=True)


def _bn_relu_kernel(y_ref, scale_ref, shift_ref, o_ref):
    """Tiled pass 2 of the upsample: normalize + ReLU, one full-width store."""
    o_ref[...] = jnp.maximum(y_ref[...] * scale_ref[...] + shift_ref[...], 0.0)


# --------------------------------------------------------------------------
# Wrappers (XLA glue only for patch gathering; all matmul/BN work in Pallas)
# --------------------------------------------------------------------------
def _im2col(x, d):
    """x: (N, H, W, C) -> (N*H*W, 9*C) for a 3x3 conv, dilation d, padding d."""
    N, H, W, C = x.shape
    xp = jnp.pad(x, ((0, 0), (d, d), (d, d), (0, 0)))
    taps = [xp[:, kh * d:kh * d + H, kw * d:kw * d + W, :]
            for kh in range(3) for kw in range(3)]
    return jnp.concatenate(taps, axis=-1).reshape(N * H * W, 9 * C)


def bsa_forward(p, xG, xD, xS):
    N, H, W, _ = xG.shape
    ch = p["bpost"].shape[1]
    # bf16 cast happens before the im2col blow-up (halves its HBM traffic).
    gs = jnp.split(xG.astype(jnp.bfloat16), 4, axis=-1)
    ds = jnp.split(xD.astype(jnp.bfloat16), 4, axis=-1)
    ss = jnp.split(xS.astype(jnp.bfloat16), 4, axis=-1)
    patches = jnp.concatenate(
        [_im2col(jnp.concatenate([gs[j], ds[j], ss[j]], axis=-1), d)
         for j, d in enumerate(_DILATIONS)], axis=-1)       # (M, 4*9*cin_mix)
    M = N * H * W
    K = patches.shape[1]
    TM = _row_tile(M)
    flops = 2 * M * K * 4 * ch + 2 * M * 4 * ch * ch
    byts = (patches.size * 2 + p["wdil"].size * 2 + p["wpost"].size * 2
            + (p["bdil"].size + p["bpost"].size) * 4 + M * ch * 4)
    out = pl.pallas_call(
        _bsa_kernel,
        out_shape=jax.ShapeDtypeStruct((M, ch), jnp.float32),
        grid=(M // TM,),
        in_specs=[
            pl.BlockSpec((TM, K), lambda i: (i, 0)),
            _full_spec(p["wdil"].shape),
            _full_spec(p["bdil"].shape),
            _full_spec(p["wpost"].shape),
            _full_spec(p["bpost"].shape),
        ],
        out_specs=pl.BlockSpec((TM, ch), lambda i: (i, 0)),
        compiler_params=pltpu.CompilerParams(
            dimension_semantics=("parallel",), vmem_limit_bytes=_VMEM_LIMIT),
        cost_estimate=_cost(flops, byts),
    )(patches, p["wdil"], p["bdil"], p["wpost"], p["bpost"])
    return out.reshape(N, H, W, ch)


def deconv_block_forward(p, x):
    N, H, W, cin = x.shape
    cout = p["gamma"].shape[1]
    M = N * H * W
    ct = 4 * cin

    # --- block-diag 4-dilation conv group -> lane-packed F (bias fused, bf16) ---
    xb = x.astype(jnp.bfloat16)
    patches = jnp.concatenate([_im2col(xb, d) for d in _DILATIONS], axis=-1)
    K = patches.shape[1]
    TM = _row_tile(M)
    flops = 2 * M * K * ct
    byts = patches.size * 2 + p["wdil"].size * 2 + p["bdil"].size * 4 + M * ct * 2
    f = pl.pallas_call(
        _dil_group_kernel,
        out_shape=jax.ShapeDtypeStruct((M, ct), jnp.bfloat16),
        grid=(M // TM,),
        in_specs=[
            pl.BlockSpec((TM, K), lambda i: (i, 0)),
            _full_spec(p["wdil"].shape),
            _full_spec(p["bdil"].shape),
        ],
        out_specs=pl.BlockSpec((TM, ct), lambda i: (i, 0)),
        compiler_params=pltpu.CompilerParams(
            dimension_semantics=("parallel",), vmem_limit_bytes=_VMEM_LIMIT),
        cost_estimate=_cost(flops, byts),
    )(patches, p["wdil"], p["bdil"])

    # --- sub-pixel phase patches for ConvTranspose2d(4,2,1) (XLA glue) ---
    fp = jnp.pad(f.reshape(N, H, W, ct), ((0, 0), (1, 1), (1, 1), (0, 0)))
    pps = []
    for a in (0, 1):
        for b in (0, 1):
            taps = [fp[:, 1 + di:1 + di + H, 1 + dj:1 + dj + W, :]
                    for (di, _kh) in _PHASE_TAPS[a]
                    for (dj, _kw) in _PHASE_TAPS[b]]
            pps.append(jnp.concatenate(taps, axis=-1).reshape(M, 4 * ct))
    pp = jnp.concatenate(pps, axis=-1)                       # (M, 16*ct) bf16

    Kp = pp.shape[1]
    mm_flops = 2 * M * Kp * 4 * cout
    if TM == M:
        # Single tile: fully fused upsample + bias + BN + ReLU in one call.
        byts = (pp.size * 2 + p["wup"].size * 2
                + (p["bup"].size + 2 * cout) * 4 + M * 4 * cout * 4)
        out = pl.pallas_call(
            _up_bn_relu_kernel,
            out_shape=jax.ShapeDtypeStruct((M, 4 * cout), jnp.float32),
            grid=(1,),
            in_specs=[
                _full_spec(pp.shape),
                _full_spec(p["wup"].shape),
                _full_spec(p["bup"].shape),
                _full_spec(p["gamma"].shape),
                _full_spec(p["beta"].shape),
            ],
            out_specs=_full_spec((M, 4 * cout)),
            compiler_params=pltpu.CompilerParams(
                dimension_semantics=("arbitrary",), vmem_limit_bytes=_VMEM_LIMIT),
            cost_estimate=_cost(mm_flops + 8 * M * 4 * cout, byts),
        )(pp, p["wup"], p["bup"], p["gamma"], p["beta"])
    else:
        # Tileable two-pass BN (v7x-friendly): pass 1 matmul + per-tile stats,
        # pass 2 normalize + ReLU.  Both passes keep a parallel M grid, so BN
        # statistics stay global while VMEM stays one tile.
        G = M // TM
        byts = (pp.size * 2 + p["wup"].size * 2 + p["bup"].size * 4
                + M * 4 * cout * 4 + G * 2 * 4 * cout * 4)
        y, stats = pl.pallas_call(
            _up_phase_kernel,
            out_shape=(jax.ShapeDtypeStruct((M, 4 * cout), jnp.float32),
                       jax.ShapeDtypeStruct((G, 2, 4 * cout), jnp.float32)),
            grid=(G,),
            in_specs=[
                pl.BlockSpec((TM, Kp), lambda i: (i, 0)),
                _full_spec(p["wup"].shape),
                _full_spec(p["bup"].shape),
            ],
            out_specs=(pl.BlockSpec((TM, 4 * cout), lambda i: (i, 0)),
                       pl.BlockSpec((1, 2, 4 * cout), lambda i: (i, 0, 0))),
            compiler_params=pltpu.CompilerParams(
                dimension_semantics=("parallel",), vmem_limit_bytes=_VMEM_LIMIT),
            cost_estimate=_cost(mm_flops + 4 * M * 4 * cout, byts),
        )(pp, p["wup"], p["bup"])

        tot = jnp.sum(stats, axis=0)                         # (2, 4*cout)
        cntbn = 4.0 * M                                      # N*2H*2W pixels
        mean = jnp.sum(tot[0].reshape(4, cout), axis=0) / cntbn
        var = jnp.sum(tot[1].reshape(4, cout), axis=0) / cntbn - mean * mean
        scale = p["gamma"].reshape(-1) * lax.rsqrt(var + _BN_EPS)
        shift = p["beta"].reshape(-1) - mean * scale
        scale_p = jnp.tile(scale, 4).reshape(1, 4 * cout)
        shift_p = jnp.tile(shift, 4).reshape(1, 4 * cout)

        byts2 = 2 * M * 4 * cout * 4 + 2 * 4 * cout * 4
        out = pl.pallas_call(
            _bn_relu_kernel,
            out_shape=jax.ShapeDtypeStruct((M, 4 * cout), jnp.float32),
            grid=(G,),
            in_specs=[
                pl.BlockSpec((TM, 4 * cout), lambda i: (i, 0)),
                _full_spec((1, 4 * cout)),
                _full_spec((1, 4 * cout)),
            ],
            out_specs=pl.BlockSpec((TM, 4 * cout), lambda i: (i, 0)),
            compiler_params=pltpu.CompilerParams(
                dimension_semantics=("parallel",), vmem_limit_bytes=_VMEM_LIMIT),
            cost_estimate=_cost(2 * M * 4 * cout, byts2),
        )(y, scale_p, shift_p)

    # interleave phases: (M, 4*cout) -> (N, 2H, 2W, cout)
    y4 = out.reshape(N, H, W, 2, 2, cout)
    return jnp.transpose(y4, (0, 1, 3, 2, 4, 5)).reshape(N, 2 * H, 2 * W, cout)


def _match_spatial(xS, h):
    # TODO(synk): reference feeds one xS to every scale; nearest-subsample it.
    stride = xS.shape[1] // h
    return xS[:, ::stride, ::stride, :]


def gd_decoder_forward(params, xG_features, xS):
    xG5, xG4, xG3, xG2 = xG_features
    xD4 = bsa_forward(params["bsam1"], xG5, xG5, _match_spatial(xS, xG5.shape[1]))
    xD4 = deconv_block_forward(params["deconv1"], xD4)
    xD3 = bsa_forward(params["bsam2"], xG4, xD4, _match_spatial(xS, xG4.shape[1]))
    xD3 = deconv_block_forward(params["deconv2"], xD3)
    xD2 = bsa_forward(params["bsam3"], xG3, xD3, _match_spatial(xS, xG3.shape[1]))
    xD2 = deconv_block_forward(params["deconv3"], xD2)
    xD1 = bsa_forward(params["bsam4"], xG2, xD2, _match_spatial(xS, xG2.shape[1]))
    return deconv_block_forward(params["deconv4"], xD1)


# --------------------------------------------------------------------------
# Deterministic parameter initialization (packed in kernel-ready layout)
# --------------------------------------------------------------------------
class _ParamGen:
    def __init__(self, seed):
        self.key = jax.random.PRNGKey(seed)

    def next(self, shape, scale):
        self.key, k = jax.random.split(self.key)
        return jax.random.normal(k, shape, jnp.float32) * scale


def _pack_conv_w(w):
    # PyTorch Conv2d weight (O, I, kh, kw) -> matmul matrix (kh*kw*I, O), f32.
    o, i, kh, kw = w.shape
    return jnp.transpose(w, (2, 3, 1, 0)).reshape(kh * kw * i, o)


def _block_diag(blocks):
    rows = sum(b.shape[0] for b in blocks)
    cols = sum(b.shape[1] for b in blocks)
    out = jnp.zeros((rows, cols), jnp.float32)
    r = c = 0
    for b in blocks:
        out = out.at[r:r + b.shape[0], c:c + b.shape[1]].set(b)
        r += b.shape[0]
        c += b.shape[1]
    return out


def _pack_deconv_phase_w(w):
    # ConvTranspose2d weight (Ci, Co, 4, 4) -> block-diag (16*Ci, 4*Co), one
    # (4*Ci, Co) block per output phase, tap order matching the wrapper gather.
    blocks = []
    for a in (0, 1):
        for b in (0, 1):
            taps = [w[:, :, kh, kw]
                    for (_di, kh) in _PHASE_TAPS[a]
                    for (_dj, kw) in _PHASE_TAPS[b]]
            blocks.append(jnp.concatenate(taps, axis=0))
    return _block_diag(blocks).astype(jnp.bfloat16)


def init_gd_decoder_params(base_channels, xs_channels, seed=0):
    pg = _ParamGen(seed)

    def conv_wb(cout, cin, k):
        s = 1.0 / float(cin * k * k) ** 0.5
        return pg.next((cout, cin, k, k), s), pg.next((cout,), s)

    def bsa_p(ch):
        part, spart = ch // 4, xs_channels // 4
        cin_mix = 2 * part + spart
        ws, bs = zip(*[conv_wb(ch, cin_mix, 3) for _ in range(4)])
        pw, pb = conv_wb(ch, 4 * ch, 1)
        return {
            "wdil": _block_diag([_pack_conv_w(w) for w in ws]).astype(jnp.bfloat16),
            "bdil": jnp.concatenate(bs).reshape(1, 4 * ch),
            "wpost": _pack_conv_w(pw).astype(jnp.bfloat16),    # (4*ch, ch)
            "bpost": pb.reshape(1, ch),
        }

    def deconv_p(cin, cout):
        ws, bs = zip(*[conv_wb(cin, cin, 3) for _ in range(4)])
        s = 1.0 / float(4 * cin * 16) ** 0.5
        uw = pg.next((4 * cin, cout, 4, 4), s)   # ConvTranspose weight (Ci,Co,kh,kw)
        ub = pg.next((cout,), s)
        return {
            "wdil": _block_diag([_pack_conv_w(w) for w in ws]).astype(jnp.bfloat16),
            "bdil": jnp.concatenate(bs).reshape(1, 4 * cin),
            "wup": _pack_deconv_phase_w(uw),                   # (16*4*cin, 4*cout)
            "bup": jnp.tile(ub, 4).reshape(1, 4 * cout),       # phase-packed bias
            "gamma": jnp.ones((1, cout), jnp.float32),
            "beta": jnp.zeros((1, cout), jnp.float32),
        }

    C = base_channels
    return {
        "bsam1": bsa_p(8 * C), "deconv1": deconv_p(8 * C, 4 * C),
        "bsam2": bsa_p(4 * C), "deconv2": deconv_p(4 * C, 2 * C),
        "bsam3": bsa_p(2 * C), "deconv3": deconv_p(2 * C, C),
        "bsam4": bsa_p(C),     "deconv4": deconv_p(C, C),
    }


# --------------------------------------------------------------------------
if __name__ == "__main__":
    C, N = 4, 2
    key = jax.random.PRNGKey(0)
    ks = jax.random.split(key, 5)

    # NCHW inputs (PyTorch convention)
    xG5 = jax.random.normal(ks[0], (N, 8 * C, 2, 2), jnp.float32)
    xG4 = jax.random.normal(ks[1], (N, 4 * C, 4, 4), jnp.float32)
    xG3 = jax.random.normal(ks[2], (N, 2 * C, 8, 8), jnp.float32)
    xG2 = jax.random.normal(ks[3], (N, C, 16, 16), jnp.float32)
    xS = jax.random.normal(ks[4], (N, 8, 16, 16), jnp.float32)

    def to_nhwc(t):
        return jnp.transpose(t, (0, 2, 3, 1))

    params = init_gd_decoder_params(base_channels=C, xs_channels=8, seed=0)

    fwd = jax.jit(gd_decoder_forward)
    y = fwd(
        params,
        (to_nhwc(xG5), to_nhwc(xG4), to_nhwc(xG3), to_nhwc(xG2)),
        to_nhwc(xS),
    )
    y = jnp.transpose(y, (0, 3, 1, 2))  # back to NCHW
    jax.block_until_ready(y)

    assert y.shape == (N, C, 32, 32), y.shape
    assert bool(jnp.all(jnp.isfinite(y)))
    print("KERNEL_OK")
</pallas_src>

<mosaic_0001>
module attributes {stable_mosaic.version = 11 : i64} {
  func.func @_bsa_kernel(%arg0: i32, %arg1: memref<8x648xbf16, #tpu.memory_space<vmem>>, %arg2: memref<648x128xbf16, #tpu.memory_space<vmem>>, %arg3: memref<1x128xf32, #tpu.memory_space<vmem>>, %arg4: memref<128x32xbf16, #tpu.memory_space<vmem>>, %arg5: memref<1x32xf32, #tpu.memory_space<vmem>>, %arg6: memref<8x32xf32, #tpu.memory_space<vmem>>) attributes {dimension_semantics = [#tpu.dimension_semantics<parallel>], iteration_bounds = array<i64: 1>, scalar_prefetch = 0 : i64, scratch_operands = 0 : i64, tpu.core_type = #tpu.core_type<tc>, window_params = [{transform_indices = @transform_0, window_bounds = array<i64: 8, 648>}, {pipeline_mode = #tpu.pipeline_mode<synchronous>, transform_indices = @transform_1, window_bounds = array<i64: 648, 128>}, {pipeline_mode = #tpu.pipeline_mode<synchronous>, transform_indices = @transform_2, window_bounds = array<i64: 1, 128>}, {pipeline_mode = #tpu.pipeline_mode<synchronous>, transform_indices = @transform_3, window_bounds = array<i64: 128, 32>}, {pipeline_mode = #tpu.pipeline_mode<synchronous>, transform_indices = @transform_4, window_bounds = array<i64: 1, 32>}, {transform_indices = @transform_5, window_bounds = array<i64: 8, 32>}]} {
    %c0 = arith.constant 0 : index
    %c0_0 = arith.constant 0 : index
    %0 = vector.load %arg1[%c0, %c0_0] : memref<8x648xbf16, #tpu.memory_space<vmem>>, vector<8x648xbf16>
    %c0_1 = arith.constant 0 : index
    %c0_2 = arith.constant 0 : index
    %1 = vector.load %arg2[%c0_1, %c0_2] : memref<648x128xbf16, #tpu.memory_space<vmem>>, vector<648x128xbf16>
    %cst = arith.constant dense<0.000000e+00> : vector<8x128xf32>
    %2 = tpu.matmul %0, %1, %cst {dimension_numbers = #tpu.dot_dimension_numbers<[1], [0], [0], [1], [0, 0, 1, 1], [], []>} : vector<8x648xbf16>, vector<648x128xbf16>, vector<8x128xf32> -> vector<8x128xf32>
    %c0_3 = arith.constant 0 : index
    %c0_4 = arith.constant 0 : index
    %3 = vector.load %arg3[%c0_3, %c0_4] : memref<1x128xf32, #tpu.memory_space<vmem>>, vector<1x128xf32>
    %4 = vector.broadcast %3 : vector<1x128xf32> to vector<8x128xf32>
    %5 = arith.addf %2, %4 : vector<8x128xf32>
    %6 = arith.truncf %5 : vector<8x128xf32> to vector<8x128xbf16>
    %c0_5 = arith.constant 0 : index
    %c0_6 = arith.constant 0 : index
    %7 = vector.load %arg4[%c0_5, %c0_6] : memref<128x32xbf16, #tpu.memory_space<vmem>>, vector<128x32xbf16>
    %cst_7 = arith.constant dense<0.000000e+00> : vector<8x32xf32>
    %8 = tpu.matmul %6, %7, %cst_7 {dimension_numbers = #tpu.dot_dimension_numbers<[1], [0], [0], [1], [0, 0, 1, 1], [], []>} : vector<8x128xbf16>, vector<128x32xbf16>, vector<8x32xf32> -> vector<8x32xf32>
    %c0_8 = arith.constant 0 : index
    %c0_9 = arith.constant 0 : index
    %9 = vector.load %arg5[%c0_8, %c0_9] : memref<1x32xf32, #tpu.memory_space<vmem>>, vector<1x32xf32>
    %10 = vector.broadcast %9 : vector<1x32xf32> to vector<8x32xf32>
    %11 = arith.addf %8, %10 : vector<8x32xf32>
    %c0_10 = arith.constant 0 : index
    %c0_11 = arith.constant 0 : index
    %12 = vector.load %arg6[%c0_10, %c0_11] : memref<8x32xf32, #tpu.memory_space<vmem>>, vector<8x32xf32>
    tpu.vector_store %arg6[%c0_10, %c0_11], %11 {strides = array<i32>} : memref<8x32xf32, #tpu.memory_space<vmem>>, vector<8x32xf32>,
    return
  }
  func.func @transform_0(%arg0: i32) -> (i32, i32) {
    %c0_i32 = arith.constant 0 : i32
    %c0_i32_0 = arith.constant 0 : i32
    return %arg0, %c0_i32 : i32, i32
  }
  func.func @transform_1(%arg0: i32) -> (i32, i32) {
    %c0_i32 = arith.constant 0 : i32
    %c0_i32_0 = arith.constant 0 : i32
    %c0_i32_1 = arith.constant 0 : i32
    return %c0_i32, %c0_i32_0 : i32, i32
  }
  func.func @transform_2(%arg0: i32) -> (i32, i32) {
    %c0_i32 = arith.constant 0 : i32
    %c0_i32_0 = arith.constant 0 : i32
    %c0_i32_1 = arith.constant 0 : i32
    return %c0_i32, %c0_i32_0 : i32, i32
  }
  func.func @transform_3(%arg0: i32) -> (i32, i32) {
    %c0_i32 = arith.constant 0 : i32
    %c0_i32_0 = arith.constant 0 : i32
    %c0_i32_1 = arith.constant 0 : i32
    return %c0_i32, %c0_i32_0 : i32, i32
  }
  func.func @transform_4(%arg0: i32) -> (i32, i32) {
    %c0_i32 = arith.constant 0 : i32
    %c0_i32_0 = arith.constant 0 : i32
    %c0_i32_1 = arith.constant 0 : i32
    return %c0_i32, %c0_i32_0 : i32, i32
  }
  func.func @transform_5(%arg0: i32) -> (i32, i32) {
    %c0_i32 = arith.constant 0 : i32
    %c0_i32_0 = arith.constant 0 : i32
    return %arg0, %c0_i32 : i32, i32
  }
}

module attributes {stable_mosaic.version = 11 : i64} {
  func.func @_dil_group_kernel(%arg0: i32, %arg1: memref<8x1152xbf16, #tpu.memory_space<vmem>>, %arg2: memref<1152x128xbf16, #tpu.memory_space<vmem>>, %arg3: memref<1x128xf32, #tpu.memory_space<vmem>>, %arg4: memref<8x128xbf16, #tpu.memory_space<vmem>>) attributes {dimension_semantics = [#tpu.dimension_semantics<parallel>], iteration_bounds = array<i64: 1>, scalar_prefetch = 0 : i64, scratch_operands = 0 : i64, tpu.core_type = #tpu.core_type<tc>, window_params = [{transform_indices = @transform_0, window_bounds = array<i64: 8, 1152>}, {pipeline_mode = #tpu.pipeline_mode<synchronous>, transform_indices = @transform_1, window_bounds = array<i64: 1152, 128>}, {pipeline_mode = #tpu.pipeline_mode<synchronous>, transform_indices = @transform_2, window_bounds = array<i64: 1, 128>}, {transform_indices = @transform_3, window_bounds = array<i64: 8, 128>}]} {
    %c0 = arith.constant 0 : index
    %c0_0 = arith.constant 0 : index
    %0 = vector.load %arg1[%c0, %c0_0] : memref<8x1152xbf16, #tpu.memory_space<vmem>>, vector<8x1152xbf16>
    %c0_1 = arith.constant 0 : index
    %c0_2 = arith.constant 0 : index
    %1 = vector.load %arg2[%c0_1, %c0_2] : memref<1152x128xbf16, #tpu.memory_space<vmem>>, vector<1152x128xbf16>
    %cst = arith.constant dense<0.000000e+00> : vector<8x128xf32>
    %2 = tpu.matmul %0, %1, %cst {dimension_numbers = #tpu.dot_dimension_numbers<[1], [0], [0], [1], [0, 0, 1, 1], [], []>} : vector<8x1152xbf16>, vector<1152x128xbf16>, vector<8x128xf32> -> vector<8x128xf32>
    %c0_3 = arith.constant 0 : index
    %c0_4 = arith.constant 0 : index
    %3 = vector.load %arg3[%c0_3, %c0_4] : memref<1x128xf32, #tpu.memory_space<vmem>>, vector<1x128xf32>
    %4 = vector.broadcast %3 : vector<1x128xf32> to vector<8x128xf32>
    %5 = arith.addf %2, %4 : vector<8x128xf32>
    %6 = arith.truncf %5 : vector<8x128xf32> to vector<8x128xbf16>
    %c0_5 = arith.constant 0 : index
    %c0_6 = arith.constant 0 : index
    %7 = vector.load %arg4[%c0_5, %c0_6] : memref<8x128xbf16, #tpu.memory_space<vmem>>, vector<8x128xbf16>
    tpu.vector_store %arg4[%c0_5, %c0_6], %6 {strides = array<i32>} : memref<8x128xbf16, #tpu.memory_space<vmem>>, vector<8x128xbf16>,
    return
  }
  func.func @transform_0(%arg0: i32) -> (i32, i32) {
    %c0_i32 = arith.constant 0 : i32
    %c0_i32_0 = arith.constant 0 : i32
    return %arg0, %c0_i32 : i32, i32
  }
  func.func @transform_1(%arg0: i32) -> (i32, i32) {
    %c0_i32 = arith.constant 0 : i32
    %c0_i32_0 = arith.constant 0 : i32
    %c0_i32_1 = arith.constant 0 : i32
    return %c0_i32, %c0_i32_0 : i32, i32
  }
  func.func @transform_2(%arg0: i32) -> (i32, i32) {
    %c0_i32 = arith.constant 0 : i32
    %c0_i32_0 = arith.constant 0 : i32
    %c0_i32_1 = arith.constant 0 : i32
    return %c0_i32, %c0_i32_0 : i32, i32
  }
  func.func @transform_3(%arg0: i32) -> (i32, i32) {
    %c0_i32 = arith.constant 0 : i32
    %c0_i32_0 = arith.constant 0 : i32
    return %arg0, %c0_i32 : i32, i32
  }
}

module attributes {stable_mosaic.version = 11 : i64} {
  func.func @_up_bn_relu_kernel(%arg0: i32, %arg1: memref<8x2048xbf16, #tpu.memory_space<vmem>>, %arg2: memref<2048x64xbf16, #tpu.memory_space<vmem>>, %arg3: memref<1x64xf32, #tpu.memory_space<vmem>>, %arg4: memref<1x16xf32, #tpu.memory_space<vmem>>, %arg5: memref<1x16xf32, #tpu.memory_space<vmem>>, %arg6: memref<8x64xf32, #tpu.memory_space<vmem>>) attributes {dimension_semantics = [#tpu.dimension_semantics<arbitrary>], iteration_bounds = array<i64: 1>, scalar_prefetch = 0 : i64, scratch_operands = 0 : i64, tpu.core_type = #tpu.core_type<tc>, window_params = [{pipeline_mode = #tpu.pipeline_mode<synchronous>, transform_indices = @transform_0, window_bounds = array<i64: 8, 2048>}, {pipeline_mode = #tpu.pipeline_mode<synchronous>, transform_indices = @transform_1, window_bounds = array<i64: 2048, 64>}, {pipeline_mode = #tpu.pipeline_mode<synchronous>, transform_indices = @transform_2, window_bounds = array<i64: 1, 64>}, {pipeline_mode = #tpu.pipeline_mode<synchronous>, transform_indices = @transform_3, window_bounds = array<i64: 1, 16>}, {pipeline_mode = #tpu.pipeline_mode<synchronous>, transform_indices = @transform_4, window_bounds = array<i64: 1, 16>}, {pipeline_mode = #tpu.pipeline_mode<synchronous>, transform_indices = @transform_5, window_bounds = array<i64: 8, 64>}]} {
    %c0 = arith.constant 0 : index
    %c0_0 = arith.constant 0 : index
    %0 = vector.load %arg1[%c0, %c0_0] : memref<8x2048xbf16, #tpu.memory_space<vmem>>, vector<8x2048xbf16>
    %c0_1 = arith.constant 0 : index
    %c0_2 = arith.constant 0 : index
    %1 = vector.load %arg2[%c0_1, %c0_2] : memref<2048x64xbf16, #tpu.memory_space<vmem>>, vector<2048x64xbf16>
    %cst = arith.constant dense<0.000000e+00> : vector<8x64xf32>
    %2 = tpu.matmul %0, %1, %cst {dimension_numbers = #tpu.dot_dimension_numbers<[1], [0], [0], [1], [0, 0, 1, 1], [], []>} : vector<8x2048xbf16>, vector<2048x64xbf16>, vector<8x64xf32> -> vector<8x64xf32>
    %c0_3 = arith.constant 0 : index
    %c0_4 = arith.constant 0 : index
    %3 = vector.load %arg3[%c0_3, %c0_4] : memref<1x64xf32, #tpu.memory_space<vmem>>, vector<1x64xf32>
    %4 = vector.broadcast %3 : vector<1x64xf32> to vector<8x64xf32>
    %5 = arith.addf %2, %4 : vector<8x64xf32>
    %cst_5 = arith.constant dense<0.000000e+00> : vector<64xf32>
    %6 = vector.multi_reduction <add>, %5, %cst_5 [0] : vector<8x64xf32> to vector<64xf32>
    %7 = vector.shape_cast %6 : vector<64xf32> to vector<1x64xf32>
    %8 = arith.mulf %5, %5 : vector<8x64xf32>
    %cst_6 = arith.constant dense<0.000000e+00> : vector<64xf32>
    %9 = vector.multi_reduction <add>, %8, %cst_6 [0] : vector<8x64xf32> to vector<64xf32>
    %10 = vector.shape_cast %9 : vector<64xf32> to vector<1x64xf32>
    %11 = vector.extract_strided_slice %7 {offsets = [0, 0], sizes = [1, 16], strides = [1, 1]} : vector<1x64xf32> to vector<1x16xf32>
    %12 = vector.extract_strided_slice %7 {offsets = [0, 16], sizes = [1, 16], strides = [1, 1]} : vector<1x64xf32> to vector<1x16xf32>
    %13 = arith.addf %11, %12 : vector<1x16xf32>
    %14 = vector.extract_strided_slice %7 {offsets = [0, 32], sizes = [1, 16], strides = [1, 1]} : vector<1x64xf32> to vector<1x16xf32>
    %15 = arith.addf %13, %14 : vector<1x16xf32>
    %16 = vector.extract_strided_slice %7 {offsets = [0, 48], sizes = [1, 16], strides = [1, 1]} : vector<1x64xf32> to vector<1x16xf32>
    %17 = arith.addf %15, %16 : vector<1x16xf32>
    %18 = vector.extract_strided_slice %10 {offsets = [0, 0], sizes = [1, 16], strides = [1, 1]} : vector<1x64xf32> to vector<1x16xf32>
    %19 = vector.extract_strided_slice %10 {offsets = [0, 16], sizes = [1, 16], strides = [1, 1]} : vector<1x64xf32> to vector<1x16xf32>
    %20 = arith.addf %18, %19 : vector<1x16xf32>
    %21 = vector.extract_strided_slice %10 {offsets = [0, 32], sizes = [1, 16], strides = [1, 1]} : vector<1x64xf32> to vector<1x16xf32>
    %22 = arith.addf %20, %21 : vector<1x16xf32>
    %23 = vector.extract_strided_slice %10 {offsets = [0, 48], sizes = [1, 16], strides = [1, 1]} : vector<1x64xf32> to vector<1x16xf32>
    %24 = arith.addf %22, %23 : vector<1x16xf32>
    %cst_7 = arith.constant 3.200000e+01 : f32
    %25 = vector.broadcast %cst_7 : f32 to vector<1x16xf32>
    %26 = arith.divf %17, %25 : vector<1x16xf32>
    %cst_8 = arith.constant 3.200000e+01 : f32
    %27 = vector.broadcast %cst_8 : f32 to vector<1x16xf32>
    %28 = arith.divf %24, %27 : vector<1x16xf32>
    %29 = arith.mulf %26, %26 : vector<1x16xf32>
    %30 = arith.subf %28, %29 : vector<1x16xf32>
    %c0_9 = arith.constant 0 : index
    %c0_10 = arith.constant 0 : index
    %31 = vector.load %arg4[%c0_9, %c0_10] : memref<1x16xf32, #tpu.memory_space<vmem>>, vector<1x16xf32>
    %cst_11 = arith.constant 9.99999974E-6 : f32
    %32 = vector.broadcast %cst_11 : f32 to vector<1x16xf32>
    %33 = arith.addf %30, %32 : vector<1x16xf32>
    %34 = math.rsqrt %33 : vector<1x16xf32>
    %35 = arith.mulf %31, %34 : vector<1x16xf32>
    %c0_12 = arith.constant 0 : index
    %c0_13 = arith.constant 0 : index
    %36 = vector.load %arg5[%c0_12, %c0_13] : memref<1x16xf32, #tpu.memory_space<vmem>>, vector<1x16xf32>
    %37 = arith.mulf %26, %35 : vector<1x16xf32>
    %38 = arith.subf %36, %37 : vector<1x16xf32>
    %39 = tpu.concatenate %35, %35, %35, %35 in 1 : vector<1x16xf32>, vector<1x16xf32>, vector<1x16xf32>, vector<1x16xf32> -> vector<1x64xf32>
    %40 = tpu.concatenate %38, %38, %38, %38 in 1 : vector<1x16xf32>, vector<1x16xf32>, vector<1x16xf32>, vector<1x16xf32> -> vector<1x64xf32>
    %41 = vector.broadcast %39 : vector<1x64xf32> to vector<8x64xf32>
    %42 = arith.mulf %5, %41 : vector<8x64xf32>
    %43 = vector.broadcast %40 : vector<1x64xf32> to vector<8x64xf32>
    %44 = arith.addf %42, %43 : vector<8x64xf32>
    %cst_14 = arith.constant 0.000000e+00 : f32
    %45 = vector.broadcast %cst_14 : f32 to vector<8x64xf32>
    %46 = arith.maximumf %44, %45 : vector<8x64xf32>
    %c0_15 = arith.constant 0 : index
    %c0_16 = arith.constant 0 : index
    %47 = vector.load %arg6[%c0_15, %c0_16] : memref<8x64xf32, #tpu.memory_space<vmem>>, vector<8x64xf32>
    tpu.vector_store %arg6[%c0_15, %c0_16], %46 {strides = array<i32>} : memref<8x64xf32, #tpu.memory_space<vmem>>, vector<8x64xf32>,
    return
  }
  func.func @transform_0(%arg0: i32) -> (i32, i32) {
    %c0_i32 = arith.constant 0 : i32
    %c0_i32_0 = arith.constant 0 : i32
    %c0_i32_1 = arith.constant 0 : i32
    return %c0_i32, %c0_i32_0 : i32, i32
  }
  func.func @transform_1(%arg0: i32) -> (i32, i32) {
    %c0_i32 = arith.constant 0 : i32
    %c0_i32_0 = arith.constant 0 : i32
    %c0_i32_1 = arith.constant 0 : i32
    return %c0_i32, %c0_i32_0 : i32, i32
  }
  func.func @transform_2(%arg0: i32) -> (i32, i32) {
    %c0_i32 = arith.constant 0 : i32
    %c0_i32_0 = arith.constant 0 : i32
    %c0_i32_1 = arith.constant 0 : i32
    return %c0_i32, %c0_i32_0 : i32, i32
  }
  func.func @transform_3(%arg0: i32) -> (i32, i32) {
    %c0_i32 = arith.constant 0 : i32
    %c0_i32_0 = arith.constant 0 : i32
    %c0_i32_1 = arith.constant 0 : i32
    return %c0_i32, %c0_i32_0 : i32, i32
  }
  func.func @transform_4(%arg0: i32) -> (i32, i32) {
    %c0_i32 = arith.constant 0 : i32
    %c0_i32_0 = arith.constant 0 : i32
    %c0_i32_1 = arith.constant 0 : i32
    return %c0_i32, %c0_i32_0 : i32, i32
  }
  func.func @transform_5(%arg0: i32) -> (i32, i32) {
    %c0_i32 = arith.constant 0 : i32
    %c0_i32_0 = arith.constant 0 : i32
    %c0_i32_1 = arith.constant 0 : i32
    return %c0_i32, %c0_i32_0 : i32, i32
  }
}

module attributes {stable_mosaic.version = 11 : i64} {
  func.func @_bsa_kernel(%arg0: i32, %arg1: memref<32x360xbf16, #tpu.memory_space<vmem>>, %arg2: memref<360x64xbf16, #tpu.memory_space<vmem>>, %arg3: memref<1x64xf32, #tpu.memory_space<vmem>>, %arg4: memref<64x16xbf16, #tpu.memory_space<vmem>>, %arg5: memref<1x16xf32, #tpu.memory_space<vmem>>, %arg6: memref<32x16xf32, #tpu.memory_space<vmem>>) attributes {dimension_semantics = [#tpu.dimension_semantics<parallel>], iteration_bounds = array<i64: 1>, scalar_prefetch = 0 : i64, scratch_operands = 0 : i64, tpu.core_type = #tpu.core_type<tc>, window_params = [{transform_indices = @transform_0, window_bounds = array<i64: 32, 360>}, {pipeline_mode = #tpu.pipeline_mode<synchronous>, transform_indices = @transform_1, window_bounds = array<i64: 360, 64>}, {pipeline_mode = #tpu.pipeline_mode<synchronous>, transform_indices = @transform_2, window_bounds = array<i64: 1, 64>}, {pipeline_mode = #tpu.pipeline_mode<synchronous>, transform_indices = @transform_3, window_bounds = array<i64: 64, 16>}, {pipeline_mode = #tpu.pipeline_mode<synchronous>, transform_indices = @transform_4, window_bounds = array<i64: 1, 16>}, {transform_indices = @transform_5, window_bounds = array<i64: 32, 16>}]} {
    %c0 = arith.constant 0 : index
    %c0_0 = arith.constant 0 : index
    %0 = vector.load %arg1[%c0, %c0_0] : memref<32x360xbf16, #tpu.memory_space<vmem>>, vector<32x360xbf16>
    %c0_1 = arith.constant 0 : index
    %c0_2 = arith.constant 0 : index
    %1 = vector.load %arg2[%c0_1, %c0_2] : memref<360x64xbf16, #tpu.memory_space<vmem>>, vector<360x64xbf16>
    %cst = arith.constant dense<0.000000e+00> : vector<32x64xf32>
    %2 = tpu.matmul %0, %1, %cst {dimension_numbers = #tpu.dot_dimension_numbers<[1], [0], [0], [1], [0, 0, 1, 1], [], []>} : vector<32x360xbf16>, vector<360x64xbf16>, vector<32x64xf32> -> vector<32x64xf32>
    %c0_3 = arith.constant 0 : index
    %c0_4 = arith.constant 0 : index
    %3 = vector.load %arg3[%c0_3, %c0_4] : memref<1x64xf32, #tpu.memory_space<vmem>>, vector<1x64xf32>
    %4 = vector.broadcast %3 : vector<1x64xf32> to vector<32x64xf32>
    %5 = arith.addf %2, %4 : vector<32x64xf32>
    %6 = arith.truncf %5 : vector<32x64xf32> to vector<32x64xbf16>
    %c0_5 = arith.constant 0 : index
    %c0_6 = arith.constant 0 : index
    %7 = vector.load %arg4[%c0_5, %c0_6] : memref<64x16xbf16, #tpu.memory_space<vmem>>, vector<64x16xbf16>
    %cst_7 = arith.constant dense<0.000000e+00> : vector<32x16xf32>
    %8 = tpu.matmul %6, %7, %cst_7 {dimension_numbers = #tpu.dot_dimension_numbers<[1], [0], [0], [1], [0, 0, 1, 1], [], []>} : vector<32x64xbf16>, vector<64x16xbf16>, vector<32x16xf32> -> vector<32x16xf32>
    %c0_8 = arith.constant 0 : index
    %c0_9 = arith.constant 0 : index
    %9 = vector.load %arg5[%c0_8, %c0_9] : memref<1x16xf32, #tpu.memory_space<vmem>>, vector<1x16xf32>
    %10 = vector.broadcast %9 : vector<1x16xf32> to vector<32x16xf32>
    %11 = arith.addf %8, %10 : vector<32x16xf32>
    %c0_10 = arith.constant 0 : index
    %c0_11 = arith.constant 0 : index
    %12 = vector.load %arg6[%c0_10, %c0_11] : memref<32x16xf32, #tpu.memory_space<vmem>>, vector<32x16xf32>
    tpu.vector_store %arg6[%c0_10, %c0_11], %11 {strides = array<i32>} : memref<32x16xf32, #tpu.memory_space<vmem>>, vector<32x16xf32>,
    return
  }
  func.func @transform_0(%arg0: i32) -> (i32, i32) {
    %c0_i32 = arith.constant 0 : i32
    %c0_i32_0 = arith.constant 0 : i32
    return %arg0, %c0_i32 : i32, i32
  }
  func.func @transform_1(%arg0: i32) -> (i32, i32) {
    %c0_i32 = arith.constant 0 : i32
    %c0_i32_0 = arith.constant 0 : i32
    %c0_i32_1 = arith.constant 0 : i32
    return %c0_i32, %c0_i32_0 : i32, i32
  }
  func.func @transform_2(%arg0: i32) -> (i32, i32) {
    %c0_i32 = arith.constant 0 : i32
    %c0_i32_0 = arith.constant 0 : i32
    %c0_i32_1 = arith.constant 0 : i32
    return %c0_i32, %c0_i32_0 : i32, i32
  }
  func.func @transform_3(%arg0: i32) -> (i32, i32) {
    %c0_i32 = arith.constant 0 : i32
    %c0_i32_0 = arith.constant 0 : i32
    %c0_i32_1 = arith.constant 0 : i32
    return %c0_i32, %c0_i32_0 : i32, i32
  }
  func.func @transform_4(%arg0: i32) -> (i32, i32) {
    %c0_i32 = arith.constant 0 : i32
    %c0_i32_0 = arith.constant 0 : i32
    %c0_i32_1 = arith.constant 0 : i32
    return %c0_i32, %c0_i32_0 : i32, i32
  }
  func.func @transform_5(%arg0: i32) -> (i32, i32) {
    %c0_i32 = arith.constant 0 : i32
    %c0_i32_0 = arith.constant 0 : i32
    return %arg0, %c0_i32 : i32, i32
  }
}

module attributes {stable_mosaic.version = 11 : i64} {
  func.func @_dil_group_kernel(%arg0: i32, %arg1: memref<32x576xbf16, #tpu.memory_space<vmem>>, %arg2: memref<576x64xbf16, #tpu.memory_space<vmem>>, %arg3: memref<1x64xf32, #tpu.memory_space<vmem>>, %arg4: memref<32x64xbf16, #tpu.memory_space<vmem>>) attributes {dimension_semantics = [#tpu.dimension_semantics<parallel>], iteration_bounds = array<i64: 1>, scalar_prefetch = 0 : i64, scratch_operands = 0 : i64, tpu.core_type = #tpu.core_type<tc>, window_params = [{transform_indices = @transform_0, window_bounds = array<i64: 32, 576>}, {pipeline_mode = #tpu.pipeline_mode<synchronous>, transform_indices = @transform_1, window_bounds = array<i64: 576, 64>}, {pipeline_mode = #tpu.pipeline_mode<synchronous>, transform_indices = @transform_2, window_bounds = array<i64: 1, 64>}, {transform_indices = @transform_3, window_bounds = array<i64: 32, 64>}]} {
    %c0 = arith.constant 0 : index
    %c0_0 = arith.constant 0 : index
    %0 = vector.load %arg1[%c0, %c0_0] : memref<32x576xbf16, #tpu.memory_space<vmem>>, vector<32x576xbf16>
    %c0_1 = arith.constant 0 : index
    %c0_2 = arith.constant 0 : index
    %1 = vector.load %arg2[%c0_1, %c0_2] : memref<576x64xbf16, #tpu.memory_space<vmem>>, vector<576x64xbf16>
    %cst = arith.constant dense<0.000000e+00> : vector<32x64xf32>
    %2 = tpu.matmul %0, %1, %cst {dimension_numbers = #tpu.dot_dimension_numbers<[1], [0], [0], [1], [0, 0, 1, 1], [], []>} : vector<32x576xbf16>, vector<576x64xbf16>, vector<32x64xf32> -> vector<32x64xf32>
    %c0_3 = arith.constant 0 : index
    %c0_4 = arith.constant 0 : index
    %3 = vector.load %arg3[%c0_3, %c0_4] : memref<1x64xf32, #tpu.memory_space<vmem>>, vector<1x64xf32>
    %4 = vector.broadcast %3 : vector<1x64xf32> to vector<32x64xf32>
    %5 = arith.addf %2, %4 : vector<32x64xf32>
    %6 = arith.truncf %5 : vector<32x64xf32> to vector<32x64xbf16>
    %c0_5 = arith.constant 0 : index
    %c0_6 = arith.constant 0 : index
    %7 = vector.load %arg4[%c0_5, %c0_6] : memref<32x64xbf16, #tpu.memory_space<vmem>>, vector<32x64xbf16>
    tpu.vector_store %arg4[%c0_5, %c0_6], %6 {strides = array<i32>} : memref<32x64xbf16, #tpu.memory_space<vmem>>, vector<32x64xbf16>,
    return
  }
  func.func @transform_0(%arg0: i32) -> (i32, i32) {
    %c0_i32 = arith.constant 0 : i32
    %c0_i32_0 = arith.constant 0 : i32
    return %arg0, %c0_i32 : i32, i32
  }
  func.func @transform_1(%arg0: i32) -> (i32, i32) {
    %c0_i32 = arith.constant 0 : i32
    %c0_i32_0 = arith.constant 0 : i32
    %c0_i32_1 = arith.constant 0 : i32
    return %c0_i32, %c0_i32_0 : i32, i32
  }
  func.func @transform_2(%arg0: i32) -> (i32, i32) {
    %c0_i32 = arith.constant 0 : i32
    %c0_i32_0 = arith.constant 0 : i32
    %c0_i32_1 = arith.constant 0 : i32
    return %c0_i32, %c0_i32_0 : i32, i32
  }
  func.func @transform_3(%arg0: i32) -> (i32, i32) {
    %c0_i32 = arith.constant 0 : i32
    %c0_i32_0 = arith.constant 0 : i32
    return %arg0, %c0_i32 : i32, i32
  }
}

module attributes {stable_mosaic.version = 11 : i64} {
  func.func @_up_bn_relu_kernel(%arg0: i32, %arg1: memref<32x1024xbf16, #tpu.memory_space<vmem>>, %arg2: memref<1024x32xbf16, #tpu.memory_space<vmem>>, %arg3: memref<1x32xf32, #tpu.memory_space<vmem>>, %arg4: memref<1x8xf32, #tpu.memory_space<vmem>>, %arg5: memref<1x8xf32, #tpu.memory_space<vmem>>, %arg6: memref<32x32xf32, #tpu.memory_space<vmem>>) attributes {dimension_semantics = [#tpu.dimension_semantics<arbitrary>], iteration_bounds = array<i64: 1>, scalar_prefetch = 0 : i64, scratch_operands = 0 : i64, tpu.core_type = #tpu.core_type<tc>, window_params = [{pipeline_mode = #tpu.pipeline_mode<synchronous>, transform_indices = @transform_0, window_bounds = array<i64: 32, 1024>}, {pipeline_mode = #tpu.pipeline_mode<synchronous>, transform_indices = @transform_1, window_bounds = array<i64: 1024, 32>}, {pipeline_mode = #tpu.pipeline_mode<synchronous>, transform_indices = @transform_2, window_bounds = array<i64: 1, 32>}, {pipeline_mode = #tpu.pipeline_mode<synchronous>, transform_indices = @transform_3, window_bounds = array<i64: 1, 8>}, {pipeline_mode = #tpu.pipeline_mode<synchronous>, transform_indices = @transform_4, window_bounds = array<i64: 1, 8>}, {pipeline_mode = #tpu.pipeline_mode<synchronous>, transform_indices = @transform_5, window_bounds = array<i64: 32, 32>}]} {
    %c0 = arith.constant 0 : index
    %c0_0 = arith.constant 0 : index
    %0 = vector.load %arg1[%c0, %c0_0] : memref<32x1024xbf16, #tpu.memory_space<vmem>>, vector<32x1024xbf16>
    %c0_1 = arith.constant 0 : index
    %c0_2 = arith.constant 0 : index
    %1 = vector.load %arg2[%c0_1, %c0_2] : memref<1024x32xbf16, #tpu.memory_space<vmem>>, vector<1024x32xbf16>
    %cst = arith.constant dense<0.000000e+00> : vector<32x32xf32>
    %2 = tpu.matmul %0, %1, %cst {dimension_numbers = #tpu.dot_dimension_numbers<[1], [0], [0], [1], [0, 0, 1, 1], [], []>} : vector<32x1024xbf16>, vector<1024x32xbf16>, vector<32x32xf32> -> vector<32x32xf32>
    %c0_3 = arith.constant 0 : index
    %c0_4 = arith.constant 0 : index
    %3 = vector.load %arg3[%c0_3, %c0_4] : memref<1x32xf32, #tpu.memory_space<vmem>>, vector<1x32xf32>
    %4 = vector.broadcast %3 : vector<1x32xf32> to vector<32x32xf32>
    %5 = arith.addf %2, %4 : vector<32x32xf32>
    %cst_5 = arith.constant dense<0.000000e+00> : vector<32xf32>
    %6 = vector.multi_reduction <add>, %5, %cst_5 [0] : vector<32x32xf32> to vector<32xf32>
    %7 = vector.shape_cast %6 : vector<32xf32> to vector<1x32xf32>
    %8 = arith.mulf %5, %5 : vector<32x32xf32>
    %cst_6 = arith.constant dense<0.000000e+00> : vector<32xf32>
    %9 = vector.multi_reduction <add>, %8, %cst_6 [0] : vector<32x32xf32> to vector<32xf32>
    %10 = vector.shape_cast %9 : vector<32xf32> to vector<1x32xf32>
    %11 = vector.extract_strided_slice %7 {offsets = [0, 0], sizes = [1, 8], strides = [1, 1]} : vector<1x32xf32> to vector<1x8xf32>
    %12 = vector.extract_strided_slice %7 {offsets = [0, 8], sizes = [1, 8], strides = [1, 1]} : vector<1x32xf32> to vector<1x8xf32>
    %13 = arith.addf %11, %12 : vector<1x8xf32>
    %14 = vector.extract_strided_slice %7 {offsets = [0, 16], sizes = [1, 8], strides = [1, 1]} : vector<1x32xf32> to vector<1x8xf32>
    %15 = arith.addf %13, %14 : vector<1x8xf32>
    %16 = vector.extract_strided_slice %7 {offsets = [0, 24], sizes = [1, 8], strides = [1, 1]} : vector<1x32xf32> to vector<1x8xf32>
    %17 = arith.addf %15, %16 : vector<1x8xf32>
    %18 = vector.extract_strided_slice %10 {offsets = [0, 0], sizes = [1, 8], strides = [1, 1]} : vector<1x32xf32> to vector<1x8xf32>
    %19 = vector.extract_strided_slice %10 {offsets = [0, 8], sizes = [1, 8], strides = [1, 1]} : vector<1x32xf32> to vector<1x8xf32>
    %20 = arith.addf %18, %19 : vector<1x8xf32>
    %21 = vector.extract_strided_slice %10 {offsets = [0, 16], sizes = [1, 8], strides = [1, 1]} : vector<1x32xf32> to vector<1x8xf32>
    %22 = arith.addf %20, %21 : vector<1x8xf32>
    %23 = vector.extract_strided_slice %10 {offsets = [0, 24], sizes = [1, 8], strides = [1, 1]} : vector<1x32xf32> to vector<1x8xf32>
    %24 = arith.addf %22, %23 : vector<1x8xf32>
    %cst_7 = arith.constant 1.280000e+02 : f32
    %25 = vector.broadcast %cst_7 : f32 to vector<1x8xf32>
    %26 = arith.divf %17, %25 : vector<1x8xf32>
    %cst_8 = arith.constant 1.280000e+02 : f32
    %27 = vector.broadcast %cst_8 : f32 to vector<1x8xf32>
    %28 = arith.divf %24, %27 : vector<1x8xf32>
    %29 = arith.mulf %26, %26 : vector<1x8xf32>
    %30 = arith.subf %28, %29 : vector<1x8xf32>
    %c0_9 = arith.constant 0 : index
    %c0_10 = arith.constant 0 : index
    %31 = vector.load %arg4[%c0_9, %c0_10] : memref<1x8xf32, #tpu.memory_space<vmem>>, vector<1x8xf32>
    %cst_11 = arith.constant 9.99999974E-6 : f32
    %32 = vector.broadcast %cst_11 : f32 to vector<1x8xf32>
    %33 = arith.addf %30, %32 : vector<1x8xf32>
    %34 = math.rsqrt %33 : vector<1x8xf32>
    %35 = arith.mulf %31, %34 : vector<1x8xf32>
    %c0_12 = arith.constant 0 : index
    %c0_13 = arith.constant 0 : index
    %36 = vector.load %arg5[%c0_12, %c0_13] : memref<1x8xf32, #tpu.memory_space<vmem>>, vector<1x8xf32>
    %37 = arith.mulf %26, %35 : vector<1x8xf32>
    %38 = arith.subf %36, %37 : vector<1x8xf32>
    %39 = tpu.concatenate %35, %35, %35, %35 in 1 : vector<1x8xf32>, vector<1x8xf32>, vector<1x8xf32>, vector<1x8xf32> -> vector<1x32xf32>
    %40 = tpu.concatenate %38, %38, %38, %38 in 1 : vector<1x8xf32>, vector<1x8xf32>, vector<1x8xf32>, vector<1x8xf32> -> vector<1x32xf32>
    %41 = vector.broadcast %39 : vector<1x32xf32> to vector<32x32xf32>
    %42 = arith.mulf %5, %41 : vector<32x32xf32>
    %43 = vector.broadcast %40 : vector<1x32xf32> to vector<32x32xf32>
    %44 = arith.addf %42, %43 : vector<32x32xf32>
    %cst_14 = arith.constant 0.000000e+00 : f32
    %45 = vector.broadcast %cst_14 : f32 to vector<32x32xf32>
    %46 = arith.maximumf %44, %45 : vector<32x32xf32>
    %c0_15 = arith.constant 0 : index
    %c0_16 = arith.constant 0 : index
    %47 = vector.load %arg6[%c0_15, %c0_16] : memref<32x32xf32, #tpu.memory_space<vmem>>, vector<32x32xf32>
    tpu.vector_store %arg6[%c0_15, %c0_16], %46 {strides = array<i32>} : memref<32x32xf32, #tpu.memory_space<vmem>>, vector<32x32xf32>,
    return
  }
  func.func @transform_0(%arg0: i32) -> (i32, i32) {
    %c0_i32 = arith.constant 0 : i32
    %c0_i32_0 = arith.constant 0 : i32
    %c0_i32_1 = arith.constant 0 : i32
    return %c0_i32, %c0_i32_0 : i32, i32
  }
  func.func @transform_1(%arg0: i32) -> (i32, i32) {
    %c0_i32 = arith.constant 0 : i32
    %c0_i32_0 = arith.constant 0 : i32
    %c0_i32_1 = arith.constant 0 : i32
    return %c0_i32, %c0_i32_0 : i32, i32
  }
  func.func @transform_2(%arg0: i32) -> (i32, i32) {
    %c0_i32 = arith.constant 0 : i32
    %c0_i32_0 = arith.constant 0 : i32
    %c0_i32_1 = arith.constant 0 : i32
    return %c0_i32, %c0_i32_0 : i32, i32
  }
  func.func @transform_3(%arg0: i32) -> (i32, i32) {
    %c0_i32 = arith.constant 0 : i32
    %c0_i32_0 = arith.constant 0 : i32
    %c0_i32_1 = arith.constant 0 : i32
    return %c0_i32, %c0_i32_0 : i32, i32
  }
  func.func @transform_4(%arg0: i32) -> (i32, i32) {
    %c0_i32 = arith.constant 0 : i32
    %c0_i32_0 = arith.constant 0 : i32
    %c0_i32_1 = arith.constant 0 : i32
    return %c0_i32, %c0_i32_0 : i32, i32
  }
  func.func @transform_5(%arg0: i32) -> (i32, i32) {
    %c0_i32 = arith.constant 0 : i32
    %c0_i32_0 = arith.constant 0 : i32
    %c0_i32_1 = arith.constant 0 : i32
    return %c0_i32, %c0_i32_0 : i32, i32
  }
}

module attributes {stable_mosaic.version = 11 : i64} {
  func.func @_bsa_kernel(%arg0: i32, %arg1: memref<128x216xbf16, #tpu.memory_space<vmem>>, %arg2: memref<216x32xbf16, #tpu.memory_space<vmem>>, %arg3: memref<1x32xf32, #tpu.memory_space<vmem>>, %arg4: memref<32x8xbf16, #tpu.memory_space<vmem>>, %arg5: memref<1x8xf32, #tpu.memory_space<vmem>>, %arg6: memref<128x8xf32, #tpu.memory_space<vmem>>) attributes {dimension_semantics = [#tpu.dimension_semantics<parallel>], iteration_bounds = array<i64: 1>, scalar_prefetch = 0 : i64, scratch_operands = 0 : i64, tpu.core_type = #tpu.core_type<tc>, window_params = [{transform_indices = @transform_0, window_bounds = array<i64: 128, 216>}, {pipeline_mode = #tpu.pipeline_mode<synchronous>, transform_indices = @transform_1, window_bounds = array<i64: 216, 32>}, {pipeline_mode = #tpu.pipeline_mode<synchronous>, transform_indices = @transform_2, window_bounds = array<i64: 1, 32>}, {pipeline_mode = #tpu.pipeline_mode<synchronous>, transform_indices = @transform_3, window_bounds = array<i64: 32, 8>}, {pipeline_mode = #tpu.pipeline_mode<synchronous>, transform_indices = @transform_4, window_bounds = array<i64: 1, 8>}, {transform_indices = @transform_5, window_bounds = array<i64: 128, 8>}]} {
    %c0 = arith.constant 0 : index
    %c0_0 = arith.constant 0 : index
    %0 = vector.load %arg1[%c0, %c0_0] : memref<128x216xbf16, #tpu.memory_space<vmem>>, vector<128x216xbf16>
    %c0_1 = arith.constant 0 : index
    %c0_2 = arith.constant 0 : index
    %1 = vector.load %arg2[%c0_1, %c0_2] : memref<216x32xbf16, #tpu.memory_space<vmem>>, vector<216x32xbf16>
    %cst = arith.constant dense<0.000000e+00> : vector<128x32xf32>
    %2 = tpu.matmul %0, %1, %cst {dimension_numbers = #tpu.dot_dimension_numbers<[1], [0], [0], [1], [0, 0, 1, 1], [], []>} : vector<128x216xbf16>, vector<216x32xbf16>, vector<128x32xf32> -> vector<128x32xf32>
    %c0_3 = arith.constant 0 : index
    %c0_4 = arith.constant 0 : index
    %3 = vector.load %arg3[%c0_3, %c0_4] : memref<1x32xf32, #tpu.memory_space<vmem>>, vector<1x32xf32>
    %4 = vector.broadcast %3 : vector<1x32xf32> to vector<128x32xf32>
    %5 = arith.addf %2, %4 : vector<128x32xf32>
    %6 = arith.truncf %5 : vector<128x32xf32> to vector<128x32xbf16>
    %c0_5 = arith.constant 0 : index
    %c0_6 = arith.constant 0 : index
    %7 = vector.load %arg4[%c0_5, %c0_6] : memref<32x8xbf16, #tpu.memory_space<vmem>>, vector<32x8xbf16>
    %cst_7 = arith.constant dense<0.000000e+00> : vector<128x8xf32>
    %8 = tpu.matmul %6, %7, %cst_7 {dimension_numbers = #tpu.dot_dimension_numbers<[1], [0], [0], [1], [0, 0, 1, 1], [], []>} : vector<128x32xbf16>, vector<32x8xbf16>, vector<128x8xf32> -> vector<128x8xf32>
    %c0_8 = arith.constant 0 : index
    %c0_9 = arith.constant 0 : index
    %9 = vector.load %arg5[%c0_8, %c0_9] : memref<1x8xf32, #tpu.memory_space<vmem>>, vector<1x8xf32>
    %10 = vector.broadcast %9 : vector<1x8xf32> to vector<128x8xf32>
    %11 = arith.addf %8, %10 : vector<128x8xf32>
    %c0_10 = arith.constant 0 : index
    %c0_11 = arith.constant 0 : index
    %12 = vector.load %arg6[%c0_10, %c0_11] : memref<128x8xf32, #tpu.memory_space<vmem>>, vector<128x8xf32>
    tpu.vector_store %arg6[%c0_10, %c0_11], %11 {strides = array<i32>} : memref<128x8xf32, #tpu.memory_space<vmem>>, vector<128x8xf32>,
    return
  }
  func.func @transform_0(%arg0: i32) -> (i32, i32) {
    %c0_i32 = arith.constant 0 : i32
    %c0_i32_0 = arith.constant 0 : i32
    return %arg0, %c0_i32 : i32, i32
  }
  func.func @transform_1(%arg0: i32) -> (i32, i32) {
    %c0_i32 = arith.constant 0 : i32
    %c0_i32_0 = arith.constant 0 : i32
    %c0_i32_1 = arith.constant 0 : i32
    return %c0_i32, %c0_i32_0 : i32, i32
  }
  func.func @transform_2(%arg0: i32) -> (i32, i32) {
    %c0_i32 = arith.constant 0 : i32
    %c0_i32_0 = arith.constant 0 : i32
    %c0_i32_1 = arith.constant 0 : i32
    return %c0_i32, %c0_i32_0 : i32, i32
  }
  func.func @transform_3(%arg0: i32) -> (i32, i32) {
    %c0_i32 = arith.constant 0 : i32
    %c0_i32_0 = arith.constant 0 : i32
    %c0_i32_1 = arith.constant 0 : i32
    return %c0_i32, %c0_i32_0 : i32, i32
  }
  func.func @transform_4(%arg0: i32) -> (i32, i32) {
    %c0_i32 = arith.constant 0 : i32
    %c0_i32_0 = arith.constant 0 : i32
    %c0_i32_1 = arith.constant 0 : i32
    return %c0_i32, %c0_i32_0 : i32, i32
  }
  func.func @transform_5(%arg0: i32) -> (i32, i32) {
    %c0_i32 = arith.constant 0 : i32
    %c0_i32_0 = arith.constant 0 : i32
    return %arg0, %c0_i32 : i32, i32
  }
}

module attributes {stable_mosaic.version = 11 : i64} {
  func.func @_dil_group_kernel(%arg0: i32, %arg1: memref<128x288xbf16, #tpu.memory_space<vmem>>, %arg2: memref<288x32xbf16, #tpu.memory_space<vmem>>, %arg3: memref<1x32xf32, #tpu.memory_space<vmem>>, %arg4: memref<128x32xbf16, #tpu.memory_space<vmem>>) attributes {dimension_semantics = [#tpu.dimension_semantics<parallel>], iteration_bounds = array<i64: 1>, scalar_prefetch = 0 : i64, scratch_operands = 0 : i64, tpu.core_type = #tpu.core_type<tc>, window_params = [{transform_indices = @transform_0, window_bounds = array<i64: 128, 288>}, {pipeline_mode = #tpu.pipeline_mode<synchronous>, transform_indices = @transform_1, window_bounds = array<i64: 288, 32>}, {pipeline_mode = #tpu.pipeline_mode<synchronous>, transform_indices = @transform_2, window_bounds = array<i64: 1, 32>}, {transform_indices = @transform_3, window_bounds = array<i64: 128, 32>}]} {
    %c0 = arith.constant 0 : index
    %c0_0 = arith.constant 0 : index
    %0 = vector.load %arg1[%c0, %c0_0] : memref<128x288xbf16, #tpu.memory_space<vmem>>, vector<128x288xbf16>
    %c0_1 = arith.constant 0 : index
    %c0_2 = arith.constant 0 : index
    %1 = vector.load %arg2[%c0_1, %c0_2] : memref<288x32xbf16, #tpu.memory_space<vmem>>, vector<288x32xbf16>
    %cst = arith.constant dense<0.000000e+00> : vector<128x32xf32>
    %2 = tpu.matmul %0, %1, %cst {dimension_numbers = #tpu.dot_dimension_numbers<[1], [0], [0], [1], [0, 0, 1, 1], [], []>} : vector<128x288xbf16>, vector<288x32xbf16>, vector<128x32xf32> -> vector<128x32xf32>
    %c0_3 = arith.constant 0 : index
    %c0_4 = arith.constant 0 : index
    %3 = vector.load %arg3[%c0_3, %c0_4] : memref<1x32xf32, #tpu.memory_space<vmem>>, vector<1x32xf32>
    %4 = vector.broadcast %3 : vector<1x32xf32> to vector<128x32xf32>
    %5 = arith.addf %2, %4 : vector<128x32xf32>
    %6 = arith.truncf %5 : vector<128x32xf32> to vector<128x32xbf16>
    %c0_5 = arith.constant 0 : index
    %c0_6 = arith.constant 0 : index
    %7 = vector.load %arg4[%c0_5, %c0_6] : memref<128x32xbf16, #tpu.memory_space<vmem>>, vector<128x32xbf16>
    tpu.vector_store %arg4[%c0_5, %c0_6], %6 {strides = array<i32>} : memref<128x32xbf16, #tpu.memory_space<vmem>>, vector<128x32xbf16>,
    return
  }
  func.func @transform_0(%arg0: i32) -> (i32, i32) {
    %c0_i32 = arith.constant 0 : i32
    %c0_i32_0 = arith.constant 0 : i32
    return %arg0, %c0_i32 : i32, i32
  }
  func.func @transform_1(%arg0: i32) -> (i32, i32) {
    %c0_i32 = arith.constant 0 : i32
    %c0_i32_0 = arith.constant 0 : i32
    %c0_i32_1 = arith.constant 0 : i32
    return %c0_i32, %c0_i32_0 : i32, i32
  }
  func.func @transform_2(%arg0: i32) -> (i32, i32) {
    %c0_i32 = arith.constant 0 : i32
    %c0_i32_0 = arith.constant 0 : i32
    %c0_i32_1 = arith.constant 0 : i32
    return %c0_i32, %c0_i32_0 : i32, i32
  }
  func.func @transform_3(%arg0: i32) -> (i32, i32) {
    %c0_i32 = arith.constant 0 : i32
    %c0_i32_0 = arith.constant 0 : i32
    return %arg0, %c0_i32 : i32, i32
  }
}

module attributes {stable_mosaic.version = 11 : i64} {
  func.func @_up_bn_relu_kernel(%arg0: i32, %arg1: memref<128x512xbf16, #tpu.memory_space<vmem>>, %arg2: memref<512x16xbf16, #tpu.memory_space<vmem>>, %arg3: memref<1x16xf32, #tpu.memory_space<vmem>>, %arg4: memref<1x4xf32, #tpu.memory_space<vmem>>, %arg5: memref<1x4xf32, #tpu.memory_space<vmem>>, %arg6: memref<128x16xf32, #tpu.memory_space<vmem>>) attributes {dimension_semantics = [#tpu.dimension_semantics<arbitrary>], iteration_bounds = array<i64: 1>, scalar_prefetch = 0 : i64, scratch_operands = 0 : i64, tpu.core_type = #tpu.core_type<tc>, window_params = [{pipeline_mode = #tpu.pipeline_mode<synchronous>, transform_indices = @transform_0, window_bounds = array<i64: 128, 512>}, {pipeline_mode = #tpu.pipeline_mode<synchronous>, transform_indices = @transform_1, window_bounds = array<i64: 512, 16>}, {pipeline_mode = #tpu.pipeline_mode<synchronous>, transform_indices = @transform_2, window_bounds = array<i64: 1, 16>}, {pipeline_mode = #tpu.pipeline_mode<synchronous>, transform_indices = @transform_3, window_bounds = array<i64: 1, 4>}, {pipeline_mode = #tpu.pipeline_mode<synchronous>, transform_indices = @transform_4, window_bounds = array<i64: 1, 4>}, {pipeline_mode = #tpu.pipeline_mode<synchronous>, transform_indices = @transform_5, window_bounds = array<i64: 128, 16>}]} {
    %c0 = arith.constant 0 : index
    %c0_0 = arith.constant 0 : index
    %0 = vector.load %arg1[%c0, %c0_0] : memref<128x512xbf16, #tpu.memory_space<vmem>>, vector<128x512xbf16>
    %c0_1 = arith.constant 0 : index
    %c0_2 = arith.constant 0 : index
    %1 = vector.load %arg2[%c0_1, %c0_2] : memref<512x16xbf16, #tpu.memory_space<vmem>>, vector<512x16xbf16>
    %cst = arith.constant dense<0.000000e+00> : vector<128x16xf32>
    %2 = tpu.matmul %0, %1, %cst {dimension_numbers = #tpu.dot_dimension_numbers<[1], [0], [0], [1], [0, 0, 1, 1], [], []>} : vector<128x512xbf16>, vector<512x16xbf16>, vector<128x16xf32> -> vector<128x16xf32>
    %c0_3 = arith.constant 0 : index
    %c0_4 = arith.constant 0 : index
    %3 = vector.load %arg3[%c0_3, %c0_4] : memref<1x16xf32, #tpu.memory_space<vmem>>, vector<1x16xf32>
    %4 = vector.broadcast %3 : vector<1x16xf32> to vector<128x16xf32>
    %5 = arith.addf %2, %4 : vector<128x16xf32>
    %cst_5 = arith.constant dense<0.000000e+00> : vector<16xf32>
    %6 = vector.multi_reduction <add>, %5, %cst_5 [0] : vector<128x16xf32> to vector<16xf32>
    %7 = vector.shape_cast %6 : vector<16xf32> to vector<1x16xf32>
    %8 = arith.mulf %5, %5 : vector<128x16xf32>
    %cst_6 = arith.constant dense<0.000000e+00> : vector<16xf32>
    %9 = vector.multi_reduction <add>, %8, %cst_6 [0] : vector<128x16xf32> to vector<16xf32>
    %10 = vector.shape_cast %9 : vector<16xf32> to vector<1x16xf32>
    %11 = vector.extract_strided_slice %7 {offsets = [0, 0], sizes = [1, 4], strides = [1, 1]} : vector<1x16xf32> to vector<1x4xf32>
    %12 = vector.extract_strided_slice %7 {offsets = [0, 4], sizes = [1, 4], strides = [1, 1]} : vector<1x16xf32> to vector<1x4xf32>
    %13 = arith.addf %11, %12 : vector<1x4xf32>
    %14 = vector.extract_strided_slice %7 {offsets = [0, 8], sizes = [1, 4], strides = [1, 1]} : vector<1x16xf32> to vector<1x4xf32>
    %15 = arith.addf %13, %14 : vector<1x4xf32>
    %16 = vector.extract_strided_slice %7 {offsets = [0, 12], sizes = [1, 4], strides = [1, 1]} : vector<1x16xf32> to vector<1x4xf32>
    %17 = arith.addf %15, %16 : vector<1x4xf32>
    %18 = vector.extract_strided_slice %10 {offsets = [0, 0], sizes = [1, 4], strides = [1, 1]} : vector<1x16xf32> to vector<1x4xf32>
    %19 = vector.extract_strided_slice %10 {offsets = [0, 4], sizes = [1, 4], strides = [1, 1]} : vector<1x16xf32> to vector<1x4xf32>
    %20 = arith.addf %18, %19 : vector<1x4xf32>
    %21 = vector.extract_strided_slice %10 {offsets = [0, 8], sizes = [1, 4], strides = [1, 1]} : vector<1x16xf32> to vector<1x4xf32>
    %22 = arith.addf %20, %21 : vector<1x4xf32>
    %23 = vector.extract_strided_slice %10 {offsets = [0, 12], sizes = [1, 4], strides = [1, 1]} : vector<1x16xf32> to vector<1x4xf32>
    %24 = arith.addf %22, %23 : vector<1x4xf32>
    %cst_7 = arith.constant 5.120000e+02 : f32
    %25 = vector.broadcast %cst_7 : f32 to vector<1x4xf32>
    %26 = arith.divf %17, %25 : vector<1x4xf32>
    %cst_8 = arith.constant 5.120000e+02 : f32
    %27 = vector.broadcast %cst_8 : f32 to vector<1x4xf32>
    %28 = arith.divf %24, %27 : vector<1x4xf32>
    %29 = arith.mulf %26, %26 : vector<1x4xf32>
    %30 = arith.subf %28, %29 : vector<1x4xf32>
    %c0_9 = arith.constant 0 : index
    %c0_10 = arith.constant 0 : index
    %31 = vector.load %arg4[%c0_9, %c0_10] : memref<1x4xf32, #tpu.memory_space<vmem>>, vector<1x4xf32>
    %cst_11 = arith.constant 9.99999974E-6 : f32
    %32 = vector.broadcast %cst_11 : f32 to vector<1x4xf32>
    %33 = arith.addf %30, %32 : vector<1x4xf32>
    %34 = math.rsqrt %33 : vector<1x4xf32>
    %35 = arith.mulf %31, %34 : vector<1x4xf32>
    %c0_12 = arith.constant 0 : index
    %c0_13 = arith.constant 0 : index
    %36 = vector.load %arg5[%c0_12, %c0_13] : memref<1x4xf32, #tpu.memory_space<vmem>>, vector<1x4xf32>
    %37 = arith.mulf %26, %35 : vector<1x4xf32>
    %38 = arith.subf %36, %37 : vector<1x4xf32>
    %39 = tpu.concatenate %35, %35, %35, %35 in 1 : vector<1x4xf32>, vector<1x4xf32>, vector<1x4xf32>, vector<1x4xf32> -> vector<1x16xf32>
    %40 = tpu.concatenate %38, %38, %38, %38 in 1 : vector<1x4xf32>, vector<1x4xf32>, vector<1x4xf32>, vector<1x4xf32> -> vector<1x16xf32>
    %41 = vector.broadcast %39 : vector<1x16xf32> to vector<128x16xf32>
    %42 = arith.mulf %5, %41 : vector<128x16xf32>
    %43 = vector.broadcast %40 : vector<1x16xf32> to vector<128x16xf32>
    %44 = arith.addf %42, %43 : vector<128x16xf32>
    %cst_14 = arith.constant 0.000000e+00 : f32
    %45 = vector.broadcast %cst_14 : f32 to vector<128x16xf32>
    %46 = arith.maximumf %44, %45 : vector<128x16xf32>
    %c0_15 = arith.constant 0 : index
    %c0_16 = arith.constant 0 : index
    %47 = vector.load %arg6[%c0_15, %c0_16] : memref<128x16xf32, #tpu.memory_space<vmem>>, vector<128x16xf32>
    tpu.vector_store %arg6[%c0_15, %c0_16], %46 {strides = array<i32>} : memref<128x16xf32, #tpu.memory_space<vmem>>, vector<128x16xf32>,
    return
  }
  func.func @transform_0(%arg0: i32) -> (i32, i32) {
    %c0_i32 = arith.constant 0 : i32
    %c0_i32_0 = arith.constant 0 : i32
    %c0_i32_1 = arith.constant 0 : i32
    return %c0_i32, %c0_i32_0 : i32, i32
  }
  func.func @transform_1(%arg0: i32) -> (i32, i32) {
    %c0_i32 = arith.constant 0 : i32
    %c0_i32_0 = arith.constant 0 : i32
    %c0_i32_1 = arith.constant 0 : i32
    return %c0_i32, %c0_i32_0 : i32, i32
  }
  func.func @transform_2(%arg0: i32) -> (i32, i32) {
    %c0_i32 = arith.constant 0 : i32
    %c0_i32_0 = arith.constant 0 : i32
    %c0_i32_1 = arith.constant 0 : i32
    return %c0_i32, %c0_i32_0 : i32, i32
  }
  func.func @transform_3(%arg0: i32) -> (i32, i32) {
    %c0_i32 = arith.constant 0 : i32
    %c0_i32_0 = arith.constant 0 : i32
    %c0_i32_1 = arith.constant 0 : i32
    return %c0_i32, %c0_i32_0 : i32, i32
  }
  func.func @transform_4(%arg0: i32) -> (i32, i32) {
    %c0_i32 = arith.constant 0 : i32
    %c0_i32_0 = arith.constant 0 : i32
    %c0_i32_1 = arith.constant 0 : i32
    return %c0_i32, %c0_i32_0 : i32, i32
  }
  func.func @transform_5(%arg0: i32) -> (i32, i32) {
    %c0_i32 = arith.constant 0 : i32
    %c0_i32_0 = arith.constant 0 : i32
    %c0_i32_1 = arith.constant 0 : i32
    return %c0_i32, %c0_i32_0 : i32, i32
  }
}

module attributes {stable_mosaic.version = 11 : i64} {
  func.func @_bsa_kernel(%arg0: i32, %arg1: memref<256x144xbf16, #tpu.memory_space<vmem>>, %arg2: memref<144x16xbf16, #tpu.memory_space<vmem>>, %arg3: memref<1x16xf32, #tpu.memory_space<vmem>>, %arg4: memref<16x4xbf16, #tpu.memory_space<vmem>>, %arg5: memref<1x4xf32, #tpu.memory_space<vmem>>, %arg6: memref<256x4xf32, #tpu.memory_space<vmem>>) attributes {dimension_semantics = [#tpu.dimension_semantics<parallel>], iteration_bounds = array<i64: 2>, scalar_prefetch = 0 : i64, scratch_operands = 0 : i64, tpu.core_type = #tpu.core_type<tc>, window_params = [{transform_indices = @transform_0, window_bounds = array<i64: 256, 144>}, {pipeline_mode = #tpu.pipeline_mode<synchronous>, transform_indices = @transform_1, window_bounds = array<i64: 144, 16>}, {pipeline_mode = #tpu.pipeline_mode<synchronous>, transform_indices = @transform_2, window_bounds = array<i64: 1, 16>}, {pipeline_mode = #tpu.pipeline_mode<synchronous>, transform_indices = @transform_3, window_bounds = array<i64: 16, 4>}, {pipeline_mode = #tpu.pipeline_mode<synchronous>, transform_indices = @transform_4, window_bounds = array<i64: 1, 4>}, {transform_indices = @transform_5, window_bounds = array<i64: 256, 4>}]} {
    %c0 = arith.constant 0 : index
    %c0_0 = arith.constant 0 : index
    %0 = vector.load %arg1[%c0, %c0_0] : memref<256x144xbf16, #tpu.memory_space<vmem>>, vector<256x144xbf16>
    %c0_1 = arith.constant 0 : index
    %c0_2 = arith.constant 0 : index
    %1 = vector.load %arg2[%c0_1, %c0_2] : memref<144x16xbf16, #tpu.memory_space<vmem>>, vector<144x16xbf16>
    %cst = arith.constant dense<0.000000e+00> : vector<256x16xf32>
    %2 = tpu.matmul %0, %1, %cst {dimension_numbers = #tpu.dot_dimension_numbers<[1], [0], [0], [1], [0, 0, 1, 1], [], []>} : vector<256x144xbf16>, vector<144x16xbf16>, vector<256x16xf32> -> vector<256x16xf32>
    %c0_3 = arith.constant 0 : index
    %c0_4 = arith.constant 0 : index
    %3 = vector.load %arg3[%c0_3, %c0_4] : memref<1x16xf32, #tpu.memory_space<vmem>>, vector<1x16xf32>
    %4 = vector.broadcast %3 : vector<1x16xf32> to vector<256x16xf32>
    %5 = arith.addf %2, %4 : vector<256x16xf32>
    %6 = arith.truncf %5 : vector<256x16xf32> to vector<256x16xbf16>
    %c0_5 = arith.constant 0 : index
    %c0_6 = arith.constant 0 : index
    %7 = vector.load %arg4[%c0_5, %c0_6] : memref<16x4xbf16, #tpu.memory_space<vmem>>, vector<16x4xbf16>
    %cst_7 = arith.constant dense<0.000000e+00> : vector<256x4xf32>
    %8 = tpu.matmul %6, %7, %cst_7 {dimension_numbers = #tpu.dot_dimension_numbers<[1], [0], [0], [1], [0, 0, 1, 1], [], []>} : vector<256x16xbf16>, vector<16x4xbf16>, vector<256x4xf32> -> vector<256x4xf32>
    %c0_8 = arith.constant 0 : index
    %c0_9 = arith.constant 0 : index
    %9 = vector.load %arg5[%c0_8, %c0_9] : memref<1x4xf32, #tpu.memory_space<vmem>>, vector<1x4xf32>
    %10 = vector.broadcast %9 : vector<1x4xf32> to vector<256x4xf32>
    %11 = arith.addf %8, %10 : vector<256x4xf32>
    %c0_10 = arith.constant 0 : index
    %c0_11 = arith.constant 0 : index
    %12 = vector.load %arg6[%c0_10, %c0_11] : memref<256x4xf32, #tpu.memory_space<vmem>>, vector<256x4xf32>
    tpu.vector_store %arg6[%c0_10, %c0_11], %11 {strides = array<i32>} : memref<256x4xf32, #tpu.memory_space<vmem>>, vector<256x4xf32>,
    return
  }
  func.func @transform_0(%arg0: i32) -> (i32, i32) {
    %c0_i32 = arith.constant 0 : i32
    %c0_i32_0 = arith.constant 0 : i32
    return %arg0, %c0_i32 : i32, i32
  }
  func.func @transform_1(%arg0: i32) -> (i32, i32) {
    %c0_i32 = arith.constant 0 : i32
    %c0_i32_0 = arith.constant 0 : i32
    %c0_i32_1 = arith.constant 0 : i32
    return %c0_i32, %c0_i32_0 : i32, i32
  }
  func.func @transform_2(%arg0: i32) -> (i32, i32) {
    %c0_i32 = arith.constant 0 : i32
    %c0_i32_0 = arith.constant 0 : i32
    %c0_i32_1 = arith.constant 0 : i32
    return %c0_i32, %c0_i32_0 : i32, i32
  }
  func.func @transform_3(%arg0: i32) -> (i32, i32) {
    %c0_i32 = arith.constant 0 : i32
    %c0_i32_0 = arith.constant 0 : i32
    %c0_i32_1 = arith.constant 0 : i32
    return %c0_i32, %c0_i32_0 : i32, i32
  }
  func.func @transform_4(%arg0: i32) -> (i32, i32) {
    %c0_i32 = arith.constant 0 : i32
    %c0_i32_0 = arith.constant 0 : i32
    %c0_i32_1 = arith.constant 0 : i32
    return %c0_i32, %c0_i32_0 : i32, i32
  }
  func.func @transform_5(%arg0: i32) -> (i32, i32) {
    %c0_i32 = arith.constant 0 : i32
    %c0_i32_0 = arith.constant 0 : i32
    return %arg0, %c0_i32 : i32, i32
  }
}

module attributes {stable_mosaic.version = 11 : i64} {
  func.func @_dil_group_kernel(%arg0: i32, %arg1: memref<256x144xbf16, #tpu.memory_space<vmem>>, %arg2: memref<144x16xbf16, #tpu.memory_space<vmem>>, %arg3: memref<1x16xf32, #tpu.memory_space<vmem>>, %arg4: memref<256x16xbf16, #tpu.memory_space<vmem>>) attributes {dimension_semantics = [#tpu.dimension_semantics<parallel>], iteration_bounds = array<i64: 2>, scalar_prefetch = 0 : i64, scratch_operands = 0 : i64, tpu.core_type = #tpu.core_type<tc>, window_params = [{transform_indices = @transform_0, window_bounds = array<i64: 256, 144>}, {pipeline_mode = #tpu.pipeline_mode<synchronous>, transform_indices = @transform_1, window_bounds = array<i64: 144, 16>}, {pipeline_mode = #tpu.pipeline_mode<synchronous>, transform_indices = @transform_2, window_bounds = array<i64: 1, 16>}, {transform_indices = @transform_3, window_bounds = array<i64: 256, 16>}]} {
    %c0 = arith.constant 0 : index
    %c0_0 = arith.constant 0 : index
    %0 = vector.load %arg1[%c0, %c0_0] : memref<256x144xbf16, #tpu.memory_space<vmem>>, vector<256x144xbf16>
    %c0_1 = arith.constant 0 : index
    %c0_2 = arith.constant 0 : index
    %1 = vector.load %arg2[%c0_1, %c0_2] : memref<144x16xbf16, #tpu.memory_space<vmem>>, vector<144x16xbf16>
    %cst = arith.constant dense<0.000000e+00> : vector<256x16xf32>
    %2 = tpu.matmul %0, %1, %cst {dimension_numbers = #tpu.dot_dimension_numbers<[1], [0], [0], [1], [0, 0, 1, 1], [], []>} : vector<256x144xbf16>, vector<144x16xbf16>, vector<256x16xf32> -> vector<256x16xf32>
    %c0_3 = arith.constant 0 : index
    %c0_4 = arith.constant 0 : index
    %3 = vector.load %arg3[%c0_3, %c0_4] : memref<1x16xf32, #tpu.memory_space<vmem>>, vector<1x16xf32>
    %4 = vector.broadcast %3 : vector<1x16xf32> to vector<256x16xf32>
    %5 = arith.addf %2, %4 : vector<256x16xf32>
    %6 = arith.truncf %5 : vector<256x16xf32> to vector<256x16xbf16>
    %c0_5 = arith.constant 0 : index
    %c0_6 = arith.constant 0 : index
    %7 = vector.load %arg4[%c0_5, %c0_6] : memref<256x16xbf16, #tpu.memory_space<vmem>>, vector<256x16xbf16>
    tpu.vector_store %arg4[%c0_5, %c0_6], %6 {strides = array<i32>} : memref<256x16xbf16, #tpu.memory_space<vmem>>, vector<256x16xbf16>,
    return
  }
  func.func @transform_0(%arg0: i32) -> (i32, i32) {
    %c0_i32 = arith.constant 0 : i32
    %c0_i32_0 = arith.constant 0 : i32
    return %arg0, %c0_i32 : i32, i32
  }
  func.func @transform_1(%arg0: i32) -> (i32, i32) {
    %c0_i32 = arith.constant 0 : i32
    %c0_i32_0 = arith.constant 0 : i32
    %c0_i32_1 = arith.constant 0 : i32
    return %c0_i32, %c0_i32_0 : i32, i32
  }
  func.func @transform_2(%arg0: i32) -> (i32, i32) {
    %c0_i32 = arith.constant 0 : i32
    %c0_i32_0 = arith.constant 0 : i32
    %c0_i32_1 = arith.constant 0 : i32
    return %c0_i32, %c0_i32_0 : i32, i32
  }
  func.func @transform_3(%arg0: i32) -> (i32, i32) {
    %c0_i32 = arith.constant 0 : i32
    %c0_i32_0 = arith.constant 0 : i32
    return %arg0, %c0_i32 : i32, i32
  }
}

module attributes {stable_mosaic.version = 11 : i64} {
  func.func @_up_phase_kernel(%arg0: i32, %arg1: memref<256x256xbf16, #tpu.memory_space<vmem>>, %arg2: memref<256x16xbf16, #tpu.memory_space<vmem>>, %arg3: memref<1x16xf32, #tpu.memory_space<vmem>>, %arg4: memref<256x16xf32, #tpu.memory_space<vmem>>, %arg5: memref<1x2x16xf32, #tpu.memory_space<vmem>>) attributes {dimension_semantics = [#tpu.dimension_semantics<parallel>], iteration_bounds = array<i64: 2>, scalar_prefetch = 0 : i64, scratch_operands = 0 : i64, tpu.core_type = #tpu.core_type<tc>, window_params = [{transform_indices = @transform_0, window_bounds = array<i64: 256, 256>}, {pipeline_mode = #tpu.pipeline_mode<synchronous>, transform_indices = @transform_1, window_bounds = array<i64: 256, 16>}, {pipeline_mode = #tpu.pipeline_mode<synchronous>, transform_indices = @transform_2, window_bounds = array<i64: 1, 16>}, {transform_indices = @transform_3, window_bounds = array<i64: 256, 16>}, {transform_indices = @transform_4, window_bounds = array<i64: 1, 2, 16>}]} {
    %c0 = arith.constant 0 : index
    %c0_0 = arith.constant 0 : index
    %0 = vector.load %arg1[%c0, %c0_0] : memref<256x256xbf16, #tpu.memory_space<vmem>>, vector<256x256xbf16>
    %c0_1 = arith.constant 0 : index
    %c0_2 = arith.constant 0 : index
    %1 = vector.load %arg2[%c0_1, %c0_2] : memref<256x16xbf16, #tpu.memory_space<vmem>>, vector<256x16xbf16>
    %cst = arith.constant dense<0.000000e+00> : vector<256x16xf32>
    %2 = tpu.matmul %0, %1, %cst {dimension_numbers = #tpu.dot_dimension_numbers<[1], [0], [0], [1], [0, 0, 1, 1], [], []>} : vector<256x256xbf16>, vector<256x16xbf16>, vector<256x16xf32> -> vector<256x16xf32>
    %c0_3 = arith.constant 0 : index
    %c0_4 = arith.constant 0 : index
    %3 = vector.load %arg3[%c0_3, %c0_4] : memref<1x16xf32, #tpu.memory_space<vmem>>, vector<1x16xf32>
    %4 = vector.broadcast %3 : vector<1x16xf32> to vector<256x16xf32>
    %5 = arith.addf %2, %4 : vector<256x16xf32>
    %c0_5 = arith.constant 0 : index
    %c0_6 = arith.constant 0 : index
    %6 = vector.load %arg4[%c0_5, %c0_6] : memref<256x16xf32, #tpu.memory_space<vmem>>, vector<256x16xf32>
    tpu.vector_store %arg4[%c0_5, %c0_6], %5 {strides = array<i32>} : memref<256x16xf32, #tpu.memory_space<vmem>>, vector<256x16xf32>,
    %cst_7 = arith.constant dense<0.000000e+00> : vector<16xf32>
    %7 = vector.multi_reduction <add>, %5, %cst_7 [0] : vector<256x16xf32> to vector<16xf32>
    %8 = vector.shape_cast %7 : vector<16xf32> to vector<1x16xf32>
    %c0_8 = arith.constant 0 : index
    %c0_9 = arith.constant 0 : index
    %c0_10 = arith.constant 0 : index
    %9 = vector.load %arg5[%c0_8, %c0_9, %c0_10] : memref<1x2x16xf32, #tpu.memory_space<vmem>>, vector<1x1x16xf32>
    %10 = vector.shape_cast %9 : vector<1x1x16xf32> to vector<1x16xf32>
    %11 = vector.shape_cast %8 : vector<1x16xf32> to vector<1x1x16xf32>
    tpu.vector_store %arg5[%c0_8, %c0_9, %c0_10], %11 {strides = array<i32>} : memref<1x2x16xf32, #tpu.memory_space<vmem>>, vector<1x1x16xf32>,
    %12 = arith.mulf %5, %5 : vector<256x16xf32>
    %cst_11 = arith.constant dense<0.000000e+00> : vector<16xf32>
    %13 = vector.multi_reduction <add>, %12, %cst_11 [0] : vector<256x16xf32> to vector<16xf32>
    %14 = vector.shape_cast %13 : vector<16xf32> to vector<1x16xf32>
    %c0_12 = arith.constant 0 : index
    %c1 = arith.constant 1 : index
    %c0_13 = arith.constant 0 : index
    %15 = vector.load %arg5[%c0_12, %c1, %c0_13] : memref<1x2x16xf32, #tpu.memory_space<vmem>>, vector<1x1x16xf32>
    %16 = vector.shape_cast %15 : vector<1x1x16xf32> to vector<1x16xf32>
    %17 = vector.shape_cast %14 : vector<1x16xf32> to vector<1x1x16xf32>
    tpu.vector_store %arg5[%c0_12, %c1, %c0_13], %17 {strides = array<i32>} : memref<1x2x16xf32, #tpu.memory_space<vmem>>, vector<1x1x16xf32>,
    return
  }
  func.func @transform_0(%arg0: i32) -> (i32, i32) {
    %c0_i32 = arith.constant 0 : i32
    %c0_i32_0 = arith.constant 0 : i32
    return %arg0, %c0_i32 : i32, i32
  }
  func.func @transform_1(%arg0: i32) -> (i32, i32) {
    %c0_i32 = arith.constant 0 : i32
    %c0_i32_0 = arith.constant 0 : i32
    %c0_i32_1 = arith.constant 0 : i32
    return %c0_i32, %c0_i32_0 : i32, i32
  }
  func.func @transform_2(%arg0: i32) -> (i32, i32) {
    %c0_i32 = arith.constant 0 : i32
    %c0_i32_0 = arith.constant 0 : i32
    %c0_i32_1 = arith.constant 0 : i32
    return %c0_i32, %c0_i32_0 : i32, i32
  }
  func.func @transform_3(%arg0: i32) -> (i32, i32) {
    %c0_i32 = arith.constant 0 : i32
    %c0_i32_0 = arith.constant 0 : i32
    return %arg0, %c0_i32 : i32, i32
  }
  func.func @transform_4(%arg0: i32) -> (i32, i32, i32) {
    %c0_i32 = arith.constant 0 : i32
    %c0_i32_0 = arith.constant 0 : i32
    %c0_i32_1 = arith.constant 0 : i32
    return %arg0, %c0_i32, %c0_i32_0 : i32, i32, i32
  }
}

module attributes {stable_mosaic.version = 11 : i64} {
  func.func @_bn_relu_kernel(%arg0: i32, %arg1: memref<256x16xf32, #tpu.memory_space<vmem>>, %arg2: memref<1x16xf32, #tpu.memory_space<vmem>>, %arg3: memref<1x16xf32, #tpu.memory_space<vmem>>, %arg4: memref<256x16xf32, #tpu.memory_space<vmem>>) attributes {dimension_semantics = [#tpu.dimension_semantics<parallel>], iteration_bounds = array<i64: 2>, scalar_prefetch = 0 : i64, scratch_operands = 0 : i64, tpu.core_type = #tpu.core_type<tc>, window_params = [{transform_indices = @transform_0, window_bounds = array<i64: 256, 16>}, {pipeline_mode = #tpu.pipeline_mode<synchronous>, transform_indices = @transform_1, window_bounds = array<i64: 1, 16>}, {pipeline_mode = #tpu.pipeline_mode<synchronous>, transform_indices = @transform_2, window_bounds = array<i64: 1, 16>}, {transform_indices = @transform_3, window_bounds = array<i64: 256, 16>}]} {
    %c0 = arith.constant 0 : index
    %c0_0 = arith.constant 0 : index
    %0 = vector.load %arg1[%c0, %c0_0] : memref<256x16xf32, #tpu.memory_space<vmem>>, vector<256x16xf32>
    %c0_1 = arith.constant 0 : index
    %c0_2 = arith.constant 0 : index
    %1 = vector.load %arg2[%c0_1, %c0_2] : memref<1x16xf32, #tpu.memory_space<vmem>>, vector<1x16xf32>
    %2 = vector.broadcast %1 : vector<1x16xf32> to vector<256x16xf32>
    %3 = arith.mulf %0, %2 : vector<256x16xf32>
    %c0_3 = arith.constant 0 : index
    %c0_4 = arith.constant 0 : index
    %4 = vector.load %arg3[%c0_3, %c0_4] : memref<1x16xf32, #tpu.memory_space<vmem>>, vector<1x16xf32>
    %5 = vector.broadcast %4 : vector<1x16xf32> to vector<256x16xf32>
    %6 = arith.addf %3, %5 : vector<256x16xf32>
    %cst = arith.constant 0.000000e+00 : f32
    %7 = vector.broadcast %cst : f32 to vector<256x16xf32>
    %8 = arith.maximumf %6, %7 : vector<256x16xf32>
    %c0_5 = arith.constant 0 : index
    %c0_6 = arith.constant 0 : index
    %9 = vector.load %arg4[%c0_5, %c0_6] : memref<256x16xf32, #tpu.memory_space<vmem>>, vector<256x16xf32>
    tpu.vector_store %arg4[%c0_5, %c0_6], %8 {strides = array<i32>} : memref<256x16xf32, #tpu.memory_space<vmem>>, vector<256x16xf32>,
    return
  }
  func.func @transform_0(%arg0: i32) -> (i32, i32) {
    %c0_i32 = arith.constant 0 : i32
    %c0_i32_0 = arith.constant 0 : i32
    return %arg0, %c0_i32 : i32, i32
  }
  func.func @transform_1(%arg0: i32) -> (i32, i32) {
    %c0_i32 = arith.constant 0 : i32
    %c0_i32_0 = arith.constant 0 : i32
    %c0_i32_1 = arith.constant 0 : i32
    return %c0_i32, %c0_i32_0 : i32, i32
  }
  func.func @transform_2(%arg0: i32) -> (i32, i32) {
    %c0_i32 = arith.constant 0 : i32
    %c0_i32_0 = arith.constant 0 : i32
    %c0_i32_1 = arith.constant 0 : i32
    return %c0_i32, %c0_i32_0 : i32, i32
  }
  func.func @transform_3(%arg0: i32) -> (i32, i32) {
    %c0_i32 = arith.constant 0 : i32
    %c0_i32_0 = arith.constant 0 : i32
    return %arg0, %c0_i32 : i32, i32
  }
}

</mosaic_0001>

<llo_original>
// kernel: gd_decoder_forward.13
$region0: #{gd_decoder_forward.13}
  #allocation0 [shape = 'u32[]', space=smem, size = 0x4, offset = 0x4, fixed_abs, tag = 'smem constant byte address 0x4 - core index']
  #allocation1 [shape = 'u32[144,128]{1,0:T(1,128)}', space=vmem, size = 0x12000, scoped, tag = 'internal scratch']
  %s0 = inlined_call_operand.vmem [shape: bf16[8,648], index: 0, kind: input, shape index: {}]
  %s1 = inlined_call_operand.vmem [shape: bf16[648,128], index: 1, kind: input, shape index: {}]
  %s2 = inlined_call_operand.vmem [shape: f32[1,128], index: 2, kind: input, shape index: {}]
  %s3 = inlined_call_operand.vmem [shape: bf16[128,32], index: 3, kind: input, shape index: {}]
  %s4 = inlined_call_operand.vmem [shape: f32[1,32], index: 4, kind: input, shape index: {}]
  %s5 = inlined_call_operand.vmem [shape: f32[8,32], index: 5, kind: output, shape index: {}]
  %s6 = sld [smem:[#allocation0]]
  $region30: #{gd_decoder_forward.13} parent=0
    _
  %s8 = ssub.s32 1, %s6
  %s9 = scalar_select 0, %s8, %s6
  // Predicated region
  $region2: #{gd_decoder_forward.13} parent=0 // pred_check
    _
  $region3: #{gd_decoder_forward.13} parent=0 // pred_check_branch
    %11 = sbr.rel (0) target = $region5
  $region4: #{gd_decoder_forward.13} parent=0 // pred_region
    _
  $region5: #{gd_decoder_forward.13} parent=0 // pred_fallthru
    _
  // Predicated region
  $region6: #{gd_decoder_forward.13} parent=0 // pred_check
    _
  $region7: #{gd_decoder_forward.13} parent=0 // pred_check_branch
    %13 = sbr.rel (0) target = $region9
  $region8: #{gd_decoder_forward.13} parent=0 // pred_region
    _
  $region9: #{gd_decoder_forward.13} parent=0 // pred_fallthru
    _
  // Predicated region
  $region10: #{gd_decoder_forward.13} parent=0 // pred_check
    _
  $region11: #{gd_decoder_forward.13} parent=0 // pred_check_branch
    %15 = sbr.rel (0) target = $region13
  $region12: #{gd_decoder_forward.13} parent=0 // pred_region
    _
  $region13: #{gd_decoder_forward.13} parent=0 // pred_fallthru
    _
  // Predicated region
  $region14: #{gd_decoder_forward.13} parent=0 // pred_check
    _
  $region15: #{gd_decoder_forward.13} parent=0 // pred_check_branch
    %17 = sbr.rel (0) target = $region17
  $region16: #{gd_decoder_forward.13} parent=0 // pred_region
    _
  $region17: #{gd_decoder_forward.13} parent=0 // pred_fallthru
    _
  // Predicated region
  $region18: #{gd_decoder_forward.13} parent=0 // pred_check
    _
  $region19: #{gd_decoder_forward.13} parent=0 // pred_check_branch
    %19 = sbr.rel (0) target = $region21
  $region20: #{gd_decoder_forward.13} parent=0 // pred_region
    _
  $region21: #{gd_decoder_forward.13} parent=0 // pred_fallthru
    _
  %v21 = vld [vmem:[%s0] sm:$0xff]
  %v22 = vld [vmem:[%s0 + $0x8] sm:$0xff]
  %v23 = vld [vmem:[%s0 + $0x10] sm:$0xff]
  %v24 = vld [vmem:[%s1] sm:$0xf]
  %v25 = vld [vmem:[%s1 + $0x4] sm:$0xf]
  %v26 = vld [vmem:[%s1 + $0x8] sm:$0xf]
  %v27 = vld [vmem:[%s1 + $0xc] sm:$0xf]
  %v28 = vld [vmem:[%s1 + $0x10] sm:$0xf]
  %v29 = vld [vmem:[%s1 + $0x14] sm:$0xf]
  %v30 = vld [vmem:[%s1 + $0x18] sm:$0xf]
  %v31 = vld [vmem:[%s1 + $0x1c] sm:$0xf]
  %v32 = vld [vmem:[%s1 + $0x20] sm:$0xf]
  %v33 = vld [vmem:[%s1 + $0x24] sm:$0xf]
  %v34 = vld [vmem:[%s1 + $0x28] sm:$0xf]
  %v35 = vld [vmem:[%s1 + $0x2c] sm:$0xf]
  %v36 = vld [vmem:[%s1 + $0x30] sm:$0xf]
  %v37 = vld [vmem:[%s1 + $0x34] sm:$0xf]
  %v38 = vld [vmem:[%s1 + $0x38] sm:$0xf]
  %v39 = vld [vmem:[%s1 + $0x3c] sm:$0xf]
  %v40 = vld [vmem:[%s1 + $0x40] sm:$0xf]
  %v41 = vld [vmem:[%s1 + $0x44] sm:$0xf]
  %v42 = vld [vmem:[%s1 + $0x48] sm:$0xf]
  %v43 = vld [vmem:[%s1 + $0x4c] sm:$0xf]
  %v44 = vld [vmem:[%s1 + $0x50] sm:$0xf]
  %v45 = vld [vmem:[%s1 + $0x54] sm:$0xf]
  %v46 = vld [vmem:[%s1 + $0x58] sm:$0xf]
  %v47 = vld [vmem:[%s1 + $0x5c] sm:$0xf]
  %v48 = vld [vmem:[%s1 + $0x60] sm:$0xf]
  %v49 = vld [vmem:[%s1 + $0x64] sm:$0xf]
  %v50 = vld [vmem:[%s1 + $0x68] sm:$0xf]
  %v51 = vld [vmem:[%s1 + $0x6c] sm:$0xf]
  %v52 = vld [vmem:[%s1 + $0x70] sm:$0xf]
  %v53 = vld [vmem:[%s1 + $0x74] sm:$0xf]
  %v54 = vld [vmem:[%s1 + $0x78] sm:$0xf]
  %v55 = vld [vmem:[%s1 + $0x7c] sm:$0xf]
  %v56 = vld [vmem:[%s1 + $0x80] sm:$0xf]
  %v57 = vld [vmem:[%s1 + $0x84] sm:$0xf]
  %v58 = vld [vmem:[%s1 + $0x88] sm:$0xf]
  %v59 = vld [vmem:[%s1 + $0x8c] sm:$0xf]
  %v60 = vld [vmem:[%s1 + $0x90] sm:$0xf]
  %v61 = vld [vmem:[%s1 + $0x94] sm:$0xf]
  %v62 = vld [vmem:[%s1 + $0x98] sm:$0xf]
  %v63 = vld [vmem:[%s1 + $0x9c] sm:$0xf]
  %v64 = vld [vmem:[%s1 + $0xa0] sm:$0xf]
  %v65 = vld [vmem:[%s1 + $0xa4] sm:$0xf]
  %v66 = vld [vmem:[%s1 + $0xa8] sm:$0xf]
  %v67 = vld [vmem:[%s1 + $0xac] sm:$0xf]
  %v68 = vld [vmem:[%s1 + $0xb0] sm:$0xf]
  %v69 = vld [vmem:[%s1 + $0xb4] sm:$0xf]
  %v70 = vld [vmem:[%s1 + $0xb8] sm:$0xf]
  %v71 = vld [vmem:[%s1 + $0xbc] sm:$0xf]
  %v72 = vld [vmem:[%s1 + $0xc0] sm:$0xf]
  %v73 = vld [vmem:[%s1 + $0xc4] sm:$0xf]
  %v74 = vld [vmem:[%s1 + $0xc8] sm:$0xf]
  %v75 = vld [vmem:[%s1 + $0xcc] sm:$0xf]
  %v76 = vld [vmem:[%s1 + $0xd0] sm:$0xf]
  %v77 = vld [vmem:[%s1 + $0xd4] sm:$0xf]
  %v78 = vld [vmem:[%s1 + $0xd8] sm:$0xf]
  %v79 = vld [vmem:[%s1 + $0xdc] sm:$0xf]
  %v80 = vld [vmem:[%s1 + $0xe0] sm:$0xf]
  %v81 = vld [vmem:[%s1 + $0xe4] sm:$0xf]
  %v82 = vld [vmem:[%s1 + $0xe8] sm:$0xf]
  %v83 = vld [vmem:[%s1 + $0xec] sm:$0xf]
  %v84 = vld [vmem:[%s1 + $0xf0] sm:$0xf]
  %v85 = vld [vmem:[%s1 + $0xf4] sm:$0xf]
  %v86 = vld [vmem:[%s1 + $0xf8] sm:$0xf]
  %v87 = vld [vmem:[%s1 + $0xfc] sm:$0xf]
  %v88 = vld [vmem:[%s1 + $0x100] sm:$0xf]
  %v89 = vld [vmem:[%s1 + $0x104] sm:$0xf]
  %v90 = vld [vmem:[%s1 + $0x108] sm:$0xf]
  %v91 = vld [vmem:[%s1 + $0x10c] sm:$0xf]
  %v92 = vld [vmem:[%s1 + $0x110] sm:$0xf]
  %v93 = vld [vmem:[%s1 + $0x114] sm:$0xf]
  %v94 = vld [vmem:[%s1 + $0x118] sm:$0xf]
  %v95 = vld [vmem:[%s1 + $0x11c] sm:$0xf]
  %v96 = vld [vmem:[%s1 + $0x120] sm:$0xf]
  %v97 = vld [vmem:[%s1 + $0x124] sm:$0xf]
  %v98 = vld [vmem:[%s1 + $0x128] sm:$0xf]
  %v99 = vld [vmem:[%s1 + $0x12c] sm:$0xf]
  %v100 = vld [vmem:[%s1 + $0x130] sm:$0xf]
  %v101 = vld [vmem:[%s1 + $0x134] sm:$0xf]
  %v102 = vld [vmem:[%s1 + $0x138] sm:$0xf]
  %v103 = vld [vmem:[%s1 + $0x13c] sm:$0xf]
  %v104 = vld [vmem:[%s1 + $0x140] sm:$0xf]
  %v105 = vld [vmem:[%s2] sm:$0x1]
  %v107 = vlaneseq
  %v108 = vshrl.u32 %v107, 7
  %v109 = vsub.s32 0, %v108
  %v110 = vrot.slane %v105, %v109
  %v115 = vunpack.c.l.b16 %v21
  %v116 = vunpack.c.h.b16 %v21
  %v117 = vunpack.c.l.b16 %v22
  %v118 = vunpack.c.h.b16 %v22
  %v119 = vunpack.c.l.b16 %v23
  %v120 = vunpack.c.h.b16 %v23
  %v121 = vpack.c.b16 %v115, %v115
  %v122 = vpack.c.b16 %v116, %v116
  %v123 = vpack.c.b16 %v117, %v117
  %v124 = vpack.c.b16 %v118, %v118
  %v125 = vpack.c.b16 %v119, %v119
  %v126 = vpack.c.b16 %v120, %v120
  %v213 = vunpack.c.l.b16 %v24
  %v214 = vunpack.c.l.b16 %v25
  %v215 = vunpack.c.l.b16 %v26
  %v216 = vunpack.c.l.b16 %v27
  %v217 = vunpack.c.l.b16 %v28
  %v218 = vunpack.c.l.b16 %v29
  %v219 = vunpack.c.l.b16 %v30
  %v220 = vunpack.c.l.b16 %v31
  %v221 = vunpack.c.l.b16 %v32
  %v222 = vunpack.c.l.b16 %v33
  %v223 = vunpack.c.l.b16 %v34
  %v224 = vunpack.c.l.b16 %v35
  %v225 = vunpack.c.l.b16 %v36
  %v226 = vunpack.c.l.b16 %v37
  %v227 = vunpack.c.l.b16 %v38
  %v228 = vunpack.c.l.b16 %v39
  %v229 = vunpack.c.l.b16 %v40
  %v230 = vunpack.c.l.b16 %v41
  %v231 = vunpack.c.l.b16 %v42
  %v232 = vunpack.c.l.b16 %v43
  %v233 = vunpack.c.l.b16 %v44
  %v234 = vunpack.c.l.b16 %v45
  %v235 = vunpack.c.l.b16 %v46
  %v236 = vunpack.c.l.b16 %v47
  %v237 = vunpack.c.l.b16 %v48
  %v238 = vunpack.c.l.b16 %v49
  %v239 = vunpack.c.l.b16 %v50
  %v240 = vunpack.c.l.b16 %v51
  %v241 = vunpack.c.l.b16 %v52
  %v242 = vunpack.c.l.b16 %v53
  %v243 = vunpack.c.l.b16 %v54
  %v244 = vunpack.c.l.b16 %v55
  %v245 = vunpack.c.l.b16 %v56
  %v246 = vunpack.c.l.b16 %v57
  %v247 = vunpack.c.l.b16 %v58
  %v248 = vunpack.c.l.b16 %v59
  %v249 = vunpack.c.l.b16 %v60
  %v250 = vunpack.c.l.b16 %v61
  %v251 = vunpack.c.l.b16 %v62
  %v252 = vunpack.c.l.b16 %v63
  %v253 = vunpack.c.l.b16 %v64
  %v254 = vunpack.c.l.b16 %v65
  %v255 = vunpack.c.l.b16 %v66
  %v256 = vunpack.c.l.b16 %v67
  %v257 = vunpack.c.l.b16 %v68
  %v258 = vunpack.c.l.b16 %v69
  %v259 = vunpack.c.l.b16 %v70
  %v260 = vunpack.c.l.b16 %v71
  %v261 = vunpack.c.l.b16 %v72
  %v262 = vunpack.c.l.b16 %v73
  %v263 = vunpack.c.l.b16 %v74
  %v264 = vunpack.c.l.b16 %v75
  %v265 = vunpack.c.l.b16 %v76
  %v266 = vunpack.c.l.b16 %v77
  %v267 = vunpack.c.l.b16 %v78
  %v268 = vunpack.c.l.b16 %v79
  %v269 = vunpack.c.l.b16 %v80
  %v270 = vunpack.c.l.b16 %v81
  %v271 = vunpack.c.l.b16 %v82
  %v272 = vunpack.c.l.b16 %v83
  %v273 = vunpack.c.l.b16 %v84
  %v274 = vunpack.c.l.b16 %v85
  %v275 = vunpack.c.l.b16 %v86
  %v276 = vunpack.c.l.b16 %v87
  %v277 = vunpack.c.l.b16 %v88
  %v278 = vunpack.c.l.b16 %v89
  %v279 = vunpack.c.l.b16 %v90
  %v280 = vunpack.c.l.b16 %v91
  %v281 = vunpack.c.l.b16 %v92
  %v282 = vunpack.c.l.b16 %v93
  %v283 = vunpack.c.l.b16 %v94
  %v284 = vunpack.c.l.b16 %v95
  %v285 = vunpack.c.l.b16 %v96
  %v286 = vunpack.c.l.b16 %v97
  %v287 = vunpack.c.l.b16 %v98
  %v288 = vunpack.c.l.b16 %v99
  %v289 = vunpack.c.l.b16 %v100
  %v290 = vunpack.c.l.b16 %v101
  %v291 = vunpack.c.l.b16 %v102
  %v292 = vunpack.c.l.b16 %v103
  %v293 = vunpack.c.l.b16 %v104
  %v294 = vpack.c.b16 %v214, %v213
  %v295 = vpack.c.b16 %v216, %v215
  %v296 = vpack.c.b16 %v218, %v217
  %v297 = vpack.c.b16 %v220, %v219
  %v298 = vpack.c.b16 %v222, %v221
  %v299 = vpack.c.b16 %v224, %v223
  %v300 = vpack.c.b16 %v226, %v225
  %v301 = vpack.c.b16 %v228, %v227
  %v302 = vpack.c.b16 %v230, %v229
  %v303 = vpack.c.b16 %v232, %v231
  %v304 = vpack.c.b16 %v234, %v233
  %v305 = vpack.c.b16 %v236, %v235
  %v306 = vpack.c.b16 %v238, %v237
  %v307 = vpack.c.b16 %v240, %v239
  %v308 = vpack.c.b16 %v242, %v241
  %v309 = vpack.c.b16 %v244, %v243
  %v310 = vpack.c.b16 %v246, %v245
  %v311 = vpack.c.b16 %v248, %v247
  %v312 = vpack.c.b16 %v250, %v249
  %v313 = vpack.c.b16 %v252, %v251
  %v314 = vpack.c.b16 %v254, %v253
  %v315 = vpack.c.b16 %v256, %v255
  %v316 = vpack.c.b16 %v258, %v257
  %v317 = vpack.c.b16 %v260, %v259
  %v318 = vpack.c.b16 %v262, %v261
  %v319 = vpack.c.b16 %v264, %v263
  %v320 = vpack.c.b16 %v266, %v265
  %v321 = vpack.c.b16 %v268, %v267
  %v322 = vpack.c.b16 %v270, %v269
  %v323 = vpack.c.b16 %v272, %v271
  %v324 = vpack.c.b16 %v274, %v273
  %v325 = vpack.c.b16 %v276, %v275
  %v326 = vpack.c.b16 %v278, %v277
  %v327 = vpack.c.b16 %v280, %v279
  %v328 = vpack.c.b16 %v282, %v281
  %v329 = vpack.c.b16 %v284, %v283
  %v330 = vpack.c.b16 %v286, %v285
  %v331 = vpack.c.b16 %v288, %v287
  %v332 = vpack.c.b16 %v290, %v289
  %v333 = vpack.c.b16 %v292, %v291
  %v334 = vpack.c.b16 %v293, %v293
  %vm375 = vcmask 64512
  %v377 = vsel %vm375, %v126, 0
  %vm379 = vcmask 1043456
  %v381 = vsel %vm379, %v334, 0
  %383 = vmatprep.subr.bf16.mxu0 0
  %384 = vmatpush1.bf16.msra.mxu0 %v294
  %385 = vmatprep.subr.bf16.mxu0 0
  %386 = vmatpush1.bf16.msra.mxu0 %v295
  %387 = vmatprep.subr.bf16.mxu0 0
  %388 = vmatpush1.bf16.msra.mxu0 %v296
  %389 = vmatprep.subr.bf16.mxu0 0
  %390 = vmatpush1.bf16.msra.mxu0 %v297
  %391 = vmatprep.subr.bf16.mxu0 0
  %392 = vmatpush1.bf16.msra.mxu0 %v298
  %393 = vmatprep.subr.bf16.mxu0 0
  %394 = vmatpush1.bf16.msra.mxu0 %v299
  %395 = vmatprep.subr.bf16.mxu0 0
  %396 = vmatpush1.bf16.msra.mxu0 %v300
  %397 = vmatprep.subr.bf16.mxu0 0
  %398 = vmatpush1.bf16.msra.mxu0 %v301
  %399 = vmatprep.subr.bf16.mxu0 0
  %400 = vmatpush1.bf16.msra.mxu0 %v302
  %401 = vmatprep.subr.bf16.mxu0 0
  %402 = vmatpush1.bf16.msra.mxu0 %v303
  %403 = vmatprep.subr.bf16.mxu0 0
  %404 = vmatpush1.bf16.msra.mxu0 %v304
  %405 = vmatprep.subr.bf16.mxu0 0
  %406 = vmatpush1.bf16.msra.mxu0 %v305
  %407 = vmatprep.subr.bf16.mxu0 0
  %408 = vmatpush1.bf16.msra.mxu0 %v306
  %409 = vmatprep.subr.bf16.mxu0 0
  %410 = vmatpush1.bf16.msra.mxu0 %v307
  %411 = vmatprep.subr.bf16.mxu0 0
  %412 = vmatpush1.bf16.msra.mxu0 %v308
  %413 = vmatprep.subr.bf16.mxu0 0
  %414 = vmatpush1.bf16.msra.mxu0 %v309
  %415 = vmatprep.mubr.bf16.mxu0 %v122
  %416 = vmatmul.mubr.bf16.gmra.mrb[0].mxu0 %v121
  %v417 = vpop.f32.mrb[0].mxu0
  %v418 = vadd.f32 %v110, %v417
  %v419 = vpop.f32.mrb[0].mxu0
  %v420 = vpop.f32.mrb[0].mxu0
  %v421 = vpop.f32.mrb[0].mxu0
  %422 = vdwg.mxu0
  %423 = vmatprep.subr.bf16.mxu0 0
  %424 = vmatpush1.bf16.msra.mxu0 %v310
  %425 = vmatprep.subr.bf16.mxu0 0
  %426 = vmatpush1.bf16.msra.mxu0 %v311
  %427 = vmatprep.subr.bf16.mxu0 0
  %428 = vmatpush1.bf16.msra.mxu0 %v312
  %429 = vmatprep.subr.bf16.mxu0 0
  %430 = vmatpush1.bf16.msra.mxu0 %v313
  %431 = vmatprep.subr.bf16.mxu0 0
  %432 = vmatpush1.bf16.msra.mxu0 %v314
  %433 = vmatprep.subr.bf16.mxu0 0
  %434 = vmatpush1.bf16.msra.mxu0 %v315
  %435 = vmatprep.subr.bf16.mxu0 0
  %436 = vmatpush1.bf16.msra.mxu0 %v316
  %437 = vmatprep.subr.bf16.mxu0 0
  %438 = vmatpush1.bf16.msra.mxu0 %v317
  %439 = vmatprep.subr.bf16.mxu0 0
  %440 = vmatpush1.bf16.msra.mxu0 %v318
  %441 = vmatprep.subr.bf16.mxu0 0
  %442 = vmatpush1.bf16.msra.mxu0 %v319
  %443 = vmatprep.subr.bf16.mxu0 0
  %444 = vmatpush1.bf16.msra.mxu0 %v320
  %445 = vmatprep.subr.bf16.mxu0 0
  %446 = vmatpush1.bf16.msra.mxu0 %v321
  %447 = vmatprep.subr.bf16.mxu0 0
  %448 = vmatpush1.bf16.msra.mxu0 %v322
  %449 = vmatprep.subr.bf16.mxu0 0
  %450 = vmatpush1.bf16.msra.mxu0 %v323
  %451 = vmatprep.subr.bf16.mxu0 0
  %452 = vmatpush1.bf16.msra.mxu0 %v324
  %453 = vmatprep.subr.bf16.mxu0 0
  %454 = vmatpush1.bf16.msra.mxu0 %v325
  %455 = vmatprep.mubr.bf16.mxu0 %v124
  %456 = vmatmul.mubr.bf16.gmra.mrb[0].mxu0 %v123
  %v457 = vpop.f32.mrb[0].mxu0
  %v458 = vadd.f32 %v418, %v457
  %v459 = vpop.f32.mrb[0].mxu0
  %v460 = vpop.f32.mrb[0].mxu0
  %v461 = vpop.f32.mrb[0].mxu0
  %462 = vdwg.mxu0
  %463 = vmatprep.subr.bf16.mxu0 0
  %464 = vmatpush1.bf16.msra.mxu0 %v326
  %465 = vmatprep.subr.bf16.mxu0 0
  %466 = vmatpush1.bf16.msra.mxu0 %v327
  %467 = vmatprep.subr.bf16.mxu0 0
  %468 = vmatpush1.bf16.msra.mxu0 %v328
  %469 = vmatprep.subr.bf16.mxu0 0
  %470 = vmatpush1.bf16.msra.mxu0 %v329
  %471 = vmatprep.subr.bf16.mxu0 0
  %472 = vmatpush1.bf16.msra.mxu0 %v330
  %473 = vmatprep.subr.bf16.mxu0 0
  %474 = vmatpush1.bf16.msra.mxu0 %v331
  %475 = vmatprep.subr.bf16.mxu0 0
  %476 = vmatpush1.bf16.msra.mxu0 %v332
  %477 = vmatprep.subr.bf16.mxu0 0
  %478 = vmatpush1.bf16.msra.mxu0 %v333
  %479 = vmatprep.subr.bf16.mxu0 0
  %480 = vmatpush1.bf16.msra.mxu0 %v381
  %481 = vmatprep.subr.bf16.mxu0 0
  %482 = vmatpush1.bf16.msra.mxu0 0
  %483 = vmatprep.subr.bf16.mxu0 0
  %484 = vmatpush1.bf16.msra.mxu0 0
  %485 = vmatprep.subr.bf16.mxu0 0
  %486 = vmatpush1.bf16.msra.mxu0 0
  %487 = vmatprep.subr.bf16.mxu0 0
  %488 = vmatpush1.bf16.msra.mxu0 0
  %489 = vmatprep.subr.bf16.mxu0 0
  %490 = vmatpush1.bf16.msra.mxu0 0
  %491 = vmatprep.subr.bf16.mxu0 0
  %492 = vmatpush1.bf16.msra.mxu0 0
  %493 = vmatprep.subr.bf16.mxu0 0
  %494 = vmatpush1.bf16.msra.mxu0 0
  %495 = vmatprep.mubr.bf16.mxu0 %v377
  %496 = vmatmul.mubr.bf16.gmra.mrb[0].mxu0 %v125
  %v497 = vpop.f32.mrb[0].mxu0
  %v498 = vadd.f32 %v458, %v497
  %v499 = vpop.f32.mrb[0].mxu0
  %v500 = vpop.f32.mrb[0].mxu0
  %v501 = vpop.f32.mrb[0].mxu0
  %502 = vdwg.mxu0
  %v503 = vpack.c.bf16 %v498, %v498
  %v504 = vld [vmem:[%s3] sm:$0xf]
  %v505 = vld [vmem:[%s3 + $0x4] sm:$0xf]
  %v506 = vld [vmem:[%s3 + $0x8] sm:$0xf]
  %v507 = vld [vmem:[%s3 + $0xc] sm:$0xf]
  %v508 = vld [vmem:[%s3 + $0x10] sm:$0xf]
  %v509 = vld [vmem:[%s3 + $0x14] sm:$0xf]
  %v510 = vld [vmem:[%s3 + $0x18] sm:$0xf]
  %v511 = vld [vmem:[%s3 + $0x1c] sm:$0xf]
  %v512 = vld [vmem:[%s3 + $0x20] sm:$0xf]
  %v513 = vld [vmem:[%s3 + $0x24] sm:$0xf]
  %v514 = vld [vmem:[%s3 + $0x28] sm:$0xf]
  %v515 = vld [vmem:[%s3 + $0x2c] sm:$0xf]
  %v516 = vld [vmem:[%s3 + $0x30] sm:$0xf]
  %v517 = vld [vmem:[%s3 + $0x34] sm:$0xf]
  %v518 = vld [vmem:[%s3 + $0x38] sm:$0xf]
  %v519 = vld [vmem:[%s3 + $0x3c] sm:$0xf]
  %v520 = vld [vmem:[%s4] sm:$0x1]
  %v522 = vlaneseq
  %v523 = vshrl.u32 %v522, 7
  %v524 = vsub.s32 0, %v523
  %v525 = vrot.slane %v520, %v524
  %v543 = vunpack.c.l.b16 %v504
  %v544 = vunpack.c.l.b16 %v505
  %v545 = vunpack.c.l.b16 %v506
  %v546 = vunpack.c.l.b16 %v507
  %v547 = vunpack.c.l.b16 %v508
  %v548 = vunpack.c.l.b16 %v509
  %v549 = vunpack.c.l.b16 %v510
  %v550 = vunpack.c.l.b16 %v511
  %v551 = vunpack.c.l.b16 %v512
  %v552 = vunpack.c.l.b16 %v513
  %v553 = vunpack.c.l.b16 %v514
  %v554 = vunpack.c.l.b16 %v515
  %v555 = vunpack.c.l.b16 %v516
  %v556 = vunpack.c.l.b16 %v517
  %v557 = vunpack.c.l.b16 %v518
  %v558 = vunpack.c.l.b16 %v519
  %v559 = vpack.c.b16 %v544, %v543
  %v560 = vpack.c.b16 %v546, %v545
  %v561 = vpack.c.b16 %v548, %v547
  %v562 = vpack.c.b16 %v550, %v549
  %v563 = vpack.c.b16 %v552, %v551
  %v564 = vpack.c.b16 %v554, %v553
  %v565 = vpack.c.b16 %v556, %v555
  %v566 = vpack.c.b16 %v558, %v557
  %575 = vmatprep.subr.bf16.mxu0 0
  %576 = vmatpush1.bf16.msra.mxu0 %v559
  %577 = vmatprep.subr.bf16.mxu0 0
  %578 = vmatpush1.bf16.msra.mxu0 %v560
  %579 = vmatprep.subr.bf16.mxu0 0
  %580 = vmatpush1.bf16.msra.mxu0 %v561
  %581 = vmatprep.subr.bf16.mxu0 0
  %582 = vmatpush1.bf16.msra.mxu0 %v562
  %583 = vmatprep.subr.bf16.mxu0 0
  %584 = vmatpush1.bf16.msra.mxu0 %v563
  %585 = vmatprep.subr.bf16.mxu0 0
  %586 = vmatpush1.bf16.msra.mxu0 %v564
  %587 = vmatprep.subr.bf16.mxu0 0
  %588 = vmatpush1.bf16.msra.mxu0 %v565
  %589 = vmatprep.subr.bf16.mxu0 0
  %590 = vmatpush1.bf16.msra.mxu0 %v566
  %591 = vmatprep.subr.bf16.mxu0 0
  %592 = vmatpush1.bf16.msra.mxu0 0
  %593 = vmatprep.subr.bf16.mxu0 0
  %594 = vmatpush1.bf16.msra.mxu0 0
  %595 = vmatprep.subr.bf16.mxu0 0
  %596 = vmatpush1.bf16.msra.mxu0 0
  %597 = vmatprep.subr.bf16.mxu0 0
  %598 = vmatpush1.bf16.msra.mxu0 0
  %599 = vmatprep.subr.bf16.mxu0 0
  %600 = vmatpush1.bf16.msra.mxu0 0
  %601 = vmatprep.subr.bf16.mxu0 0
  %602 = vmatpush1.bf16.msra.mxu0 0
  %603 = vmatprep.subr.bf16.mxu0 0
  %604 = vmatpush1.bf16.msra.mxu0 0
  %605 = vmatprep.subr.bf16.mxu0 0
  %606 = vmatpush1.bf16.msra.mxu0 0
  %607 = vmatprep.mubr.bf16.mxu0 0
  %608 = vmatmul.mubr.bf16.gmra.mrb[0].mxu0 %v503
  %v609 = vpop.f32.mrb[0].mxu0
  %v610 = vadd.f32 %v525, %v609
  %v611 = vpop.f32.mrb[0].mxu0
  %v612 = vpop.f32.mrb[0].mxu0
  %v613 = vpop.f32.mrb[0].mxu0
  %614 = vdwg.mxu0
  %vm615 = vcmask 261120
  %616 = vst.msk [vmem:[%s5] sm:$0xff] %vm615, %v610
  // Predicated region
  $region22: #{gd_decoder_forward.13} parent=0 // pred_check
    _
  $region23: #{gd_decoder_forward.13} parent=0 // pred_check_branch
    %618 = sbr.rel (0) target = $region25
  $region24: #{gd_decoder_forward.13} parent=0 // pred_region
    _
  $region25: #{gd_decoder_forward.13} parent=0 // pred_fallthru
    _
  // Predicated region
  $region26: #{gd_decoder_forward.13} parent=0 // pred_check
    _
  $region27: #{gd_decoder_forward.13} parent=0 // pred_check_branch
    %620 = sbr.rel (0) target = $region29
  $region28: #{gd_decoder_forward.13} parent=0 // pred_region
    _
  $region29: #{gd_decoder_forward.13} parent=0 // pred_fallthru
    _

// kernel: gd_decoder_forward.14
$region0: #{gd_decoder_forward.14}
  #allocation0 [shape = 'u32[]', space=smem, size = 0x4, offset = 0x4, fixed_abs, tag = 'smem constant byte address 0x4 - core index']
  #allocation1 [shape = 'u32[144,128]{1,0:T(1,128)}', space=vmem, size = 0x12000, scoped, tag = 'internal scratch']
  %s0 = inlined_call_operand.vmem [shape: bf16[8,1152], index: 0, kind: input, shape index: {}]
  %s1 = inlined_call_operand.vmem [shape: bf16[1152,128], index: 1, kind: input, shape index: {}]
  %s2 = inlined_call_operand.vmem [shape: f32[1,128], index: 2, kind: input, shape index: {}]
  %s3 = inlined_call_operand.vmem [shape: bf16[8,128], index: 3, kind: output, shape index: {}]
  %s4 = sld [smem:[#allocation0]]
  $region22: #{gd_decoder_forward.14} parent=0
    _
  %s6 = ssub.s32 1, %s4
  %s7 = scalar_select 0, %s6, %s4
  // Predicated region
  $region2: #{gd_decoder_forward.14} parent=0 // pred_check
    _
  $region3: #{gd_decoder_forward.14} parent=0 // pred_check_branch
    %9 = sbr.rel (0) target = $region5
  $region4: #{gd_decoder_forward.14} parent=0 // pred_region
    _
  $region5: #{gd_decoder_forward.14} parent=0 // pred_fallthru
    _
  // Predicated region
  $region6: #{gd_decoder_forward.14} parent=0 // pred_check
    _
  $region7: #{gd_decoder_forward.14} parent=0 // pred_check_branch
    %11 = sbr.rel (0) target = $region9
  $region8: #{gd_decoder_forward.14} parent=0 // pred_region
    _
  $region9: #{gd_decoder_forward.14} parent=0 // pred_fallthru
    _
  // Predicated region
  $region10: #{gd_decoder_forward.14} parent=0 // pred_check
    _
  $region11: #{gd_decoder_forward.14} parent=0 // pred_check_branch
    %13 = sbr.rel (0) target = $region13
  $region12: #{gd_decoder_forward.14} parent=0 // pred_region
    _
  $region13: #{gd_decoder_forward.14} parent=0 // pred_fallthru
    _
  %v15 = vld [vmem:[%s0] sm:$0xff]
  %v16 = vld [vmem:[%s0 + $0x8] sm:$0xff]
  %v17 = vld [vmem:[%s0 + $0x10] sm:$0xff]
  %v18 = vld [vmem:[%s0 + $0x18] sm:$0xff]
  %v19 = vld [vmem:[%s0 + $0x20] sm:$0xf]
  %v20 = vld [vmem:[%s1] sm:$0xf]
  %v21 = vld [vmem:[%s1 + $0x4] sm:$0xf]
  %v22 = vld [vmem:[%s1 + $0x8] sm:$0xf]
  %v23 = vld [vmem:[%s1 + $0xc] sm:$0xf]
  %v24 = vld [vmem:[%s1 + $0x10] sm:$0xf]
  %v25 = vld [vmem:[%s1 + $0x14] sm:$0xf]
  %v26 = vld [vmem:[%s1 + $0x18] sm:$0xf]
  %v27 = vld [vmem:[%s1 + $0x1c] sm:$0xf]
  %v28 = vld [vmem:[%s1 + $0x20] sm:$0xf]
  %v29 = vld [vmem:[%s1 + $0x24] sm:$0xf]
  %v30 = vld [vmem:[%s1 + $0x28] sm:$0xf]
  %v31 = vld [vmem:[%s1 + $0x2c] sm:$0xf]
  %v32 = vld [vmem:[%s1 + $0x30] sm:$0xf]
  %v33 = vld [vmem:[%s1 + $0x34] sm:$0xf]
  %v34 = vld [vmem:[%s1 + $0x38] sm:$0xf]
  %v35 = vld [vmem:[%s1 + $0x3c] sm:$0xf]
  %v36 = vld [vmem:[%s1 + $0x40] sm:$0xf]
  %v37 = vld [vmem:[%s1 + $0x44] sm:$0xf]
  %v38 = vld [vmem:[%s1 + $0x48] sm:$0xf]
  %v39 = vld [vmem:[%s1 + $0x4c] sm:$0xf]
  %v40 = vld [vmem:[%s1 + $0x50] sm:$0xf]
  %v41 = vld [vmem:[%s1 + $0x54] sm:$0xf]
  %v42 = vld [vmem:[%s1 + $0x58] sm:$0xf]
  %v43 = vld [vmem:[%s1 + $0x5c] sm:$0xf]
  %v44 = vld [vmem:[%s1 + $0x60] sm:$0xf]
  %v45 = vld [vmem:[%s1 + $0x64] sm:$0xf]
  %v46 = vld [vmem:[%s1 + $0x68] sm:$0xf]
  %v47 = vld [vmem:[%s1 + $0x6c] sm:$0xf]
  %v48 = vld [vmem:[%s1 + $0x70] sm:$0xf]
  %v49 = vld [vmem:[%s1 + $0x74] sm:$0xf]
  %v50 = vld [vmem:[%s1 + $0x78] sm:$0xf]
  %v51 = vld [vmem:[%s1 + $0x7c] sm:$0xf]
  %v52 = vld [vmem:[%s1 + $0x80] sm:$0xf]
  %v53 = vld [vmem:[%s1 + $0x84] sm:$0xf]
  %v54 = vld [vmem:[%s1 + $0x88] sm:$0xf]
  %v55 = vld [vmem:[%s1 + $0x8c] sm:$0xf]
  %v56 = vld [vmem:[%s1 + $0x90] sm:$0xf]
  %v57 = vld [vmem:[%s1 + $0x94] sm:$0xf]
  %v58 = vld [vmem:[%s1 + $0x98] sm:$0xf]
  %v59 = vld [vmem:[%s1 + $0x9c] sm:$0xf]
  %v60 = vld [vmem:[%s1 + $0xa0] sm:$0xf]
  %v61 = vld [vmem:[%s1 + $0xa4] sm:$0xf]
  %v62 = vld [vmem:[%s1 + $0xa8] sm:$0xf]
  %v63 = vld [vmem:[%s1 + $0xac] sm:$0xf]
  %v64 = vld [vmem:[%s1 + $0xb0] sm:$0xf]
  %v65 = vld [vmem:[%s1 + $0xb4] sm:$0xf]
  %v66 = vld [vmem:[%s1 + $0xb8] sm:$0xf]
  %v67 = vld [vmem:[%s1 + $0xbc] sm:$0xf]
  %v68 = vld [vmem:[%s1 + $0xc0] sm:$0xf]
  %v69 = vld [vmem:[%s1 + $0xc4] sm:$0xf]
  %v70 = vld [vmem:[%s1 + $0xc8] sm:$0xf]
  %v71 = vld [vmem:[%s1 + $0xcc] sm:$0xf]
  %v72 = vld [vmem:[%s1 + $0xd0] sm:$0xf]
  %v73 = vld [vmem:[%s1 + $0xd4] sm:$0xf]
  %v74 = vld [vmem:[%s1 + $0xd8] sm:$0xf]
  %v75 = vld [vmem:[%s1 + $0xdc] sm:$0xf]
  %v76 = vld [vmem:[%s1 + $0xe0] sm:$0xf]
  %v77 = vld [vmem:[%s1 + $0xe4] sm:$0xf]
  %v78 = vld [vmem:[%s1 + $0xe8] sm:$0xf]
  %v79 = vld [vmem:[%s1 + $0xec] sm:$0xf]
  %v80 = vld [vmem:[%s1 + $0xf0] sm:$0xf]
  %v81 = vld [vmem:[%s1 + $0xf4] sm:$0xf]
  %v82 = vld [vmem:[%s1 + $0xf8] sm:$0xf]
  %v83 = vld [vmem:[%s1 + $0xfc] sm:$0xf]
  %v84 = vld [vmem:[%s1 + $0x100] sm:$0xf]
  %v85 = vld [vmem:[%s1 + $0x104] sm:$0xf]
  %v86 = vld [vmem:[%s1 + $0x108] sm:$0xf]
  %v87 = vld [vmem:[%s1 + $0x10c] sm:$0xf]
  %v88 = vld [vmem:[%s1 + $0x110] sm:$0xf]
  %v89 = vld [vmem:[%s1 + $0x114] sm:$0xf]
  %v90 = vld [vmem:[%s1 + $0x118] sm:$0xf]
  %v91 = vld [vmem:[%s1 + $0x11c] sm:$0xf]
  %v92 = vld [vmem:[%s1 + $0x120] sm:$0xf]
  %v93 = vld [vmem:[%s1 + $0x124] sm:$0xf]
  %v94 = vld [vmem:[%s1 + $0x128] sm:$0xf]
  %v95 = vld [vmem:[%s1 + $0x12c] sm:$0xf]
  %v96 = vld [vmem:[%s1 + $0x130] sm:$0xf]
  %v97 = vld [vmem:[%s1 + $0x134] sm:$0xf]
  %v98 = vld [vmem:[%s1 + $0x138] sm:$0xf]
  %v99 = vld [vmem:[%s1 + $0x13c] sm:$0xf]
  %v100 = vld [vmem:[%s1 + $0x140] sm:$0xf]
  %v101 = vld [vmem:[%s1 + $0x144] sm:$0xf]
  %v102 = vld [vmem:[%s1 + $0x148] sm:$0xf]
  %v103 = vld [vmem:[%s1 + $0x14c] sm:$0xf]
  %v104 = vld [vmem:[%s1 + $0x150] sm:$0xf]
  %v105 = vld [vmem:[%s1 + $0x154] sm:$0xf]
  %v106 = vld [vmem:[%s1 + $0x158] sm:$0xf]
  %v107 = vld [vmem:[%s1 + $0x15c] sm:$0xf]
  %v108 = vld [vmem:[%s1 + $0x160] sm:$0xf]
  %v109 = vld [vmem:[%s1 + $0x164] sm:$0xf]
  %v110 = vld [vmem:[%s1 + $0x168] sm:$0xf]
  %v111 = vld [vmem:[%s1 + $0x16c] sm:$0xf]
  %v112 = vld [vmem:[%s1 + $0x170] sm:$0xf]
  %v113 = vld [vmem:[%s1 + $0x174] sm:$0xf]
  %v114 = vld [vmem:[%s1 + $0x178] sm:$0xf]
  %v115 = vld [vmem:[%s1 + $0x17c] sm:$0xf]
  %v116 = vld [vmem:[%s1 + $0x180] sm:$0xf]
  %v117 = vld [vmem:[%s1 + $0x184] sm:$0xf]
  %v118 = vld [vmem:[%s1 + $0x188] sm:$0xf]
  %v119 = vld [vmem:[%s1 + $0x18c] sm:$0xf]
  %v120 = vld [vmem:[%s1 + $0x190] sm:$0xf]
  %v121 = vld [vmem:[%s1 + $0x194] sm:$0xf]
  %v122 = vld [vmem:[%s1 + $0x198] sm:$0xf]
  %v123 = vld [vmem:[%s1 + $0x19c] sm:$0xf]
  %v124 = vld [vmem:[%s1 + $0x1a0] sm:$0xf]
  %v125 = vld [vmem:[%s1 + $0x1a4] sm:$0xf]
  %v126 = vld [vmem:[%s1 + $0x1a8] sm:$0xf]
  %v127 = vld [vmem:[%s1 + $0x1ac] sm:$0xf]
  %v128 = vld [vmem:[%s1 + $0x1b0] sm:$0xf]
  %v129 = vld [vmem:[%s1 + $0x1b4] sm:$0xf]
  %v130 = vld [vmem:[%s1 + $0x1b8] sm:$0xf]
  %v131 = vld [vmem:[%s1 + $0x1bc] sm:$0xf]
  %v132 = vld [vmem:[%s1 + $0x1c0] sm:$0xf]
  %v133 = vld [vmem:[%s1 + $0x1c4] sm:$0xf]
  %v134 = vld [vmem:[%s1 + $0x1c8] sm:$0xf]
  %v135 = vld [vmem:[%s1 + $0x1cc] sm:$0xf]
  %v136 = vld [vmem:[%s1 + $0x1d0] sm:$0xf]
  %v137 = vld [vmem:[%s1 + $0x1d4] sm:$0xf]
  %v138 = vld [vmem:[%s1 + $0x1d8] sm:$0xf]
  %v139 = vld [vmem:[%s1 + $0x1dc] sm:$0xf]
  %v140 = vld [vmem:[%s1 + $0x1e0] sm:$0xf]
  %v141 = vld [vmem:[%s1 + $0x1e4] sm:$0xf]
  %v142 = vld [vmem:[%s1 + $0x1e8] sm:$0xf]
  %v143 = vld [vmem:[%s1 + $0x1ec] sm:$0xf]
  %v144 = vld [vmem:[%s1 + $0x1f0] sm:$0xf]
  %v145 = vld [vmem:[%s1 + $0x1f4] sm:$0xf]
  %v146 = vld [vmem:[%s1 + $0x1f8] sm:$0xf]
  %v147 = vld [vmem:[%s1 + $0x1fc] sm:$0xf]
  %v148 = vld [vmem:[%s1 + $0x200] sm:$0xf]
  %v149 = vld [vmem:[%s1 + $0x204] sm:$0xf]
  %v150 = vld [vmem:[%s1 + $0x208] sm:$0xf]
  %v151 = vld [vmem:[%s1 + $0x20c] sm:$0xf]
  %v152 = vld [vmem:[%s1 + $0x210] sm:$0xf]
  %v153 = vld [vmem:[%s1 + $0x214] sm:$0xf]
  %v154 = vld [vmem:[%s1 + $0x218] sm:$0xf]
  %v155 = vld [vmem:[%s1 + $0x21c] sm:$0xf]
  %v156 = vld [vmem:[%s1 + $0x220] sm:$0xf]
  %v157 = vld [vmem:[%s1 + $0x224] sm:$0xf]
  %v158 = vld [vmem:[%s1 + $0x228] sm:$0xf]
  %v159 = vld [vmem:[%s1 + $0x22c] sm:$0xf]
  %v160 = vld [vmem:[%s1 + $0x230] sm:$0xf]
  %v161 = vld [vmem:[%s1 + $0x234] sm:$0xf]
  %v162 = vld [vmem:[%s1 + $0x238] sm:$0xf]
  %v163 = vld [vmem:[%s1 + $0x23c] sm:$0xf]
  %v164 = vld [vmem:[%s2] sm:$0x1]
  %v166 = vlaneseq
  %v167 = vshrl.u32 %v166, 7
  %v168 = vsub.s32 0, %v167
  %v169 = vrot.slane %v164, %v168
  %v176 = vunpack.c.l.b16 %v15
  %v177 = vunpack.c.h.b16 %v15
  %v178 = vunpack.c.l.b16 %v16
  %v179 = vunpack.c.h.b16 %v16
  %v180 = vunpack.c.l.b16 %v17
  %v181 = vunpack.c.h.b16 %v17
  %v182 = vunpack.c.l.b16 %v18
  %v183 = vunpack.c.h.b16 %v18
  %v184 = vunpack.c.l.b16 %v19
  %v185 = vpack.c.b16 %v176, %v176
  %v186 = vpack.c.b16 %v177, %v177
  %v187 = vpack.c.b16 %v178, %v178
  %v188 = vpack.c.b16 %v179, %v179
  %v189 = vpack.c.b16 %v180, %v180
  %v190 = vpack.c.b16 %v181, %v181
  %v191 = vpack.c.b16 %v182, %v182
  %v192 = vpack.c.b16 %v183, %v183
  %v193 = vpack.c.b16 %v184, %v184
  %v347 = vunpack.c.l.b16 %v20
  %v348 = vunpack.c.l.b16 %v21
  %v349 = vunpack.c.l.b16 %v22
  %v350 = vunpack.c.l.b16 %v23
  %v351 = vunpack.c.l.b16 %v24
  %v352 = vunpack.c.l.b16 %v25
  %v353 = vunpack.c.l.b16 %v26
  %v354 = vunpack.c.l.b16 %v27
  %v355 = vunpack.c.l.b16 %v28
  %v356 = vunpack.c.l.b16 %v29
  %v357 = vunpack.c.l.b16 %v30
  %v358 = vunpack.c.l.b16 %v31
  %v359 = vunpack.c.l.b16 %v32
  %v360 = vunpack.c.l.b16 %v33
  %v361 = vunpack.c.l.b16 %v34
  %v362 = vunpack.c.l.b16 %v35
  %v363 = vunpack.c.l.b16 %v36
  %v364 = vunpack.c.l.b16 %v37
  %v365 = vunpack.c.l.b16 %v38
  %v366 = vunpack.c.l.b16 %v39
  %v367 = vunpack.c.l.b16 %v40
  %v368 = vunpack.c.l.b16 %v41
  %v369 = vunpack.c.l.b16 %v42
  %v370 = vunpack.c.l.b16 %v43
  %v371 = vunpack.c.l.b16 %v44
  %v372 = vunpack.c.l.b16 %v45
  %v373 = vunpack.c.l.b16 %v46
  %v374 = vunpack.c.l.b16 %v47
  %v375 = vunpack.c.l.b16 %v48
  %v376 = vunpack.c.l.b16 %v49
  %v377 = vunpack.c.l.b16 %v50
  %v378 = vunpack.c.l.b16 %v51
  %v379 = vunpack.c.l.b16 %v52
  %v380 = vunpack.c.l.b16 %v53
  %v381 = vunpack.c.l.b16 %v54
  %v382 = vunpack.c.l.b16 %v55
  %v383 = vunpack.c.l.b16 %v56
  %v384 = vunpack.c.l.b16 %v57
  %v385 = vunpack.c.l.b16 %v58
  %v386 = vunpack.c.l.b16 %v59
  %v387 = vunpack.c.l.b16 %v60
  %v388 = vunpack.c.l.b16 %v61
  %v389 = vunpack.c.l.b16 %v62
  %v390 = vunpack.c.l.b16 %v63
  %v391 = vunpack.c.l.b16 %v64
  %v392 = vunpack.c.l.b16 %v65
  %v393 = vunpack.c.l.b16 %v66
  %v394 = vunpack.c.l.b16 %v67
  %v395 = vunpack.c.l.b16 %v68
  %v396 = vunpack.c.l.b16 %v69
  %v397 = vunpack.c.l.b16 %v70
  %v398 = vunpack.c.l.b16 %v71
  %v399 = vunpack.c.l.b16 %v72
  %v400 = vunpack.c.l.b16 %v73
  %v401 = vunpack.c.l.b16 %v74
  %v402 = vunpack.c.l.b16 %v75
  %v403 = vunpack.c.l.b16 %v76
  %v404 = vunpack.c.l.b16 %v77
  %v405 = vunpack.c.l.b16 %v78
  %v406 = vunpack.c.l.b16 %v79
  %v407 = vunpack.c.l.b16 %v80
  %v408 = vunpack.c.l.b16 %v81
  %v409 = vunpack.c.l.b16 %v82
  %v410 = vunpack.c.l.b16 %v83
  %v411 = vunpack.c.l.b16 %v84
  %v412 = vunpack.c.l.b16 %v85
  %v413 = vunpack.c.l.b16 %v86
  %v414 = vunpack.c.l.b16 %v87
  %v415 = vunpack.c.l.b16 %v88
  %v416 = vunpack.c.l.b16 %v89
  %v417 = vunpack.c.l.b16 %v90
  %v418 = vunpack.c.l.b16 %v91
  %v419 = vunpack.c.l.b16 %v92
  %v420 = vunpack.c.l.b16 %v93
  %v421 = vunpack.c.l.b16 %v94
  %v422 = vunpack.c.l.b16 %v95
  %v423 = vunpack.c.l.b16 %v96
  %v424 = vunpack.c.l.b16 %v97
  %v425 = vunpack.c.l.b16 %v98
  %v426 = vunpack.c.l.b16 %v99
  %v427 = vunpack.c.l.b16 %v100
  %v428 = vunpack.c.l.b16 %v101
  %v429 = vunpack.c.l.b16 %v102
  %v430 = vunpack.c.l.b16 %v103
  %v431 = vunpack.c.l.b16 %v104
  %v432 = vunpack.c.l.b16 %v105
  %v433 = vunpack.c.l.b16 %v106
  %v434 = vunpack.c.l.b16 %v107
  %v435 = vunpack.c.l.b16 %v108
  %v436 = vunpack.c.l.b16 %v109
  %v437 = vunpack.c.l.b16 %v110
  %v438 = vunpack.c.l.b16 %v111
  %v439 = vunpack.c.l.b16 %v112
  %v440 = vunpack.c.l.b16 %v113
  %v441 = vunpack.c.l.b16 %v114
  %v442 = vunpack.c.l.b16 %v115
  %v443 = vunpack.c.l.b16 %v116
  %v444 = vunpack.c.l.b16 %v117
  %v445 = vunpack.c.l.b16 %v118
  %v446 = vunpack.c.l.b16 %v119
  %v447 = vunpack.c.l.b16 %v120
  %v448 = vunpack.c.l.b16 %v121
  %v449 = vunpack.c.l.b16 %v122
  %v450 = vunpack.c.l.b16 %v123
  %v451 = vunpack.c.l.b16 %v124
  %v452 = vunpack.c.l.b16 %v125
  %v453 = vunpack.c.l.b16 %v126
  %v454 = vunpack.c.l.b16 %v127
  %v455 = vunpack.c.l.b16 %v128
  %v456 = vunpack.c.l.b16 %v129
  %v457 = vunpack.c.l.b16 %v130
  %v458 = vunpack.c.l.b16 %v131
  %v459 = vunpack.c.l.b16 %v132
  %v460 = vunpack.c.l.b16 %v133
  %v461 = vunpack.c.l.b16 %v134
  %v462 = vunpack.c.l.b16 %v135
  %v463 = vunpack.c.l.b16 %v136
  %v464 = vunpack.c.l.b16 %v137
  %v465 = vunpack.c.l.b16 %v138
  %v466 = vunpack.c.l.b16 %v139
  %v467 = vunpack.c.l.b16 %v140
  %v468 = vunpack.c.l.b16 %v141
  %v469 = vunpack.c.l.b16 %v142
  %v470 = vunpack.c.l.b16 %v143
  %v471 = vunpack.c.l.b16 %v144
  %v472 = vunpack.c.l.b16 %v145
  %v473 = vunpack.c.l.b16 %v146
  %v474 = vunpack.c.l.b16 %v147
  %v475 = vunpack.c.l.b16 %v148
  %v476 = vunpack.c.l.b16 %v149
  %v477 = vunpack.c.l.b16 %v150
  %v478 = vunpack.c.l.b16 %v151
  %v479 = vunpack.c.l.b16 %v152
  %v480 = vunpack.c.l.b16 %v153
  %v481 = vunpack.c.l.b16 %v154
  %v482 = vunpack.c.l.b16 %v155
  %v483 = vunpack.c.l.b16 %v156
  %v484 = vunpack.c.l.b16 %v157
  %v485 = vunpack.c.l.b16 %v158
  %v486 = vunpack.c.l.b16 %v159
  %v487 = vunpack.c.l.b16 %v160
  %v488 = vunpack.c.l.b16 %v161
  %v489 = vunpack.c.l.b16 %v162
  %v490 = vunpack.c.l.b16 %v163
  %v491 = vpack.c.b16 %v348, %v347
  %v492 = vpack.c.b16 %v350, %v349
  %v493 = vpack.c.b16 %v352, %v351
  %v494 = vpack.c.b16 %v354, %v353
  %v495 = vpack.c.b16 %v356, %v355
  %v496 = vpack.c.b16 %v358, %v357
  %v497 = vpack.c.b16 %v360, %v359
  %v498 = vpack.c.b16 %v362, %v361
  %v499 = vpack.c.b16 %v364, %v363
  %v500 = vpack.c.b16 %v366, %v365
  %v501 = vpack.c.b16 %v368, %v367
  %v502 = vpack.c.b16 %v370, %v369
  %v503 = vpack.c.b16 %v372, %v371
  %v504 = vpack.c.b16 %v374, %v373
  %v505 = vpack.c.b16 %v376, %v375
  %v506 = vpack.c.b16 %v378, %v377
  %v507 = vpack.c.b16 %v380, %v379
  %v508 = vpack.c.b16 %v382, %v381
  %v509 = vpack.c.b16 %v384, %v383
  %v510 = vpack.c.b16 %v386, %v385
  %v511 = vpack.c.b16 %v388, %v387
  %v512 = vpack.c.b16 %v390, %v389
  %v513 = vpack.c.b16 %v392, %v391
  %v514 = vpack.c.b16 %v394, %v393
  %v515 = vpack.c.b16 %v396, %v395
  %v516 = vpack.c.b16 %v398, %v397
  %v517 = vpack.c.b16 %v400, %v399
  %v518 = vpack.c.b16 %v402, %v401
  %v519 = vpack.c.b16 %v404, %v403
  %v520 = vpack.c.b16 %v406, %v405
  %v521 = vpack.c.b16 %v408, %v407
  %v522 = vpack.c.b16 %v410, %v409
  %v523 = vpack.c.b16 %v412, %v411
  %v524 = vpack.c.b16 %v414, %v413
  %v525 = vpack.c.b16 %v416, %v415
  %v526 = vpack.c.b16 %v418, %v417
  %v527 = vpack.c.b16 %v420, %v419
  %v528 = vpack.c.b16 %v422, %v421
  %v529 = vpack.c.b16 %v424, %v423
  %v530 = vpack.c.b16 %v426, %v425
  %v531 = vpack.c.b16 %v428, %v427
  %v532 = vpack.c.b16 %v430, %v429
  %v533 = vpack.c.b16 %v432, %v431
  %v534 = vpack.c.b16 %v434, %v433
  %v535 = vpack.c.b16 %v436, %v435
  %v536 = vpack.c.b16 %v438, %v437
  %v537 = vpack.c.b16 %v440, %v439
  %v538 = vpack.c.b16 %v442, %v441
  %v539 = vpack.c.b16 %v444, %v443
  %v540 = vpack.c.b16 %v446, %v445
  %v541 = vpack.c.b16 %v448, %v447
  %v542 = vpack.c.b16 %v450, %v449
  %v543 = vpack.c.b16 %v452, %v451
  %v544 = vpack.c.b16 %v454, %v453
  %v545 = vpack.c.b16 %v456, %v455
  %v546 = vpack.c.b16 %v458, %v457
  %v547 = vpack.c.b16 %v460, %v459
  %v548 = vpack.c.b16 %v462, %v461
  %v549 = vpack.c.b16 %v464, %v463
  %v550 = vpack.c.b16 %v466, %v465
  %v551 = vpack.c.b16 %v468, %v467
  %v552 = vpack.c.b16 %v470, %v469
  %v553 = vpack.c.b16 %v472, %v471
  %v554 = vpack.c.b16 %v474, %v473
  %v555 = vpack.c.b16 %v476, %v475
  %v556 = vpack.c.b16 %v478, %v477
  %v557 = vpack.c.b16 %v480, %v479
  %v558 = vpack.c.b16 %v482, %v481
  %v559 = vpack.c.b16 %v484, %v483
  %v560 = vpack.c.b16 %v486, %v485
  %v561 = vpack.c.b16 %v488, %v487
  %v562 = vpack.c.b16 %v490, %v489
  %635 = vmatprep.subr.bf16.mxu0 0
  %636 = vmatpush1.bf16.msra.mxu0 %v491
  %637 = vmatprep.subr.bf16.mxu0 0
  %638 = vmatpush1.bf16.msra.mxu0 %v492
  %639 = vmatprep.subr.bf16.mxu0 0
  %640 = vmatpush1.bf16.msra.mxu0 %v493
  %641 = vmatprep.subr.bf16.mxu0 0
  %642 = vmatpush1.bf16.msra.mxu0 %v494
  %643 = vmatprep.subr.bf16.mxu0 0
  %644 = vmatpush1.bf16.msra.mxu0 %v495
  %645 = vmatprep.subr.bf16.mxu0 0
  %646 = vmatpush1.bf16.msra.mxu0 %v496
  %647 = vmatprep.subr.bf16.mxu0 0
  %648 = vmatpush1.bf16.msra.mxu0 %v497
  %649 = vmatprep.subr.bf16.mxu0 0
  %650 = vmatpush1.bf16.msra.mxu0 %v498
  %651 = vmatprep.subr.bf16.mxu0 0
  %652 = vmatpush1.bf16.msra.mxu0 %v499
  %653 = vmatprep.subr.bf16.mxu0 0
  %654 = vmatpush1.bf16.msra.mxu0 %v500
  %655 = vmatprep.subr.bf16.mxu0 0
  %656 = vmatpush1.bf16.msra.mxu0 %v501
  %657 = vmatprep.subr.bf16.mxu0 0
  %658 = vmatpush1.bf16.msra.mxu0 %v502
  %659 = vmatprep.subr.bf16.mxu0 0
  %660 = vmatpush1.bf16.msra.mxu0 %v503
  %661 = vmatprep.subr.bf16.mxu0 0
  %662 = vmatpush1.bf16.msra.mxu0 %v504
  %663 = vmatprep.subr.bf16.mxu0 0
  %664 = vmatpush1.bf16.msra.mxu0 %v505
  %665 = vmatprep.subr.bf16.mxu0 0
  %666 = vmatpush1.bf16.msra.mxu0 %v506
  %667 = vmatprep.mubr.bf16.mxu0 %v186
  %668 = vmatmul.mubr.bf16.gmra.mrb[0].mxu0 %v185
  %v669 = vpop.f32.mrb[0].mxu0
  %v670 = vadd.f32 %v169, %v669
  %v671 = vpop.f32.mrb[0].mxu0
  %v672 = vpop.f32.mrb[0].mxu0
  %v673 = vpop.f32.mrb[0].mxu0
  %674 = vdwg.mxu0
  %675 = vmatprep.subr.bf16.mxu0 0
  %676 = vmatpush1.bf16.msra.mxu0 %v507
  %677 = vmatprep.subr.bf16.mxu0 0
  %678 = vmatpush1.bf16.msra.mxu0 %v508
  %679 = vmatprep.subr.bf16.mxu0 0
  %680 = vmatpush1.bf16.msra.mxu0 %v509
  %681 = vmatprep.subr.bf16.mxu0 0
  %682 = vmatpush1.bf16.msra.mxu0 %v510
  %683 = vmatprep.subr.bf16.mxu0 0
  %684 = vmatpush1.bf16.msra.mxu0 %v511
  %685 = vmatprep.subr.bf16.mxu0 0
  %686 = vmatpush1.bf16.msra.mxu0 %v512
  %687 = vmatprep.subr.bf16.mxu0 0
  %688 = vmatpush1.bf16.msra.mxu0 %v513
  %689 = vmatprep.subr.bf16.mxu0 0
  %690 = vmatpush1.bf16.msra.mxu0 %v514
  %691 = vmatprep.subr.bf16.mxu0 0
  %692 = vmatpush1.bf16.msra.mxu0 %v515
  %693 = vmatprep.subr.bf16.mxu0 0
  %694 = vmatpush1.bf16.msra.mxu0 %v516
  %695 = vmatprep.subr.bf16.mxu0 0
  %696 = vmatpush1.bf16.msra.mxu0 %v517
  %697 = vmatprep.subr.bf16.mxu0 0
  %698 = vmatpush1.bf16.msra.mxu0 %v518
  %699 = vmatprep.subr.bf16.mxu0 0
  %700 = vmatpush1.bf16.msra.mxu0 %v519
  %701 = vmatprep.subr.bf16.mxu0 0
  %702 = vmatpush1.bf16.msra.mxu0 %v520
  %703 = vmatprep.subr.bf16.mxu0 0
  %704 = vmatpush1.bf16.msra.mxu0 %v521
  %705 = vmatprep.subr.bf16.mxu0 0
  %706 = vmatpush1.bf16.msra.mxu0 %v522
  %707 = vmatprep.mubr.bf16.mxu0 %v188
  %708 = vmatmul.mubr.bf16.gmra.mrb[0].mxu0 %v187
  %v709 = vpop.f32.mrb[0].mxu0
  %v710 = vadd.f32 %v670, %v709
  %v711 = vpop.f32.mrb[0].mxu0
  %v712 = vpop.f32.mrb[0].mxu0
  %v713 = vpop.f32.mrb[0].mxu0
  %714 = vdwg.mxu0
  %715 = vmatprep.subr.bf16.mxu0 0
  %716 = vmatpush1.bf16.msra.mxu0 %v523
  %717 = vmatprep.subr.bf16.mxu0 0
  %718 = vmatpush1.bf16.msra.mxu0 %v524
  %719 = vmatprep.subr.bf16.mxu0 0
  %720 = vmatpush1.bf16.msra.mxu0 %v525
  %721 = vmatprep.subr.bf16.mxu0 0
  %722 = vmatpush1.bf16.msra.mxu0 %v526
  %723 = vmatprep.subr.bf16.mxu0 0
  %724 = vmatpush1.bf16.msra.mxu0 %v527
  %725 = vmatprep.subr.bf16.mxu0 0
  %726 = vmatpush1.bf16.msra.mxu0 %v528
  %727 = vmatprep.subr.bf16.mxu0 0
  %728 = vmatpush1.bf16.msra.mxu0 %v529
  %729 = vmatprep.subr.bf16.mxu0 0
  %730 = vmatpush1.bf16.msra.mxu0 %v530
  %731 = vmatprep.subr.bf16.mxu0 0
  %732 = vmatpush1.bf16.msra.mxu0 %v531
  %733 = vmatprep.subr.bf16.mxu0 0
  %734 = vmatpush1.bf16.msra.mxu0 %v532
  %735 = vmatprep.subr.bf16.mxu0 0
  %736 = vmatpush1.bf16.msra.mxu0 %v533
  %737 = vmatprep.subr.bf16.mxu0 0
  %738 = vmatpush1.bf16.msra.mxu0 %v534
  %739 = vmatprep.subr.bf16.mxu0 0
  %740 = vmatpush1.bf16.msra.mxu0 %v535
  %741 = vmatprep.subr.bf16.mxu0 0
  %742 = vmatpush1.bf16.msra.mxu0 %v536
  %743 = vmatprep.subr.bf16.mxu0 0
  %744 = vmatpush1.bf16.msra.mxu0 %v537
  %745 = vmatprep.subr.bf16.mxu0 0
  %746 = vmatpush1.bf16.msra.mxu0 %v538
  %747 = vmatprep.mubr.bf16.mxu0 %v190
  %748 = vmatmul.mubr.bf16.gmra.mrb[0].mxu0 %v189
  %v749 = vpop.f32.mrb[0].mxu0
  %v750 = vadd.f32 %v710, %v749
  %v751 = vpop.f32.mrb[0].mxu0
  %v752 = vpop.f32.mrb[0].mxu0
  %v753 = vpop.f32.mrb[0].mxu0
  %754 = vdwg.mxu0
  %755 = vmatprep.subr.bf16.mxu0 0
  %756 = vmatpush1.bf16.msra.mxu0 %v539
  %757 = vmatprep.subr.bf16.mxu0 0
  %758 = vmatpush1.bf16.msra.mxu0 %v540
  %759 = vmatprep.subr.bf16.mxu0 0
  %760 = vmatpush1.bf16.msra.mxu0 %v541
  %761 = vmatprep.subr.bf16.mxu0 0
  %762 = vmatpush1.bf16.msra.mxu0 %v542
  %763 = vmatprep.subr.bf16.mxu0 0
  %764 = vmatpush1.bf16.msra.mxu0 %v543
  %765 = vmatprep.subr.bf16.mxu0 0
  %766 = vmatpush1.bf16.msra.mxu0 %v544
  %767 = vmatprep.subr.bf16.mxu0 0
  %768 = vmatpush1.bf16.msra.mxu0 %v545
  %769 = vmatprep.subr.bf16.mxu0 0
  %770 = vmatpush1.bf16.msra.mxu0 %v546
  %771 = vmatprep.subr.bf16.mxu0 0
  %772 = vmatpush1.bf16.msra.mxu0 %v547
  %773 = vmatprep.subr.bf16.mxu0 0
  %774 = vmatpush1.bf16.msra.mxu0 %v548
  %775 = vmatprep.subr.bf16.mxu0 0
  %776 = vmatpush1.bf16.msra.mxu0 %v549
  %777 = vmatprep.subr.bf16.mxu0 0
  %778 = vmatpush1.bf16.msra.mxu0 %v550
  %779 = vmatprep.subr.bf16.mxu0 0
  %780 = vmatpush1.bf16.msra.mxu0 %v551
  %781 = vmatprep.subr.bf16.mxu0 0
  %782 = vmatpush1.bf16.msra.mxu0 %v552
  %783 = vmatprep.subr.bf16.mxu0 0
  %784 = vmatpush1.bf16.msra.mxu0 %v553
  %785 = vmatprep.subr.bf16.mxu0 0
  %786 = vmatpush1.bf16.msra.mxu0 %v554
  %787 = vmatprep.mubr.bf16.mxu0 %v192
  %788 = vmatmul.mubr.bf16.gmra.mrb[0].mxu0 %v191
  %v789 = vpop.f32.mrb[0].mxu0
  %v790 = vadd.f32 %v750, %v789
  %v791 = vpop.f32.mrb[0].mxu0
  %v792 = vpop.f32.mrb[0].mxu0
  %v793 = vpop.f32.mrb[0].mxu0
  %794 = vdwg.mxu0
  %795 = vmatprep.subr.bf16.mxu0 0
  %796 = vmatpush1.bf16.msra.mxu0 %v555
  %797 = vmatprep.subr.bf16.mxu0 0
  %798 = vmatpush1.bf16.msra.mxu0 %v556
  %799 = vmatprep.subr.bf16.mxu0 0
  %800 = vmatpush1.bf16.msra.mxu0 %v557
  %801 = vmatprep.subr.bf16.mxu0 0
  %802 = vmatpush1.bf16.msra.mxu0 %v558
  %803 = vmatprep.subr.bf16.mxu0 0
  %804 = vmatpush1.bf16.msra.mxu0 %v559
  %805 = vmatprep.subr.bf16.mxu0 0
  %806 = vmatpush1.bf16.msra.mxu0 %v560
  %807 = vmatprep.subr.bf16.mxu0 0
  %808 = vmatpush1.bf16.msra.mxu0 %v561
  %809 = vmatprep.subr.bf16.mxu0 0
  %810 = vmatpush1.bf16.msra.mxu0 %v562
  %811 = vmatprep.subr.bf16.mxu0 0
  %812 = vmatpush1.bf16.msra.mxu0 0
  %813 = vmatprep.subr.bf16.mxu0 0
  %814 = vmatpush1.bf16.msra.mxu0 0
  %815 = vmatprep.subr.bf16.mxu0 0
  %816 = vmatpush1.bf16.msra.mxu0 0
  %817 = vmatprep.subr.bf16.mxu0 0
  %818 = vmatpush1.bf16.msra.mxu0 0
  %819 = vmatprep.subr.bf16.mxu0 0
  %820 = vmatpush1.bf16.msra.mxu0 0
  %821 = vmatprep.subr.bf16.mxu0 0
  %822 = vmatpush1.bf16.msra.mxu0 0
  %823 = vmatprep.subr.bf16.mxu0 0
  %824 = vmatpush1.bf16.msra.mxu0 0
  %825 = vmatprep.subr.bf16.mxu0 0
  %826 = vmatpush1.bf16.msra.mxu0 0
  %827 = vmatprep.mubr.bf16.mxu0 0
  %828 = vmatmul.mubr.bf16.gmra.mrb[0].mxu0 %v193
  %v829 = vpop.f32.mrb[0].mxu0
  %v830 = vadd.f32 %v790, %v829
  %v831 = vpop.f32.mrb[0].mxu0
  %v832 = vpop.f32.mrb[0].mxu0
  %v833 = vpop.f32.mrb[0].mxu0
  %834 = vdwg.mxu0
  %v835 = vpack.c.bf16 %v830, %v830
  %836 = vst [vmem:[%s3] sm:$0xf] %v835
  // Predicated region
  $region14: #{gd_decoder_forward.14} parent=0 // pred_check
    _
  $region15: #{gd_decoder_forward.14} parent=0 // pred_check_branch
    %838 = sbr.rel (0) target = $region17
  $region16: #{gd_decoder_forward.14} parent=0 // pred_region
    _
  $region17: #{gd_decoder_forward.14} parent=0 // pred_fallthru
    _
  // Predicated region
  $region18: #{gd_decoder_forward.14} parent=0 // pred_check
    _
  $region19: #{gd_decoder_forward.14} parent=0 // pred_check_branch
    %840 = sbr.rel (0) target = $region21
  $region20: #{gd_decoder_forward.14} parent=0 // pred_region
    _
  $region21: #{gd_decoder_forward.14} parent=0 // pred_fallthru
    _

// kernel: gd_decoder_forward.15
$region0: #{gd_decoder_forward.15}
  #allocation0 [shape = 'u32[]', space=smem, size = 0x4, offset = 0x4, fixed_abs, tag = 'smem constant byte address 0x4 - core index']
  #allocation1 [shape = 'u32[144,128]{1,0:T(1,128)}', space=vmem, size = 0x12000, scoped, tag = 'internal scratch']
  %s0 = inlined_call_operand.vmem [shape: bf16[8,2048], index: 0, kind: input, shape index: {}]
  %s1 = inlined_call_operand.vmem [shape: bf16[2048,64], index: 1, kind: input, shape index: {}]
  %s2 = inlined_call_operand.vmem [shape: f32[1,64], index: 2, kind: input, shape index: {}]
  %s3 = inlined_call_operand.vmem [shape: f32[1,16], index: 3, kind: input, shape index: {}]
  %s4 = inlined_call_operand.vmem [shape: f32[1,16], index: 4, kind: input, shape index: {}]
  %s5 = inlined_call_operand.vmem [shape: f32[8,64], index: 5, kind: output, shape index: {}]
  %s6 = sld [smem:[#allocation0]]
  $region30: #{gd_decoder_forward.15} parent=0
    _
  %s8 = ssub.s32 1, %s6
  %s9 = scalar_select 0, %s8, %s6
  // Predicated region
  $region2: #{gd_decoder_forward.15} parent=0 // pred_check
    _
  $region3: #{gd_decoder_forward.15} parent=0 // pred_check_branch
    %11 = sbr.rel (0) target = $region5
  $region4: #{gd_decoder_forward.15} parent=0 // pred_region
    _
  $region5: #{gd_decoder_forward.15} parent=0 // pred_fallthru
    _
  // Predicated region
  $region6: #{gd_decoder_forward.15} parent=0 // pred_check
    _
  $region7: #{gd_decoder_forward.15} parent=0 // pred_check_branch
    %13 = sbr.rel (0) target = $region9
  $region8: #{gd_decoder_forward.15} parent=0 // pred_region
    _
  $region9: #{gd_decoder_forward.15} parent=0 // pred_fallthru
    _
  // Predicated region
  $region10: #{gd_decoder_forward.15} parent=0 // pred_check
    _
  $region11: #{gd_decoder_forward.15} parent=0 // pred_check_branch
    %15 = sbr.rel (0) target = $region13
  $region12: #{gd_decoder_forward.15} parent=0 // pred_region
    _
  $region13: #{gd_decoder_forward.15} parent=0 // pred_fallthru
    _
  // Predicated region
  $region14: #{gd_decoder_forward.15} parent=0 // pred_check
    _
  $region15: #{gd_decoder_forward.15} parent=0 // pred_check_branch
    %17 = sbr.rel (0) target = $region17
  $region16: #{gd_decoder_forward.15} parent=0 // pred_region
    _
  $region17: #{gd_decoder_forward.15} parent=0 // pred_fallthru
    _
  // Predicated region
  $region18: #{gd_decoder_forward.15} parent=0 // pred_check
    _
  $region19: #{gd_decoder_forward.15} parent=0 // pred_check_branch
    %19 = sbr.rel (0) target = $region21
  $region20: #{gd_decoder_forward.15} parent=0 // pred_region
    _
  $region21: #{gd_decoder_forward.15} parent=0 // pred_fallthru
    _
  %v21 = vld [vmem:[%s0] sm:$0xff]
  %v22 = vld [vmem:[%s0 + $0x8] sm:$0xff]
  %v23 = vld [vmem:[%s0 + $0x10] sm:$0xff]
  %v24 = vld [vmem:[%s0 + $0x18] sm:$0xff]
  %v25 = vld [vmem:[%s0 + $0x20] sm:$0xff]
  %v26 = vld [vmem:[%s0 + $0x28] sm:$0xff]
  %v27 = vld [vmem:[%s0 + $0x30] sm:$0xff]
  %v28 = vld [vmem:[%s0 + $0x38] sm:$0xff]
  %v29 = vld [vmem:[%s1] sm:$0xf]
  %v30 = vld [vmem:[%s1 + $0x4] sm:$0xf]
  %v31 = vld [vmem:[%s1 + $0x8] sm:$0xf]
  %v32 = vld [vmem:[%s1 + $0xc] sm:$0xf]
  %v33 = vld [vmem:[%s1 + $0x10] sm:$0xf]
  %v34 = vld [vmem:[%s1 + $0x14] sm:$0xf]
  %v35 = vld [vmem:[%s1 + $0x18] sm:$0xf]
  %v36 = vld [vmem:[%s1 + $0x1c] sm:$0xf]
  %v37 = vld [vmem:[%s1 + $0x20] sm:$0xf]
  %v38 = vld [vmem:[%s1 + $0x24] sm:$0xf]
  %v39 = vld [vmem:[%s1 + $0x28] sm:$0xf]
  %v40 = vld [vmem:[%s1 + $0x2c] sm:$0xf]
  %v41 = vld [vmem:[%s1 + $0x30] sm:$0xf]
  %v42 = vld [vmem:[%s1 + $0x34] sm:$0xf]
  %v43 = vld [vmem:[%s1 + $0x38] sm:$0xf]
  %v44 = vld [vmem:[%s1 + $0x3c] sm:$0xf]
  %v45 = vld [vmem:[%s1 + $0x40] sm:$0xf]
  %v46 = vld [vmem:[%s1 + $0x44] sm:$0xf]
  %v47 = vld [vmem:[%s1 + $0x48] sm:$0xf]
  %v48 = vld [vmem:[%s1 + $0x4c] sm:$0xf]
  %v49 = vld [vmem:[%s1 + $0x50] sm:$0xf]
  %v50 = vld [vmem:[%s1 + $0x54] sm:$0xf]
  %v51 = vld [vmem:[%s1 + $0x58] sm:$0xf]
  %v52 = vld [vmem:[%s1 + $0x5c] sm:$0xf]
  %v53 = vld [vmem:[%s1 + $0x60] sm:$0xf]
  %v54 = vld [vmem:[%s1 + $0x64] sm:$0xf]
  %v55 = vld [vmem:[%s1 + $0x68] sm:$0xf]
  %v56 = vld [vmem:[%s1 + $0x6c] sm:$0xf]
  %v57 = vld [vmem:[%s1 + $0x70] sm:$0xf]
  %v58 = vld [vmem:[%s1 + $0x74] sm:$0xf]
  %v59 = vld [vmem:[%s1 + $0x78] sm:$0xf]
  %v60 = vld [vmem:[%s1 + $0x7c] sm:$0xf]
  %v61 = vld [vmem:[%s1 + $0x80] sm:$0xf]
  %v62 = vld [vmem:[%s1 + $0x84] sm:$0xf]
  %v63 = vld [vmem:[%s1 + $0x88] sm:$0xf]
  %v64 = vld [vmem:[%s1 + $0x8c] sm:$0xf]
  %v65 = vld [vmem:[%s1 + $0x90] sm:$0xf]
  %v66 = vld [vmem:[%s1 + $0x94] sm:$0xf]
  %v67 = vld [vmem:[%s1 + $0x98] sm:$0xf]
  %v68 = vld [vmem:[%s1 + $0x9c] sm:$0xf]
  %v69 = vld [vmem:[%s1 + $0xa0] sm:$0xf]
  %v70 = vld [vmem:[%s1 + $0xa4] sm:$0xf]
  %v71 = vld [vmem:[%s1 + $0xa8] sm:$0xf]
  %v72 = vld [vmem:[%s1 + $0xac] sm:$0xf]
  %v73 = vld [vmem:[%s1 + $0xb0] sm:$0xf]
  %v74 = vld [vmem:[%s1 + $0xb4] sm:$0xf]
  %v75 = vld [vmem:[%s1 + $0xb8] sm:$0xf]
  %v76 = vld [vmem:[%s1 + $0xbc] sm:$0xf]
  %v77 = vld [vmem:[%s1 + $0xc0] sm:$0xf]
  %v78 = vld [vmem:[%s1 + $0xc4] sm:$0xf]
  %v79 = vld [vmem:[%s1 + $0xc8] sm:$0xf]
  %v80 = vld [vmem:[%s1 + $0xcc] sm:$0xf]
  %v81 = vld [vmem:[%s1 + $0xd0] sm:$0xf]
  %v82 = vld [vmem:[%s1 + $0xd4] sm:$0xf]
  %v83 = vld [vmem:[%s1 + $0xd8] sm:$0xf]
  %v84 = vld [vmem:[%s1 + $0xdc] sm:$0xf]
  %v85 = vld [vmem:[%s1 + $0xe0] sm:$0xf]
  %v86 = vld [vmem:[%s1 + $0xe4] sm:$0xf]
  %v87 = vld [vmem:[%s1 + $0xe8] sm:$0xf]
  %v88 = vld [vmem:[%s1 + $0xec] sm:$0xf]
  %v89 = vld [vmem:[%s1 + $0xf0] sm:$0xf]
  %v90 = vld [vmem:[%s1 + $0xf4] sm:$0xf]
  %v91 = vld [vmem:[%s1 + $0xf8] sm:$0xf]
  %v92 = vld [vmem:[%s1 + $0xfc] sm:$0xf]
  %v93 = vld [vmem:[%s1 + $0x100] sm:$0xf]
  %v94 = vld [vmem:[%s1 + $0x104] sm:$0xf]
  %v95 = vld [vmem:[%s1 + $0x108] sm:$0xf]
  %v96 = vld [vmem:[%s1 + $0x10c] sm:$0xf]
  %v97 = vld [vmem:[%s1 + $0x110] sm:$0xf]
  %v98 = vld [vmem:[%s1 + $0x114] sm:$0xf]
  %v99 = vld [vmem:[%s1 + $0x118] sm:$0xf]
  %v100 = vld [vmem:[%s1 + $0x11c] sm:$0xf]
  %v101 = vld [vmem:[%s1 + $0x120] sm:$0xf]
  %v102 = vld [vmem:[%s1 + $0x124] sm:$0xf]
  %v103 = vld [vmem:[%s1 + $0x128] sm:$0xf]
  %v104 = vld [vmem:[%s1 + $0x12c] sm:$0xf]
  %v105 = vld [vmem:[%s1 + $0x130] sm:$0xf]
  %v106 = vld [vmem:[%s1 + $0x134] sm:$0xf]
  %v107 = vld [vmem:[%s1 + $0x138] sm:$0xf]
  %v108 = vld [vmem:[%s1 + $0x13c] sm:$0xf]
  %v109 = vld [vmem:[%s1 + $0x140] sm:$0xf]
  %v110 = vld [vmem:[%s1 + $0x144] sm:$0xf]
  %v111 = vld [vmem:[%s1 + $0x148] sm:$0xf]
  %v112 = vld [vmem:[%s1 + $0x14c] sm:$0xf]
  %v113 = vld [vmem:[%s1 + $0x150] sm:$0xf]
  %v114 = vld [vmem:[%s1 + $0x154] sm:$0xf]
  %v115 = vld [vmem:[%s1 + $0x158] sm:$0xf]
  %v116 = vld [vmem:[%s1 + $0x15c] sm:$0xf]
  %v117 = vld [vmem:[%s1 + $0x160] sm:$0xf]
  %v118 = vld [vmem:[%s1 + $0x164] sm:$0xf]
  %v119 = vld [vmem:[%s1 + $0x168] sm:$0xf]
  %v120 = vld [vmem:[%s1 + $0x16c] sm:$0xf]
  %v121 = vld [vmem:[%s1 + $0x170] sm:$0xf]
  %v122 = vld [vmem:[%s1 + $0x174] sm:$0xf]
  %v123 = vld [vmem:[%s1 + $0x178] sm:$0xf]
  %v124 = vld [vmem:[%s1 + $0x17c] sm:$0xf]
  %v125 = vld [vmem:[%s1 + $0x180] sm:$0xf]
  %v126 = vld [vmem:[%s1 + $0x184] sm:$0xf]
  %v127 = vld [vmem:[%s1 + $0x188] sm:$0xf]
  %v128 = vld [vmem:[%s1 + $0x18c] sm:$0xf]
  %v129 = vld [vmem:[%s1 + $0x190] sm:$0xf]
  %v130 = vld [vmem:[%s1 + $0x194] sm:$0xf]
  %v131 = vld [vmem:[%s1 + $0x198] sm:$0xf]
  %v132 = vld [vmem:[%s1 + $0x19c] sm:$0xf]
  %v133 = vld [vmem:[%s1 + $0x1a0] sm:$0xf]
  %v134 = vld [vmem:[%s1 + $0x1a4] sm:$0xf]
  %v135 = vld [vmem:[%s1 + $0x1a8] sm:$0xf]
  %v136 = vld [vmem:[%s1 + $0x1ac] sm:$0xf]
  %v137 = vld [vmem:[%s1 + $0x1b0] sm:$0xf]
  %v138 = vld [vmem:[%s1 + $0x1b4] sm:$0xf]
  %v139 = vld [vmem:[%s1 + $0x1b8] sm:$0xf]
  %v140 = vld [vmem:[%s1 + $0x1bc] sm:$0xf]
  %v141 = vld [vmem:[%s1 + $0x1c0] sm:$0xf]
  %v142 = vld [vmem:[%s1 + $0x1c4] sm:$0xf]
  %v143 = vld [vmem:[%s1 + $0x1c8] sm:$0xf]
  %v144 = vld [vmem:[%s1 + $0x1cc] sm:$0xf]
  %v145 = vld [vmem:[%s1 + $0x1d0] sm:$0xf]
  %v146 = vld [vmem:[%s1 + $0x1d4] sm:$0xf]
  %v147 = vld [vmem:[%s1 + $0x1d8] sm:$0xf]
  %v148 = vld [vmem:[%s1 + $0x1dc] sm:$0xf]
  %v149 = vld [vmem:[%s1 + $0x1e0] sm:$0xf]
  %v150 = vld [vmem:[%s1 + $0x1e4] sm:$0xf]
  %v151 = vld [vmem:[%s1 + $0x1e8] sm:$0xf]
  %v152 = vld [vmem:[%s1 + $0x1ec] sm:$0xf]
  %v153 = vld [vmem:[%s1 + $0x1f0] sm:$0xf]
  %v154 = vld [vmem:[%s1 + $0x1f4] sm:$0xf]
  %v155 = vld [vmem:[%s1 + $0x1f8] sm:$0xf]
  %v156 = vld [vmem:[%s1 + $0x1fc] sm:$0xf]
  %v157 = vld [vmem:[%s1 + $0x200] sm:$0xf]
  %v158 = vld [vmem:[%s1 + $0x204] sm:$0xf]
  %v159 = vld [vmem:[%s1 + $0x208] sm:$0xf]
  %v160 = vld [vmem:[%s1 + $0x20c] sm:$0xf]
  %v161 = vld [vmem:[%s1 + $0x210] sm:$0xf]
  %v162 = vld [vmem:[%s1 + $0x214] sm:$0xf]
  %v163 = vld [vmem:[%s1 + $0x218] sm:$0xf]
  %v164 = vld [vmem:[%s1 + $0x21c] sm:$0xf]
  %v165 = vld [vmem:[%s1 + $0x220] sm:$0xf]
  %v166 = vld [vmem:[%s1 + $0x224] sm:$0xf]
  %v167 = vld [vmem:[%s1 + $0x228] sm:$0xf]
  %v168 = vld [vmem:[%s1 + $0x22c] sm:$0xf]
  %v169 = vld [vmem:[%s1 + $0x230] sm:$0xf]
  %v170 = vld [vmem:[%s1 + $0x234] sm:$0xf]
  %v171 = vld [vmem:[%s1 + $0x238] sm:$0xf]
  %v172 = vld [vmem:[%s1 + $0x23c] sm:$0xf]
  %v173 = vld [vmem:[%s1 + $0x240] sm:$0xf]
  %v174 = vld [vmem:[%s1 + $0x244] sm:$0xf]
  %v175 = vld [vmem:[%s1 + $0x248] sm:$0xf]
  %v176 = vld [vmem:[%s1 + $0x24c] sm:$0xf]
  %v177 = vld [vmem:[%s1 + $0x250] sm:$0xf]
  %v178 = vld [vmem:[%s1 + $0x254] sm:$0xf]
  %v179 = vld [vmem:[%s1 + $0x258] sm:$0xf]
  %v180 = vld [vmem:[%s1 + $0x25c] sm:$0xf]
  %v181 = vld [vmem:[%s1 + $0x260] sm:$0xf]
  %v182 = vld [vmem:[%s1 + $0x264] sm:$0xf]
  %v183 = vld [vmem:[%s1 + $0x268] sm:$0xf]
  %v184 = vld [vmem:[%s1 + $0x26c] sm:$0xf]
  %v185 = vld [vmem:[%s1 + $0x270] sm:$0xf]
  %v186 = vld [vmem:[%s1 + $0x274] sm:$0xf]
  %v187 = vld [vmem:[%s1 + $0x278] sm:$0xf]
  %v188 = vld [vmem:[%s1 + $0x27c] sm:$0xf]
  %v189 = vld [vmem:[%s1 + $0x280] sm:$0xf]
  %v190 = vld [vmem:[%s1 + $0x284] sm:$0xf]
  %v191 = vld [vmem:[%s1 + $0x288] sm:$0xf]
  %v192 = vld [vmem:[%s1 + $0x28c] sm:$0xf]
  %v193 = vld [vmem:[%s1 + $0x290] sm:$0xf]
  %v194 = vld [vmem:[%s1 + $0x294] sm:$0xf]
  %v195 = vld [vmem:[%s1 + $0x298] sm:$0xf]
  %v196 = vld [vmem:[%s1 + $0x29c] sm:$0xf]
  %v197 = vld [vmem:[%s1 + $0x2a0] sm:$0xf]
  %v198 = vld [vmem:[%s1 + $0x2a4] sm:$0xf]
  %v199 = vld [vmem:[%s1 + $0x2a8] sm:$0xf]
  %v200 = vld [vmem:[%s1 + $0x2ac] sm:$0xf]
  %v201 = vld [vmem:[%s1 + $0x2b0] sm:$0xf]
  %v202 = vld [vmem:[%s1 + $0x2b4] sm:$0xf]
  %v203 = vld [vmem:[%s1 + $0x2b8] sm:$0xf]
  %v204 = vld [vmem:[%s1 + $0x2bc] sm:$0xf]
  %v205 = vld [vmem:[%s1 + $0x2c0] sm:$0xf]
  %v206 = vld [vmem:[%s1 + $0x2c4] sm:$0xf]
  %v207 = vld [vmem:[%s1 + $0x2c8] sm:$0xf]
  %v208 = vld [vmem:[%s1 + $0x2cc] sm:$0xf]
  %v209 = vld [vmem:[%s1 + $0x2d0] sm:$0xf]
  %v210 = vld [vmem:[%s1 + $0x2d4] sm:$0xf]
  %v211 = vld [vmem:[%s1 + $0x2d8] sm:$0xf]
  %v212 = vld [vmem:[%s1 + $0x2dc] sm:$0xf]
  %v213 = vld [vmem:[%s1 + $0x2e0] sm:$0xf]
  %v214 = vld [vmem:[%s1 + $0x2e4] sm:$0xf]
  %v215 = vld [vmem:[%s1 + $0x2e8] sm:$0xf]
  %v216 = vld [vmem:[%s1 + $0x2ec] sm:$0xf]
  %v217 = vld [vmem:[%s1 + $0x2f0] sm:$0xf]
  %v218 = vld [vmem:[%s1 + $0x2f4] sm:$0xf]
  %v219 = vld [vmem:[%s1 + $0x2f8] sm:$0xf]
  %v220 = vld [vmem:[%s1 + $0x2fc] sm:$0xf]
  %v221 = vld [vmem:[%s1 + $0x300] sm:$0xf]
  %v222 = vld [vmem:[%s1 + $0x304] sm:$0xf]
  %v223 = vld [vmem:[%s1 + $0x308] sm:$0xf]
  %v224 = vld [vmem:[%s1 + $0x30c] sm:$0xf]
  %v225 = vld [vmem:[%s1 + $0x310] sm:$0xf]
  %v226 = vld [vmem:[%s1 + $0x314] sm:$0xf]
  %v227 = vld [vmem:[%s1 + $0x318] sm:$0xf]
  %v228 = vld [vmem:[%s1 + $0x31c] sm:$0xf]
  %v229 = vld [vmem:[%s1 + $0x320] sm:$0xf]
  %v230 = vld [vmem:[%s1 + $0x324] sm:$0xf]
  %v231 = vld [vmem:[%s1 + $0x328] sm:$0xf]
  %v232 = vld [vmem:[%s1 + $0x32c] sm:$0xf]
  %v233 = vld [vmem:[%s1 + $0x330] sm:$0xf]
  %v234 = vld [vmem:[%s1 + $0x334] sm:$0xf]
  %v235 = vld [vmem:[%s1 + $0x338] sm:$0xf]
  %v236 = vld [vmem:[%s1 + $0x33c] sm:$0xf]
  %v237 = vld [vmem:[%s1 + $0x340] sm:$0xf]
  %v238 = vld [vmem:[%s1 + $0x344] sm:$0xf]
  %v239 = vld [vmem:[%s1 + $0x348] sm:$0xf]
  %v240 = vld [vmem:[%s1 + $0x34c] sm:$0xf]
  %v241 = vld [vmem:[%s1 + $0x350] sm:$0xf]
  %v242 = vld [vmem:[%s1 + $0x354] sm:$0xf]
  %v243 = vld [vmem:[%s1 + $0x358] sm:$0xf]
  %v244 = vld [vmem:[%s1 + $0x35c] sm:$0xf]
  %v245 = vld [vmem:[%s1 + $0x360] sm:$0xf]
  %v246 = vld [vmem:[%s1 + $0x364] sm:$0xf]
  %v247 = vld [vmem:[%s1 + $0x368] sm:$0xf]
  %v248 = vld [vmem:[%s1 + $0x36c] sm:$0xf]
  %v249 = vld [vmem:[%s1 + $0x370] sm:$0xf]
  %v250 = vld [vmem:[%s1 + $0x374] sm:$0xf]
  %v251 = vld [vmem:[%s1 + $0x378] sm:$0xf]
  %v252 = vld [vmem:[%s1 + $0x37c] sm:$0xf]
  %v253 = vld [vmem:[%s1 + $0x380] sm:$0xf]
  %v254 = vld [vmem:[%s1 + $0x384] sm:$0xf]
  %v255 = vld [vmem:[%s1 + $0x388] sm:$0xf]
  %v256 = vld [vmem:[%s1 + $0x38c] sm:$0xf]
  %v257 = vld [vmem:[%s1 + $0x390] sm:$0xf]
  %v258 = vld [vmem:[%s1 + $0x394] sm:$0xf]
  %v259 = vld [vmem:[%s1 + $0x398] sm:$0xf]
  %v260 = vld [vmem:[%s1 + $0x39c] sm:$0xf]
  %v261 = vld [vmem:[%s1 + $0x3a0] sm:$0xf]
  %v262 = vld [vmem:[%s1 + $0x3a4] sm:$0xf]
  %v263 = vld [vmem:[%s1 + $0x3a8] sm:$0xf]
  %v264 = vld [vmem:[%s1 + $0x3ac] sm:$0xf]
  %v265 = vld [vmem:[%s1 + $0x3b0] sm:$0xf]
  %v266 = vld [vmem:[%s1 + $0x3b4] sm:$0xf]
  %v267 = vld [vmem:[%s1 + $0x3b8] sm:$0xf]
  %v268 = vld [vmem:[%s1 + $0x3bc] sm:$0xf]
  %v269 = vld [vmem:[%s1 + $0x3c0] sm:$0xf]
  %v270 = vld [vmem:[%s1 + $0x3c4] sm:$0xf]
  %v271 = vld [vmem:[%s1 + $0x3c8] sm:$0xf]
  %v272 = vld [vmem:[%s1 + $0x3cc] sm:$0xf]
  %v273 = vld [vmem:[%s1 + $0x3d0] sm:$0xf]
  %v274 = vld [vmem:[%s1 + $0x3d4] sm:$0xf]
  %v275 = vld [vmem:[%s1 + $0x3d8] sm:$0xf]
  %v276 = vld [vmem:[%s1 + $0x3dc] sm:$0xf]
  %v277 = vld [vmem:[%s1 + $0x3e0] sm:$0xf]
  %v278 = vld [vmem:[%s1 + $0x3e4] sm:$0xf]
  %v279 = vld [vmem:[%s1 + $0x3e8] sm:$0xf]
  %v280 = vld [vmem:[%s1 + $0x3ec] sm:$0xf]
  %v281 = vld [vmem:[%s1 + $0x3f0] sm:$0xf]
  %v282 = vld [vmem:[%s1 + $0x3f4] sm:$0xf]
  %v283 = vld [vmem:[%s1 + $0x3f8] sm:$0xf]
  %v284 = vld [vmem:[%s1 + $0x3fc] sm:$0xf]
  %v285 = vld [vmem:[%s2] sm:$0x1]
  %v287 = vlaneseq
  %v288 = vshrl.u32 %v287, 7
  %v289 = vsub.s32 0, %v288
  %v290 = vrot.slane %v285, %v289
  %v300 = vunpack.c.l.b16 %v21
  %v301 = vunpack.c.h.b16 %v21
  %v302 = vunpack.c.l.b16 %v22
  %v303 = vunpack.c.h.b16 %v22
  %v304 = vunpack.c.l.b16 %v23
  %v305 = vunpack.c.h.b16 %v23
  %v306 = vunpack.c.l.b16 %v24
  %v307 = vunpack.c.h.b16 %v24
  %v308 = vunpack.c.l.b16 %v25
  %v309 = vunpack.c.h.b16 %v25
  %v310 = vunpack.c.l.b16 %v26
  %v311 = vunpack.c.h.b16 %v26
  %v312 = vunpack.c.l.b16 %v27
  %v313 = vunpack.c.h.b16 %v27
  %v314 = vunpack.c.l.b16 %v28
  %v315 = vunpack.c.h.b16 %v28
  %v316 = vpack.c.b16 %v300, %v300
  %v317 = vpack.c.b16 %v301, %v301
  %v318 = vpack.c.b16 %v302, %v302
  %v319 = vpack.c.b16 %v303, %v303
  %v320 = vpack.c.b16 %v304, %v304
  %v321 = vpack.c.b16 %v305, %v305
  %v322 = vpack.c.b16 %v306, %v306
  %v323 = vpack.c.b16 %v307, %v307
  %v324 = vpack.c.b16 %v308, %v308
  %v325 = vpack.c.b16 %v309, %v309
  %v326 = vpack.c.b16 %v310, %v310
  %v327 = vpack.c.b16 %v311, %v311
  %v328 = vpack.c.b16 %v312, %v312
  %v329 = vpack.c.b16 %v313, %v313
  %v330 = vpack.c.b16 %v314, %v314
  %v331 = vpack.c.b16 %v315, %v315
  %v604 = vunpack.c.l.b16 %v29
  %v605 = vunpack.c.l.b16 %v30
  %v606 = vunpack.c.l.b16 %v31
  %v607 = vunpack.c.l.b16 %v32
  %v608 = vunpack.c.l.b16 %v33
  %v609 = vunpack.c.l.b16 %v34
  %v610 = vunpack.c.l.b16 %v35
  %v611 = vunpack.c.l.b16 %v36
  %v612 = vunpack.c.l.b16 %v37
  %v613 = vunpack.c.l.b16 %v38
  %v614 = vunpack.c.l.b16 %v39
  %v615 = vunpack.c.l.b16 %v40
  %v616 = vunpack.c.l.b16 %v41
  %v617 = vunpack.c.l.b16 %v42
  %v618 = vunpack.c.l.b16 %v43
  %v619 = vunpack.c.l.b16 %v44
  %v620 = vunpack.c.l.b16 %v45
  %v621 = vunpack.c.l.b16 %v46
  %v622 = vunpack.c.l.b16 %v47
  %v623 = vunpack.c.l.b16 %v48
  %v624 = vunpack.c.l.b16 %v49
  %v625 = vunpack.c.l.b16 %v50
  %v626 = vunpack.c.l.b16 %v51
  %v627 = vunpack.c.l.b16 %v52
  %v628 = vunpack.c.l.b16 %v53
  %v629 = vunpack.c.l.b16 %v54
  %v630 = vunpack.c.l.b16 %v55
  %v631 = vunpack.c.l.b16 %v56
  %v632 = vunpack.c.l.b16 %v57
  %v633 = vunpack.c.l.b16 %v58
  %v634 = vunpack.c.l.b16 %v59
  %v635 = vunpack.c.l.b16 %v60
  %v636 = vunpack.c.l.b16 %v61
  %v637 = vunpack.c.l.b16 %v62
  %v638 = vunpack.c.l.b16 %v63
  %v639 = vunpack.c.l.b16 %v64
  %v640 = vunpack.c.l.b16 %v65
  %v641 = vunpack.c.l.b16 %v66
  %v642 = vunpack.c.l.b16 %v67
  %v643 = vunpack.c.l.b16 %v68
  %v644 = vunpack.c.l.b16 %v69
  %v645 = vunpack.c.l.b16 %v70
  %v646 = vunpack.c.l.b16 %v71
  %v647 = vunpack.c.l.b16 %v72
  %v648 = vunpack.c.l.b16 %v73
  %v649 = vunpack.c.l.b16 %v74
  %v650 = vunpack.c.l.b16 %v75
  %v651 = vunpack.c.l.b16 %v76
  %v652 = vunpack.c.l.b16 %v77
  %v653 = vunpack.c.l.b16 %v78
  %v654 = vunpack.c.l.b16 %v79
  %v655 = vunpack.c.l.b16 %v80
  %v656 = vunpack.c.l.b16 %v81
  %v657 = vunpack.c.l.b16 %v82
  %v658 = vunpack.c.l.b16 %v83
  %v659 = vunpack.c.l.b16 %v84
  %v660 = vunpack.c.l.b16 %v85
  %v661 = vunpack.c.l.b16 %v86
  %v662 = vunpack.c.l.b16 %v87
  %v663 = vunpack.c.l.b16 %v88
  %v664 = vunpack.c.l.b16 %v89
  %v665 = vunpack.c.l.b16 %v90
  %v666 = vunpack.c.l.b16 %v91
  %v667 = vunpack.c.l.b16 %v92
  %v668 = vunpack.c.l.b16 %v93
  %v669 = vunpack.c.l.b16 %v94
  %v670 = vunpack.c.l.b16 %v95
  %v671 = vunpack.c.l.b16 %v96
  %v672 = vunpack.c.l.b16 %v97
  %v673 = vunpack.c.l.b16 %v98
  %v674 = vunpack.c.l.b16 %v99
  %v675 = vunpack.c.l.b16 %v100
  %v676 = vunpack.c.l.b16 %v101
  %v677 = vunpack.c.l.b16 %v102
  %v678 = vunpack.c.l.b16 %v103
  %v679 = vunpack.c.l.b16 %v104
  %v680 = vunpack.c.l.b16 %v105
  %v681 = vunpack.c.l.b16 %v106
  %v682 = vunpack.c.l.b16 %v107
  %v683 = vunpack.c.l.b16 %v108
  %v684 = vunpack.c.l.b16 %v109
  %v685 = vunpack.c.l.b16 %v110
  %v686 = vunpack.c.l.b16 %v111
  %v687 = vunpack.c.l.b16 %v112
  %v688 = vunpack.c.l.b16 %v113
  %v689 = vunpack.c.l.b16 %v114
  %v690 = vunpack.c.l.b16 %v115
  %v691 = vunpack.c.l.b16 %v116
  %v692 = vunpack.c.l.b16 %v117
  %v693 = vunpack.c.l.b16 %v118
  %v694 = vunpack.c.l.b16 %v119
  %v695 = vunpack.c.l.b16 %v120
  %v696 = vunpack.c.l.b16 %v121
  %v697 = vunpack.c.l.b16 %v122
  %v698 = vunpack.c.l.b16 %v123
  %v699 = vunpack.c.l.b16 %v124
  %v700 = vunpack.c.l.b16 %v125
  %v701 = vunpack.c.l.b16 %v126
  %v702 = vunpack.c.l.b16 %v127
  %v703 = vunpack.c.l.b16 %v128
  %v704 = vunpack.c.l.b16 %v129
  %v705 = vunpack.c.l.b16 %v130
  %v706 = vunpack.c.l.b16 %v131
  %v707 = vunpack.c.l.b16 %v132
  %v708 = vunpack.c.l.b16 %v133
  %v709 = vunpack.c.l.b16 %v134
  %v710 = vunpack.c.l.b16 %v135
  %v711 = vunpack.c.l.b16 %v136
  %v712 = vunpack.c.l.b16 %v137
  %v713 = vunpack.c.l.b16 %v138
  %v714 = vunpack.c.l.b16 %v139
  %v715 = vunpack.c.l.b16 %v140
  %v716 = vunpack.c.l.b16 %v141
  %v717 = vunpack.c.l.b16 %v142
  %v718 = vunpack.c.l.b16 %v143
  %v719 = vunpack.c.l.b16 %v144
  %v720 = vunpack.c.l.b16 %v145
  %v721 = vunpack.c.l.b16 %v146
  %v722 = vunpack.c.l.b16 %v147
  %v723 = vunpack.c.l.b16 %v148
  %v724 = vunpack.c.l.b16 %v149
  %v725 = vunpack.c.l.b16 %v150
  %v726 = vunpack.c.l.b16 %v151
  %v727 = vunpack.c.l.b16 %v152
  %v728 = vunpack.c.l.b16 %v153
  %v729 = vunpack.c.l.b16 %v154
  %v730 = vunpack.c.l.b16 %v155
  %v731 = vunpack.c.l.b16 %v156
  %v732 = vunpack.c.l.b16 %v157
  %v733 = vunpack.c.l.b16 %v158
  %v734 = vunpack.c.l.b16 %v159
  %v735 = vunpack.c.l.b16 %v160
  %v736 = vunpack.c.l.b16 %v161
  %v737 = vunpack.c.l.b16 %v162
  %v738 = vunpack.c.l.b16 %v163
  %v739 = vunpack.c.l.b16 %v164
  %v740 = vunpack.c.l.b16 %v165
  %v741 = vunpack.c.l.b16 %v166
  %v742 = vunpack.c.l.b16 %v167
  %v743 = vunpack.c.l.b16 %v168
  %v744 = vunpack.c.l.b16 %v169
  %v745 = vunpack.c.l.b16 %v170
  %v746 = vunpack.c.l.b16 %v171
  %v747 = vunpack.c.l.b16 %v172
  %v748 = vunpack.c.l.b16 %v173
  %v749 = vunpack.c.l.b16 %v174
  %v750 = vunpack.c.l.b16 %v175
  %v751 = vunpack.c.l.b16 %v176
  %v752 = vunpack.c.l.b16 %v177
  %v753 = vunpack.c.l.b16 %v178
  %v754 = vunpack.c.l.b16 %v179
  %v755 = vunpack.c.l.b16 %v180
  %v756 = vunpack.c.l.b16 %v181
  %v757 = vunpack.c.l.b16 %v182
  %v758 = vunpack.c.l.b16 %v183
  %v759 = vunpack.c.l.b16 %v184
  %v760 = vunpack.c.l.b16 %v185
  %v761 = vunpack.c.l.b16 %v186
  %v762 = vunpack.c.l.b16 %v187
  %v763 = vunpack.c.l.b16 %v188
  %v764 = vunpack.c.l.b16 %v189
  %v765 = vunpack.c.l.b16 %v190
  %v766 = vunpack.c.l.b16 %v191
  %v767 = vunpack.c.l.b16 %v192
  %v768 = vunpack.c.l.b16 %v193
  %v769 = vunpack.c.l.b16 %v194
  %v770 = vunpack.c.l.b16 %v195
  %v771 = vunpack.c.l.b16 %v196
  %v772 = vunpack.c.l.b16 %v197
  %v773 = vunpack.c.l.b16 %v198
  %v774 = vunpack.c.l.b16 %v199
  %v775 = vunpack.c.l.b16 %v200
  %v776 = vunpack.c.l.b16 %v201
  %v777 = vunpack.c.l.b16 %v202
  %v778 = vunpack.c.l.b16 %v203
  %v779 = vunpack.c.l.b16 %v204
  %v780 = vunpack.c.l.b16 %v205
  %v781 = vunpack.c.l.b16 %v206
  %v782 = vunpack.c.l.b16 %v207
  %v783 = vunpack.c.l.b16 %v208
  %v784 = vunpack.c.l.b16 %v209
  %v785 = vunpack.c.l.b16 %v210
  %v786 = vunpack.c.l.b16 %v211
  %v787 = vunpack.c.l.b16 %v212
  %v788 = vunpack.c.l.b16 %v213
  %v789 = vunpack.c.l.b16 %v214
  %v790 = vunpack.c.l.b16 %v215
  %v791 = vunpack.c.l.b16 %v216
  %v792 = vunpack.c.l.b16 %v217
  %v793 = vunpack.c.l.b16 %v218
  %v794 = vunpack.c.l.b16 %v219
  %v795 = vunpack.c.l.b16 %v220
  %v796 = vunpack.c.l.b16 %v221
  %v797 = vunpack.c.l.b16 %v222
  %v798 = vunpack.c.l.b16 %v223
  %v799 = vunpack.c.l.b16 %v224
  %v800 = vunpack.c.l.b16 %v225
  %v801 = vunpack.c.l.b16 %v226
  %v802 = vunpack.c.l.b16 %v227
  %v803 = vunpack.c.l.b16 %v228
  %v804 = vunpack.c.l.b16 %v229
  %v805 = vunpack.c.l.b16 %v230
  %v806 = vunpack.c.l.b16 %v231
  %v807 = vunpack.c.l.b16 %v232
  %v808 = vunpack.c.l.b16 %v233
  %v809 = vunpack.c.l.b16 %v234
  %v810 = vunpack.c.l.b16 %v235
  %v811 = vunpack.c.l.b16 %v236
  %v812 = vunpack.c.l.b16 %v237
  %v813 = vunpack.c.l.b16 %v238
  %v814 = vunpack.c.l.b16 %v239
  %v815 = vunpack.c.l.b16 %v240
  %v816 = vunpack.c.l.b16 %v241
  %v817 = vunpack.c.l.b16 %v242
  %v818 = vunpack.c.l.b16 %v243
  %v819 = vunpack.c.l.b16 %v244
  %v820 = vunpack.c.l.b16 %v245
  %v821 = vunpack.c.l.b16 %v246
  %v822 = vunpack.c.l.b16 %v247
  %v823 = vunpack.c.l.b16 %v248
  %v824 = vunpack.c.l.b16 %v249
  %v825 = vunpack.c.l.b16 %v250
  %v826 = vunpack.c.l.b16 %v251
  %v827 = vunpack.c.l.b16 %v252
  %v828 = vunpack.c.l.b16 %v253
  %v829 = vunpack.c.l.b16 %v254
  %v830 = vunpack.c.l.b16 %v255
  %v831 = vunpack.c.l.b16 %v256
  %v832 = vunpack.c.l.b16 %v257
  %v833 = vunpack.c.l.b16 %v258
  %v834 = vunpack.c.l.b16 %v259
  %v835 = vunpack.c.l.b16 %v260
  %v836 = vunpack.c.l.b16 %v261
  %v837 = vunpack.c.l.b16 %v262
  %v838 = vunpack.c.l.b16 %v263
  %v839 = vunpack.c.l.b16 %v264
  %v840 = vunpack.c.l.b16 %v265
  %v841 = vunpack.c.l.b16 %v266
  %v842 = vunpack.c.l.b16 %v267
  %v843 = vunpack.c.l.b16 %v268
  %v844 = vunpack.c.l.b16 %v269
  %v845 = vunpack.c.l.b16 %v270
  %v846 = vunpack.c.l.b16 %v271
  %v847 = vunpack.c.l.b16 %v272
  %v848 = vunpack.c.l.b16 %v273
  %v849 = vunpack.c.l.b16 %v274
  %v850 = vunpack.c.l.b16 %v275
  %v851 = vunpack.c.l.b16 %v276
  %v852 = vunpack.c.l.b16 %v277
  %v853 = vunpack.c.l.b16 %v278
  %v854 = vunpack.c.l.b16 %v279
  %v855 = vunpack.c.l.b16 %v280
  %v856 = vunpack.c.l.b16 %v281
  %v857 = vunpack.c.l.b16 %v282
  %v858 = vunpack.c.l.b16 %v283
  %v859 = vunpack.c.l.b16 %v284
  %v860 = vpack.c.b16 %v605, %v604
  %v861 = vpack.c.b16 %v607, %v606
  %v862 = vpack.c.b16 %v609, %v608
  %v863 = vpack.c.b16 %v611, %v610
  %v864 = vpack.c.b16 %v613, %v612
  %v865 = vpack.c.b16 %v615, %v614
  %v866 = vpack.c.b16 %v617, %v616
  %v867 = vpack.c.b16 %v619, %v618
  %v868 = vpack.c.b16 %v621, %v620
  %v869 = vpack.c.b16 %v623, %v622
  %v870 = vpack.c.b16 %v625, %v624
  %v871 = vpack.c.b16 %v627, %v626
  %v872 = vpack.c.b16 %v629, %v628
  %v873 = vpack.c.b16 %v631, %v630
  %v874 = vpack.c.b16 %v633, %v632
  %v875 = vpack.c.b16 %v635, %v634
  %v876 = vpack.c.b16 %v637, %v636
  %v877 = vpack.c.b16 %v639, %v638
  %v878 = vpack.c.b16 %v641, %v640
  %v879 = vpack.c.b16 %v643, %v642
  %v880 = vpack.c.b16 %v645, %v644
  %v881 = vpack.c.b16 %v647, %v646
  %v882 = vpack.c.b16 %v649, %v648
  %v883 = vpack.c.b16 %v651, %v650
  %v884 = vpack.c.b16 %v653, %v652
  %v885 = vpack.c.b16 %v655, %v654
  %v886 = vpack.c.b16 %v657, %v656
  %v887 = vpack.c.b16 %v659, %v658
  %v888 = vpack.c.b16 %v661, %v660
  %v889 = vpack.c.b16 %v663, %v662
  %v890 = vpack.c.b16 %v665, %v664
  %v891 = vpack.c.b16 %v667, %v666
  %v892 = vpack.c.b16 %v669, %v668
  %v893 = vpack.c.b16 %v671, %v670
  %v894 = vpack.c.b16 %v673, %v672
  %v895 = vpack.c.b16 %v675, %v674
  %v896 = vpack.c.b16 %v677, %v676
  %v897 = vpack.c.b16 %v679, %v678
  %v898 = vpack.c.b16 %v681, %v680
  %v899 = vpack.c.b16 %v683, %v682
  %v900 = vpack.c.b16 %v685, %v684
  %v901 = vpack.c.b16 %v687, %v686
  %v902 = vpack.c.b16 %v689, %v688
  %v903 = vpack.c.b16 %v691, %v690
  %v904 = vpack.c.b16 %v693, %v692
  %v905 = vpack.c.b16 %v695, %v694
  %v906 = vpack.c.b16 %v697, %v696
  %v907 = vpack.c.b16 %v699, %v698
  %v908 = vpack.c.b16 %v701, %v700
  %v909 = vpack.c.b16 %v703, %v702
  %v910 = vpack.c.b16 %v705, %v704
  %v911 = vpack.c.b16 %v707, %v706
  %v912 = vpack.c.b16 %v709, %v708
  %v913 = vpack.c.b16 %v711, %v710
  %v914 = vpack.c.b16 %v713, %v712
  %v915 = vpack.c.b16 %v715, %v714
  %v916 = vpack.c.b16 %v717, %v716
  %v917 = vpack.c.b16 %v719, %v718
  %v918 = vpack.c.b16 %v721, %v720
  %v919 = vpack.c.b16 %v723, %v722
  %v920 = vpack.c.b16 %v725, %v724
  %v921 = vpack.c.b16 %v727, %v726
  %v922 = vpack.c.b16 %v729, %v728
  %v923 = vpack.c.b16 %v731, %v730
  %v924 = vpack.c.b16 %v733, %v732
  %v925 = vpack.c.b16 %v735, %v734
  %v926 = vpack.c.b16 %v737, %v736
  %v927 = vpack.c.b16 %v739, %v738
  %v928 = vpack.c.b16 %v741, %v740
  %v929 = vpack.c.b16 %v743, %v742
  %v930 = vpack.c.b16 %v745, %v744
  %v931 = vpack.c.b16 %v747, %v746
  %v932 = vpack.c.b16 %v749, %v748
  %v933 = vpack.c.b16 %v751, %v750
  %v934 = vpack.c.b16 %v753, %v752
  %v935 = vpack.c.b16 %v755, %v754
  %v936 = vpack.c.b16 %v757, %v756
  %v937 = vpack.c.b16 %v759, %v758
  %v938 = vpack.c.b16 %v761, %v760
  %v939 = vpack.c.b16 %v763, %v762
  %v940 = vpack.c.b16 %v765, %v764
  %v941 = vpack.c.b16 %v767, %v766
  %v942 = vpack.c.b16 %v769, %v768
  %v943 = vpack.c.b16 %v771, %v770
  %v944 = vpack.c.b16 %v773, %v772
  %v945 = vpack.c.b16 %v775, %v774
  %v946 = vpack.c.b16 %v777, %v776
  %v947 = vpack.c.b16 %v779, %v778
  %v948 = vpack.c.b16 %v781, %v780
  %v949 = vpack.c.b16 %v783, %v782
  %v950 = vpack.c.b16 %v785, %v784
  %v951 = vpack.c.b16 %v787, %v786
  %v952 = vpack.c.b16 %v789, %v788
  %v953 = vpack.c.b16 %v791, %v790
  %v954 = vpack.c.b16 %v793, %v792
  %v955 = vpack.c.b16 %v795, %v794
  %v956 = vpack.c.b16 %v797, %v796
  %v957 = vpack.c.b16 %v799, %v798
  %v958 = vpack.c.b16 %v801, %v800
  %v959 = vpack.c.b16 %v803, %v802
  %v960 = vpack.c.b16 %v805, %v804
  %v961 = vpack.c.b16 %v807, %v806
  %v962 = vpack.c.b16 %v809, %v808
  %v963 = vpack.c.b16 %v811, %v810
  %v964 = vpack.c.b16 %v813, %v812
  %v965 = vpack.c.b16 %v815, %v814
  %v966 = vpack.c.b16 %v817, %v816
  %v967 = vpack.c.b16 %v819, %v818
  %v968 = vpack.c.b16 %v821, %v820
  %v969 = vpack.c.b16 %v823, %v822
  %v970 = vpack.c.b16 %v825, %v824
  %v971 = vpack.c.b16 %v827, %v826
  %v972 = vpack.c.b16 %v829, %v828
  %v973 = vpack.c.b16 %v831, %v830
  %v974 = vpack.c.b16 %v833, %v832
  %v975 = vpack.c.b16 %v835, %v834
  %v976 = vpack.c.b16 %v837, %v836
  %v977 = vpack.c.b16 %v839, %v838
  %v978 = vpack.c.b16 %v841, %v840
  %v979 = vpack.c.b16 %v843, %v842
  %v980 = vpack.c.b16 %v845, %v844
  %v981 = vpack.c.b16 %v847, %v846
  %v982 = vpack.c.b16 %v849, %v848
  %v983 = vpack.c.b16 %v851, %v850
  %v984 = vpack.c.b16 %v853, %v852
  %v985 = vpack.c.b16 %v855, %v854
  %v986 = vpack.c.b16 %v857, %v856
  %v987 = vpack.c.b16 %v859, %v858
  %1116 = vmatprep.subr.bf16.mxu0 0
  %1117 = vmatpush1.bf16.msra.mxu0 %v860
  %1118 = vmatprep.subr.bf16.mxu0 0
  %1119 = vmatpush1.bf16.msra.mxu0 %v861
  %1120 = vmatprep.subr.bf16.mxu0 0
  %1121 = vmatpush1.bf16.msra.mxu0 %v862
  %1122 = vmatprep.subr.bf16.mxu0 0
  %1123 = vmatpush1.bf16.msra.mxu0 %v863
  %1124 = vmatprep.subr.bf16.mxu0 0
  %1125 = vmatpush1.bf16.msra.mxu0 %v864
  %1126 = vmatprep.subr.bf16.mxu0 0
  %1127 = vmatpush1.bf16.msra.mxu0 %v865
  %1128 = vmatprep.subr.bf16.mxu0 0
  %1129 = vmatpush1.bf16.msra.mxu0 %v866
  %1130 = vmatprep.subr.bf16.mxu0 0
  %1131 = vmatpush1.bf16.msra.mxu0 %v867
  %1132 = vmatprep.subr.bf16.mxu0 0
  %1133 = vmatpush1.bf16.msra.mxu0 %v868
  %1134 = vmatprep.subr.bf16.mxu0 0
  %1135 = vmatpush1.bf16.msra.mxu0 %v869
  %1136 = vmatprep.subr.bf16.mxu0 0
  %1137 = vmatpush1.bf16.msra.mxu0 %v870
  %1138 = vmatprep.subr.bf16.mxu0 0
  %1139 = vmatpush1.bf16.msra.mxu0 %v871
  %1140 = vmatprep.subr.bf16.mxu0 0
  %1141 = vmatpush1.bf16.msra.mxu0 %v872
  %1142 = vmatprep.subr.bf16.mxu0 0
  %1143 = vmatpush1.bf16.msra.mxu0 %v873
  %1144 = vmatprep.subr.bf16.mxu0 0
  %1145 = vmatpush1.bf16.msra.mxu0 %v874
  %1146 = vmatprep.subr.bf16.mxu0 0
  %1147 = vmatpush1.bf16.msra.mxu0 %v875
  %1148 = vmatprep.mubr.bf16.mxu0 %v317
  %1149 = vmatmul.mubr.bf16.gmra.mrb[0].mxu0 %v316
  %v1150 = vpop.f32.mrb[0].mxu0
  %v1151 = vadd.f32 %v290, %v1150
  %v1152 = vpop.f32.mrb[0].mxu0
  %v1153 = vpop.f32.mrb[0].mxu0
  %v1154 = vpop.f32.mrb[0].mxu0
  %1155 = vdwg.mxu0
  %1156 = vmatprep.subr.bf16.mxu0 0
  %1157 = vmatpush1.bf16.msra.mxu0 %v876
  %1158 = vmatprep.subr.bf16.mxu0 0
  %1159 = vmatpush1.bf16.msra.mxu0 %v877
  %1160 = vmatprep.subr.bf16.mxu0 0
  %1161 = vmatpush1.bf16.msra.mxu0 %v878
  %1162 = vmatprep.subr.bf16.mxu0 0
  %1163 = vmatpush1.bf16.msra.mxu0 %v879
  %1164 = vmatprep.subr.bf16.mxu0 0
  %1165 = vmatpush1.bf16.msra.mxu0 %v880
  %1166 = vmatprep.subr.bf16.mxu0 0
  %1167 = vmatpush1.bf16.msra.mxu0 %v881
  %1168 = vmatprep.subr.bf16.mxu0 0
  %1169 = vmatpush1.bf16.msra.mxu0 %v882
  %1170 = vmatprep.subr.bf16.mxu0 0
  %1171 = vmatpush1.bf16.msra.mxu0 %v883
  %1172 = vmatprep.subr.bf16.mxu0 0
  %1173 = vmatpush1.bf16.msra.mxu0 %v884
  %1174 = vmatprep.subr.bf16.mxu0 0
  %1175 = vmatpush1.bf16.msra.mxu0 %v885
  %1176 = vmatprep.subr.bf16.mxu0 0
  %1177 = vmatpush1.bf16.msra.mxu0 %v886
  %1178 = vmatprep.subr.bf16.mxu0 0
  %1179 = vmatpush1.bf16.msra.mxu0 %v887
  %1180 = vmatprep.subr.bf16.mxu0 0
  %1181 = vmatpush1.bf16.msra.mxu0 %v888
  %1182 = vmatprep.subr.bf16.mxu0 0
  %1183 = vmatpush1.bf16.msra.mxu0 %v889
  %1184 = vmatprep.subr.bf16.mxu0 0
  %1185 = vmatpush1.bf16.msra.mxu0 %v890
  %1186 = vmatprep.subr.bf16.mxu0 0
  %1187 = vmatpush1.bf16.msra.mxu0 %v891
  %1188 = vmatprep.mubr.bf16.mxu0 %v319
  %1189 = vmatmul.mubr.bf16.gmra.mrb[0].mxu0 %v318
  %v1190 = vpop.f32.mrb[0].mxu0
  %v1191 = vadd.f32 %v1151, %v1190
  %v1192 = vpop.f32.mrb[0].mxu0
  %v1193 = vpop.f32.mrb[0].mxu0
  %v1194 = vpop.f32.mrb[0].mxu0
  %1195 = vdwg.mxu0
  %1196 = vmatprep.subr.bf16.mxu0 0
  %1197 = vmatpush1.bf16.msra.mxu0 %v892
  %1198 = vmatprep.subr.bf16.mxu0 0
  %1199 = vmatpush1.bf16.msra.mxu0 %v893
  %1200 = vmatprep.subr.bf16.mxu0 0
  %1201 = vmatpush1.bf16.msra.mxu0 %v894
  %1202 = vmatprep.subr.bf16.mxu0 0
  %1203 = vmatpush1.bf16.msra.mxu0 %v895
  %1204 = vmatprep.subr.bf16.mxu0 0
  %1205 = vmatpush1.bf16.msra.mxu0 %v896
  %1206 = vmatprep.subr.bf16.mxu0 0
  %1207 = vmatpush1.bf16.msra.mxu0 %v897
  %1208 = vmatprep.subr.bf16.mxu0 0
  %1209 = vmatpush1.bf16.msra.mxu0 %v898
  %1210 = vmatprep.subr.bf16.mxu0 0
  %1211 = vmatpush1.bf16.msra.mxu0 %v899
  %1212 = vmatprep.subr.bf16.mxu0 0
  %1213 = vmatpush1.bf16.msra.mxu0 %v900
  %1214 = vmatprep.subr.bf16.mxu0 0
  %1215 = vmatpush1.bf16.msra.mxu0 %v901
  %1216 = vmatprep.subr.bf16.mxu0 0
  %1217 = vmatpush1.bf16.msra.mxu0 %v902
  %1218 = vmatprep.subr.bf16.mxu0 0
  %1219 = vmatpush1.bf16.msra.mxu0 %v903
  %1220 = vmatprep.subr.bf16.mxu0 0
  %1221 = vmatpush1.bf16.msra.mxu0 %v904
  %1222 = vmatprep.subr.bf16.mxu0 0
  %1223 = vmatpush1.bf16.msra.mxu0 %v905
  %1224 = vmatprep.subr.bf16.mxu0 0
  %1225 = vmatpush1.bf16.msra.mxu0 %v906
  %1226 = vmatprep.subr.bf16.mxu0 0
  %1227 = vmatpush1.bf16.msra.mxu0 %v907
  %1228 = vmatprep.mubr.bf16.mxu0 %v321
  %1229 = vmatmul.mubr.bf16.gmra.mrb[0].mxu0 %v320
  %v1230 = vpop.f32.mrb[0].mxu0
  %v1231 = vadd.f32 %v1191, %v1230
  %v1232 = vpop.f32.mrb[0].mxu0
  %v1233 = vpop.f32.mrb[0].mxu0
  %v1234 = vpop.f32.mrb[0].mxu0
  %1235 = vdwg.mxu0
  %1236 = vmatprep.subr.bf16.mxu0 0
  %1237 = vmatpush1.bf16.msra.mxu0 %v908
  %1238 = vmatprep.subr.bf16.mxu0 0
  %1239 = vmatpush1.bf16.msra.mxu0 %v909
  %1240 = vmatprep.subr.bf16.mxu0 0
  %1241 = vmatpush1.bf16.msra.mxu0 %v910
  %1242 = vmatprep.subr.bf16.mxu0 0
  %1243 = vmatpush1.bf16.msra.mxu0 %v911
  %1244 = vmatprep.subr.bf16.mxu0 0
  %1245 = vmatpush1.bf16.msra.mxu0 %v912
  %1246 = vmatprep.subr.bf16.mxu0 0
  %1247 = vmatpush1.bf16.msra.mxu0 %v913
  %1248 = vmatprep.subr.bf16.mxu0 0
  %1249 = vmatpush1.bf16.msra.mxu0 %v914
  %1250 = vmatprep.subr.bf16.mxu0 0
  %1251 = vmatpush1.bf16.msra.mxu0 %v915
  %1252 = vmatprep.subr.bf16.mxu0 0
  %1253 = vmatpush1.bf16.msra.mxu0 %v916
  %1254 = vmatprep.subr.bf16.mxu0 0
  %1255 = vmatpush1.bf16.msra.mxu0 %v917
  %1256 = vmatprep.subr.bf16.mxu0 0
  %1257 = vmatpush1.bf16.msra.mxu0 %v918
  %1258 = vmatprep.subr.bf16.mxu0 0
  %1259 = vmatpush1.bf16.msra.mxu0 %v919
  %1260 = vmatprep.subr.bf16.mxu0 0
  %1261 = vmatpush1.bf16.msra.mxu0 %v920
  %1262 = vmatprep.subr.bf16.mxu0 0
  %1263 = vmatpush1.bf16.msra.mxu0 %v921
  %1264 = vmatprep.subr.bf16.mxu0 0
  %1265 = vmatpush1.bf16.msra.mxu0 %v922
  %1266 = vmatprep.subr.bf16.mxu0 0
  %1267 = vmatpush1.bf16.msra.mxu0 %v923
  %1268 = vmatprep.mubr.bf16.mxu0 %v323
  %1269 = vmatmul.mubr.bf16.gmra.mrb[0].mxu0 %v322
  %v1270 = vpop.f32.mrb[0].mxu0
  %v1271 = vadd.f32 %v1231, %v1270
  %v1272 = vpop.f32.mrb[0].mxu0
  %v1273 = vpop.f32.mrb[0].mxu0
  %v1274 = vpop.f32.mrb[0].mxu0
  %1275 = vdwg.mxu0
  %1276 = vmatprep.subr.bf16.mxu0 0
  %1277 = vmatpush1.bf16.msra.mxu0 %v924
  %1278 = vmatprep.subr.bf16.mxu0 0
  %1279 = vmatpush1.bf16.msra.mxu0 %v925
  %1280 = vmatprep.subr.bf16.mxu0 0
  %1281 = vmatpush1.bf16.msra.mxu0 %v926
  %1282 = vmatprep.subr.bf16.mxu0 0
  %1283 = vmatpush1.bf16.msra.mxu0 %v927
  %1284 = vmatprep.subr.bf16.mxu0 0
  %1285 = vmatpush1.bf16.msra.mxu0 %v928
  %1286 = vmatprep.subr.bf16.mxu0 0
  %1287 = vmatpush1.bf16.msra.mxu0 %v929
  %1288 = vmatprep.subr.bf16.mxu0 0
  %1289 = vmatpush1.bf16.msra.mxu0 %v930
  %1290 = vmatprep.subr.bf16.mxu0 0
  %1291 = vmatpush1.bf16.msra.mxu0 %v931
  %1292 = vmatprep.subr.bf16.mxu0 0
  %1293 = vmatpush1.bf16.msra.mxu0 %v932
  %1294 = vmatprep.subr.bf16.mxu0 0
  %1295 = vmatpush1.bf16.msra.mxu0 %v933
  %1296 = vmatprep.subr.bf16.mxu0 0
  %1297 = vmatpush1.bf16.msra.mxu0 %v934
  %1298 = vmatprep.subr.bf16.mxu0 0
  %1299 = vmatpush1.bf16.msra.mxu0 %v935
  %1300 = vmatprep.subr.bf16.mxu0 0
  %1301 = vmatpush1.bf16.msra.mxu0 %v936
  %1302 = vmatprep.subr.bf16.mxu0 0
  %1303 = vmatpush1.bf16.msra.mxu0 %v937
  %1304 = vmatprep.subr.bf16.mxu0 0
  %1305 = vmatpush1.bf16.msra.mxu0 %v938
  %1306 = vmatprep.subr.bf16.mxu0 0
  %1307 = vmatpush1.bf16.msra.mxu0 %v939
  %1308 = vmatprep.mubr.bf16.mxu0 %v325
  %1309 = vmatmul.mubr.bf16.gmra.mrb[0].mxu0 %v324
  %v1310 = vpop.f32.mrb[0].mxu0
  %v1311 = vadd.f32 %v1271, %v1310
  %v1312 = vpop.f32.mrb[0].mxu0
  %v1313 = vpop.f32.mrb[0].mxu0
  %v1314 = vpop.f32.mrb[0].mxu0
  %1315 = vdwg.mxu0
  %1316 = vmatprep.subr.bf16.mxu0 0
  %1317 = vmatpush1.bf16.msra.mxu0 %v940
  %1318 = vmatprep.subr.bf16.mxu0 0
  %1319 = vmatpush1.bf16.msra.mxu0 %v941
  %1320 = vmatprep.subr.bf16.mxu0 0
  %1321 = vmatpush1.bf16.msra.mxu0 %v942
  %1322 = vmatprep.subr.bf16.mxu0 0
  %1323 = vmatpush1.bf16.msra.mxu0 %v943
  %1324 = vmatprep.subr.bf16.mxu0 0
  %1325 = vmatpush1.bf16.msra.mxu0 %v944
  %1326 = vmatprep.subr.bf16.mxu0 0
  %1327 = vmatpush1.bf16.msra.mxu0 %v945
  %1328 = vmatprep.subr.bf16.mxu0 0
  %1329 = vmatpush1.bf16.msra.mxu0 %v946
  %1330 = vmatprep.subr.bf16.mxu0 0
  %1331 = vmatpush1.bf16.msra.mxu0 %v947
  %1332 = vmatprep.subr.bf16.mxu0 0
  %1333 = vmatpush1.bf16.msra.mxu0 %v948
  %1334 = vmatprep.subr.bf16.mxu0 0
  %1335 = vmatpush1.bf16.msra.mxu0 %v949
  %1336 = vmatprep.subr.bf16.mxu0 0
  %1337 = vmatpush1.bf16.msra.mxu0 %v950
  %1338 = vmatprep.subr.bf16.mxu0 0
  %1339 = vmatpush1.bf16.msra.mxu0 %v951
  %1340 = vmatprep.subr.bf16.mxu0 0
  %1341 = vmatpush1.bf16.msra.mxu0 %v952
  %1342 = vmatprep.subr.bf16.mxu0 0
  %1343 = vmatpush1.bf16.msra.mxu0 %v953
  %1344 = vmatprep.subr.bf16.mxu0 0
  %1345 = vmatpush1.bf16.msra.mxu0 %v954
  %1346 = vmatprep.subr.bf16.mxu0 0
  %1347 = vmatpush1.bf16.msra.mxu0 %v955
  %1348 = vmatprep.mubr.bf16.mxu0 %v327
  %1349 = vmatmul.mubr.bf16.gmra.mrb[0].mxu0 %v326
  %v1350 = vpop.f32.mrb[0].mxu0
  %v1351 = vadd.f32 %v1311, %v1350
  %v1352 = vpop.f32.mrb[0].mxu0
  %v1353 = vpop.f32.mrb[0].mxu0
  %v1354 = vpop.f32.mrb[0].mxu0
  %1355 = vdwg.mxu0
  %1356 = vmatprep.subr.bf16.mxu0 0
  %1357 = vmatpush1.bf16.msra.mxu0 %v956
  %1358 = vmatprep.subr.bf16.mxu0 0
  %1359 = vmatpush1.bf16.msra.mxu0 %v957
  %1360 = vmatprep.subr.bf16.mxu0 0
  %1361 = vmatpush1.bf16.msra.mxu0 %v958
  %1362 = vmatprep.subr.bf16.mxu0 0
  %1363 = vmatpush1.bf16.msra.mxu0 %v959
  %1364 = vmatprep.subr.bf16.mxu0 0
  %1365 = vmatpush1.bf16.msra.mxu0 %v960
  %1366 = vmatprep.subr.bf16.mxu0 0
  %1367 = vmatpush1.bf16.msra.mxu0 %v961
  %1368 = vmatprep.subr.bf16.mxu0 0
  %1369 = vmatpush1.bf16.msra.mxu0 %v962
  %1370 = vmatprep.subr.bf16.mxu0 0
  %1371 = vmatpush1.bf16.msra.mxu0 %v963
  %1372 = vmatprep.subr.bf16.mxu0 0
  %1373 = vmatpush1.bf16.msra.mxu0 %v964
  %1374 = vmatprep.subr.bf16.mxu0 0
  %1375 = vmatpush1.bf16.msra.mxu0 %v965
  %1376 = vmatprep.subr.bf16.mxu0 0
  %1377 = vmatpush1.bf16.msra.mxu0 %v966
  %1378 = vmatprep.subr.bf16.mxu0 0
  %1379 = vmatpush1.bf16.msra.mxu0 %v967
  %1380 = vmatprep.subr.bf16.mxu0 0
  %1381 = vmatpush1.bf16.msra.mxu0 %v968
  %1382 = vmatprep.subr.bf16.mxu0 0
  %1383 = vmatpush1.bf16.msra.mxu0 %v969
  %1384 = vmatprep.subr.bf16.mxu0 0
  %1385 = vmatpush1.bf16.msra.mxu0 %v970
  %1386 = vmatprep.subr.bf16.mxu0 0
  %1387 = vmatpush1.bf16.msra.mxu0 %v971
  %1388 = vmatprep.mubr.bf16.mxu0 %v329
  %1389 = vmatmul.mubr.bf16.gmra.mrb[0].mxu0 %v328
  %v1390 = vpop.f32.mrb[0].mxu0
  %v1391 = vadd.f32 %v1351, %v1390
  %v1392 = vpop.f32.mrb[0].mxu0
  %v1393 = vpop.f32.mrb[0].mxu0
  %v1394 = vpop.f32.mrb[0].mxu0
  %1395 = vdwg.mxu0
  %1396 = vmatprep.subr.bf16.mxu0 0
  %1397 = vmatpush1.bf16.msra.mxu0 %v972
  %1398 = vmatprep.subr.bf16.mxu0 0
  %1399 = vmatpush1.bf16.msra.mxu0 %v973
  %1400 = vmatprep.subr.bf16.mxu0 0
  %1401 = vmatpush1.bf16.msra.mxu0 %v974
  %1402 = vmatprep.subr.bf16.mxu0 0
  %1403 = vmatpush1.bf16.msra.mxu0 %v975
  %1404 = vmatprep.subr.bf16.mxu0 0
  %1405 = vmatpush1.bf16.msra.mxu0 %v976
  %1406 = vmatprep.subr.bf16.mxu0 0
  %1407 = vmatpush1.bf16.msra.mxu0 %v977
  %1408 = vmatprep.subr.bf16.mxu0 0
  %1409 = vmatpush1.bf16.msra.mxu0 %v978
  %1410 = vmatprep.subr.bf16.mxu0 0
  %1411 = vmatpush1.bf16.msra.mxu0 %v979
  %1412 = vmatprep.subr.bf16.mxu0 0
  %1413 = vmatpush1.bf16.msra.mxu0 %v980
  %1414 = vmatprep.subr.bf16.mxu0 0
  %1415 = vmatpush1.bf16.msra.mxu0 %v981
  %1416 = vmatprep.subr.bf16.mxu0 0
  %1417 = vmatpush1.bf16.msra.mxu0 %v982
  %1418 = vmatprep.subr.bf16.mxu0 0
  %1419 = vmatpush1.bf16.msra.mxu0 %v983
  %1420 = vmatprep.subr.bf16.mxu0 0
  %1421 = vmatpush1.bf16.msra.mxu0 %v984
  %1422 = vmatprep.subr.bf16.mxu0 0
  %1423 = vmatpush1.bf16.msra.mxu0 %v985
  %1424 = vmatprep.subr.bf16.mxu0 0
  %1425 = vmatpush1.bf16.msra.mxu0 %v986
  %1426 = vmatprep.subr.bf16.mxu0 0
  %1427 = vmatpush1.bf16.msra.mxu0 %v987
  %1428 = vmatprep.mubr.bf16.mxu0 %v331
  %1429 = vmatmul.mubr.bf16.gmra.mrb[0].mxu0 %v330
  %v1430 = vpop.f32.mrb[0].mxu0
  %v1431 = vadd.f32 %v1391, %v1430
  %v1432 = vpop.f32.mrb[0].mxu0
  %v1433 = vpop.f32.mrb[0].mxu0
  %v1434 = vpop.f32.mrb[0].mxu0
  %1435 = vdwg.mxu0
  %vm1436 = vcmask 523264
  %v1437 = vsel %vm1436, %v1431, 0.0
  %v1438 = vrot.slane %v1437, 4
  %v1439 = vadd.f32 %v1437, %v1438
  %v1440 = vrot.slane %v1439, 2
  %v1441 = vadd.f32 %v1439, %v1440
  %v1442 = vrot.slane %v1441, 1
  %v1443 = vadd.f32 %v1441, %v1442
  %v1444 = vmul.f32 %v1431, %v1431
  %v1445 = vsel %vm1436, %v1444, 0.0
  %v1446 = vrot.slane %v1445, 4
  %v1447 = vadd.f32 %v1445, %v1446
  %v1448 = vrot.slane %v1447, 2
  %v1449 = vadd.f32 %v1447, %v1448
  %v1450 = vrot.slane %v1449, 1
  %v1451 = vadd.f32 %v1449, %v1450
  %1453 = vrot.lane.b32.xlu0 %v1443, 112
  %v1454 = vpop.permute.xlu0 %1453
  %v1456 = vadd.f32 %v1443, %v1454
  %1457 = vrot.lane.b32.xlu0 %v1443, 96
  %v1458 = vpop.permute.xlu0 %1457
  %v1460 = vadd.f32 %v1456, %v1458
  %1461 = vrot.lane.b32.xlu0 %v1443, 80
  %v1462 = vpop.permute.xlu0 %1461
  %v1464 = vadd.f32 %v1460, %v1462
  %1466 = vrot.lane.b32.xlu0 %v1451, 112
  %v1467 = vpop.permute.xlu0 %1466
  %v1469 = vadd.f32 %v1451, %v1467
  %1470 = vrot.lane.b32.xlu0 %v1451, 96
  %v1471 = vpop.permute.xlu0 %1470
  %v1473 = vadd.f32 %v1469, %v1471
  %1474 = vrot.lane.b32.xlu0 %v1451, 80
  %v1475 = vpop.permute.xlu0 %1474
  %v1477 = vadd.f32 %v1473, %v1475
  %v1478 = vrcp.pop 32.0
  %v1479 = vmul.f32 %v1464, %v1478
  %v1480 = vmul.f32 %v1477, %v1478
  %v1481 = vmul.f32 %v1479, %v1479
  %v1482 = vsub.f32 %v1480, %v1481
  %v1483 = vld [vmem:[%s3] sm:$0x1]
  %v1484 = vadd.f32 %v1482, 1e-05
  %v1485 = vrsqrt.pop %v1484
  %v1486 = vmul.f32 %v1483, %v1485
  %v1487 = vld [vmem:[%s4] sm:$0x1]
  %v1488 = vmul.f32 %v1479, %v1486
  %v1489 = vsub.f32 %v1487, %v1488
  %v1491 = vlaneseq
  %v1492 = vshrl.u32 %v1491, 7
  %v1493 = vsub.s32 0, %v1492
  %v1494 = vrot.slane %v1486, %v1493
  %1495 = vrot.lane.b32.xlu0 %v1494, 16
  %v1496 = vpop.permute.xlu0 %1495
  %1498 = vrot.lane.b32.xlu0 %v1494, 32
  %v1499 = vpop.permute.xlu0 %1498
  %1501 = vrot.lane.b32.xlu0 %v1494, 48
  %v1502 = vpop.permute.xlu0 %1501
  %vm1504 = vcmask 130048
  %v1505 = vsel %vm1504, %v1486, %v1496
  %vm1506 = vcmask 261120
  %v1507 = vsel %vm1506, %v1505, %v1499
  %vm1508 = vcmask 392192
  %v1509 = vsel %vm1508, %v1507, %v1502
  %v1511 = vlaneseq
  %v1512 = vshrl.u32 %v1511, 7
  %v1513 = vsub.s32 0, %v1512
  %v1514 = vrot.slane %v1489, %v1513
  %1515 = vrot.lane.b32.xlu0 %v1514, 16
  %v1516 = vpop.permute.xlu0 %1515
  %1518 = vrot.lane.b32.xlu0 %v1514, 32
  %v1519 = vpop.permute.xlu0 %1518
  %1521 = vrot.lane.b32.xlu0 %v1514, 48
  %v1522 = vpop.permute.xlu0 %1521
  %v1524 = vsel %vm1504, %v1489, %v1516
  %v1525 = vsel %vm1506, %v1524, %v1519
  %v1526 = vsel %vm1508, %v1525, %v1522
  %v1527 = vlaneseq
  %v1528 = vshrl.u32 %v1527, 7
  %v1529 = vsub.s32 0, %v1528
  %v1530 = vrot.slane %v1509, %v1529
  %v1531 = vmul.f32 %v1431, %v1530
  %v1532 = vlaneseq
  %v1533 = vshrl.u32 %v1532, 7
  %v1534 = vsub.s32 0, %v1533
  %v1535 = vrot.slane %v1526, %v1534
  %v1536 = vadd.f32 %v1531, %v1535
  %v1537 = vmax.f32 %v1536, 0.0
  %1538 = vst.msk [vmem:[%s5] sm:$0xff] %vm1436, %v1537
  // Predicated region
  $region22: #{gd_decoder_forward.15} parent=0 // pred_check
    _
  $region23: #{gd_decoder_forward.15} parent=0 // pred_check_branch
    %1540 = sbr.rel (0) target = $region25
  $region24: #{gd_decoder_forward.15} parent=0 // pred_region
    _
  $region25: #{gd_decoder_forward.15} parent=0 // pred_fallthru
    _
  // Predicated region
  $region26: #{gd_decoder_forward.15} parent=0 // pred_check
    _
  $region27: #{gd_decoder_forward.15} parent=0 // pred_check_branch
    %1542 = sbr.rel (0) target = $region29
  $region28: #{gd_decoder_forward.15} parent=0 // pred_region
    _
  $region29: #{gd_decoder_forward.15} parent=0 // pred_fallthru
    _

// kernel: gd_decoder_forward.16
$region0: #{gd_decoder_forward.16}
  #allocation0 [shape = 'u32[]', space=smem, size = 0x4, offset = 0x4, fixed_abs, tag = 'smem constant byte address 0x4 - core index']
  #allocation1 [shape = 'u32[144,128]{1,0:T(1,128)}', space=vmem, size = 0x12000, scoped, tag = 'internal scratch']
  %s0 = inlined_call_operand.vmem [shape: bf16[32,360], index: 0, kind: input, shape index: {}]
  %s1 = inlined_call_operand.vmem [shape: bf16[360,64], index: 1, kind: input, shape index: {}]
  %s2 = inlined_call_operand.vmem [shape: f32[1,64], index: 2, kind: input, shape index: {}]
  %s3 = inlined_call_operand.vmem [shape: bf16[64,16], index: 3, kind: input, shape index: {}]
  %s4 = inlined_call_operand.vmem [shape: f32[1,16], index: 4, kind: input, shape index: {}]
  %s5 = inlined_call_operand.vmem [shape: f32[32,16], index: 5, kind: output, shape index: {}]
  %s6 = sld [smem:[#allocation0]]
  $region30: #{gd_decoder_forward.16} parent=0
    _
  %s8 = ssub.s32 1, %s6
  %s9 = scalar_select 0, %s8, %s6
  // Predicated region
  $region2: #{gd_decoder_forward.16} parent=0 // pred_check
    _
  $region3: #{gd_decoder_forward.16} parent=0 // pred_check_branch
    %11 = sbr.rel (0) target = $region5
  $region4: #{gd_decoder_forward.16} parent=0 // pred_region
    _
  $region5: #{gd_decoder_forward.16} parent=0 // pred_fallthru
    _
  // Predicated region
  $region6: #{gd_decoder_forward.16} parent=0 // pred_check
    _
  $region7: #{gd_decoder_forward.16} parent=0 // pred_check_branch
    %13 = sbr.rel (0) target = $region9
  $region8: #{gd_decoder_forward.16} parent=0 // pred_region
    _
  $region9: #{gd_decoder_forward.16} parent=0 // pred_fallthru
    _
  // Predicated region
  $region10: #{gd_decoder_forward.16} parent=0 // pred_check
    _
  $region11: #{gd_decoder_forward.16} parent=0 // pred_check_branch
    %15 = sbr.rel (0) target = $region13
  $region12: #{gd_decoder_forward.16} parent=0 // pred_region
    _
  $region13: #{gd_decoder_forward.16} parent=0 // pred_fallthru
    _
  // Predicated region
  $region14: #{gd_decoder_forward.16} parent=0 // pred_check
    _
  $region15: #{gd_decoder_forward.16} parent=0 // pred_check_branch
    %17 = sbr.rel (0) target = $region17
  $region16: #{gd_decoder_forward.16} parent=0 // pred_region
    _
  $region17: #{gd_decoder_forward.16} parent=0 // pred_fallthru
    _
  // Predicated region
  $region18: #{gd_decoder_forward.16} parent=0 // pred_check
    _
  $region19: #{gd_decoder_forward.16} parent=0 // pred_check_branch
    %19 = sbr.rel (0) target = $region21
  $region20: #{gd_decoder_forward.16} parent=0 // pred_region
    _
  $region21: #{gd_decoder_forward.16} parent=0 // pred_fallthru
    _
  %v21 = vld [vmem:[%s0] sm:$0xff]
  %v22 = vld [vmem:[%s0 + $0x8] sm:$0xf]
  %v23 = vld [vmem:[%s0 + $0xc] sm:$0xff]
  %v24 = vld [vmem:[%s0 + $0x14] sm:$0xf]
  %v25 = vld [vmem:[%s0 + $0x18] sm:$0xff]
  %v26 = vld [vmem:[%s0 + $0x20] sm:$0xf]
  %v27 = vld [vmem:[%s0 + $0x24] sm:$0xff]
  %v28 = vld [vmem:[%s0 + $0x2c] sm:$0xf]
  %v29 = vld [vmem:[%s1] sm:$0xf]
  %v30 = vld [vmem:[%s1 + $0x4] sm:$0xf]
  %v31 = vld [vmem:[%s1 + $0x8] sm:$0xf]
  %v32 = vld [vmem:[%s1 + $0xc] sm:$0xf]
  %v33 = vld [vmem:[%s1 + $0x10] sm:$0xf]
  %v34 = vld [vmem:[%s1 + $0x14] sm:$0xf]
  %v35 = vld [vmem:[%s1 + $0x18] sm:$0xf]
  %v36 = vld [vmem:[%s1 + $0x1c] sm:$0xf]
  %v37 = vld [vmem:[%s1 + $0x20] sm:$0xf]
  %v38 = vld [vmem:[%s1 + $0x24] sm:$0xf]
  %v39 = vld [vmem:[%s1 + $0x28] sm:$0xf]
  %v40 = vld [vmem:[%s1 + $0x2c] sm:$0xf]
  %v41 = vld [vmem:[%s1 + $0x30] sm:$0xf]
  %v42 = vld [vmem:[%s1 + $0x34] sm:$0xf]
  %v43 = vld [vmem:[%s1 + $0x38] sm:$0xf]
  %v44 = vld [vmem:[%s1 + $0x3c] sm:$0xf]
  %v45 = vld [vmem:[%s1 + $0x40] sm:$0xf]
  %v46 = vld [vmem:[%s1 + $0x44] sm:$0xf]
  %v47 = vld [vmem:[%s1 + $0x48] sm:$0xf]
  %v48 = vld [vmem:[%s1 + $0x4c] sm:$0xf]
  %v49 = vld [vmem:[%s1 + $0x50] sm:$0xf]
  %v50 = vld [vmem:[%s1 + $0x54] sm:$0xf]
  %v51 = vld [vmem:[%s1 + $0x58] sm:$0xf]
  %v52 = vld [vmem:[%s1 + $0x5c] sm:$0xf]
  %v53 = vld [vmem:[%s1 + $0x60] sm:$0xf]
  %v54 = vld [vmem:[%s1 + $0x64] sm:$0xf]
  %v55 = vld [vmem:[%s1 + $0x68] sm:$0xf]
  %v56 = vld [vmem:[%s1 + $0x6c] sm:$0xf]
  %v57 = vld [vmem:[%s1 + $0x70] sm:$0xf]
  %v58 = vld [vmem:[%s1 + $0x74] sm:$0xf]
  %v59 = vld [vmem:[%s1 + $0x78] sm:$0xf]
  %v60 = vld [vmem:[%s1 + $0x7c] sm:$0xf]
  %v61 = vld [vmem:[%s1 + $0x80] sm:$0xf]
  %v62 = vld [vmem:[%s1 + $0x84] sm:$0xf]
  %v63 = vld [vmem:[%s1 + $0x88] sm:$0xf]
  %v64 = vld [vmem:[%s1 + $0x8c] sm:$0xf]
  %v65 = vld [vmem:[%s1 + $0x90] sm:$0xf]
  %v66 = vld [vmem:[%s1 + $0x94] sm:$0xf]
  %v67 = vld [vmem:[%s1 + $0x98] sm:$0xf]
  %v68 = vld [vmem:[%s1 + $0x9c] sm:$0xf]
  %v69 = vld [vmem:[%s1 + $0xa0] sm:$0xf]
  %v70 = vld [vmem:[%s1 + $0xa4] sm:$0xf]
  %v71 = vld [vmem:[%s1 + $0xa8] sm:$0xf]
  %v72 = vld [vmem:[%s1 + $0xac] sm:$0xf]
  %v73 = vld [vmem:[%s1 + $0xb0] sm:$0xf]
  %v74 = vld [vmem:[%s2] sm:$0x1]
  %v76 = vlaneseq
  %v77 = vshrl.u32 %v76, 7
  %v78 = vsub.s32 0, %v77
  %v79 = vrot.slane %v74, %v78
  %v89 = vunpack.c.l.b16 %v21
  %v90 = vunpack.c.h.b16 %v21
  %v91 = vunpack.c.l.b16 %v22
  %v92 = vunpack.c.l.b16 %v23
  %v93 = vunpack.c.h.b16 %v23
  %v94 = vunpack.c.l.b16 %v24
  %v95 = vunpack.c.l.b16 %v25
  %v96 = vunpack.c.h.b16 %v25
  %v97 = vunpack.c.l.b16 %v26
  %v98 = vunpack.c.l.b16 %v27
  %v99 = vunpack.c.h.b16 %v27
  %v100 = vunpack.c.l.b16 %v28
  %v101 = vpack.c.b16 %v92, %v89
  %v102 = vpack.c.b16 %v93, %v90
  %v103 = vpack.c.b16 %v94, %v91
  %v104 = vpack.c.b16 %v98, %v95
  %v105 = vpack.c.b16 %v99, %v96
  %v106 = vpack.c.b16 %v100, %v97
  %v156 = vunpack.c.l.b16 %v29
  %v157 = vunpack.c.l.b16 %v30
  %v158 = vunpack.c.l.b16 %v31
  %v159 = vunpack.c.l.b16 %v32
  %v160 = vunpack.c.l.b16 %v33
  %v161 = vunpack.c.l.b16 %v34
  %v162 = vunpack.c.l.b16 %v35
  %v163 = vunpack.c.l.b16 %v36
  %v164 = vunpack.c.l.b16 %v37
  %v165 = vunpack.c.l.b16 %v38
  %v166 = vunpack.c.l.b16 %v39
  %v167 = vunpack.c.l.b16 %v40
  %v168 = vunpack.c.l.b16 %v41
  %v169 = vunpack.c.l.b16 %v42
  %v170 = vunpack.c.l.b16 %v43
  %v171 = vunpack.c.l.b16 %v44
  %v172 = vunpack.c.l.b16 %v45
  %v173 = vunpack.c.l.b16 %v46
  %v174 = vunpack.c.l.b16 %v47
  %v175 = vunpack.c.l.b16 %v48
  %v176 = vunpack.c.l.b16 %v49
  %v177 = vunpack.c.l.b16 %v50
  %v178 = vunpack.c.l.b16 %v51
  %v179 = vunpack.c.l.b16 %v52
  %v180 = vunpack.c.l.b16 %v53
  %v181 = vunpack.c.l.b16 %v54
  %v182 = vunpack.c.l.b16 %v55
  %v183 = vunpack.c.l.b16 %v56
  %v184 = vunpack.c.l.b16 %v57
  %v185 = vunpack.c.l.b16 %v58
  %v186 = vunpack.c.l.b16 %v59
  %v187 = vunpack.c.l.b16 %v60
  %v188 = vunpack.c.l.b16 %v61
  %v189 = vunpack.c.l.b16 %v62
  %v190 = vunpack.c.l.b16 %v63
  %v191 = vunpack.c.l.b16 %v64
  %v192 = vunpack.c.l.b16 %v65
  %v193 = vunpack.c.l.b16 %v66
  %v194 = vunpack.c.l.b16 %v67
  %v195 = vunpack.c.l.b16 %v68
  %v196 = vunpack.c.l.b16 %v69
  %v197 = vunpack.c.l.b16 %v70
  %v198 = vunpack.c.l.b16 %v71
  %v199 = vunpack.c.l.b16 %v72
  %v200 = vunpack.c.l.b16 %v73
  %v201 = vpack.c.b16 %v157, %v156
  %v202 = vpack.c.b16 %v159, %v158
  %v203 = vpack.c.b16 %v161, %v160
  %v204 = vpack.c.b16 %v163, %v162
  %v205 = vpack.c.b16 %v165, %v164
  %v206 = vpack.c.b16 %v167, %v166
  %v207 = vpack.c.b16 %v169, %v168
  %v208 = vpack.c.b16 %v171, %v170
  %v209 = vpack.c.b16 %v173, %v172
  %v210 = vpack.c.b16 %v175, %v174
  %v211 = vpack.c.b16 %v177, %v176
  %v212 = vpack.c.b16 %v179, %v178
  %v213 = vpack.c.b16 %v181, %v180
  %v214 = vpack.c.b16 %v183, %v182
  %v215 = vpack.c.b16 %v185, %v184
  %v216 = vpack.c.b16 %v187, %v186
  %v217 = vpack.c.b16 %v189, %v188
  %v218 = vpack.c.b16 %v191, %v190
  %v219 = vpack.c.b16 %v193, %v192
  %v220 = vpack.c.b16 %v195, %v194
  %v221 = vpack.c.b16 %v197, %v196
  %v222 = vpack.c.b16 %v199, %v198
  %v223 = vpack.c.b16 %v200, %v200
  %vm246 = vcmask 850944
  %v248 = vsel %vm246, %v103, 0
  %v251 = vsel %vm246, %v106, 0
  %vm253 = vcmask 1043456
  %v255 = vsel %vm253, %v223, 0
  %257 = vmatprep.subr.bf16.mxu0 0
  %258 = vmatpush1.bf16.msra.mxu0 %v201
  %259 = vmatprep.subr.bf16.mxu0 0
  %260 = vmatpush1.bf16.msra.mxu0 %v202
  %261 = vmatprep.subr.bf16.mxu0 0
  %262 = vmatpush1.bf16.msra.mxu0 %v203
  %263 = vmatprep.subr.bf16.mxu0 0
  %264 = vmatpush1.bf16.msra.mxu0 %v204
  %265 = vmatprep.subr.bf16.mxu0 0
  %266 = vmatpush1.bf16.msra.mxu0 %v205
  %267 = vmatprep.subr.bf16.mxu0 0
  %268 = vmatpush1.bf16.msra.mxu0 %v206
  %269 = vmatprep.subr.bf16.mxu0 0
  %270 = vmatpush1.bf16.msra.mxu0 %v207
  %271 = vmatprep.subr.bf16.mxu0 0
  %272 = vmatpush1.bf16.msra.mxu0 %v208
  %273 = vmatprep.subr.bf16.mxu0 0
  %274 = vmatpush1.bf16.msra.mxu0 %v209
  %275 = vmatprep.subr.bf16.mxu0 0
  %276 = vmatpush1.bf16.msra.mxu0 %v210
  %277 = vmatprep.subr.bf16.mxu0 0
  %278 = vmatpush1.bf16.msra.mxu0 %v211
  %279 = vmatprep.subr.bf16.mxu0 0
  %280 = vmatpush1.bf16.msra.mxu0 %v212
  %281 = vmatprep.subr.bf16.mxu0 0
  %282 = vmatpush1.bf16.msra.mxu0 %v213
  %283 = vmatprep.subr.bf16.mxu0 0
  %284 = vmatpush1.bf16.msra.mxu0 %v214
  %285 = vmatprep.subr.bf16.mxu0 0
  %286 = vmatpush1.bf16.msra.mxu0 %v215
  %287 = vmatprep.subr.bf16.mxu0 0
  %288 = vmatpush1.bf16.msra.mxu0 %v216
  %289 = vmatprep.mubr.bf16.mxu0 %v102
  %290 = vmatmul.mubr.bf16.gmra.mrb[0].mxu0 %v101
  %v291 = vpop.f32.mrb[0].mxu0
  %v292 = vadd.f32 %v79, %v291
  %v293 = vpop.f32.mrb[0].mxu0
  %v294 = vpop.f32.mrb[0].mxu0
  %v295 = vadd.f32 %v79, %v294
  %v296 = vpop.f32.mrb[0].mxu0
  %297 = vmatprep.mubr.bf16.mxu0 %v105
  %298 = vmatmul.mubr.bf16.gmra.mrb[0].mxu0 %v104
  %v299 = vpop.f32.mrb[0].mxu0
  %v300 = vadd.f32 %v79, %v299
  %v301 = vpop.f32.mrb[0].mxu0
  %v302 = vpop.f32.mrb[0].mxu0
  %v303 = vadd.f32 %v79, %v302
  %v304 = vpop.f32.mrb[0].mxu0
  %305 = vdwg.mxu0
  %306 = vmatprep.subr.bf16.mxu0 0
  %307 = vmatpush1.bf16.msra.mxu0 %v217
  %308 = vmatprep.subr.bf16.mxu0 0
  %309 = vmatpush1.bf16.msra.mxu0 %v218
  %310 = vmatprep.subr.bf16.mxu0 0
  %311 = vmatpush1.bf16.msra.mxu0 %v219
  %312 = vmatprep.subr.bf16.mxu0 0
  %313 = vmatpush1.bf16.msra.mxu0 %v220
  %314 = vmatprep.subr.bf16.mxu0 0
  %315 = vmatpush1.bf16.msra.mxu0 %v221
  %316 = vmatprep.subr.bf16.mxu0 0
  %317 = vmatpush1.bf16.msra.mxu0 %v222
  %318 = vmatprep.subr.bf16.mxu0 0
  %319 = vmatpush1.bf16.msra.mxu0 %v255
  %320 = vmatprep.subr.bf16.mxu0 0
  %321 = vmatpush1.bf16.msra.mxu0 0
  %322 = vmatprep.subr.bf16.mxu0 0
  %323 = vmatpush1.bf16.msra.mxu0 0
  %324 = vmatprep.subr.bf16.mxu0 0
  %325 = vmatpush1.bf16.msra.mxu0 0
  %326 = vmatprep.subr.bf16.mxu0 0
  %327 = vmatpush1.bf16.msra.mxu0 0
  %328 = vmatprep.subr.bf16.mxu0 0
  %329 = vmatpush1.bf16.msra.mxu0 0
  %330 = vmatprep.subr.bf16.mxu0 0
  %331 = vmatpush1.bf16.msra.mxu0 0
  %332 = vmatprep.subr.bf16.mxu0 0
  %333 = vmatpush1.bf16.msra.mxu0 0
  %334 = vmatprep.subr.bf16.mxu0 0
  %335 = vmatpush1.bf16.msra.mxu0 0
  %336 = vmatprep.subr.bf16.mxu0 0
  %337 = vmatpush1.bf16.msra.mxu0 0
  %338 = vmatprep.mubr.bf16.mxu0 0
  %339 = vmatmul.mubr.bf16.gmra.mrb[0].mxu0 %v248
  %v340 = vpop.f32.mrb[0].mxu0
  %v341 = vadd.f32 %v292, %v340
  %v342 = vpop.f32.mrb[0].mxu0
  %v343 = vpop.f32.mrb[0].mxu0
  %v344 = vadd.f32 %v295, %v343
  %v345 = vpop.f32.mrb[0].mxu0
  %346 = vmatprep.mubr.bf16.mxu0 0
  %347 = vmatmul.mubr.bf16.gmra.mrb[0].mxu0 %v251
  %v348 = vpop.f32.mrb[0].mxu0
  %v349 = vadd.f32 %v300, %v348
  %v350 = vpop.f32.mrb[0].mxu0
  %v351 = vpop.f32.mrb[0].mxu0
  %v352 = vadd.f32 %v303, %v351
  %v353 = vpop.f32.mrb[0].mxu0
  %354 = vdwg.mxu0
  %v355 = vpack.c.bf16 %v344, %v341
  %v356 = vpack.c.bf16 %v352, %v349
  %v357 = vld [vmem:[%s3] sm:$0xf]
  %v358 = vld [vmem:[%s3 + $0x4] sm:$0xf]
  %v359 = vld [vmem:[%s3 + $0x8] sm:$0xf]
  %v360 = vld [vmem:[%s3 + $0xc] sm:$0xf]
  %v361 = vld [vmem:[%s3 + $0x10] sm:$0xf]
  %v362 = vld [vmem:[%s3 + $0x14] sm:$0xf]
  %v363 = vld [vmem:[%s3 + $0x18] sm:$0xf]
  %v364 = vld [vmem:[%s3 + $0x1c] sm:$0xf]
  %v365 = vld [vmem:[%s4] sm:$0x1]
  %v367 = vlaneseq
  %v368 = vshrl.u32 %v367, 7
  %v369 = vsub.s32 0, %v368
  %v370 = vrot.slane %v365, %v369
  %v380 = vunpack.c.l.b16 %v357
  %v381 = vunpack.c.l.b16 %v358
  %v382 = vunpack.c.l.b16 %v359
  %v383 = vunpack.c.l.b16 %v360
  %v384 = vunpack.c.l.b16 %v361
  %v385 = vunpack.c.l.b16 %v362
  %v386 = vunpack.c.l.b16 %v363
  %v387 = vunpack.c.l.b16 %v364
  %v388 = vpack.c.b16 %v381, %v380
  %v389 = vpack.c.b16 %v383, %v382
  %v390 = vpack.c.b16 %v385, %v384
  %v391 = vpack.c.b16 %v387, %v386
  %vm396 = vcmask 523264
  %v398 = vsel %vm396, %v355, 0
  %v401 = vsel %vm396, %v356, 0
  %403 = vmatprep.subr.bf16.mxu0 0
  %404 = vmatpush1.bf16.msra.mxu0 %v388
  %405 = vmatprep.subr.bf16.mxu0 0
  %406 = vmatpush1.bf16.msra.mxu0 %v389
  %407 = vmatprep.subr.bf16.mxu0 0
  %408 = vmatpush1.bf16.msra.mxu0 %v390
  %409 = vmatprep.subr.bf16.mxu0 0
  %410 = vmatpush1.bf16.msra.mxu0 %v391
  %411 = vmatprep.subr.bf16.mxu0 0
  %412 = vmatpush1.bf16.msra.mxu0 0
  %413 = vmatprep.subr.bf16.mxu0 0
  %414 = vmatpush1.bf16.msra.mxu0 0
  %415 = vmatprep.subr.bf16.mxu0 0
  %416 = vmatpush1.bf16.msra.mxu0 0
  %417 = vmatprep.subr.bf16.mxu0 0
  %418 = vmatpush1.bf16.msra.mxu0 0
  %419 = vmatprep.subr.bf16.mxu0 0
  %420 = vmatpush1.bf16.msra.mxu0 0
  %421 = vmatprep.subr.bf16.mxu0 0
  %422 = vmatpush1.bf16.msra.mxu0 0
  %423 = vmatprep.subr.bf16.mxu0 0
  %424 = vmatpush1.bf16.msra.mxu0 0
  %425 = vmatprep.subr.bf16.mxu0 0
  %426 = vmatpush1.bf16.msra.mxu0 0
  %427 = vmatprep.subr.bf16.mxu0 0
  %428 = vmatpush1.bf16.msra.mxu0 0
  %429 = vmatprep.subr.bf16.mxu0 0
  %430 = vmatpush1.bf16.msra.mxu0 0
  %431 = vmatprep.subr.bf16.mxu0 0
  %432 = vmatpush1.bf16.msra.mxu0 0
  %433 = vmatprep.subr.bf16.mxu0 0
  %434 = vmatpush1.bf16.msra.mxu0 0
  %435 = vmatprep.mubr.bf16.mxu0 0
  %436 = vmatmul.mubr.bf16.gmra.mrb[0].mxu0 %v398
  %v437 = vpop.f32.mrb[0].mxu0
  %v438 = vadd.f32 %v370, %v437
  %v439 = vpop.f32.mrb[0].mxu0
  %v440 = vpop.f32.mrb[0].mxu0
  %v441 = vadd.f32 %v370, %v440
  %v442 = vpop.f32.mrb[0].mxu0
  %443 = vmatprep.mubr.bf16.mxu0 0
  %444 = vmatmul.mubr.bf16.gmra.mrb[0].mxu0 %v401
  %v445 = vpop.f32.mrb[0].mxu0
  %v446 = vadd.f32 %v370, %v445
  %v447 = vpop.f32.mrb[0].mxu0
  %v448 = vpop.f32.mrb[0].mxu0
  %v449 = vadd.f32 %v370, %v448
  %v450 = vpop.f32.mrb[0].mxu0
  %451 = vdwg.mxu0
  %vm452 = vcmask 130048
  %453 = vst.msk [vmem:[%s5] sm:$0xff] %vm452, %v438
  %454 = vst.msk [vmem:[%s5 + $0x8] sm:$0xff] %vm452, %v441
  %455 = vst.msk [vmem:[%s5 + $0x10] sm:$0xff] %vm452, %v446
  %456 = vst.msk [vmem:[%s5 + $0x18] sm:$0xff] %vm452, %v449
  // Predicated region
  $region22: #{gd_decoder_forward.16} parent=0 // pred_check
    _
  $region23: #{gd_decoder_forward.16} parent=0 // pred_check_branch
    %458 = sbr.rel (0) target = $region25
  $region24: #{gd_decoder_forward.16} parent=0 // pred_region
    _
  $region25: #{gd_decoder_forward.16} parent=0 // pred_fallthru
    _
  // Predicated region
  $region26: #{gd_decoder_forward.16} parent=0 // pred_check
    _
  $region27: #{gd_decoder_forward.16} parent=0 // pred_check_branch
    %460 = sbr.rel (0) target = $region29
  $region28: #{gd_decoder_forward.16} parent=0 // pred_region
    _
  $region29: #{gd_decoder_forward.16} parent=0 // pred_fallthru
    _

// kernel: gd_decoder_forward.17
$region0: #{gd_decoder_forward.17}
  #allocation0 [shape = 'u32[]', space=smem, size = 0x4, offset = 0x4, fixed_abs, tag = 'smem constant byte address 0x4 - core index']
  #allocation1 [shape = 'u32[144,128]{1,0:T(1,128)}', space=vmem, size = 0x12000, scoped, tag = 'internal scratch']
  %s0 = inlined_call_operand.vmem [shape: bf16[32,576], index: 0, kind: input, shape index: {}]
  %s1 = inlined_call_operand.vmem [shape: bf16[576,64], index: 1, kind: input, shape index: {}]
  %s2 = inlined_call_operand.vmem [shape: f32[1,64], index: 2, kind: input, shape index: {}]
  %s3 = inlined_call_operand.vmem [shape: bf16[32,64], index: 3, kind: output, shape index: {}]
  %s4 = sld [smem:[#allocation0]]
  $region22: #{gd_decoder_forward.17} parent=0
    _
  %s6 = ssub.s32 1, %s4
  %s7 = scalar_select 0, %s6, %s4
  // Predicated region
  $region2: #{gd_decoder_forward.17} parent=0 // pred_check
    _
  $region3: #{gd_decoder_forward.17} parent=0 // pred_check_branch
    %9 = sbr.rel (0) target = $region5
  $region4: #{gd_decoder_forward.17} parent=0 // pred_region
    _
  $region5: #{gd_decoder_forward.17} parent=0 // pred_fallthru
    _
  // Predicated region
  $region6: #{gd_decoder_forward.17} parent=0 // pred_check
    _
  $region7: #{gd_decoder_forward.17} parent=0 // pred_check_branch
    %11 = sbr.rel (0) target = $region9
  $region8: #{gd_decoder_forward.17} parent=0 // pred_region
    _
  $region9: #{gd_decoder_forward.17} parent=0 // pred_fallthru
    _
  // Predicated region
  $region10: #{gd_decoder_forward.17} parent=0 // pred_check
    _
  $region11: #{gd_decoder_forward.17} parent=0 // pred_check_branch
    %13 = sbr.rel (0) target = $region13
  $region12: #{gd_decoder_forward.17} parent=0 // pred_region
    _
  $region13: #{gd_decoder_forward.17} parent=0 // pred_fallthru
    _
  %v15 = vld [vmem:[%s0] sm:$0xff]
  %v16 = vld [vmem:[%s0 + $0x8] sm:$0xff]
  %v17 = vld [vmem:[%s0 + $0x10] sm:$0xf]
  %v18 = vld [vmem:[%s0 + $0x14] sm:$0xff]
  %v19 = vld [vmem:[%s0 + $0x1c] sm:$0xff]
  %v20 = vld [vmem:[%s0 + $0x24] sm:$0xf]
  %v21 = vld [vmem:[%s0 + $0x28] sm:$0xff]
  %v22 = vld [vmem:[%s0 + $0x30] sm:$0xff]
  %v23 = vld [vmem:[%s0 + $0x38] sm:$0xf]
  %v24 = vld [vmem:[%s0 + $0x3c] sm:$0xff]
  %v25 = vld [vmem:[%s0 + $0x44] sm:$0xff]
  %v26 = vld [vmem:[%s0 + $0x4c] sm:$0xf]
  %v27 = vld [vmem:[%s1] sm:$0xf]
  %v28 = vld [vmem:[%s1 + $0x4] sm:$0xf]
  %v29 = vld [vmem:[%s1 + $0x8] sm:$0xf]
  %v30 = vld [vmem:[%s1 + $0xc] sm:$0xf]
  %v31 = vld [vmem:[%s1 + $0x10] sm:$0xf]
  %v32 = vld [vmem:[%s1 + $0x14] sm:$0xf]
  %v33 = vld [vmem:[%s1 + $0x18] sm:$0xf]
  %v34 = vld [vmem:[%s1 + $0x1c] sm:$0xf]
  %v35 = vld [vmem:[%s1 + $0x20] sm:$0xf]
  %v36 = vld [vmem:[%s1 + $0x24] sm:$0xf]
  %v37 = vld [vmem:[%s1 + $0x28] sm:$0xf]
  %v38 = vld [vmem:[%s1 + $0x2c] sm:$0xf]
  %v39 = vld [vmem:[%s1 + $0x30] sm:$0xf]
  %v40 = vld [vmem:[%s1 + $0x34] sm:$0xf]
  %v41 = vld [vmem:[%s1 + $0x38] sm:$0xf]
  %v42 = vld [vmem:[%s1 + $0x3c] sm:$0xf]
  %v43 = vld [vmem:[%s1 + $0x40] sm:$0xf]
  %v44 = vld [vmem:[%s1 + $0x44] sm:$0xf]
  %v45 = vld [vmem:[%s1 + $0x48] sm:$0xf]
  %v46 = vld [vmem:[%s1 + $0x4c] sm:$0xf]
  %v47 = vld [vmem:[%s1 + $0x50] sm:$0xf]
  %v48 = vld [vmem:[%s1 + $0x54] sm:$0xf]
  %v49 = vld [vmem:[%s1 + $0x58] sm:$0xf]
  %v50 = vld [vmem:[%s1 + $0x5c] sm:$0xf]
  %v51 = vld [vmem:[%s1 + $0x60] sm:$0xf]
  %v52 = vld [vmem:[%s1 + $0x64] sm:$0xf]
  %v53 = vld [vmem:[%s1 + $0x68] sm:$0xf]
  %v54 = vld [vmem:[%s1 + $0x6c] sm:$0xf]
  %v55 = vld [vmem:[%s1 + $0x70] sm:$0xf]
  %v56 = vld [vmem:[%s1 + $0x74] sm:$0xf]
  %v57 = vld [vmem:[%s1 + $0x78] sm:$0xf]
  %v58 = vld [vmem:[%s1 + $0x7c] sm:$0xf]
  %v59 = vld [vmem:[%s1 + $0x80] sm:$0xf]
  %v60 = vld [vmem:[%s1 + $0x84] sm:$0xf]
  %v61 = vld [vmem:[%s1 + $0x88] sm:$0xf]
  %v62 = vld [vmem:[%s1 + $0x8c] sm:$0xf]
  %v63 = vld [vmem:[%s1 + $0x90] sm:$0xf]
  %v64 = vld [vmem:[%s1 + $0x94] sm:$0xf]
  %v65 = vld [vmem:[%s1 + $0x98] sm:$0xf]
  %v66 = vld [vmem:[%s1 + $0x9c] sm:$0xf]
  %v67 = vld [vmem:[%s1 + $0xa0] sm:$0xf]
  %v68 = vld [vmem:[%s1 + $0xa4] sm:$0xf]
  %v69 = vld [vmem:[%s1 + $0xa8] sm:$0xf]
  %v70 = vld [vmem:[%s1 + $0xac] sm:$0xf]
  %v71 = vld [vmem:[%s1 + $0xb0] sm:$0xf]
  %v72 = vld [vmem:[%s1 + $0xb4] sm:$0xf]
  %v73 = vld [vmem:[%s1 + $0xb8] sm:$0xf]
  %v74 = vld [vmem:[%s1 + $0xbc] sm:$0xf]
  %v75 = vld [vmem:[%s1 + $0xc0] sm:$0xf]
  %v76 = vld [vmem:[%s1 + $0xc4] sm:$0xf]
  %v77 = vld [vmem:[%s1 + $0xc8] sm:$0xf]
  %v78 = vld [vmem:[%s1 + $0xcc] sm:$0xf]
  %v79 = vld [vmem:[%s1 + $0xd0] sm:$0xf]
  %v80 = vld [vmem:[%s1 + $0xd4] sm:$0xf]
  %v81 = vld [vmem:[%s1 + $0xd8] sm:$0xf]
  %v82 = vld [vmem:[%s1 + $0xdc] sm:$0xf]
  %v83 = vld [vmem:[%s1 + $0xe0] sm:$0xf]
  %v84 = vld [vmem:[%s1 + $0xe4] sm:$0xf]
  %v85 = vld [vmem:[%s1 + $0xe8] sm:$0xf]
  %v86 = vld [vmem:[%s1 + $0xec] sm:$0xf]
  %v87 = vld [vmem:[%s1 + $0xf0] sm:$0xf]
  %v88 = vld [vmem:[%s1 + $0xf4] sm:$0xf]
  %v89 = vld [vmem:[%s1 + $0xf8] sm:$0xf]
  %v90 = vld [vmem:[%s1 + $0xfc] sm:$0xf]
  %v91 = vld [vmem:[%s1 + $0x100] sm:$0xf]
  %v92 = vld [vmem:[%s1 + $0x104] sm:$0xf]
  %v93 = vld [vmem:[%s1 + $0x108] sm:$0xf]
  %v94 = vld [vmem:[%s1 + $0x10c] sm:$0xf]
  %v95 = vld [vmem:[%s1 + $0x110] sm:$0xf]
  %v96 = vld [vmem:[%s1 + $0x114] sm:$0xf]
  %v97 = vld [vmem:[%s1 + $0x118] sm:$0xf]
  %v98 = vld [vmem:[%s1 + $0x11c] sm:$0xf]
  %v99 = vld [vmem:[%s2] sm:$0x1]
  %v101 = vlaneseq
  %v102 = vshrl.u32 %v101, 7
  %v103 = vsub.s32 0, %v102
  %v104 = vrot.slane %v99, %v103
  %v118 = vunpack.c.l.b16 %v15
  %v119 = vunpack.c.h.b16 %v15
  %v120 = vunpack.c.l.b16 %v16
  %v121 = vunpack.c.h.b16 %v16
  %v122 = vunpack.c.l.b16 %v17
  %v123 = vunpack.c.l.b16 %v18
  %v124 = vunpack.c.h.b16 %v18
  %v125 = vunpack.c.l.b16 %v19
  %v126 = vunpack.c.h.b16 %v19
  %v127 = vunpack.c.l.b16 %v20
  %v128 = vunpack.c.l.b16 %v21
  %v129 = vunpack.c.h.b16 %v21
  %v130 = vunpack.c.l.b16 %v22
  %v131 = vunpack.c.h.b16 %v22
  %v132 = vunpack.c.l.b16 %v23
  %v133 = vunpack.c.l.b16 %v24
  %v134 = vunpack.c.h.b16 %v24
  %v135 = vunpack.c.l.b16 %v25
  %v136 = vunpack.c.h.b16 %v25
  %v137 = vunpack.c.l.b16 %v26
  %v138 = vpack.c.b16 %v123, %v118
  %v139 = vpack.c.b16 %v124, %v119
  %v140 = vpack.c.b16 %v125, %v120
  %v141 = vpack.c.b16 %v126, %v121
  %v142 = vpack.c.b16 %v127, %v122
  %v143 = vpack.c.b16 %v133, %v128
  %v144 = vpack.c.b16 %v134, %v129
  %v145 = vpack.c.b16 %v135, %v130
  %v146 = vpack.c.b16 %v136, %v131
  %v147 = vpack.c.b16 %v137, %v132
  %v228 = vunpack.c.l.b16 %v27
  %v229 = vunpack.c.l.b16 %v28
  %v230 = vunpack.c.l.b16 %v29
  %v231 = vunpack.c.l.b16 %v30
  %v232 = vunpack.c.l.b16 %v31
  %v233 = vunpack.c.l.b16 %v32
  %v234 = vunpack.c.l.b16 %v33
  %v235 = vunpack.c.l.b16 %v34
  %v236 = vunpack.c.l.b16 %v35
  %v237 = vunpack.c.l.b16 %v36
  %v238 = vunpack.c.l.b16 %v37
  %v239 = vunpack.c.l.b16 %v38
  %v240 = vunpack.c.l.b16 %v39
  %v241 = vunpack.c.l.b16 %v40
  %v242 = vunpack.c.l.b16 %v41
  %v243 = vunpack.c.l.b16 %v42
  %v244 = vunpack.c.l.b16 %v43
  %v245 = vunpack.c.l.b16 %v44
  %v246 = vunpack.c.l.b16 %v45
  %v247 = vunpack.c.l.b16 %v46
  %v248 = vunpack.c.l.b16 %v47
  %v249 = vunpack.c.l.b16 %v48
  %v250 = vunpack.c.l.b16 %v49
  %v251 = vunpack.c.l.b16 %v50
  %v252 = vunpack.c.l.b16 %v51
  %v253 = vunpack.c.l.b16 %v52
  %v254 = vunpack.c.l.b16 %v53
  %v255 = vunpack.c.l.b16 %v54
  %v256 = vunpack.c.l.b16 %v55
  %v257 = vunpack.c.l.b16 %v56
  %v258 = vunpack.c.l.b16 %v57
  %v259 = vunpack.c.l.b16 %v58
  %v260 = vunpack.c.l.b16 %v59
  %v261 = vunpack.c.l.b16 %v60
  %v262 = vunpack.c.l.b16 %v61
  %v263 = vunpack.c.l.b16 %v62
  %v264 = vunpack.c.l.b16 %v63
  %v265 = vunpack.c.l.b16 %v64
  %v266 = vunpack.c.l.b16 %v65
  %v267 = vunpack.c.l.b16 %v66
  %v268 = vunpack.c.l.b16 %v67
  %v269 = vunpack.c.l.b16 %v68
  %v270 = vunpack.c.l.b16 %v69
  %v271 = vunpack.c.l.b16 %v70
  %v272 = vunpack.c.l.b16 %v71
  %v273 = vunpack.c.l.b16 %v72
  %v274 = vunpack.c.l.b16 %v73
  %v275 = vunpack.c.l.b16 %v74
  %v276 = vunpack.c.l.b16 %v75
  %v277 = vunpack.c.l.b16 %v76
  %v278 = vunpack.c.l.b16 %v77
  %v279 = vunpack.c.l.b16 %v78
  %v280 = vunpack.c.l.b16 %v79
  %v281 = vunpack.c.l.b16 %v80
  %v282 = vunpack.c.l.b16 %v81
  %v283 = vunpack.c.l.b16 %v82
  %v284 = vunpack.c.l.b16 %v83
  %v285 = vunpack.c.l.b16 %v84
  %v286 = vunpack.c.l.b16 %v85
  %v287 = vunpack.c.l.b16 %v86
  %v288 = vunpack.c.l.b16 %v87
  %v289 = vunpack.c.l.b16 %v88
  %v290 = vunpack.c.l.b16 %v89
  %v291 = vunpack.c.l.b16 %v90
  %v292 = vunpack.c.l.b16 %v91
  %v293 = vunpack.c.l.b16 %v92
  %v294 = vunpack.c.l.b16 %v93
  %v295 = vunpack.c.l.b16 %v94
  %v296 = vunpack.c.l.b16 %v95
  %v297 = vunpack.c.l.b16 %v96
  %v298 = vunpack.c.l.b16 %v97
  %v299 = vunpack.c.l.b16 %v98
  %v300 = vpack.c.b16 %v229, %v228
  %v301 = vpack.c.b16 %v231, %v230
  %v302 = vpack.c.b16 %v233, %v232
  %v303 = vpack.c.b16 %v235, %v234
  %v304 = vpack.c.b16 %v237, %v236
  %v305 = vpack.c.b16 %v239, %v238
  %v306 = vpack.c.b16 %v241, %v240
  %v307 = vpack.c.b16 %v243, %v242
  %v308 = vpack.c.b16 %v245, %v244
  %v309 = vpack.c.b16 %v247, %v246
  %v310 = vpack.c.b16 %v249, %v248
  %v311 = vpack.c.b16 %v251, %v250
  %v312 = vpack.c.b16 %v253, %v252
  %v313 = vpack.c.b16 %v255, %v254
  %v314 = vpack.c.b16 %v257, %v256
  %v315 = vpack.c.b16 %v259, %v258
  %v316 = vpack.c.b16 %v261, %v260
  %v317 = vpack.c.b16 %v263, %v262
  %v318 = vpack.c.b16 %v265, %v264
  %v319 = vpack.c.b16 %v267, %v266
  %v320 = vpack.c.b16 %v269, %v268
  %v321 = vpack.c.b16 %v271, %v270
  %v322 = vpack.c.b16 %v273, %v272
  %v323 = vpack.c.b16 %v275, %v274
  %v324 = vpack.c.b16 %v277, %v276
  %v325 = vpack.c.b16 %v279, %v278
  %v326 = vpack.c.b16 %v281, %v280
  %v327 = vpack.c.b16 %v283, %v282
  %v328 = vpack.c.b16 %v285, %v284
  %v329 = vpack.c.b16 %v287, %v286
  %v330 = vpack.c.b16 %v289, %v288
  %v331 = vpack.c.b16 %v291, %v290
  %v332 = vpack.c.b16 %v293, %v292
  %v333 = vpack.c.b16 %v295, %v294
  %v334 = vpack.c.b16 %v297, %v296
  %v335 = vpack.c.b16 %v299, %v298
  %vm372 = vcmask 523264
  %v374 = vsel %vm372, %v142, 0
  %v377 = vsel %vm372, %v147, 0
  %379 = vmatprep.subr.bf16.mxu0 0
  %380 = vmatpush1.bf16.msra.mxu0 %v300
  %381 = vmatprep.subr.bf16.mxu0 0
  %382 = vmatpush1.bf16.msra.mxu0 %v301
  %383 = vmatprep.subr.bf16.mxu0 0
  %384 = vmatpush1.bf16.msra.mxu0 %v302
  %385 = vmatprep.subr.bf16.mxu0 0
  %386 = vmatpush1.bf16.msra.mxu0 %v303
  %387 = vmatprep.subr.bf16.mxu0 0
  %388 = vmatpush1.bf16.msra.mxu0 %v304
  %389 = vmatprep.subr.bf16.mxu0 0
  %390 = vmatpush1.bf16.msra.mxu0 %v305
  %391 = vmatprep.subr.bf16.mxu0 0
  %392 = vmatpush1.bf16.msra.mxu0 %v306
  %393 = vmatprep.subr.bf16.mxu0 0
  %394 = vmatpush1.bf16.msra.mxu0 %v307
  %395 = vmatprep.subr.bf16.mxu0 0
  %396 = vmatpush1.bf16.msra.mxu0 %v308
  %397 = vmatprep.subr.bf16.mxu0 0
  %398 = vmatpush1.bf16.msra.mxu0 %v309
  %399 = vmatprep.subr.bf16.mxu0 0
  %400 = vmatpush1.bf16.msra.mxu0 %v310
  %401 = vmatprep.subr.bf16.mxu0 0
  %402 = vmatpush1.bf16.msra.mxu0 %v311
  %403 = vmatprep.subr.bf16.mxu0 0
  %404 = vmatpush1.bf16.msra.mxu0 %v312
  %405 = vmatprep.subr.bf16.mxu0 0
  %406 = vmatpush1.bf16.msra.mxu0 %v313
  %407 = vmatprep.subr.bf16.mxu0 0
  %408 = vmatpush1.bf16.msra.mxu0 %v314
  %409 = vmatprep.subr.bf16.mxu0 0
  %410 = vmatpush1.bf16.msra.mxu0 %v315
  %411 = vmatprep.mubr.bf16.mxu0 %v139
  %412 = vmatmul.mubr.bf16.gmra.mrb[0].mxu0 %v138
  %v413 = vpop.f32.mrb[0].mxu0
  %v414 = vadd.f32 %v104, %v413
  %v415 = vpop.f32.mrb[0].mxu0
  %v416 = vpop.f32.mrb[0].mxu0
  %v417 = vadd.f32 %v104, %v416
  %v418 = vpop.f32.mrb[0].mxu0
  %419 = vmatprep.mubr.bf16.mxu0 %v144
  %420 = vmatmul.mubr.bf16.gmra.mrb[0].mxu0 %v143
  %v421 = vpop.f32.mrb[0].mxu0
  %v422 = vadd.f32 %v104, %v421
  %v423 = vpop.f32.mrb[0].mxu0
  %v424 = vpop.f32.mrb[0].mxu0
  %v425 = vadd.f32 %v104, %v424
  %v426 = vpop.f32.mrb[0].mxu0
  %427 = vdwg.mxu0
  %428 = vmatprep.subr.bf16.mxu0 0
  %429 = vmatpush1.bf16.msra.mxu0 %v316
  %430 = vmatprep.subr.bf16.mxu0 0
  %431 = vmatpush1.bf16.msra.mxu0 %v317
  %432 = vmatprep.subr.bf16.mxu0 0
  %433 = vmatpush1.bf16.msra.mxu0 %v318
  %434 = vmatprep.subr.bf16.mxu0 0
  %435 = vmatpush1.bf16.msra.mxu0 %v319
  %436 = vmatprep.subr.bf16.mxu0 0
  %437 = vmatpush1.bf16.msra.mxu0 %v320
  %438 = vmatprep.subr.bf16.mxu0 0
  %439 = vmatpush1.bf16.msra.mxu0 %v321
  %440 = vmatprep.subr.bf16.mxu0 0
  %441 = vmatpush1.bf16.msra.mxu0 %v322
  %442 = vmatprep.subr.bf16.mxu0 0
  %443 = vmatpush1.bf16.msra.mxu0 %v323
  %444 = vmatprep.subr.bf16.mxu0 0
  %445 = vmatpush1.bf16.msra.mxu0 %v324
  %446 = vmatprep.subr.bf16.mxu0 0
  %447 = vmatpush1.bf16.msra.mxu0 %v325
  %448 = vmatprep.subr.bf16.mxu0 0
  %449 = vmatpush1.bf16.msra.mxu0 %v326
  %450 = vmatprep.subr.bf16.mxu0 0
  %451 = vmatpush1.bf16.msra.mxu0 %v327
  %452 = vmatprep.subr.bf16.mxu0 0
  %453 = vmatpush1.bf16.msra.mxu0 %v328
  %454 = vmatprep.subr.bf16.mxu0 0
  %455 = vmatpush1.bf16.msra.mxu0 %v329
  %456 = vmatprep.subr.bf16.mxu0 0
  %457 = vmatpush1.bf16.msra.mxu0 %v330
  %458 = vmatprep.subr.bf16.mxu0 0
  %459 = vmatpush1.bf16.msra.mxu0 %v331
  %460 = vmatprep.mubr.bf16.mxu0 %v141
  %461 = vmatmul.mubr.bf16.gmra.mrb[0].mxu0 %v140
  %v462 = vpop.f32.mrb[0].mxu0
  %v463 = vadd.f32 %v414, %v462
  %v464 = vpop.f32.mrb[0].mxu0
  %v465 = vpop.f32.mrb[0].mxu0
  %v466 = vadd.f32 %v417, %v465
  %v467 = vpop.f32.mrb[0].mxu0
  %468 = vmatprep.mubr.bf16.mxu0 %v146
  %469 = vmatmul.mubr.bf16.gmra.mrb[0].mxu0 %v145
  %v470 = vpop.f32.mrb[0].mxu0
  %v471 = vadd.f32 %v422, %v470
  %v472 = vpop.f32.mrb[0].mxu0
  %v473 = vpop.f32.mrb[0].mxu0
  %v474 = vadd.f32 %v425, %v473
  %v475 = vpop.f32.mrb[0].mxu0
  %476 = vdwg.mxu0
  %477 = vmatprep.subr.bf16.mxu0 0
  %478 = vmatpush1.bf16.msra.mxu0 %v332
  %479 = vmatprep.subr.bf16.mxu0 0
  %480 = vmatpush1.bf16.msra.mxu0 %v333
  %481 = vmatprep.subr.bf16.mxu0 0
  %482 = vmatpush1.bf16.msra.mxu0 %v334
  %483 = vmatprep.subr.bf16.mxu0 0
  %484 = vmatpush1.bf16.msra.mxu0 %v335
  %485 = vmatprep.subr.bf16.mxu0 0
  %486 = vmatpush1.bf16.msra.mxu0 0
  %487 = vmatprep.subr.bf16.mxu0 0
  %488 = vmatpush1.bf16.msra.mxu0 0
  %489 = vmatprep.subr.bf16.mxu0 0
  %490 = vmatpush1.bf16.msra.mxu0 0
  %491 = vmatprep.subr.bf16.mxu0 0
  %492 = vmatpush1.bf16.msra.mxu0 0
  %493 = vmatprep.subr.bf16.mxu0 0
  %494 = vmatpush1.bf16.msra.mxu0 0
  %495 = vmatprep.subr.bf16.mxu0 0
  %496 = vmatpush1.bf16.msra.mxu0 0
  %497 = vmatprep.subr.bf16.mxu0 0
  %498 = vmatpush1.bf16.msra.mxu0 0
  %499 = vmatprep.subr.bf16.mxu0 0
  %500 = vmatpush1.bf16.msra.mxu0 0
  %501 = vmatprep.subr.bf16.mxu0 0
  %502 = vmatpush1.bf16.msra.mxu0 0
  %503 = vmatprep.subr.bf16.mxu0 0
  %504 = vmatpush1.bf16.msra.mxu0 0
  %505 = vmatprep.subr.bf16.mxu0 0
  %506 = vmatpush1.bf16.msra.mxu0 0
  %507 = vmatprep.subr.bf16.mxu0 0
  %508 = vmatpush1.bf16.msra.mxu0 0
  %509 = vmatprep.mubr.bf16.mxu0 0
  %510 = vmatmul.mubr.bf16.gmra.mrb[0].mxu0 %v374
  %v511 = vpop.f32.mrb[0].mxu0
  %v512 = vadd.f32 %v463, %v511
  %v513 = vpop.f32.mrb[0].mxu0
  %v514 = vpop.f32.mrb[0].mxu0
  %v515 = vadd.f32 %v466, %v514
  %v516 = vpop.f32.mrb[0].mxu0
  %517 = vmatprep.mubr.bf16.mxu0 0
  %518 = vmatmul.mubr.bf16.gmra.mrb[0].mxu0 %v377
  %v519 = vpop.f32.mrb[0].mxu0
  %v520 = vadd.f32 %v471, %v519
  %v521 = vpop.f32.mrb[0].mxu0
  %v522 = vpop.f32.mrb[0].mxu0
  %v523 = vadd.f32 %v474, %v522
  %v524 = vpop.f32.mrb[0].mxu0
  %525 = vdwg.mxu0
  %v526 = vpack.c.bf16 %v515, %v512
  %v527 = vpack.c.bf16 %v523, %v520
  %v530 = vunpack.c.l.b16 %v526
  %v531 = vunpack.c.h.b16 %v526
  %v532 = vunpack.c.l.b16 %v527
  %v533 = vunpack.c.h.b16 %v527
  %v534 = vpack.c.b16 %v530, %v530
  %v535 = vpack.c.b16 %v531, %v531
  %v536 = vpack.c.b16 %v532, %v532
  %v537 = vpack.c.b16 %v533, %v533
  %vm542 = vcmask 519168
  %543 = vst.msk [vmem:[%s3] sm:$0xf] %vm542, %v534
  %544 = vst.msk [vmem:[%s3 + $0x4] sm:$0xf] %vm542, %v535
  %545 = vst.msk [vmem:[%s3 + $0x8] sm:$0xf] %vm542, %v536
  %546 = vst.msk [vmem:[%s3 + $0xc] sm:$0xf] %vm542, %v537
  // Predicated region
  $region14: #{gd_decoder_forward.17} parent=0 // pred_check
    _
  $region15: #{gd_decoder_forward.17} parent=0 // pred_check_branch
    %548 = sbr.rel (0) target = $region17
  $region16: #{gd_decoder_forward.17} parent=0 // pred_region
    _
  $region17: #{gd_decoder_forward.17} parent=0 // pred_fallthru
    _
  // Predicated region
  $region18: #{gd_decoder_forward.17} parent=0 // pred_check
    _
  $region19: #{gd_decoder_forward.17} parent=0 // pred_check_branch
    %550 = sbr.rel (0) target = $region21
  $region20: #{gd_decoder_forward.17} parent=0 // pred_region
    _
  $region21: #{gd_decoder_forward.17} parent=0 // pred_fallthru
    _

// kernel: gd_decoder_forward.18
$region0: #{gd_decoder_forward.18}
  #allocation0 [shape = 'u32[]', space=smem, size = 0x4, offset = 0x4, fixed_abs, tag = 'smem constant byte address 0x4 - core index']
  #allocation1 [shape = 'u32[144,128]{1,0:T(1,128)}', space=vmem, size = 0x12000, scoped, tag = 'internal scratch']
  %s0 = inlined_call_operand.vmem [shape: bf16[32,1024], index: 0, kind: input, shape index: {}]
  %s1 = inlined_call_operand.vmem [shape: bf16[1024,32], index: 1, kind: input, shape index: {}]
  %s2 = inlined_call_operand.vmem [shape: f32[1,32], index: 2, kind: input, shape index: {}]
  %s3 = inlined_call_operand.vmem [shape: f32[1,8], index: 3, kind: input, shape index: {}]
  %s4 = inlined_call_operand.vmem [shape: f32[1,8], index: 4, kind: input, shape index: {}]
  %s5 = inlined_call_operand.vmem [shape: f32[32,32], index: 5, kind: output, shape index: {}]
  %s6 = sld [smem:[#allocation0]]
  $region30: #{gd_decoder_forward.18} parent=0
    _
  %s8 = ssub.s32 1, %s6
  %s9 = scalar_select 0, %s8, %s6
  // Predicated region
  $region2: #{gd_decoder_forward.18} parent=0 // pred_check
    _
  $region3: #{gd_decoder_forward.18} parent=0 // pred_check_branch
    %11 = sbr.rel (0) target = $region5
  $region4: #{gd_decoder_forward.18} parent=0 // pred_region
    _
  $region5: #{gd_decoder_forward.18} parent=0 // pred_fallthru
    _
  // Predicated region
  $region6: #{gd_decoder_forward.18} parent=0 // pred_check
    _
  $region7: #{gd_decoder_forward.18} parent=0 // pred_check_branch
    %13 = sbr.rel (0) target = $region9
  $region8: #{gd_decoder_forward.18} parent=0 // pred_region
    _
  $region9: #{gd_decoder_forward.18} parent=0 // pred_fallthru
    _
  // Predicated region
  $region10: #{gd_decoder_forward.18} parent=0 // pred_check
    _
  $region11: #{gd_decoder_forward.18} parent=0 // pred_check_branch
    %15 = sbr.rel (0) target = $region13
  $region12: #{gd_decoder_forward.18} parent=0 // pred_region
    _
  $region13: #{gd_decoder_forward.18} parent=0 // pred_fallthru
    _
  // Predicated region
  $region14: #{gd_decoder_forward.18} parent=0 // pred_check
    _
  $region15: #{gd_decoder_forward.18} parent=0 // pred_check_branch
    %17 = sbr.rel (0) target = $region17
  $region16: #{gd_decoder_forward.18} parent=0 // pred_region
    _
  $region17: #{gd_decoder_forward.18} parent=0 // pred_fallthru
    _
  // Predicated region
  $region18: #{gd_decoder_forward.18} parent=0 // pred_check
    _
  $region19: #{gd_decoder_forward.18} parent=0 // pred_check_branch
    %19 = sbr.rel (0) target = $region21
  $region20: #{gd_decoder_forward.18} parent=0 // pred_region
    _
  $region21: #{gd_decoder_forward.18} parent=0 // pred_fallthru
    _
  %v21 = vld [vmem:[%s0] sm:$0xff]
  %v22 = vld [vmem:[%s0 + $0x8] sm:$0xff]
  %v23 = vld [vmem:[%s0 + $0x10] sm:$0xff]
  %v24 = vld [vmem:[%s0 + $0x18] sm:$0xff]
  %v25 = vld [vmem:[%s0 + $0x20] sm:$0xff]
  %v26 = vld [vmem:[%s0 + $0x28] sm:$0xff]
  %v27 = vld [vmem:[%s0 + $0x30] sm:$0xff]
  %v28 = vld [vmem:[%s0 + $0x38] sm:$0xff]
  %v29 = vld [vmem:[%s0 + $0x40] sm:$0xff]
  %v30 = vld [vmem:[%s0 + $0x48] sm:$0xff]
  %v31 = vld [vmem:[%s0 + $0x50] sm:$0xff]
  %v32 = vld [vmem:[%s0 + $0x58] sm:$0xff]
  %v33 = vld [vmem:[%s0 + $0x60] sm:$0xff]
  %v34 = vld [vmem:[%s0 + $0x68] sm:$0xff]
  %v35 = vld [vmem:[%s0 + $0x70] sm:$0xff]
  %v36 = vld [vmem:[%s0 + $0x78] sm:$0xff]
  %v37 = vld [vmem:[%s1] sm:$0xf]
  %v38 = vld [vmem:[%s1 + $0x4] sm:$0xf]
  %v39 = vld [vmem:[%s1 + $0x8] sm:$0xf]
  %v40 = vld [vmem:[%s1 + $0xc] sm:$0xf]
  %v41 = vld [vmem:[%s1 + $0x10] sm:$0xf]
  %v42 = vld [vmem:[%s1 + $0x14] sm:$0xf]
  %v43 = vld [vmem:[%s1 + $0x18] sm:$0xf]
  %v44 = vld [vmem:[%s1 + $0x1c] sm:$0xf]
  %v45 = vld [vmem:[%s1 + $0x20] sm:$0xf]
  %v46 = vld [vmem:[%s1 + $0x24] sm:$0xf]
  %v47 = vld [vmem:[%s1 + $0x28] sm:$0xf]
  %v48 = vld [vmem:[%s1 + $0x2c] sm:$0xf]
  %v49 = vld [vmem:[%s1 + $0x30] sm:$0xf]
  %v50 = vld [vmem:[%s1 + $0x34] sm:$0xf]
  %v51 = vld [vmem:[%s1 + $0x38] sm:$0xf]
  %v52 = vld [vmem:[%s1 + $0x3c] sm:$0xf]
  %v53 = vld [vmem:[%s1 + $0x40] sm:$0xf]
  %v54 = vld [vmem:[%s1 + $0x44] sm:$0xf]
  %v55 = vld [vmem:[%s1 + $0x48] sm:$0xf]
  %v56 = vld [vmem:[%s1 + $0x4c] sm:$0xf]
  %v57 = vld [vmem:[%s1 + $0x50] sm:$0xf]
  %v58 = vld [vmem:[%s1 + $0x54] sm:$0xf]
  %v59 = vld [vmem:[%s1 + $0x58] sm:$0xf]
  %v60 = vld [vmem:[%s1 + $0x5c] sm:$0xf]
  %v61 = vld [vmem:[%s1 + $0x60] sm:$0xf]
  %v62 = vld [vmem:[%s1 + $0x64] sm:$0xf]
  %v63 = vld [vmem:[%s1 + $0x68] sm:$0xf]
  %v64 = vld [vmem:[%s1 + $0x6c] sm:$0xf]
  %v65 = vld [vmem:[%s1 + $0x70] sm:$0xf]
  %v66 = vld [vmem:[%s1 + $0x74] sm:$0xf]
  %v67 = vld [vmem:[%s1 + $0x78] sm:$0xf]
  %v68 = vld [vmem:[%s1 + $0x7c] sm:$0xf]
  %v69 = vld [vmem:[%s1 + $0x80] sm:$0xf]
  %v70 = vld [vmem:[%s1 + $0x84] sm:$0xf]
  %v71 = vld [vmem:[%s1 + $0x88] sm:$0xf]
  %v72 = vld [vmem:[%s1 + $0x8c] sm:$0xf]
  %v73 = vld [vmem:[%s1 + $0x90] sm:$0xf]
  %v74 = vld [vmem:[%s1 + $0x94] sm:$0xf]
  %v75 = vld [vmem:[%s1 + $0x98] sm:$0xf]
  %v76 = vld [vmem:[%s1 + $0x9c] sm:$0xf]
  %v77 = vld [vmem:[%s1 + $0xa0] sm:$0xf]
  %v78 = vld [vmem:[%s1 + $0xa4] sm:$0xf]
  %v79 = vld [vmem:[%s1 + $0xa8] sm:$0xf]
  %v80 = vld [vmem:[%s1 + $0xac] sm:$0xf]
  %v81 = vld [vmem:[%s1 + $0xb0] sm:$0xf]
  %v82 = vld [vmem:[%s1 + $0xb4] sm:$0xf]
  %v83 = vld [vmem:[%s1 + $0xb8] sm:$0xf]
  %v84 = vld [vmem:[%s1 + $0xbc] sm:$0xf]
  %v85 = vld [vmem:[%s1 + $0xc0] sm:$0xf]
  %v86 = vld [vmem:[%s1 + $0xc4] sm:$0xf]
  %v87 = vld [vmem:[%s1 + $0xc8] sm:$0xf]
  %v88 = vld [vmem:[%s1 + $0xcc] sm:$0xf]
  %v89 = vld [vmem:[%s1 + $0xd0] sm:$0xf]
  %v90 = vld [vmem:[%s1 + $0xd4] sm:$0xf]
  %v91 = vld [vmem:[%s1 + $0xd8] sm:$0xf]
  %v92 = vld [vmem:[%s1 + $0xdc] sm:$0xf]
  %v93 = vld [vmem:[%s1 + $0xe0] sm:$0xf]
  %v94 = vld [vmem:[%s1 + $0xe4] sm:$0xf]
  %v95 = vld [vmem:[%s1 + $0xe8] sm:$0xf]
  %v96 = vld [vmem:[%s1 + $0xec] sm:$0xf]
  %v97 = vld [vmem:[%s1 + $0xf0] sm:$0xf]
  %v98 = vld [vmem:[%s1 + $0xf4] sm:$0xf]
  %v99 = vld [vmem:[%s1 + $0xf8] sm:$0xf]
  %v100 = vld [vmem:[%s1 + $0xfc] sm:$0xf]
  %v101 = vld [vmem:[%s1 + $0x100] sm:$0xf]
  %v102 = vld [vmem:[%s1 + $0x104] sm:$0xf]
  %v103 = vld [vmem:[%s1 + $0x108] sm:$0xf]
  %v104 = vld [vmem:[%s1 + $0x10c] sm:$0xf]
  %v105 = vld [vmem:[%s1 + $0x110] sm:$0xf]
  %v106 = vld [vmem:[%s1 + $0x114] sm:$0xf]
  %v107 = vld [vmem:[%s1 + $0x118] sm:$0xf]
  %v108 = vld [vmem:[%s1 + $0x11c] sm:$0xf]
  %v109 = vld [vmem:[%s1 + $0x120] sm:$0xf]
  %v110 = vld [vmem:[%s1 + $0x124] sm:$0xf]
  %v111 = vld [vmem:[%s1 + $0x128] sm:$0xf]
  %v112 = vld [vmem:[%s1 + $0x12c] sm:$0xf]
  %v113 = vld [vmem:[%s1 + $0x130] sm:$0xf]
  %v114 = vld [vmem:[%s1 + $0x134] sm:$0xf]
  %v115 = vld [vmem:[%s1 + $0x138] sm:$0xf]
  %v116 = vld [vmem:[%s1 + $0x13c] sm:$0xf]
  %v117 = vld [vmem:[%s1 + $0x140] sm:$0xf]
  %v118 = vld [vmem:[%s1 + $0x144] sm:$0xf]
  %v119 = vld [vmem:[%s1 + $0x148] sm:$0xf]
  %v120 = vld [vmem:[%s1 + $0x14c] sm:$0xf]
  %v121 = vld [vmem:[%s1 + $0x150] sm:$0xf]
  %v122 = vld [vmem:[%s1 + $0x154] sm:$0xf]
  %v123 = vld [vmem:[%s1 + $0x158] sm:$0xf]
  %v124 = vld [vmem:[%s1 + $0x15c] sm:$0xf]
  %v125 = vld [vmem:[%s1 + $0x160] sm:$0xf]
  %v126 = vld [vmem:[%s1 + $0x164] sm:$0xf]
  %v127 = vld [vmem:[%s1 + $0x168] sm:$0xf]
  %v128 = vld [vmem:[%s1 + $0x16c] sm:$0xf]
  %v129 = vld [vmem:[%s1 + $0x170] sm:$0xf]
  %v130 = vld [vmem:[%s1 + $0x174] sm:$0xf]
  %v131 = vld [vmem:[%s1 + $0x178] sm:$0xf]
  %v132 = vld [vmem:[%s1 + $0x17c] sm:$0xf]
  %v133 = vld [vmem:[%s1 + $0x180] sm:$0xf]
  %v134 = vld [vmem:[%s1 + $0x184] sm:$0xf]
  %v135 = vld [vmem:[%s1 + $0x188] sm:$0xf]
  %v136 = vld [vmem:[%s1 + $0x18c] sm:$0xf]
  %v137 = vld [vmem:[%s1 + $0x190] sm:$0xf]
  %v138 = vld [vmem:[%s1 + $0x194] sm:$0xf]
  %v139 = vld [vmem:[%s1 + $0x198] sm:$0xf]
  %v140 = vld [vmem:[%s1 + $0x19c] sm:$0xf]
  %v141 = vld [vmem:[%s1 + $0x1a0] sm:$0xf]
  %v142 = vld [vmem:[%s1 + $0x1a4] sm:$0xf]
  %v143 = vld [vmem:[%s1 + $0x1a8] sm:$0xf]
  %v144 = vld [vmem:[%s1 + $0x1ac] sm:$0xf]
  %v145 = vld [vmem:[%s1 + $0x1b0] sm:$0xf]
  %v146 = vld [vmem:[%s1 + $0x1b4] sm:$0xf]
  %v147 = vld [vmem:[%s1 + $0x1b8] sm:$0xf]
  %v148 = vld [vmem:[%s1 + $0x1bc] sm:$0xf]
  %v149 = vld [vmem:[%s1 + $0x1c0] sm:$0xf]
  %v150 = vld [vmem:[%s1 + $0x1c4] sm:$0xf]
  %v151 = vld [vmem:[%s1 + $0x1c8] sm:$0xf]
  %v152 = vld [vmem:[%s1 + $0x1cc] sm:$0xf]
  %v153 = vld [vmem:[%s1 + $0x1d0] sm:$0xf]
  %v154 = vld [vmem:[%s1 + $0x1d4] sm:$0xf]
  %v155 = vld [vmem:[%s1 + $0x1d8] sm:$0xf]
  %v156 = vld [vmem:[%s1 + $0x1dc] sm:$0xf]
  %v157 = vld [vmem:[%s1 + $0x1e0] sm:$0xf]
  %v158 = vld [vmem:[%s1 + $0x1e4] sm:$0xf]
  %v159 = vld [vmem:[%s1 + $0x1e8] sm:$0xf]
  %v160 = vld [vmem:[%s1 + $0x1ec] sm:$0xf]
  %v161 = vld [vmem:[%s1 + $0x1f0] sm:$0xf]
  %v162 = vld [vmem:[%s1 + $0x1f4] sm:$0xf]
  %v163 = vld [vmem:[%s1 + $0x1f8] sm:$0xf]
  %v164 = vld [vmem:[%s1 + $0x1fc] sm:$0xf]
  %v165 = vld [vmem:[%s2] sm:$0x1]
  %v167 = vlaneseq
  %v168 = vshrl.u32 %v167, 7
  %v169 = vsub.s32 0, %v168
  %v170 = vrot.slane %v165, %v169
  %v188 = vunpack.c.l.b16 %v21
  %v189 = vunpack.c.h.b16 %v21
  %v190 = vunpack.c.l.b16 %v22
  %v191 = vunpack.c.h.b16 %v22
  %v192 = vunpack.c.l.b16 %v23
  %v193 = vunpack.c.h.b16 %v23
  %v194 = vunpack.c.l.b16 %v24
  %v195 = vunpack.c.h.b16 %v24
  %v196 = vunpack.c.l.b16 %v25
  %v197 = vunpack.c.h.b16 %v25
  %v198 = vunpack.c.l.b16 %v26
  %v199 = vunpack.c.h.b16 %v26
  %v200 = vunpack.c.l.b16 %v27
  %v201 = vunpack.c.h.b16 %v27
  %v202 = vunpack.c.l.b16 %v28
  %v203 = vunpack.c.h.b16 %v28
  %v204 = vunpack.c.l.b16 %v29
  %v205 = vunpack.c.h.b16 %v29
  %v206 = vunpack.c.l.b16 %v30
  %v207 = vunpack.c.h.b16 %v30
  %v208 = vunpack.c.l.b16 %v31
  %v209 = vunpack.c.h.b16 %v31
  %v210 = vunpack.c.l.b16 %v32
  %v211 = vunpack.c.h.b16 %v32
  %v212 = vunpack.c.l.b16 %v33
  %v213 = vunpack.c.h.b16 %v33
  %v214 = vunpack.c.l.b16 %v34
  %v215 = vunpack.c.h.b16 %v34
  %v216 = vunpack.c.l.b16 %v35
  %v217 = vunpack.c.h.b16 %v35
  %v218 = vunpack.c.l.b16 %v36
  %v219 = vunpack.c.h.b16 %v36
  %v220 = vpack.c.b16 %v196, %v188
  %v221 = vpack.c.b16 %v197, %v189
  %v222 = vpack.c.b16 %v198, %v190
  %v223 = vpack.c.b16 %v199, %v191
  %v224 = vpack.c.b16 %v200, %v192
  %v225 = vpack.c.b16 %v201, %v193
  %v226 = vpack.c.b16 %v202, %v194
  %v227 = vpack.c.b16 %v203, %v195
  %v228 = vpack.c.b16 %v212, %v204
  %v229 = vpack.c.b16 %v213, %v205
  %v230 = vpack.c.b16 %v214, %v206
  %v231 = vpack.c.b16 %v215, %v207
  %v232 = vpack.c.b16 %v216, %v208
  %v233 = vpack.c.b16 %v217, %v209
  %v234 = vpack.c.b16 %v218, %v210
  %v235 = vpack.c.b16 %v219, %v211
  %v380 = vunpack.c.l.b16 %v37
  %v381 = vunpack.c.l.b16 %v38
  %v382 = vunpack.c.l.b16 %v39
  %v383 = vunpack.c.l.b16 %v40
  %v384 = vunpack.c.l.b16 %v41
  %v385 = vunpack.c.l.b16 %v42
  %v386 = vunpack.c.l.b16 %v43
  %v387 = vunpack.c.l.b16 %v44
  %v388 = vunpack.c.l.b16 %v45
  %v389 = vunpack.c.l.b16 %v46
  %v390 = vunpack.c.l.b16 %v47
  %v391 = vunpack.c.l.b16 %v48
  %v392 = vunpack.c.l.b16 %v49
  %v393 = vunpack.c.l.b16 %v50
  %v394 = vunpack.c.l.b16 %v51
  %v395 = vunpack.c.l.b16 %v52
  %v396 = vunpack.c.l.b16 %v53
  %v397 = vunpack.c.l.b16 %v54
  %v398 = vunpack.c.l.b16 %v55
  %v399 = vunpack.c.l.b16 %v56
  %v400 = vunpack.c.l.b16 %v57
  %v401 = vunpack.c.l.b16 %v58
  %v402 = vunpack.c.l.b16 %v59
  %v403 = vunpack.c.l.b16 %v60
  %v404 = vunpack.c.l.b16 %v61
  %v405 = vunpack.c.l.b16 %v62
  %v406 = vunpack.c.l.b16 %v63
  %v407 = vunpack.c.l.b16 %v64
  %v408 = vunpack.c.l.b16 %v65
  %v409 = vunpack.c.l.b16 %v66
  %v410 = vunpack.c.l.b16 %v67
  %v411 = vunpack.c.l.b16 %v68
  %v412 = vunpack.c.l.b16 %v69
  %v413 = vunpack.c.l.b16 %v70
  %v414 = vunpack.c.l.b16 %v71
  %v415 = vunpack.c.l.b16 %v72
  %v416 = vunpack.c.l.b16 %v73
  %v417 = vunpack.c.l.b16 %v74
  %v418 = vunpack.c.l.b16 %v75
  %v419 = vunpack.c.l.b16 %v76
  %v420 = vunpack.c.l.b16 %v77
  %v421 = vunpack.c.l.b16 %v78
  %v422 = vunpack.c.l.b16 %v79
  %v423 = vunpack.c.l.b16 %v80
  %v424 = vunpack.c.l.b16 %v81
  %v425 = vunpack.c.l.b16 %v82
  %v426 = vunpack.c.l.b16 %v83
  %v427 = vunpack.c.l.b16 %v84
  %v428 = vunpack.c.l.b16 %v85
  %v429 = vunpack.c.l.b16 %v86
  %v430 = vunpack.c.l.b16 %v87
  %v431 = vunpack.c.l.b16 %v88
  %v432 = vunpack.c.l.b16 %v89
  %v433 = vunpack.c.l.b16 %v90
  %v434 = vunpack.c.l.b16 %v91
  %v435 = vunpack.c.l.b16 %v92
  %v436 = vunpack.c.l.b16 %v93
  %v437 = vunpack.c.l.b16 %v94
  %v438 = vunpack.c.l.b16 %v95
  %v439 = vunpack.c.l.b16 %v96
  %v440 = vunpack.c.l.b16 %v97
  %v441 = vunpack.c.l.b16 %v98
  %v442 = vunpack.c.l.b16 %v99
  %v443 = vunpack.c.l.b16 %v100
  %v444 = vunpack.c.l.b16 %v101
  %v445 = vunpack.c.l.b16 %v102
  %v446 = vunpack.c.l.b16 %v103
  %v447 = vunpack.c.l.b16 %v104
  %v448 = vunpack.c.l.b16 %v105
  %v449 = vunpack.c.l.b16 %v106
  %v450 = vunpack.c.l.b16 %v107
  %v451 = vunpack.c.l.b16 %v108
  %v452 = vunpack.c.l.b16 %v109
  %v453 = vunpack.c.l.b16 %v110
  %v454 = vunpack.c.l.b16 %v111
  %v455 = vunpack.c.l.b16 %v112
  %v456 = vunpack.c.l.b16 %v113
  %v457 = vunpack.c.l.b16 %v114
  %v458 = vunpack.c.l.b16 %v115
  %v459 = vunpack.c.l.b16 %v116
  %v460 = vunpack.c.l.b16 %v117
  %v461 = vunpack.c.l.b16 %v118
  %v462 = vunpack.c.l.b16 %v119
  %v463 = vunpack.c.l.b16 %v120
  %v464 = vunpack.c.l.b16 %v121
  %v465 = vunpack.c.l.b16 %v122
  %v466 = vunpack.c.l.b16 %v123
  %v467 = vunpack.c.l.b16 %v124
  %v468 = vunpack.c.l.b16 %v125
  %v469 = vunpack.c.l.b16 %v126
  %v470 = vunpack.c.l.b16 %v127
  %v471 = vunpack.c.l.b16 %v128
  %v472 = vunpack.c.l.b16 %v129
  %v473 = vunpack.c.l.b16 %v130
  %v474 = vunpack.c.l.b16 %v131
  %v475 = vunpack.c.l.b16 %v132
  %v476 = vunpack.c.l.b16 %v133
  %v477 = vunpack.c.l.b16 %v134
  %v478 = vunpack.c.l.b16 %v135
  %v479 = vunpack.c.l.b16 %v136
  %v480 = vunpack.c.l.b16 %v137
  %v481 = vunpack.c.l.b16 %v138
  %v482 = vunpack.c.l.b16 %v139
  %v483 = vunpack.c.l.b16 %v140
  %v484 = vunpack.c.l.b16 %v141
  %v485 = vunpack.c.l.b16 %v142
  %v486 = vunpack.c.l.b16 %v143
  %v487 = vunpack.c.l.b16 %v144
  %v488 = vunpack.c.l.b16 %v145
  %v489 = vunpack.c.l.b16 %v146
  %v490 = vunpack.c.l.b16 %v147
  %v491 = vunpack.c.l.b16 %v148
  %v492 = vunpack.c.l.b16 %v149
  %v493 = vunpack.c.l.b16 %v150
  %v494 = vunpack.c.l.b16 %v151
  %v495 = vunpack.c.l.b16 %v152
  %v496 = vunpack.c.l.b16 %v153
  %v497 = vunpack.c.l.b16 %v154
  %v498 = vunpack.c.l.b16 %v155
  %v499 = vunpack.c.l.b16 %v156
  %v500 = vunpack.c.l.b16 %v157
  %v501 = vunpack.c.l.b16 %v158
  %v502 = vunpack.c.l.b16 %v159
  %v503 = vunpack.c.l.b16 %v160
  %v504 = vunpack.c.l.b16 %v161
  %v505 = vunpack.c.l.b16 %v162
  %v506 = vunpack.c.l.b16 %v163
  %v507 = vunpack.c.l.b16 %v164
  %v508 = vpack.c.b16 %v381, %v380
  %v509 = vpack.c.b16 %v383, %v382
  %v510 = vpack.c.b16 %v385, %v384
  %v511 = vpack.c.b16 %v387, %v386
  %v512 = vpack.c.b16 %v389, %v388
  %v513 = vpack.c.b16 %v391, %v390
  %v514 = vpack.c.b16 %v393, %v392
  %v515 = vpack.c.b16 %v395, %v394
  %v516 = vpack.c.b16 %v397, %v396
  %v517 = vpack.c.b16 %v399, %v398
  %v518 = vpack.c.b16 %v401, %v400
  %v519 = vpack.c.b16 %v403, %v402
  %v520 = vpack.c.b16 %v405, %v404
  %v521 = vpack.c.b16 %v407, %v406
  %v522 = vpack.c.b16 %v409, %v408
  %v523 = vpack.c.b16 %v411, %v410
  %v524 = vpack.c.b16 %v413, %v412
  %v525 = vpack.c.b16 %v415, %v414
  %v526 = vpack.c.b16 %v417, %v416
  %v527 = vpack.c.b16 %v419, %v418
  %v528 = vpack.c.b16 %v421, %v420
  %v529 = vpack.c.b16 %v423, %v422
  %v530 = vpack.c.b16 %v425, %v424
  %v531 = vpack.c.b16 %v427, %v426
  %v532 = vpack.c.b16 %v429, %v428
  %v533 = vpack.c.b16 %v431, %v430
  %v534 = vpack.c.b16 %v433, %v432
  %v535 = vpack.c.b16 %v435, %v434
  %v536 = vpack.c.b16 %v437, %v436
  %v537 = vpack.c.b16 %v439, %v438
  %v538 = vpack.c.b16 %v441, %v440
  %v539 = vpack.c.b16 %v443, %v442
  %v540 = vpack.c.b16 %v445, %v444
  %v541 = vpack.c.b16 %v447, %v446
  %v542 = vpack.c.b16 %v449, %v448
  %v543 = vpack.c.b16 %v451, %v450
  %v544 = vpack.c.b16 %v453, %v452
  %v545 = vpack.c.b16 %v455, %v454
  %v546 = vpack.c.b16 %v457, %v456
  %v547 = vpack.c.b16 %v459, %v458
  %v548 = vpack.c.b16 %v461, %v460
  %v549 = vpack.c.b16 %v463, %v462
  %v550 = vpack.c.b16 %v465, %v464
  %v551 = vpack.c.b16 %v467, %v466
  %v552 = vpack.c.b16 %v469, %v468
  %v553 = vpack.c.b16 %v471, %v470
  %v554 = vpack.c.b16 %v473, %v472
  %v555 = vpack.c.b16 %v475, %v474
  %v556 = vpack.c.b16 %v477, %v476
  %v557 = vpack.c.b16 %v479, %v478
  %v558 = vpack.c.b16 %v481, %v480
  %v559 = vpack.c.b16 %v483, %v482
  %v560 = vpack.c.b16 %v485, %v484
  %v561 = vpack.c.b16 %v487, %v486
  %v562 = vpack.c.b16 %v489, %v488
  %v563 = vpack.c.b16 %v491, %v490
  %v564 = vpack.c.b16 %v493, %v492
  %v565 = vpack.c.b16 %v495, %v494
  %v566 = vpack.c.b16 %v497, %v496
  %v567 = vpack.c.b16 %v499, %v498
  %v568 = vpack.c.b16 %v501, %v500
  %v569 = vpack.c.b16 %v503, %v502
  %v570 = vpack.c.b16 %v505, %v504
  %v571 = vpack.c.b16 %v507, %v506
  %636 = vmatprep.subr.bf16.mxu0 0
  %637 = vmatpush1.bf16.msra.mxu0 %v508
  %638 = vmatprep.subr.bf16.mxu0 0
  %639 = vmatpush1.bf16.msra.mxu0 %v509
  %640 = vmatprep.subr.bf16.mxu0 0
  %641 = vmatpush1.bf16.msra.mxu0 %v510
  %642 = vmatprep.subr.bf16.mxu0 0
  %643 = vmatpush1.bf16.msra.mxu0 %v511
  %644 = vmatprep.subr.bf16.mxu0 0
  %645 = vmatpush1.bf16.msra.mxu0 %v512
  %646 = vmatprep.subr.bf16.mxu0 0
  %647 = vmatpush1.bf16.msra.mxu0 %v513
  %648 = vmatprep.subr.bf16.mxu0 0
  %649 = vmatpush1.bf16.msra.mxu0 %v514
  %650 = vmatprep.subr.bf16.mxu0 0
  %651 = vmatpush1.bf16.msra.mxu0 %v515
  %652 = vmatprep.subr.bf16.mxu0 0
  %653 = vmatpush1.bf16.msra.mxu0 %v516
  %654 = vmatprep.subr.bf16.mxu0 0
  %655 = vmatpush1.bf16.msra.mxu0 %v517
  %656 = vmatprep.subr.bf16.mxu0 0
  %657 = vmatpush1.bf16.msra.mxu0 %v518
  %658 = vmatprep.subr.bf16.mxu0 0
  %659 = vmatpush1.bf16.msra.mxu0 %v519
  %660 = vmatprep.subr.bf16.mxu0 0
  %661 = vmatpush1.bf16.msra.mxu0 %v520
  %662 = vmatprep.subr.bf16.mxu0 0
  %663 = vmatpush1.bf16.msra.mxu0 %v521
  %664 = vmatprep.subr.bf16.mxu0 0
  %665 = vmatpush1.bf16.msra.mxu0 %v522
  %666 = vmatprep.subr.bf16.mxu0 0
  %667 = vmatpush1.bf16.msra.mxu0 %v523
  %668 = vmatprep.mubr.bf16.mxu0 %v221
  %669 = vmatmul.mubr.bf16.gmra.mrb[0].mxu0 %v220
  %v670 = vpop.f32.mrb[0].mxu0
  %v671 = vadd.f32 %v170, %v670
  %v672 = vpop.f32.mrb[0].mxu0
  %v673 = vpop.f32.mrb[0].mxu0
  %v674 = vadd.f32 %v170, %v673
  %v675 = vpop.f32.mrb[0].mxu0
  %676 = vmatprep.mubr.bf16.mxu0 %v229
  %677 = vmatmul.mubr.bf16.gmra.mrb[0].mxu0 %v228
  %v678 = vpop.f32.mrb[0].mxu0
  %v679 = vadd.f32 %v170, %v678
  %v680 = vpop.f32.mrb[0].mxu0
  %v681 = vpop.f32.mrb[0].mxu0
  %v682 = vadd.f32 %v170, %v681
  %v683 = vpop.f32.mrb[0].mxu0
  %684 = vdwg.mxu0
  %685 = vmatprep.subr.bf16.mxu0 0
  %686 = vmatpush1.bf16.msra.mxu0 %v524
  %687 = vmatprep.subr.bf16.mxu0 0
  %688 = vmatpush1.bf16.msra.mxu0 %v525
  %689 = vmatprep.subr.bf16.mxu0 0
  %690 = vmatpush1.bf16.msra.mxu0 %v526
  %691 = vmatprep.subr.bf16.mxu0 0
  %692 = vmatpush1.bf16.msra.mxu0 %v527
  %693 = vmatprep.subr.bf16.mxu0 0
  %694 = vmatpush1.bf16.msra.mxu0 %v528
  %695 = vmatprep.subr.bf16.mxu0 0
  %696 = vmatpush1.bf16.msra.mxu0 %v529
  %697 = vmatprep.subr.bf16.mxu0 0
  %698 = vmatpush1.bf16.msra.mxu0 %v530
  %699 = vmatprep.subr.bf16.mxu0 0
  %700 = vmatpush1.bf16.msra.mxu0 %v531
  %701 = vmatprep.subr.bf16.mxu0 0
  %702 = vmatpush1.bf16.msra.mxu0 %v532
  %703 = vmatprep.subr.bf16.mxu0 0
  %704 = vmatpush1.bf16.msra.mxu0 %v533
  %705 = vmatprep.subr.bf16.mxu0 0
  %706 = vmatpush1.bf16.msra.mxu0 %v534
  %707 = vmatprep.subr.bf16.mxu0 0
  %708 = vmatpush1.bf16.msra.mxu0 %v535
  %709 = vmatprep.subr.bf16.mxu0 0
  %710 = vmatpush1.bf16.msra.mxu0 %v536
  %711 = vmatprep.subr.bf16.mxu0 0
  %712 = vmatpush1.bf16.msra.mxu0 %v537
  %713 = vmatprep.subr.bf16.mxu0 0
  %714 = vmatpush1.bf16.msra.mxu0 %v538
  %715 = vmatprep.subr.bf16.mxu0 0
  %716 = vmatpush1.bf16.msra.mxu0 %v539
  %717 = vmatprep.mubr.bf16.mxu0 %v223
  %718 = vmatmul.mubr.bf16.gmra.mrb[0].mxu0 %v222
  %v719 = vpop.f32.mrb[0].mxu0
  %v720 = vadd.f32 %v671, %v719
  %v721 = vpop.f32.mrb[0].mxu0
  %v722 = vpop.f32.mrb[0].mxu0
  %v723 = vadd.f32 %v674, %v722
  %v724 = vpop.f32.mrb[0].mxu0
  %725 = vmatprep.mubr.bf16.mxu0 %v231
  %726 = vmatmul.mubr.bf16.gmra.mrb[0].mxu0 %v230
  %v727 = vpop.f32.mrb[0].mxu0
  %v728 = vadd.f32 %v679, %v727
  %v729 = vpop.f32.mrb[0].mxu0
  %v730 = vpop.f32.mrb[0].mxu0
  %v731 = vadd.f32 %v682, %v730
  %v732 = vpop.f32.mrb[0].mxu0
  %733 = vdwg.mxu0
  %734 = vmatprep.subr.bf16.mxu0 0
  %735 = vmatpush1.bf16.msra.mxu0 %v540
  %736 = vmatprep.subr.bf16.mxu0 0
  %737 = vmatpush1.bf16.msra.mxu0 %v541
  %738 = vmatprep.subr.bf16.mxu0 0
  %739 = vmatpush1.bf16.msra.mxu0 %v542
  %740 = vmatprep.subr.bf16.mxu0 0
  %741 = vmatpush1.bf16.msra.mxu0 %v543
  %742 = vmatprep.subr.bf16.mxu0 0
  %743 = vmatpush1.bf16.msra.mxu0 %v544
  %744 = vmatprep.subr.bf16.mxu0 0
  %745 = vmatpush1.bf16.msra.mxu0 %v545
  %746 = vmatprep.subr.bf16.mxu0 0
  %747 = vmatpush1.bf16.msra.mxu0 %v546
  %748 = vmatprep.subr.bf16.mxu0 0
  %749 = vmatpush1.bf16.msra.mxu0 %v547
  %750 = vmatprep.subr.bf16.mxu0 0
  %751 = vmatpush1.bf16.msra.mxu0 %v548
  %752 = vmatprep.subr.bf16.mxu0 0
  %753 = vmatpush1.bf16.msra.mxu0 %v549
  %754 = vmatprep.subr.bf16.mxu0 0
  %755 = vmatpush1.bf16.msra.mxu0 %v550
  %756 = vmatprep.subr.bf16.mxu0 0
  %757 = vmatpush1.bf16.msra.mxu0 %v551
  %758 = vmatprep.subr.bf16.mxu0 0
  %759 = vmatpush1.bf16.msra.mxu0 %v552
  %760 = vmatprep.subr.bf16.mxu0 0
  %761 = vmatpush1.bf16.msra.mxu0 %v553
  %762 = vmatprep.subr.bf16.mxu0 0
  %763 = vmatpush1.bf16.msra.mxu0 %v554
  %764 = vmatprep.subr.bf16.mxu0 0
  %765 = vmatpush1.bf16.msra.mxu0 %v555
  %766 = vmatprep.mubr.bf16.mxu0 %v225
  %767 = vmatmul.mubr.bf16.gmra.mrb[0].mxu0 %v224
  %v768 = vpop.f32.mrb[0].mxu0
  %v769 = vadd.f32 %v720, %v768
  %v770 = vpop.f32.mrb[0].mxu0
  %v771 = vpop.f32.mrb[0].mxu0
  %v772 = vadd.f32 %v723, %v771
  %v773 = vpop.f32.mrb[0].mxu0
  %774 = vmatprep.mubr.bf16.mxu0 %v233
  %775 = vmatmul.mubr.bf16.gmra.mrb[0].mxu0 %v232
  %v776 = vpop.f32.mrb[0].mxu0
  %v777 = vadd.f32 %v728, %v776
  %v778 = vpop.f32.mrb[0].mxu0
  %v779 = vpop.f32.mrb[0].mxu0
  %v780 = vadd.f32 %v731, %v779
  %v781 = vpop.f32.mrb[0].mxu0
  %782 = vdwg.mxu0
  %783 = vmatprep.subr.bf16.mxu0 0
  %784 = vmatpush1.bf16.msra.mxu0 %v556
  %785 = vmatprep.subr.bf16.mxu0 0
  %786 = vmatpush1.bf16.msra.mxu0 %v557
  %787 = vmatprep.subr.bf16.mxu0 0
  %788 = vmatpush1.bf16.msra.mxu0 %v558
  %789 = vmatprep.subr.bf16.mxu0 0
  %790 = vmatpush1.bf16.msra.mxu0 %v559
  %791 = vmatprep.subr.bf16.mxu0 0
  %792 = vmatpush1.bf16.msra.mxu0 %v560
  %793 = vmatprep.subr.bf16.mxu0 0
  %794 = vmatpush1.bf16.msra.mxu0 %v561
  %795 = vmatprep.subr.bf16.mxu0 0
  %796 = vmatpush1.bf16.msra.mxu0 %v562
  %797 = vmatprep.subr.bf16.mxu0 0
  %798 = vmatpush1.bf16.msra.mxu0 %v563
  %799 = vmatprep.subr.bf16.mxu0 0
  %800 = vmatpush1.bf16.msra.mxu0 %v564
  %801 = vmatprep.subr.bf16.mxu0 0
  %802 = vmatpush1.bf16.msra.mxu0 %v565
  %803 = vmatprep.subr.bf16.mxu0 0
  %804 = vmatpush1.bf16.msra.mxu0 %v566
  %805 = vmatprep.subr.bf16.mxu0 0
  %806 = vmatpush1.bf16.msra.mxu0 %v567
  %807 = vmatprep.subr.bf16.mxu0 0
  %808 = vmatpush1.bf16.msra.mxu0 %v568
  %809 = vmatprep.subr.bf16.mxu0 0
  %810 = vmatpush1.bf16.msra.mxu0 %v569
  %811 = vmatprep.subr.bf16.mxu0 0
  %812 = vmatpush1.bf16.msra.mxu0 %v570
  %813 = vmatprep.subr.bf16.mxu0 0
  %814 = vmatpush1.bf16.msra.mxu0 %v571
  %815 = vmatprep.mubr.bf16.mxu0 %v227
  %816 = vmatmul.mubr.bf16.gmra.mrb[0].mxu0 %v226
  %v817 = vpop.f32.mrb[0].mxu0
  %v818 = vadd.f32 %v769, %v817
  %v819 = vpop.f32.mrb[0].mxu0
  %v820 = vpop.f32.mrb[0].mxu0
  %v821 = vadd.f32 %v772, %v820
  %v822 = vpop.f32.mrb[0].mxu0
  %823 = vmatprep.mubr.bf16.mxu0 %v235
  %824 = vmatmul.mubr.bf16.gmra.mrb[0].mxu0 %v234
  %v825 = vpop.f32.mrb[0].mxu0
  %v826 = vadd.f32 %v777, %v825
  %v827 = vpop.f32.mrb[0].mxu0
  %v828 = vpop.f32.mrb[0].mxu0
  %v829 = vadd.f32 %v780, %v828
  %v830 = vpop.f32.mrb[0].mxu0
  %831 = vdwg.mxu0
  %vm832 = vcmask 261120
  %v833 = vsel %vm832, %v818, 0.0
  %v834 = vsel %vm832, %v821, 0.0
  %v835 = vadd.f32 %v833, %v834
  %v836 = vsel %vm832, %v826, 0.0
  %v837 = vadd.f32 %v835, %v836
  %v838 = vsel %vm832, %v829, 0.0
  %v839 = vadd.f32 %v837, %v838
  %v840 = vrot.slane %v839, 4
  %v841 = vadd.f32 %v839, %v840
  %v842 = vrot.slane %v841, 2
  %v843 = vadd.f32 %v841, %v842
  %v844 = vrot.slane %v843, 1
  %v845 = vadd.f32 %v843, %v844
  %v846 = vmul.f32 %v818, %v818
  %v847 = vmul.f32 %v821, %v821
  %v848 = vmul.f32 %v826, %v826
  %v849 = vmul.f32 %v829, %v829
  %v850 = vsel %vm832, %v846, 0.0
  %v851 = vsel %vm832, %v847, 0.0
  %v852 = vadd.f32 %v850, %v851
  %v853 = vsel %vm832, %v848, 0.0
  %v854 = vadd.f32 %v852, %v853
  %v855 = vsel %vm832, %v849, 0.0
  %v856 = vadd.f32 %v854, %v855
  %v857 = vrot.slane %v856, 4
  %v858 = vadd.f32 %v856, %v857
  %v859 = vrot.slane %v858, 2
  %v860 = vadd.f32 %v858, %v859
  %v861 = vrot.slane %v860, 1
  %v862 = vadd.f32 %v860, %v861
  %864 = vrot.lane.b32.xlu0 %v845, 120
  %v865 = vpop.permute.xlu0 %864
  %v867 = vadd.f32 %v845, %v865
  %868 = vrot.lane.b32.xlu0 %v845, 112
  %v869 = vpop.permute.xlu0 %868
  %v871 = vadd.f32 %v867, %v869
  %872 = vrot.lane.b32.xlu0 %v845, 104
  %v873 = vpop.permute.xlu0 %872
  %v875 = vadd.f32 %v871, %v873
  %877 = vrot.lane.b32.xlu0 %v862, 120
  %v878 = vpop.permute.xlu0 %877
  %v880 = vadd.f32 %v862, %v878
  %881 = vrot.lane.b32.xlu0 %v862, 112
  %v882 = vpop.permute.xlu0 %881
  %v884 = vadd.f32 %v880, %v882
  %885 = vrot.lane.b32.xlu0 %v862, 104
  %v886 = vpop.permute.xlu0 %885
  %v888 = vadd.f32 %v884, %v886
  %v889 = vrcp.pop 128.0
  %v890 = vmul.f32 %v875, %v889
  %v891 = vmul.f32 %v888, %v889
  %v892 = vmul.f32 %v890, %v890
  %v893 = vsub.f32 %v891, %v892
  %v894 = vld [vmem:[%s3] sm:$0x1]
  %v895 = vadd.f32 %v893, 1e-05
  %v896 = vrsqrt.pop %v895
  %v897 = vmul.f32 %v894, %v896
  %v898 = vld [vmem:[%s4] sm:$0x1]
  %v899 = vmul.f32 %v890, %v897
  %v900 = vsub.f32 %v898, %v899
  %v902 = vlaneseq
  %v903 = vshrl.u32 %v902, 7
  %v904 = vsub.s32 0, %v903
  %v905 = vrot.slane %v897, %v904
  %906 = vrot.lane.b32.xlu0 %v905, 8
  %v907 = vpop.permute.xlu0 %906
  %909 = vrot.lane.b32.xlu0 %v905, 16
  %v910 = vpop.permute.xlu0 %909
  %912 = vrot.lane.b32.xlu0 %v905, 24
  %v913 = vpop.permute.xlu0 %912
  %vm915 = vcmask 64512
  %v916 = vsel %vm915, %v897, %v907
  %vm917 = vcmask 130048
  %v918 = vsel %vm917, %v916, %v910
  %vm919 = vcmask 195584
  %v920 = vsel %vm919, %v918, %v913
  %v922 = vlaneseq
  %v923 = vshrl.u32 %v922, 7
  %v924 = vsub.s32 0, %v923
  %v925 = vrot.slane %v900, %v924
  %926 = vrot.lane.b32.xlu0 %v925, 8
  %v927 = vpop.permute.xlu0 %926
  %929 = vrot.lane.b32.xlu0 %v925, 16
  %v930 = vpop.permute.xlu0 %929
  %932 = vrot.lane.b32.xlu0 %v925, 24
  %v933 = vpop.permute.xlu0 %932
  %v935 = vsel %vm915, %v900, %v927
  %v936 = vsel %vm917, %v935, %v930
  %v937 = vsel %vm919, %v936, %v933
  %v938 = vlaneseq
  %v939 = vshrl.u32 %v938, 7
  %v940 = vsub.s32 0, %v939
  %v941 = vrot.slane %v920, %v940
  %v942 = vmul.f32 %v818, %v941
  %v943 = vmul.f32 %v821, %v941
  %v944 = vmul.f32 %v826, %v941
  %v945 = vmul.f32 %v829, %v941
  %v946 = vlaneseq
  %v947 = vshrl.u32 %v946, 7
  %v948 = vsub.s32 0, %v947
  %v949 = vrot.slane %v937, %v948
  %v950 = vadd.f32 %v942, %v949
  %v951 = vadd.f32 %v943, %v949
  %v952 = vadd.f32 %v944, %v949
  %v953 = vadd.f32 %v945, %v949
  %v954 = vmax.f32 %v950, 0.0
  %v955 = vmax.f32 %v951, 0.0
  %v956 = vmax.f32 %v952, 0.0
  %v957 = vmax.f32 %v953, 0.0
  %958 = vst.msk [vmem:[%s5] sm:$0xff] %vm832, %v954
  %959 = vst.msk [vmem:[%s5 + $0x8] sm:$0xff] %vm832, %v955
  %960 = vst.msk [vmem:[%s5 + $0x10] sm:$0xff] %vm832, %v956
  %961 = vst.msk [vmem:[%s5 + $0x18] sm:$0xff] %vm832, %v957
  // Predicated region
  $region22: #{gd_decoder_forward.18} parent=0 // pred_check
    _
  $region23: #{gd_decoder_forward.18} parent=0 // pred_check_branch
    %963 = sbr.rel (0) target = $region25
  $region24: #{gd_decoder_forward.18} parent=0 // pred_region
    _
  $region25: #{gd_decoder_forward.18} parent=0 // pred_fallthru
    _
  // Predicated region
  $region26: #{gd_decoder_forward.18} parent=0 // pred_check
    _
  $region27: #{gd_decoder_forward.18} parent=0 // pred_check_branch
    %965 = sbr.rel (0) target = $region29
  $region28: #{gd_decoder_forward.18} parent=0 // pred_region
    _
  $region29: #{gd_decoder_forward.18} parent=0 // pred_fallthru
    _

// kernel: gd_decoder_forward.19
$region0: #{gd_decoder_forward.19}
  #allocation0 [shape = 'u32[]', space=smem, size = 0x4, offset = 0x4, fixed_abs, tag = 'smem constant byte address 0x4 - core index']
  #allocation1 [shape = 'u32[144,128]{1,0:T(1,128)}', space=vmem, size = 0x12000, scoped, tag = 'internal scratch']
  %s0 = inlined_call_operand.vmem [shape: bf16[128,216], index: 0, kind: input, shape index: {}]
  %s1 = inlined_call_operand.vmem [shape: bf16[216,32], index: 1, kind: input, shape index: {}]
  %s2 = inlined_call_operand.vmem [shape: f32[1,32], index: 2, kind: input, shape index: {}]
  %s3 = inlined_call_operand.vmem [shape: bf16[32,8], index: 3, kind: input, shape index: {}]
  %s4 = inlined_call_operand.vmem [shape: f32[1,8], index: 4, kind: input, shape index: {}]
  %s5 = inlined_call_operand.vmem [shape: f32[128,8], index: 5, kind: output, shape index: {}]
  %s6 = sld [smem:[#allocation0]]
  $region30: #{gd_decoder_forward.19} parent=0
    _
  %s8 = ssub.s32 1, %s6
  %s9 = scalar_select 0, %s8, %s6
  // Predicated region
  $region2: #{gd_decoder_forward.19} parent=0 // pred_check
    _
  $region3: #{gd_decoder_forward.19} parent=0 // pred_check_branch
    %11 = sbr.rel (0) target = $region5
  $region4: #{gd_decoder_forward.19} parent=0 // pred_region
    _
  $region5: #{gd_decoder_forward.19} parent=0 // pred_fallthru
    _
  // Predicated region
  $region6: #{gd_decoder_forward.19} parent=0 // pred_check
    _
  $region7: #{gd_decoder_forward.19} parent=0 // pred_check_branch
    %13 = sbr.rel (0) target = $region9
  $region8: #{gd_decoder_forward.19} parent=0 // pred_region
    _
  $region9: #{gd_decoder_forward.19} parent=0 // pred_fallthru
    _
  // Predicated region
  $region10: #{gd_decoder_forward.19} parent=0 // pred_check
    _
  $region11: #{gd_decoder_forward.19} parent=0 // pred_check_branch
    %15 = sbr.rel (0) target = $region13
  $region12: #{gd_decoder_forward.19} parent=0 // pred_region
    _
  $region13: #{gd_decoder_forward.19} parent=0 // pred_fallthru
    _
  // Predicated region
  $region14: #{gd_decoder_forward.19} parent=0 // pred_check
    _
  $region15: #{gd_decoder_forward.19} parent=0 // pred_check_branch
    %17 = sbr.rel (0) target = $region17
  $region16: #{gd_decoder_forward.19} parent=0 // pred_region
    _
  $region17: #{gd_decoder_forward.19} parent=0 // pred_fallthru
    _
  // Predicated region
  $region18: #{gd_decoder_forward.19} parent=0 // pred_check
    _
  $region19: #{gd_decoder_forward.19} parent=0 // pred_check_branch
    %19 = sbr.rel (0) target = $region21
  $region20: #{gd_decoder_forward.19} parent=0 // pred_region
    _
  $region21: #{gd_decoder_forward.19} parent=0 // pred_fallthru
    _
  %v21 = vld [vmem:[%s0] sm:$0xff]
  %v22 = vld [vmem:[%s0 + $0x8] sm:$0xff]
  %v23 = vld [vmem:[%s0 + $0x10] sm:$0xff]
  %v24 = vld [vmem:[%s0 + $0x18] sm:$0xff]
  %v25 = vld [vmem:[%s0 + $0x20] sm:$0xff]
  %v26 = vld [vmem:[%s0 + $0x28] sm:$0xff]
  %v27 = vld [vmem:[%s0 + $0x30] sm:$0xff]
  %v28 = vld [vmem:[%s0 + $0x38] sm:$0xff]
  %v29 = vld [vmem:[%s0 + $0x40] sm:$0xff]
  %v30 = vld [vmem:[%s0 + $0x48] sm:$0xff]
  %v31 = vld [vmem:[%s0 + $0x50] sm:$0xff]
  %v32 = vld [vmem:[%s0 + $0x58] sm:$0xff]
  %v33 = vld [vmem:[%s0 + $0x60] sm:$0xff]
  %v34 = vld [vmem:[%s0 + $0x68] sm:$0xff]
  %v35 = vld [vmem:[%s0 + $0x70] sm:$0xff]
  %v36 = vld [vmem:[%s0 + $0x78] sm:$0xff]
  %v37 = vld [vmem:[%s1] sm:$0xf]
  %v38 = vld [vmem:[%s1 + $0x4] sm:$0xf]
  %v39 = vld [vmem:[%s1 + $0x8] sm:$0xf]
  %v40 = vld [vmem:[%s1 + $0xc] sm:$0xf]
  %v41 = vld [vmem:[%s1 + $0x10] sm:$0xf]
  %v42 = vld [vmem:[%s1 + $0x14] sm:$0xf]
  %v43 = vld [vmem:[%s1 + $0x18] sm:$0xf]
  %v44 = vld [vmem:[%s1 + $0x1c] sm:$0xf]
  %v45 = vld [vmem:[%s1 + $0x20] sm:$0xf]
  %v46 = vld [vmem:[%s1 + $0x24] sm:$0xf]
  %v47 = vld [vmem:[%s1 + $0x28] sm:$0xf]
  %v48 = vld [vmem:[%s1 + $0x2c] sm:$0xf]
  %v49 = vld [vmem:[%s1 + $0x30] sm:$0xf]
  %v50 = vld [vmem:[%s1 + $0x34] sm:$0xf]
  %v51 = vld [vmem:[%s1 + $0x38] sm:$0xf]
  %v52 = vld [vmem:[%s1 + $0x3c] sm:$0xf]
  %v53 = vld [vmem:[%s1 + $0x40] sm:$0xf]
  %v54 = vld [vmem:[%s1 + $0x44] sm:$0xf]
  %v55 = vld [vmem:[%s1 + $0x48] sm:$0xf]
  %v56 = vld [vmem:[%s1 + $0x4c] sm:$0xf]
  %v57 = vld [vmem:[%s1 + $0x50] sm:$0xf]
  %v58 = vld [vmem:[%s1 + $0x54] sm:$0xf]
  %v59 = vld [vmem:[%s1 + $0x58] sm:$0xf]
  %v60 = vld [vmem:[%s1 + $0x5c] sm:$0xf]
  %v61 = vld [vmem:[%s1 + $0x60] sm:$0xf]
  %v62 = vld [vmem:[%s1 + $0x64] sm:$0xf]
  %v63 = vld [vmem:[%s1 + $0x68] sm:$0xf]
  %v64 = vld [vmem:[%s2] sm:$0x1]
  %v66 = vlaneseq
  %v67 = vshrl.u32 %v66, 7
  %v68 = vsub.s32 0, %v67
  %v69 = vrot.slane %v64, %v68
  %v87 = vunpack.c.l.b16 %v21
  %v88 = vunpack.c.h.b16 %v21
  %v89 = vunpack.c.l.b16 %v22
  %v90 = vunpack.c.h.b16 %v22
  %v91 = vunpack.c.l.b16 %v23
  %v92 = vunpack.c.h.b16 %v23
  %v93 = vunpack.c.l.b16 %v24
  %v94 = vunpack.c.h.b16 %v24
  %v95 = vunpack.c.l.b16 %v25
  %v96 = vunpack.c.h.b16 %v25
  %v97 = vunpack.c.l.b16 %v26
  %v98 = vunpack.c.h.b16 %v26
  %v99 = vunpack.c.l.b16 %v27
  %v100 = vunpack.c.h.b16 %v27
  %v101 = vunpack.c.l.b16 %v28
  %v102 = vunpack.c.h.b16 %v28
  %v103 = vunpack.c.l.b16 %v29
  %v104 = vunpack.c.h.b16 %v29
  %v105 = vunpack.c.l.b16 %v30
  %v106 = vunpack.c.h.b16 %v30
  %v107 = vunpack.c.l.b16 %v31
  %v108 = vunpack.c.h.b16 %v31
  %v109 = vunpack.c.l.b16 %v32
  %v110 = vunpack.c.h.b16 %v32
  %v111 = vunpack.c.l.b16 %v33
  %v112 = vunpack.c.h.b16 %v33
  %v113 = vunpack.c.l.b16 %v34
  %v114 = vunpack.c.h.b16 %v34
  %v115 = vunpack.c.l.b16 %v35
  %v116 = vunpack.c.h.b16 %v35
  %v117 = vunpack.c.l.b16 %v36
  %v118 = vunpack.c.h.b16 %v36
  %v119 = vpack.c.b16 %v89, %v87
  %v120 = vpack.c.b16 %v90, %v88
  %v121 = vpack.c.b16 %v93, %v91
  %v122 = vpack.c.b16 %v94, %v92
  %v123 = vpack.c.b16 %v97, %v95
  %v124 = vpack.c.b16 %v98, %v96
  %v125 = vpack.c.b16 %v101, %v99
  %v126 = vpack.c.b16 %v102, %v100
  %v127 = vpack.c.b16 %v105, %v103
  %v128 = vpack.c.b16 %v106, %v104
  %v129 = vpack.c.b16 %v109, %v107
  %v130 = vpack.c.b16 %v110, %v108
  %v131 = vpack.c.b16 %v113, %v111
  %v132 = vpack.c.b16 %v114, %v112
  %v133 = vpack.c.b16 %v117, %v115
  %v134 = vpack.c.b16 %v118, %v116
  %v170 = vunpack.c.l.b16 %v37
  %v171 = vunpack.c.l.b16 %v38
  %v172 = vunpack.c.l.b16 %v39
  %v173 = vunpack.c.l.b16 %v40
  %v174 = vunpack.c.l.b16 %v41
  %v175 = vunpack.c.l.b16 %v42
  %v176 = vunpack.c.l.b16 %v43
  %v177 = vunpack.c.l.b16 %v44
  %v178 = vunpack.c.l.b16 %v45
  %v179 = vunpack.c.l.b16 %v46
  %v180 = vunpack.c.l.b16 %v47
  %v181 = vunpack.c.l.b16 %v48
  %v182 = vunpack.c.l.b16 %v49
  %v183 = vunpack.c.l.b16 %v50
  %v184 = vunpack.c.l.b16 %v51
  %v185 = vunpack.c.l.b16 %v52
  %v186 = vunpack.c.l.b16 %v53
  %v187 = vunpack.c.l.b16 %v54
  %v188 = vunpack.c.l.b16 %v55
  %v189 = vunpack.c.l.b16 %v56
  %v190 = vunpack.c.l.b16 %v57
  %v191 = vunpack.c.l.b16 %v58
  %v192 = vunpack.c.l.b16 %v59
  %v193 = vunpack.c.l.b16 %v60
  %v194 = vunpack.c.l.b16 %v61
  %v195 = vunpack.c.l.b16 %v62
  %v196 = vunpack.c.l.b16 %v63
  %v197 = vpack.c.b16 %v171, %v170
  %v198 = vpack.c.b16 %v173, %v172
  %v199 = vpack.c.b16 %v175, %v174
  %v200 = vpack.c.b16 %v177, %v176
  %v201 = vpack.c.b16 %v179, %v178
  %v202 = vpack.c.b16 %v181, %v180
  %v203 = vpack.c.b16 %v183, %v182
  %v204 = vpack.c.b16 %v185, %v184
  %v205 = vpack.c.b16 %v187, %v186
  %v206 = vpack.c.b16 %v189, %v188
  %v207 = vpack.c.b16 %v191, %v190
  %v208 = vpack.c.b16 %v193, %v192
  %v209 = vpack.c.b16 %v195, %v194
  %v210 = vpack.c.b16 %v196, %v196
  %vm224 = vcmask 719872
  %v226 = vsel %vm224, %v120, 0
  %v229 = vsel %vm224, %v122, 0
  %v232 = vsel %vm224, %v124, 0
  %v235 = vsel %vm224, %v126, 0
  %v238 = vsel %vm224, %v128, 0
  %v241 = vsel %vm224, %v130, 0
  %v244 = vsel %vm224, %v132, 0
  %v247 = vsel %vm224, %v134, 0
  %vm249 = vcmask 1043456
  %v251 = vsel %vm249, %v210, 0
  %253 = vmatprep.subr.bf16.mxu0 0
  %254 = vmatpush1.bf16.msra.mxu0 %v197
  %255 = vmatprep.subr.bf16.mxu0 0
  %256 = vmatpush1.bf16.msra.mxu0 %v198
  %257 = vmatprep.subr.bf16.mxu0 0
  %258 = vmatpush1.bf16.msra.mxu0 %v199
  %259 = vmatprep.subr.bf16.mxu0 0
  %260 = vmatpush1.bf16.msra.mxu0 %v200
  %261 = vmatprep.subr.bf16.mxu0 0
  %262 = vmatpush1.bf16.msra.mxu0 %v201
  %263 = vmatprep.subr.bf16.mxu0 0
  %264 = vmatpush1.bf16.msra.mxu0 %v202
  %265 = vmatprep.subr.bf16.mxu0 0
  %266 = vmatpush1.bf16.msra.mxu0 %v203
  %267 = vmatprep.subr.bf16.mxu0 0
  %268 = vmatpush1.bf16.msra.mxu0 %v204
  %269 = vmatprep.subr.bf16.mxu0 0
  %270 = vmatpush1.bf16.msra.mxu0 %v205
  %271 = vmatprep.subr.bf16.mxu0 0
  %272 = vmatpush1.bf16.msra.mxu0 %v206
  %273 = vmatprep.subr.bf16.mxu0 0
  %274 = vmatpush1.bf16.msra.mxu0 %v207
  %275 = vmatprep.subr.bf16.mxu0 0
  %276 = vmatpush1.bf16.msra.mxu0 %v208
  %277 = vmatprep.subr.bf16.mxu0 0
  %278 = vmatpush1.bf16.msra.mxu0 %v209
  %279 = vmatprep.subr.bf16.mxu0 0
  %280 = vmatpush1.bf16.msra.mxu0 %v251
  %281 = vmatprep.subr.bf16.mxu0 0
  %282 = vmatpush1.bf16.msra.mxu0 0
  %283 = vmatprep.subr.bf16.mxu0 0
  %284 = vmatpush1.bf16.msra.mxu0 0
  %285 = vmatprep.mubr.bf16.mxu0 %v226
  %286 = vmatmul.mubr.bf16.gmra.mrb[0].mxu0 %v119
  %v287 = vpop.f32.mrb[0].mxu0
  %v288 = vadd.f32 %v69, %v287
  %v289 = vpop.f32.mrb[0].mxu0
  %v290 = vpop.f32.mrb[0].mxu0
  %v291 = vadd.f32 %v69, %v290
  %v292 = vpop.f32.mrb[0].mxu0
  %293 = vmatprep.mubr.bf16.mxu0 %v229
  %294 = vmatmul.mubr.bf16.gmra.mrb[0].mxu0 %v121
  %v295 = vpop.f32.mrb[0].mxu0
  %v296 = vadd.f32 %v69, %v295
  %v297 = vpop.f32.mrb[0].mxu0
  %v298 = vpop.f32.mrb[0].mxu0
  %v299 = vadd.f32 %v69, %v298
  %v300 = vpop.f32.mrb[0].mxu0
  %301 = vmatprep.mubr.bf16.mxu0 %v232
  %302 = vmatmul.mubr.bf16.gmra.mrb[0].mxu0 %v123
  %v303 = vpop.f32.mrb[0].mxu0
  %v304 = vadd.f32 %v69, %v303
  %v305 = vpop.f32.mrb[0].mxu0
  %v306 = vpop.f32.mrb[0].mxu0
  %v307 = vadd.f32 %v69, %v306
  %v308 = vpop.f32.mrb[0].mxu0
  %309 = vmatprep.mubr.bf16.mxu0 %v235
  %310 = vmatmul.mubr.bf16.gmra.mrb[0].mxu0 %v125
  %v311 = vpop.f32.mrb[0].mxu0
  %v312 = vadd.f32 %v69, %v311
  %v313 = vpop.f32.mrb[0].mxu0
  %v314 = vpop.f32.mrb[0].mxu0
  %v315 = vadd.f32 %v69, %v314
  %v316 = vpop.f32.mrb[0].mxu0
  %317 = vmatprep.mubr.bf16.mxu0 %v238
  %318 = vmatmul.mubr.bf16.gmra.mrb[0].mxu0 %v127
  %v319 = vpop.f32.mrb[0].mxu0
  %v320 = vadd.f32 %v69, %v319
  %v321 = vpop.f32.mrb[0].mxu0
  %v322 = vpop.f32.mrb[0].mxu0
  %v323 = vadd.f32 %v69, %v322
  %v324 = vpop.f32.mrb[0].mxu0
  %325 = vmatprep.mubr.bf16.mxu0 %v241
  %326 = vmatmul.mubr.bf16.gmra.mrb[0].mxu0 %v129
  %v327 = vpop.f32.mrb[0].mxu0
  %v328 = vadd.f32 %v69, %v327
  %v329 = vpop.f32.mrb[0].mxu0
  %v330 = vpop.f32.mrb[0].mxu0
  %v331 = vadd.f32 %v69, %v330
  %v332 = vpop.f32.mrb[0].mxu0
  %333 = vmatprep.mubr.bf16.mxu0 %v244
  %334 = vmatmul.mubr.bf16.gmra.mrb[0].mxu0 %v131
  %v335 = vpop.f32.mrb[0].mxu0
  %v336 = vadd.f32 %v69, %v335
  %v337 = vpop.f32.mrb[0].mxu0
  %v338 = vpop.f32.mrb[0].mxu0
  %v339 = vadd.f32 %v69, %v338
  %v340 = vpop.f32.mrb[0].mxu0
  %341 = vmatprep.mubr.bf16.mxu0 %v247
  %342 = vmatmul.mubr.bf16.gmra.mrb[0].mxu0 %v133
  %v343 = vpop.f32.mrb[0].mxu0
  %v344 = vadd.f32 %v69, %v343
  %v345 = vpop.f32.mrb[0].mxu0
  %v346 = vpop.f32.mrb[0].mxu0
  %v347 = vadd.f32 %v69, %v346
  %v348 = vpop.f32.mrb[0].mxu0
  %349 = vdwg.mxu0
  %v350 = vpack.c.bf16 %v291, %v288
  %v351 = vpack.c.bf16 %v299, %v296
  %v352 = vpack.c.bf16 %v307, %v304
  %v353 = vpack.c.bf16 %v315, %v312
  %v354 = vpack.c.bf16 %v323, %v320
  %v355 = vpack.c.bf16 %v331, %v328
  %v356 = vpack.c.bf16 %v339, %v336
  %v357 = vpack.c.bf16 %v347, %v344
  %v358 = vld [vmem:[%s3] sm:$0xf]
  %v359 = vld [vmem:[%s3 + $0x4] sm:$0xf]
  %v360 = vld [vmem:[%s3 + $0x8] sm:$0xf]
  %v361 = vld [vmem:[%s3 + $0xc] sm:$0xf]
  %v362 = vld [vmem:[%s4] sm:$0x1]
  %v364 = vlaneseq
  %v365 = vshrl.u32 %v364, 7
  %v366 = vsub.s32 0, %v365
  %v367 = vrot.slane %v362, %v366
  %v373 = vunpack.c.l.b16 %v358
  %v374 = vunpack.c.l.b16 %v359
  %v375 = vunpack.c.l.b16 %v360
  %v376 = vunpack.c.l.b16 %v361
  %v377 = vpack.c.b16 %v374, %v373
  %v378 = vpack.c.b16 %v376, %v375
  %vm381 = vcmask 261120
  %v383 = vsel %vm381, %v350, 0
  %v386 = vsel %vm381, %v351, 0
  %v389 = vsel %vm381, %v352, 0
  %v392 = vsel %vm381, %v353, 0
  %v395 = vsel %vm381, %v354, 0
  %v398 = vsel %vm381, %v355, 0
  %v401 = vsel %vm381, %v356, 0
  %v404 = vsel %vm381, %v357, 0
  %406 = vmatprep.subr.bf16.mxu0 0
  %407 = vmatpush1.bf16.msra.mxu0 %v377
  %408 = vmatprep.subr.bf16.mxu0 0
  %409 = vmatpush1.bf16.msra.mxu0 %v378
  %410 = vmatprep.subr.bf16.mxu0 0
  %411 = vmatpush1.bf16.msra.mxu0 0
  %412 = vmatprep.subr.bf16.mxu0 0
  %413 = vmatpush1.bf16.msra.mxu0 0
  %414 = vmatprep.subr.bf16.mxu0 0
  %415 = vmatpush1.bf16.msra.mxu0 0
  %416 = vmatprep.subr.bf16.mxu0 0
  %417 = vmatpush1.bf16.msra.mxu0 0
  %418 = vmatprep.subr.bf16.mxu0 0
  %419 = vmatpush1.bf16.msra.mxu0 0
  %420 = vmatprep.subr.bf16.mxu0 0
  %421 = vmatpush1.bf16.msra.mxu0 0
  %422 = vmatprep.subr.bf16.mxu0 0
  %423 = vmatpush1.bf16.msra.mxu0 0
  %424 = vmatprep.subr.bf16.mxu0 0
  %425 = vmatpush1.bf16.msra.mxu0 0
  %426 = vmatprep.subr.bf16.mxu0 0
  %427 = vmatpush1.bf16.msra.mxu0 0
  %428 = vmatprep.subr.bf16.mxu0 0
  %429 = vmatpush1.bf16.msra.mxu0 0
  %430 = vmatprep.subr.bf16.mxu0 0
  %431 = vmatpush1.bf16.msra.mxu0 0
  %432 = vmatprep.subr.bf16.mxu0 0
  %433 = vmatpush1.bf16.msra.mxu0 0
  %434 = vmatprep.subr.bf16.mxu0 0
  %435 = vmatpush1.bf16.msra.mxu0 0
  %436 = vmatprep.subr.bf16.mxu0 0
  %437 = vmatpush1.bf16.msra.mxu0 0
  %438 = vmatprep.mubr.bf16.mxu0 0
  %439 = vmatmul.mubr.bf16.gmra.mrb[0].mxu0 %v383
  %v440 = vpop.f32.mrb[0].mxu0
  %v441 = vadd.f32 %v367, %v440
  %v442 = vpop.f32.mrb[0].mxu0
  %v443 = vpop.f32.mrb[0].mxu0
  %v444 = vadd.f32 %v367, %v443
  %v445 = vpop.f32.mrb[0].mxu0
  %446 = vmatprep.mubr.bf16.mxu0 0
  %447 = vmatmul.mubr.bf16.gmra.mrb[0].mxu0 %v386
  %v448 = vpop.f32.mrb[0].mxu0
  %v449 = vadd.f32 %v367, %v448
  %v450 = vpop.f32.mrb[0].mxu0
  %v451 = vpop.f32.mrb[0].mxu0
  %v452 = vadd.f32 %v367, %v451
  %v453 = vpop.f32.mrb[0].mxu0
  %454 = vmatprep.mubr.bf16.mxu0 0
  %455 = vmatmul.mubr.bf16.gmra.mrb[0].mxu0 %v389
  %v456 = vpop.f32.mrb[0].mxu0
  %v457 = vadd.f32 %v367, %v456
  %v458 = vpop.f32.mrb[0].mxu0
  %v459 = vpop.f32.mrb[0].mxu0
  %v460 = vadd.f32 %v367, %v459
  %v461 = vpop.f32.mrb[0].mxu0
  %462 = vmatprep.mubr.bf16.mxu0 0
  %463 = vmatmul.mubr.bf16.gmra.mrb[0].mxu0 %v392
  %v464 = vpop.f32.mrb[0].mxu0
  %v465 = vadd.f32 %v367, %v464
  %v466 = vpop.f32.mrb[0].mxu0
  %v467 = vpop.f32.mrb[0].mxu0
  %v468 = vadd.f32 %v367, %v467
  %v469 = vpop.f32.mrb[0].mxu0
  %470 = vmatprep.mubr.bf16.mxu0 0
  %471 = vmatmul.mubr.bf16.gmra.mrb[0].mxu0 %v395
  %v472 = vpop.f32.mrb[0].mxu0
  %v473 = vadd.f32 %v367, %v472
  %v474 = vpop.f32.mrb[0].mxu0
  %v475 = vpop.f32.mrb[0].mxu0
  %v476 = vadd.f32 %v367, %v475
  %v477 = vpop.f32.mrb[0].mxu0
  %478 = vmatprep.mubr.bf16.mxu0 0
  %479 = vmatmul.mubr.bf16.gmra.mrb[0].mxu0 %v398
  %v480 = vpop.f32.mrb[0].mxu0
  %v481 = vadd.f32 %v367, %v480
  %v482 = vpop.f32.mrb[0].mxu0
  %v483 = vpop.f32.mrb[0].mxu0
  %v484 = vadd.f32 %v367, %v483
  %v485 = vpop.f32.mrb[0].mxu0
  %486 = vmatprep.mubr.bf16.mxu0 0
  %487 = vmatmul.mubr.bf16.gmra.mrb[0].mxu0 %v401
  %v488 = vpop.f32.mrb[0].mxu0
  %v489 = vadd.f32 %v367, %v488
  %v490 = vpop.f32.mrb[0].mxu0
  %v491 = vpop.f32.mrb[0].mxu0
  %v492 = vadd.f32 %v367, %v491
  %v493 = vpop.f32.mrb[0].mxu0
  %494 = vmatprep.mubr.bf16.mxu0 0
  %495 = vmatmul.mubr.bf16.gmra.mrb[0].mxu0 %v404
  %v496 = vpop.f32.mrb[0].mxu0
  %v497 = vadd.f32 %v367, %v496
  %v498 = vpop.f32.mrb[0].mxu0
  %v499 = vpop.f32.mrb[0].mxu0
  %v500 = vadd.f32 %v367, %v499
  %v501 = vpop.f32.mrb[0].mxu0
  %502 = vdwg.mxu0
  %vm503 = vcmask 64512
  %504 = vst.msk [vmem:[%s5] sm:$0xff] %vm503, %v441
  %505 = vst.msk [vmem:[%s5 + $0x8] sm:$0xff] %vm503, %v444
  %506 = vst.msk [vmem:[%s5 + $0x10] sm:$0xff] %vm503, %v449
  %507 = vst.msk [vmem:[%s5 + $0x18] sm:$0xff] %vm503, %v452
  %508 = vst.msk [vmem:[%s5 + $0x20] sm:$0xff] %vm503, %v457
  %509 = vst.msk [vmem:[%s5 + $0x28] sm:$0xff] %vm503, %v460
  %510 = vst.msk [vmem:[%s5 + $0x30] sm:$0xff] %vm503, %v465
  %511 = vst.msk [vmem:[%s5 + $0x38] sm:$0xff] %vm503, %v468
  %512 = vst.msk [vmem:[%s5 + $0x40] sm:$0xff] %vm503, %v473
  %513 = vst.msk [vmem:[%s5 + $0x48] sm:$0xff] %vm503, %v476
  %514 = vst.msk [vmem:[%s5 + $0x50] sm:$0xff] %vm503, %v481
  %515 = vst.msk [vmem:[%s5 + $0x58] sm:$0xff] %vm503, %v484
  %516 = vst.msk [vmem:[%s5 + $0x60] sm:$0xff] %vm503, %v489
  %517 = vst.msk [vmem:[%s5 + $0x68] sm:$0xff] %vm503, %v492
  %518 = vst.msk [vmem:[%s5 + $0x70] sm:$0xff] %vm503, %v497
  %519 = vst.msk [vmem:[%s5 + $0x78] sm:$0xff] %vm503, %v500
  // Predicated region
  $region22: #{gd_decoder_forward.19} parent=0 // pred_check
    _
  $region23: #{gd_decoder_forward.19} parent=0 // pred_check_branch
    %521 = sbr.rel (0) target = $region25
  $region24: #{gd_decoder_forward.19} parent=0 // pred_region
    _
  $region25: #{gd_decoder_forward.19} parent=0 // pred_fallthru
    _
  // Predicated region
  $region26: #{gd_decoder_forward.19} parent=0 // pred_check
    _
  $region27: #{gd_decoder_forward.19} parent=0 // pred_check_branch
    %523 = sbr.rel (0) target = $region29
  $region28: #{gd_decoder_forward.19} parent=0 // pred_region
    _
  $region29: #{gd_decoder_forward.19} parent=0 // pred_fallthru
    _

// kernel: gd_decoder_forward.20
$region0: #{gd_decoder_forward.20}
  #allocation0 [shape = 'u32[]', space=smem, size = 0x4, offset = 0x4, fixed_abs, tag = 'smem constant byte address 0x4 - core index']
  #allocation1 [shape = 'u32[144,128]{1,0:T(1,128)}', space=vmem, size = 0x12000, scoped, tag = 'internal scratch']
  %s0 = inlined_call_operand.vmem [shape: bf16[128,288], index: 0, kind: input, shape index: {}]
  %s1 = inlined_call_operand.vmem [shape: bf16[288,32], index: 1, kind: input, shape index: {}]
  %s2 = inlined_call_operand.vmem [shape: f32[1,32], index: 2, kind: input, shape index: {}]
  %s3 = inlined_call_operand.vmem [shape: bf16[128,32], index: 3, kind: output, shape index: {}]
  %s4 = sld [smem:[#allocation0]]
  $region22: #{gd_decoder_forward.20} parent=0
    _
  %s6 = ssub.s32 1, %s4
  %s7 = scalar_select 0, %s6, %s4
  // Predicated region
  $region2: #{gd_decoder_forward.20} parent=0 // pred_check
    _
  $region3: #{gd_decoder_forward.20} parent=0 // pred_check_branch
    %9 = sbr.rel (0) target = $region5
  $region4: #{gd_decoder_forward.20} parent=0 // pred_region
    _
  $region5: #{gd_decoder_forward.20} parent=0 // pred_fallthru
    _
  // Predicated region
  $region6: #{gd_decoder_forward.20} parent=0 // pred_check
    _
  $region7: #{gd_decoder_forward.20} parent=0 // pred_check_branch
    %11 = sbr.rel (0) target = $region9
  $region8: #{gd_decoder_forward.20} parent=0 // pred_region
    _
  $region9: #{gd_decoder_forward.20} parent=0 // pred_fallthru
    _
  // Predicated region
  $region10: #{gd_decoder_forward.20} parent=0 // pred_check
    _
  $region11: #{gd_decoder_forward.20} parent=0 // pred_check_branch
    %13 = sbr.rel (0) target = $region13
  $region12: #{gd_decoder_forward.20} parent=0 // pred_region
    _
  $region13: #{gd_decoder_forward.20} parent=0 // pred_fallthru
    _
  %v15 = vld [vmem:[%s0] sm:$0xff]
  %v16 = vld [vmem:[%s0 + $0x8] sm:$0xf]
  %v17 = vld [vmem:[%s0 + $0xc] sm:$0xff]
  %v18 = vld [vmem:[%s0 + $0x14] sm:$0xf]
  %v19 = vld [vmem:[%s0 + $0x18] sm:$0xff]
  %v20 = vld [vmem:[%s0 + $0x20] sm:$0xf]
  %v21 = vld [vmem:[%s0 + $0x24] sm:$0xff]
  %v22 = vld [vmem:[%s0 + $0x2c] sm:$0xf]
  %v23 = vld [vmem:[%s0 + $0x30] sm:$0xff]
  %v24 = vld [vmem:[%s0 + $0x38] sm:$0xf]
  %v25 = vld [vmem:[%s0 + $0x3c] sm:$0xff]
  %v26 = vld [vmem:[%s0 + $0x44] sm:$0xf]
  %v27 = vld [vmem:[%s0 + $0x48] sm:$0xff]
  %v28 = vld [vmem:[%s0 + $0x50] sm:$0xf]
  %v29 = vld [vmem:[%s0 + $0x54] sm:$0xff]
  %v30 = vld [vmem:[%s0 + $0x5c] sm:$0xf]
  %v31 = vld [vmem:[%s0 + $0x60] sm:$0xff]
  %v32 = vld [vmem:[%s0 + $0x68] sm:$0xf]
  %v33 = vld [vmem:[%s0 + $0x6c] sm:$0xff]
  %v34 = vld [vmem:[%s0 + $0x74] sm:$0xf]
  %v35 = vld [vmem:[%s0 + $0x78] sm:$0xff]
  %v36 = vld [vmem:[%s0 + $0x80] sm:$0xf]
  %v37 = vld [vmem:[%s0 + $0x84] sm:$0xff]
  %v38 = vld [vmem:[%s0 + $0x8c] sm:$0xf]
  %v39 = vld [vmem:[%s0 + $0x90] sm:$0xff]
  %v40 = vld [vmem:[%s0 + $0x98] sm:$0xf]
  %v41 = vld [vmem:[%s0 + $0x9c] sm:$0xff]
  %v42 = vld [vmem:[%s0 + $0xa4] sm:$0xf]
  %v43 = vld [vmem:[%s0 + $0xa8] sm:$0xff]
  %v44 = vld [vmem:[%s0 + $0xb0] sm:$0xf]
  %v45 = vld [vmem:[%s0 + $0xb4] sm:$0xff]
  %v46 = vld [vmem:[%s0 + $0xbc] sm:$0xf]
  %v47 = vld [vmem:[%s1] sm:$0xf]
  %v48 = vld [vmem:[%s1 + $0x4] sm:$0xf]
  %v49 = vld [vmem:[%s1 + $0x8] sm:$0xf]
  %v50 = vld [vmem:[%s1 + $0xc] sm:$0xf]
  %v51 = vld [vmem:[%s1 + $0x10] sm:$0xf]
  %v52 = vld [vmem:[%s1 + $0x14] sm:$0xf]
  %v53 = vld [vmem:[%s1 + $0x18] sm:$0xf]
  %v54 = vld [vmem:[%s1 + $0x1c] sm:$0xf]
  %v55 = vld [vmem:[%s1 + $0x20] sm:$0xf]
  %v56 = vld [vmem:[%s1 + $0x24] sm:$0xf]
  %v57 = vld [vmem:[%s1 + $0x28] sm:$0xf]
  %v58 = vld [vmem:[%s1 + $0x2c] sm:$0xf]
  %v59 = vld [vmem:[%s1 + $0x30] sm:$0xf]
  %v60 = vld [vmem:[%s1 + $0x34] sm:$0xf]
  %v61 = vld [vmem:[%s1 + $0x38] sm:$0xf]
  %v62 = vld [vmem:[%s1 + $0x3c] sm:$0xf]
  %v63 = vld [vmem:[%s1 + $0x40] sm:$0xf]
  %v64 = vld [vmem:[%s1 + $0x44] sm:$0xf]
  %v65 = vld [vmem:[%s1 + $0x48] sm:$0xf]
  %v66 = vld [vmem:[%s1 + $0x4c] sm:$0xf]
  %v67 = vld [vmem:[%s1 + $0x50] sm:$0xf]
  %v68 = vld [vmem:[%s1 + $0x54] sm:$0xf]
  %v69 = vld [vmem:[%s1 + $0x58] sm:$0xf]
  %v70 = vld [vmem:[%s1 + $0x5c] sm:$0xf]
  %v71 = vld [vmem:[%s1 + $0x60] sm:$0xf]
  %v72 = vld [vmem:[%s1 + $0x64] sm:$0xf]
  %v73 = vld [vmem:[%s1 + $0x68] sm:$0xf]
  %v74 = vld [vmem:[%s1 + $0x6c] sm:$0xf]
  %v75 = vld [vmem:[%s1 + $0x70] sm:$0xf]
  %v76 = vld [vmem:[%s1 + $0x74] sm:$0xf]
  %v77 = vld [vmem:[%s1 + $0x78] sm:$0xf]
  %v78 = vld [vmem:[%s1 + $0x7c] sm:$0xf]
  %v79 = vld [vmem:[%s1 + $0x80] sm:$0xf]
  %v80 = vld [vmem:[%s1 + $0x84] sm:$0xf]
  %v81 = vld [vmem:[%s1 + $0x88] sm:$0xf]
  %v82 = vld [vmem:[%s1 + $0x8c] sm:$0xf]
  %v83 = vld [vmem:[%s2] sm:$0x1]
  %v85 = vlaneseq
  %v86 = vshrl.u32 %v85, 7
  %v87 = vsub.s32 0, %v86
  %v88 = vrot.slane %v83, %v87
  %v122 = vunpack.c.l.b16 %v15
  %v123 = vunpack.c.h.b16 %v15
  %v124 = vunpack.c.l.b16 %v16
  %v125 = vunpack.c.l.b16 %v17
  %v126 = vunpack.c.h.b16 %v17
  %v127 = vunpack.c.l.b16 %v18
  %v128 = vunpack.c.l.b16 %v19
  %v129 = vunpack.c.h.b16 %v19
  %v130 = vunpack.c.l.b16 %v20
  %v131 = vunpack.c.l.b16 %v21
  %v132 = vunpack.c.h.b16 %v21
  %v133 = vunpack.c.l.b16 %v22
  %v134 = vunpack.c.l.b16 %v23
  %v135 = vunpack.c.h.b16 %v23
  %v136 = vunpack.c.l.b16 %v24
  %v137 = vunpack.c.l.b16 %v25
  %v138 = vunpack.c.h.b16 %v25
  %v139 = vunpack.c.l.b16 %v26
  %v140 = vunpack.c.l.b16 %v27
  %v141 = vunpack.c.h.b16 %v27
  %v142 = vunpack.c.l.b16 %v28
  %v143 = vunpack.c.l.b16 %v29
  %v144 = vunpack.c.h.b16 %v29
  %v145 = vunpack.c.l.b16 %v30
  %v146 = vunpack.c.l.b16 %v31
  %v147 = vunpack.c.h.b16 %v31
  %v148 = vunpack.c.l.b16 %v32
  %v149 = vunpack.c.l.b16 %v33
  %v150 = vunpack.c.h.b16 %v33
  %v151 = vunpack.c.l.b16 %v34
  %v152 = vunpack.c.l.b16 %v35
  %v153 = vunpack.c.h.b16 %v35
  %v154 = vunpack.c.l.b16 %v36
  %v155 = vunpack.c.l.b16 %v37
  %v156 = vunpack.c.h.b16 %v37
  %v157 = vunpack.c.l.b16 %v38
  %v158 = vunpack.c.l.b16 %v39
  %v159 = vunpack.c.h.b16 %v39
  %v160 = vunpack.c.l.b16 %v40
  %v161 = vunpack.c.l.b16 %v41
  %v162 = vunpack.c.h.b16 %v41
  %v163 = vunpack.c.l.b16 %v42
  %v164 = vunpack.c.l.b16 %v43
  %v165 = vunpack.c.h.b16 %v43
  %v166 = vunpack.c.l.b16 %v44
  %v167 = vunpack.c.l.b16 %v45
  %v168 = vunpack.c.h.b16 %v45
  %v169 = vunpack.c.l.b16 %v46
  %v170 = vpack.c.b16 %v125, %v122
  %v171 = vpack.c.b16 %v126, %v123
  %v172 = vpack.c.b16 %v127, %v124
  %v173 = vpack.c.b16 %v131, %v128
  %v174 = vpack.c.b16 %v132, %v129
  %v175 = vpack.c.b16 %v133, %v130
  %v176 = vpack.c.b16 %v137, %v134
  %v177 = vpack.c.b16 %v138, %v135
  %v178 = vpack.c.b16 %v139, %v136
  %v179 = vpack.c.b16 %v143, %v140
  %v180 = vpack.c.b16 %v144, %v141
  %v181 = vpack.c.b16 %v145, %v142
  %v182 = vpack.c.b16 %v149, %v146
  %v183 = vpack.c.b16 %v150, %v147
  %v184 = vpack.c.b16 %v151, %v148
  %v185 = vpack.c.b16 %v155, %v152
  %v186 = vpack.c.b16 %v156, %v153
  %v187 = vpack.c.b16 %v157, %v154
  %v188 = vpack.c.b16 %v161, %v158
  %v189 = vpack.c.b16 %v162, %v159
  %v190 = vpack.c.b16 %v163, %v160
  %v191 = vpack.c.b16 %v167, %v164
  %v192 = vpack.c.b16 %v168, %v165
  %v193 = vpack.c.b16 %v169, %v166
  %v246 = vunpack.c.l.b16 %v47
  %v247 = vunpack.c.l.b16 %v48
  %v248 = vunpack.c.l.b16 %v49
  %v249 = vunpack.c.l.b16 %v50
  %v250 = vunpack.c.l.b16 %v51
  %v251 = vunpack.c.l.b16 %v52
  %v252 = vunpack.c.l.b16 %v53
  %v253 = vunpack.c.l.b16 %v54
  %v254 = vunpack.c.l.b16 %v55
  %v255 = vunpack.c.l.b16 %v56
  %v256 = vunpack.c.l.b16 %v57
  %v257 = vunpack.c.l.b16 %v58
  %v258 = vunpack.c.l.b16 %v59
  %v259 = vunpack.c.l.b16 %v60
  %v260 = vunpack.c.l.b16 %v61
  %v261 = vunpack.c.l.b16 %v62
  %v262 = vunpack.c.l.b16 %v63
  %v263 = vunpack.c.l.b16 %v64
  %v264 = vunpack.c.l.b16 %v65
  %v265 = vunpack.c.l.b16 %v66
  %v266 = vunpack.c.l.b16 %v67
  %v267 = vunpack.c.l.b16 %v68
  %v268 = vunpack.c.l.b16 %v69
  %v269 = vunpack.c.l.b16 %v70
  %v270 = vunpack.c.l.b16 %v71
  %v271 = vunpack.c.l.b16 %v72
  %v272 = vunpack.c.l.b16 %v73
  %v273 = vunpack.c.l.b16 %v74
  %v274 = vunpack.c.l.b16 %v75
  %v275 = vunpack.c.l.b16 %v76
  %v276 = vunpack.c.l.b16 %v77
  %v277 = vunpack.c.l.b16 %v78
  %v278 = vunpack.c.l.b16 %v79
  %v279 = vunpack.c.l.b16 %v80
  %v280 = vunpack.c.l.b16 %v81
  %v281 = vunpack.c.l.b16 %v82
  %v282 = vpack.c.b16 %v247, %v246
  %v283 = vpack.c.b16 %v249, %v248
  %v284 = vpack.c.b16 %v251, %v250
  %v285 = vpack.c.b16 %v253, %v252
  %v286 = vpack.c.b16 %v255, %v254
  %v287 = vpack.c.b16 %v257, %v256
  %v288 = vpack.c.b16 %v259, %v258
  %v289 = vpack.c.b16 %v261, %v260
  %v290 = vpack.c.b16 %v263, %v262
  %v291 = vpack.c.b16 %v265, %v264
  %v292 = vpack.c.b16 %v267, %v266
  %v293 = vpack.c.b16 %v269, %v268
  %v294 = vpack.c.b16 %v271, %v270
  %v295 = vpack.c.b16 %v273, %v272
  %v296 = vpack.c.b16 %v275, %v274
  %v297 = vpack.c.b16 %v277, %v276
  %v298 = vpack.c.b16 %v279, %v278
  %v299 = vpack.c.b16 %v281, %v280
  %vm318 = vcmask 261120
  %v320 = vsel %vm318, %v172, 0
  %v323 = vsel %vm318, %v175, 0
  %v326 = vsel %vm318, %v178, 0
  %v329 = vsel %vm318, %v181, 0
  %v332 = vsel %vm318, %v184, 0
  %v335 = vsel %vm318, %v187, 0
  %v338 = vsel %vm318, %v190, 0
  %v341 = vsel %vm318, %v193, 0
  %343 = vmatprep.subr.bf16.mxu0 0
  %344 = vmatpush1.bf16.msra.mxu0 %v282
  %345 = vmatprep.subr.bf16.mxu0 0
  %346 = vmatpush1.bf16.msra.mxu0 %v283
  %347 = vmatprep.subr.bf16.mxu0 0
  %348 = vmatpush1.bf16.msra.mxu0 %v284
  %349 = vmatprep.subr.bf16.mxu0 0
  %350 = vmatpush1.bf16.msra.mxu0 %v285
  %351 = vmatprep.subr.bf16.mxu0 0
  %352 = vmatpush1.bf16.msra.mxu0 %v286
  %353 = vmatprep.subr.bf16.mxu0 0
  %354 = vmatpush1.bf16.msra.mxu0 %v287
  %355 = vmatprep.subr.bf16.mxu0 0
  %356 = vmatpush1.bf16.msra.mxu0 %v288
  %357 = vmatprep.subr.bf16.mxu0 0
  %358 = vmatpush1.bf16.msra.mxu0 %v289
  %359 = vmatprep.subr.bf16.mxu0 0
  %360 = vmatpush1.bf16.msra.mxu0 %v290
  %361 = vmatprep.subr.bf16.mxu0 0
  %362 = vmatpush1.bf16.msra.mxu0 %v291
  %363 = vmatprep.subr.bf16.mxu0 0
  %364 = vmatpush1.bf16.msra.mxu0 %v292
  %365 = vmatprep.subr.bf16.mxu0 0
  %366 = vmatpush1.bf16.msra.mxu0 %v293
  %367 = vmatprep.subr.bf16.mxu0 0
  %368 = vmatpush1.bf16.msra.mxu0 %v294
  %369 = vmatprep.subr.bf16.mxu0 0
  %370 = vmatpush1.bf16.msra.mxu0 %v295
  %371 = vmatprep.subr.bf16.mxu0 0
  %372 = vmatpush1.bf16.msra.mxu0 %v296
  %373 = vmatprep.subr.bf16.mxu0 0
  %374 = vmatpush1.bf16.msra.mxu0 %v297
  %375 = vmatprep.mubr.bf16.mxu0 %v171
  %376 = vmatmul.mubr.bf16.gmra.mrb[0].mxu0 %v170
  %v377 = vpop.f32.mrb[0].mxu0
  %v378 = vadd.f32 %v88, %v377
  %v379 = vpop.f32.mrb[0].mxu0
  %v380 = vpop.f32.mrb[0].mxu0
  %v381 = vadd.f32 %v88, %v380
  %v382 = vpop.f32.mrb[0].mxu0
  %383 = vmatprep.mubr.bf16.mxu0 %v174
  %384 = vmatmul.mubr.bf16.gmra.mrb[0].mxu0 %v173
  %v385 = vpop.f32.mrb[0].mxu0
  %v386 = vadd.f32 %v88, %v385
  %v387 = vpop.f32.mrb[0].mxu0
  %v388 = vpop.f32.mrb[0].mxu0
  %v389 = vadd.f32 %v88, %v388
  %v390 = vpop.f32.mrb[0].mxu0
  %391 = vmatprep.mubr.bf16.mxu0 %v177
  %392 = vmatmul.mubr.bf16.gmra.mrb[0].mxu0 %v176
  %v393 = vpop.f32.mrb[0].mxu0
  %v394 = vadd.f32 %v88, %v393
  %v395 = vpop.f32.mrb[0].mxu0
  %v396 = vpop.f32.mrb[0].mxu0
  %v397 = vadd.f32 %v88, %v396
  %v398 = vpop.f32.mrb[0].mxu0
  %399 = vmatprep.mubr.bf16.mxu0 %v180
  %400 = vmatmul.mubr.bf16.gmra.mrb[0].mxu0 %v179
  %v401 = vpop.f32.mrb[0].mxu0
  %v402 = vadd.f32 %v88, %v401
  %v403 = vpop.f32.mrb[0].mxu0
  %v404 = vpop.f32.mrb[0].mxu0
  %v405 = vadd.f32 %v88, %v404
  %v406 = vpop.f32.mrb[0].mxu0
  %407 = vmatprep.mubr.bf16.mxu0 %v183
  %408 = vmatmul.mubr.bf16.gmra.mrb[0].mxu0 %v182
  %v409 = vpop.f32.mrb[0].mxu0
  %v410 = vadd.f32 %v88, %v409
  %v411 = vpop.f32.mrb[0].mxu0
  %v412 = vpop.f32.mrb[0].mxu0
  %v413 = vadd.f32 %v88, %v412
  %v414 = vpop.f32.mrb[0].mxu0
  %415 = vmatprep.mubr.bf16.mxu0 %v186
  %416 = vmatmul.mubr.bf16.gmra.mrb[0].mxu0 %v185
  %v417 = vpop.f32.mrb[0].mxu0
  %v418 = vadd.f32 %v88, %v417
  %v419 = vpop.f32.mrb[0].mxu0
  %v420 = vpop.f32.mrb[0].mxu0
  %v421 = vadd.f32 %v88, %v420
  %v422 = vpop.f32.mrb[0].mxu0
  %423 = vmatprep.mubr.bf16.mxu0 %v189
  %424 = vmatmul.mubr.bf16.gmra.mrb[0].mxu0 %v188
  %v425 = vpop.f32.mrb[0].mxu0
  %v426 = vadd.f32 %v88, %v425
  %v427 = vpop.f32.mrb[0].mxu0
  %v428 = vpop.f32.mrb[0].mxu0
  %v429 = vadd.f32 %v88, %v428
  %v430 = vpop.f32.mrb[0].mxu0
  %431 = vmatprep.mubr.bf16.mxu0 %v192
  %432 = vmatmul.mubr.bf16.gmra.mrb[0].mxu0 %v191
  %v433 = vpop.f32.mrb[0].mxu0
  %v434 = vadd.f32 %v88, %v433
  %v435 = vpop.f32.mrb[0].mxu0
  %v436 = vpop.f32.mrb[0].mxu0
  %v437 = vadd.f32 %v88, %v436
  %v438 = vpop.f32.mrb[0].mxu0
  %439 = vdwg.mxu0
  %440 = vmatprep.subr.bf16.mxu0 0
  %441 = vmatpush1.bf16.msra.mxu0 %v298
  %442 = vmatprep.subr.bf16.mxu0 0
  %443 = vmatpush1.bf16.msra.mxu0 %v299
  %444 = vmatprep.subr.bf16.mxu0 0
  %445 = vmatpush1.bf16.msra.mxu0 0
  %446 = vmatprep.subr.bf16.mxu0 0
  %447 = vmatpush1.bf16.msra.mxu0 0
  %448 = vmatprep.subr.bf16.mxu0 0
  %449 = vmatpush1.bf16.msra.mxu0 0
  %450 = vmatprep.subr.bf16.mxu0 0
  %451 = vmatpush1.bf16.msra.mxu0 0
  %452 = vmatprep.subr.bf16.mxu0 0
  %453 = vmatpush1.bf16.msra.mxu0 0
  %454 = vmatprep.subr.bf16.mxu0 0
  %455 = vmatpush1.bf16.msra.mxu0 0
  %456 = vmatprep.subr.bf16.mxu0 0
  %457 = vmatpush1.bf16.msra.mxu0 0
  %458 = vmatprep.subr.bf16.mxu0 0
  %459 = vmatpush1.bf16.msra.mxu0 0
  %460 = vmatprep.subr.bf16.mxu0 0
  %461 = vmatpush1.bf16.msra.mxu0 0
  %462 = vmatprep.subr.bf16.mxu0 0
  %463 = vmatpush1.bf16.msra.mxu0 0
  %464 = vmatprep.subr.bf16.mxu0 0
  %465 = vmatpush1.bf16.msra.mxu0 0
  %466 = vmatprep.subr.bf16.mxu0 0
  %467 = vmatpush1.bf16.msra.mxu0 0
  %468 = vmatprep.subr.bf16.mxu0 0
  %469 = vmatpush1.bf16.msra.mxu0 0
  %470 = vmatprep.subr.bf16.mxu0 0
  %471 = vmatpush1.bf16.msra.mxu0 0
  %472 = vmatprep.mubr.bf16.mxu0 0
  %473 = vmatmul.mubr.bf16.gmra.mrb[0].mxu0 %v320
  %v474 = vpop.f32.mrb[0].mxu0
  %v475 = vadd.f32 %v378, %v474
  %v476 = vpop.f32.mrb[0].mxu0
  %v477 = vpop.f32.mrb[0].mxu0
  %v478 = vadd.f32 %v381, %v477
  %v479 = vpop.f32.mrb[0].mxu0
  %480 = vmatprep.mubr.bf16.mxu0 0
  %481 = vmatmul.mubr.bf16.gmra.mrb[0].mxu0 %v323
  %v482 = vpop.f32.mrb[0].mxu0
  %v483 = vadd.f32 %v386, %v482
  %v484 = vpop.f32.mrb[0].mxu0
  %v485 = vpop.f32.mrb[0].mxu0
  %v486 = vadd.f32 %v389, %v485
  %v487 = vpop.f32.mrb[0].mxu0
  %488 = vmatprep.mubr.bf16.mxu0 0
  %489 = vmatmul.mubr.bf16.gmra.mrb[0].mxu0 %v326
  %v490 = vpop.f32.mrb[0].mxu0
  %v491 = vadd.f32 %v394, %v490
  %v492 = vpop.f32.mrb[0].mxu0
  %v493 = vpop.f32.mrb[0].mxu0
  %v494 = vadd.f32 %v397, %v493
  %v495 = vpop.f32.mrb[0].mxu0
  %496 = vmatprep.mubr.bf16.mxu0 0
  %497 = vmatmul.mubr.bf16.gmra.mrb[0].mxu0 %v329
  %v498 = vpop.f32.mrb[0].mxu0
  %v499 = vadd.f32 %v402, %v498
  %v500 = vpop.f32.mrb[0].mxu0
  %v501 = vpop.f32.mrb[0].mxu0
  %v502 = vadd.f32 %v405, %v501
  %v503 = vpop.f32.mrb[0].mxu0
  %504 = vmatprep.mubr.bf16.mxu0 0
  %505 = vmatmul.mubr.bf16.gmra.mrb[0].mxu0 %v332
  %v506 = vpop.f32.mrb[0].mxu0
  %v507 = vadd.f32 %v410, %v506
  %v508 = vpop.f32.mrb[0].mxu0
  %v509 = vpop.f32.mrb[0].mxu0
  %v510 = vadd.f32 %v413, %v509
  %v511 = vpop.f32.mrb[0].mxu0
  %512 = vmatprep.mubr.bf16.mxu0 0
  %513 = vmatmul.mubr.bf16.gmra.mrb[0].mxu0 %v335
  %v514 = vpop.f32.mrb[0].mxu0
  %v515 = vadd.f32 %v418, %v514
  %v516 = vpop.f32.mrb[0].mxu0
  %v517 = vpop.f32.mrb[0].mxu0
  %v518 = vadd.f32 %v421, %v517
  %v519 = vpop.f32.mrb[0].mxu0
  %520 = vmatprep.mubr.bf16.mxu0 0
  %521 = vmatmul.mubr.bf16.gmra.mrb[0].mxu0 %v338
  %v522 = vpop.f32.mrb[0].mxu0
  %v523 = vadd.f32 %v426, %v522
  %v524 = vpop.f32.mrb[0].mxu0
  %v525 = vpop.f32.mrb[0].mxu0
  %v526 = vadd.f32 %v429, %v525
  %v527 = vpop.f32.mrb[0].mxu0
  %528 = vmatprep.mubr.bf16.mxu0 0
  %529 = vmatmul.mubr.bf16.gmra.mrb[0].mxu0 %v341
  %v530 = vpop.f32.mrb[0].mxu0
  %v531 = vadd.f32 %v434, %v530
  %v532 = vpop.f32.mrb[0].mxu0
  %v533 = vpop.f32.mrb[0].mxu0
  %v534 = vadd.f32 %v437, %v533
  %v535 = vpop.f32.mrb[0].mxu0
  %536 = vdwg.mxu0
  %v537 = vpack.c.bf16 %v478, %v475
  %v538 = vpack.c.bf16 %v486, %v483
  %v539 = vpack.c.bf16 %v494, %v491
  %v540 = vpack.c.bf16 %v502, %v499
  %v541 = vpack.c.bf16 %v510, %v507
  %v542 = vpack.c.bf16 %v518, %v515
  %v543 = vpack.c.bf16 %v526, %v523
  %v544 = vpack.c.bf16 %v534, %v531
  %v553 = vunpack.c.l.b16 %v537
  %v554 = vunpack.c.h.b16 %v537
  %v555 = vunpack.c.l.b16 %v538
  %v556 = vunpack.c.h.b16 %v538
  %v557 = vunpack.c.l.b16 %v539
  %v558 = vunpack.c.h.b16 %v539
  %v559 = vunpack.c.l.b16 %v540
  %v560 = vunpack.c.h.b16 %v540
  %v561 = vunpack.c.l.b16 %v541
  %v562 = vunpack.c.h.b16 %v541
  %v563 = vunpack.c.l.b16 %v542
  %v564 = vunpack.c.h.b16 %v542
  %v565 = vunpack.c.l.b16 %v543
  %v566 = vunpack.c.h.b16 %v543
  %v567 = vunpack.c.l.b16 %v544
  %v568 = vunpack.c.h.b16 %v544
  %v569 = vpack.c.b16 %v553, %v553
  %v570 = vpack.c.b16 %v554, %v554
  %v571 = vpack.c.b16 %v555, %v555
  %v572 = vpack.c.b16 %v556, %v556
  %v573 = vpack.c.b16 %v557, %v557
  %v574 = vpack.c.b16 %v558, %v558
  %v575 = vpack.c.b16 %v559, %v559
  %v576 = vpack.c.b16 %v560, %v560
  %v577 = vpack.c.b16 %v561, %v561
  %v578 = vpack.c.b16 %v562, %v562
  %v579 = vpack.c.b16 %v563, %v563
  %v580 = vpack.c.b16 %v564, %v564
  %v581 = vpack.c.b16 %v565, %v565
  %v582 = vpack.c.b16 %v566, %v566
  %v583 = vpack.c.b16 %v567, %v567
  %v584 = vpack.c.b16 %v568, %v568
  %vm601 = vcmask 257024
  %602 = vst.msk [vmem:[%s3] sm:$0xf] %vm601, %v569
  %603 = vst.msk [vmem:[%s3 + $0x4] sm:$0xf] %vm601, %v570
  %604 = vst.msk [vmem:[%s3 + $0x8] sm:$0xf] %vm601, %v571
  %605 = vst.msk [vmem:[%s3 + $0xc] sm:$0xf] %vm601, %v572
  %606 = vst.msk [vmem:[%s3 + $0x10] sm:$0xf] %vm601, %v573
  %607 = vst.msk [vmem:[%s3 + $0x14] sm:$0xf] %vm601, %v574
  %608 = vst.msk [vmem:[%s3 + $0x18] sm:$0xf] %vm601, %v575
  %609 = vst.msk [vmem:[%s3 + $0x1c] sm:$0xf] %vm601, %v576
  %610 = vst.msk [vmem:[%s3 + $0x20] sm:$0xf] %vm601, %v577
  %611 = vst.msk [vmem:[%s3 + $0x24] sm:$0xf] %vm601, %v578
  %612 = vst.msk [vmem:[%s3 + $0x28] sm:$0xf] %vm601, %v579
  %613 = vst.msk [vmem:[%s3 + $0x2c] sm:$0xf] %vm601, %v580
  %614 = vst.msk [vmem:[%s3 + $0x30] sm:$0xf] %vm601, %v581
  %615 = vst.msk [vmem:[%s3 + $0x34] sm:$0xf] %vm601, %v582
  %616 = vst.msk [vmem:[%s3 + $0x38] sm:$0xf] %vm601, %v583
  %617 = vst.msk [vmem:[%s3 + $0x3c] sm:$0xf] %vm601, %v584
  // Predicated region
  $region14: #{gd_decoder_forward.20} parent=0 // pred_check
    _
  $region15: #{gd_decoder_forward.20} parent=0 // pred_check_branch
    %619 = sbr.rel (0) target = $region17
  $region16: #{gd_decoder_forward.20} parent=0 // pred_region
    _
  $region17: #{gd_decoder_forward.20} parent=0 // pred_fallthru
    _
  // Predicated region
  $region18: #{gd_decoder_forward.20} parent=0 // pred_check
    _
  $region19: #{gd_decoder_forward.20} parent=0 // pred_check_branch
    %621 = sbr.rel (0) target = $region21
  $region20: #{gd_decoder_forward.20} parent=0 // pred_region
    _
  $region21: #{gd_decoder_forward.20} parent=0 // pred_fallthru
    _

// kernel: gd_decoder_forward.21
$region0: #{gd_decoder_forward.21}
  #allocation0 [shape = 'u32[]', space=smem, size = 0x4, offset = 0x4, fixed_abs, tag = 'smem constant byte address 0x4 - core index']
  #allocation1 [shape = 'u32[144,128]{1,0:T(1,128)}', space=vmem, size = 0x12000, scoped, tag = 'internal scratch']
  %s0 = inlined_call_operand.vmem [shape: bf16[128,512], index: 0, kind: input, shape index: {}]
  %s1 = inlined_call_operand.vmem [shape: bf16[512,16], index: 1, kind: input, shape index: {}]
  %s2 = inlined_call_operand.vmem [shape: f32[1,16], index: 2, kind: input, shape index: {}]
  %s3 = inlined_call_operand.vmem [shape: f32[1,4], index: 3, kind: input, shape index: {}]
  %s4 = inlined_call_operand.vmem [shape: f32[1,4], index: 4, kind: input, shape index: {}]
  %s5 = inlined_call_operand.vmem [shape: f32[128,16], index: 5, kind: output, shape index: {}]
  %s6 = sld [smem:[#allocation0]]
  $region30: #{gd_decoder_forward.21} parent=0
    _
  %s8 = ssub.s32 1, %s6
  %s9 = scalar_select 0, %s8, %s6
  // Predicated region
  $region2: #{gd_decoder_forward.21} parent=0 // pred_check
    _
  $region3: #{gd_decoder_forward.21} parent=0 // pred_check_branch
    %11 = sbr.rel (0) target = $region5
  $region4: #{gd_decoder_forward.21} parent=0 // pred_region
    _
  $region5: #{gd_decoder_forward.21} parent=0 // pred_fallthru
    _
  // Predicated region
  $region6: #{gd_decoder_forward.21} parent=0 // pred_check
    _
  $region7: #{gd_decoder_forward.21} parent=0 // pred_check_branch
    %13 = sbr.rel (0) target = $region9
  $region8: #{gd_decoder_forward.21} parent=0 // pred_region
    _
  $region9: #{gd_decoder_forward.21} parent=0 // pred_fallthru
    _
  // Predicated region
  $region10: #{gd_decoder_forward.21} parent=0 // pred_check
    _
  $region11: #{gd_decoder_forward.21} parent=0 // pred_check_branch
    %15 = sbr.rel (0) target = $region13
  $region12: #{gd_decoder_forward.21} parent=0 // pred_region
    _
  $region13: #{gd_decoder_forward.21} parent=0 // pred_fallthru
    _
  // Predicated region
  $region14: #{gd_decoder_forward.21} parent=0 // pred_check
    _
  $region15: #{gd_decoder_forward.21} parent=0 // pred_check_branch
    %17 = sbr.rel (0) target = $region17
  $region16: #{gd_decoder_forward.21} parent=0 // pred_region
    _
  $region17: #{gd_decoder_forward.21} parent=0 // pred_fallthru
    _
  // Predicated region
  $region18: #{gd_decoder_forward.21} parent=0 // pred_check
    _
  $region19: #{gd_decoder_forward.21} parent=0 // pred_check_branch
    %19 = sbr.rel (0) target = $region21
  $region20: #{gd_decoder_forward.21} parent=0 // pred_region
    _
  $region21: #{gd_decoder_forward.21} parent=0 // pred_fallthru
    _
  %v21 = vld [vmem:[%s0] sm:$0xff]
  %v22 = vld [vmem:[%s0 + $0x8] sm:$0xff]
  %v23 = vld [vmem:[%s0 + $0x10] sm:$0xff]
  %v24 = vld [vmem:[%s0 + $0x18] sm:$0xff]
  %v25 = vld [vmem:[%s0 + $0x20] sm:$0xff]
  %v26 = vld [vmem:[%s0 + $0x28] sm:$0xff]
  %v27 = vld [vmem:[%s0 + $0x30] sm:$0xff]
  %v28 = vld [vmem:[%s0 + $0x38] sm:$0xff]
  %v29 = vld [vmem:[%s0 + $0x40] sm:$0xff]
  %v30 = vld [vmem:[%s0 + $0x48] sm:$0xff]
  %v31 = vld [vmem:[%s0 + $0x50] sm:$0xff]
  %v32 = vld [vmem:[%s0 + $0x58] sm:$0xff]
  %v33 = vld [vmem:[%s0 + $0x60] sm:$0xff]
  %v34 = vld [vmem:[%s0 + $0x68] sm:$0xff]
  %v35 = vld [vmem:[%s0 + $0x70] sm:$0xff]
  %v36 = vld [vmem:[%s0 + $0x78] sm:$0xff]
  %v37 = vld [vmem:[%s0 + $0x80] sm:$0xff]
  %v38 = vld [vmem:[%s0 + $0x88] sm:$0xff]
  %v39 = vld [vmem:[%s0 + $0x90] sm:$0xff]
  %v40 = vld [vmem:[%s0 + $0x98] sm:$0xff]
  %v41 = vld [vmem:[%s0 + $0xa0] sm:$0xff]
  %v42 = vld [vmem:[%s0 + $0xa8] sm:$0xff]
  %v43 = vld [vmem:[%s0 + $0xb0] sm:$0xff]
  %v44 = vld [vmem:[%s0 + $0xb8] sm:$0xff]
  %v45 = vld [vmem:[%s0 + $0xc0] sm:$0xff]
  %v46 = vld [vmem:[%s0 + $0xc8] sm:$0xff]
  %v47 = vld [vmem:[%s0 + $0xd0] sm:$0xff]
  %v48 = vld [vmem:[%s0 + $0xd8] sm:$0xff]
  %v49 = vld [vmem:[%s0 + $0xe0] sm:$0xff]
  %v50 = vld [vmem:[%s0 + $0xe8] sm:$0xff]
  %v51 = vld [vmem:[%s0 + $0xf0] sm:$0xff]
  %v52 = vld [vmem:[%s0 + $0xf8] sm:$0xff]
  %v53 = vld [vmem:[%s1] sm:$0xf]
  %v54 = vld [vmem:[%s1 + $0x4] sm:$0xf]
  %v55 = vld [vmem:[%s1 + $0x8] sm:$0xf]
  %v56 = vld [vmem:[%s1 + $0xc] sm:$0xf]
  %v57 = vld [vmem:[%s1 + $0x10] sm:$0xf]
  %v58 = vld [vmem:[%s1 + $0x14] sm:$0xf]
  %v59 = vld [vmem:[%s1 + $0x18] sm:$0xf]
  %v60 = vld [vmem:[%s1 + $0x1c] sm:$0xf]
  %v61 = vld [vmem:[%s1 + $0x20] sm:$0xf]
  %v62 = vld [vmem:[%s1 + $0x24] sm:$0xf]
  %v63 = vld [vmem:[%s1 + $0x28] sm:$0xf]
  %v64 = vld [vmem:[%s1 + $0x2c] sm:$0xf]
  %v65 = vld [vmem:[%s1 + $0x30] sm:$0xf]
  %v66 = vld [vmem:[%s1 + $0x34] sm:$0xf]
  %v67 = vld [vmem:[%s1 + $0x38] sm:$0xf]
  %v68 = vld [vmem:[%s1 + $0x3c] sm:$0xf]
  %v69 = vld [vmem:[%s1 + $0x40] sm:$0xf]
  %v70 = vld [vmem:[%s1 + $0x44] sm:$0xf]
  %v71 = vld [vmem:[%s1 + $0x48] sm:$0xf]
  %v72 = vld [vmem:[%s1 + $0x4c] sm:$0xf]
  %v73 = vld [vmem:[%s1 + $0x50] sm:$0xf]
  %v74 = vld [vmem:[%s1 + $0x54] sm:$0xf]
  %v75 = vld [vmem:[%s1 + $0x58] sm:$0xf]
  %v76 = vld [vmem:[%s1 + $0x5c] sm:$0xf]
  %v77 = vld [vmem:[%s1 + $0x60] sm:$0xf]
  %v78 = vld [vmem:[%s1 + $0x64] sm:$0xf]
  %v79 = vld [vmem:[%s1 + $0x68] sm:$0xf]
  %v80 = vld [vmem:[%s1 + $0x6c] sm:$0xf]
  %v81 = vld [vmem:[%s1 + $0x70] sm:$0xf]
  %v82 = vld [vmem:[%s1 + $0x74] sm:$0xf]
  %v83 = vld [vmem:[%s1 + $0x78] sm:$0xf]
  %v84 = vld [vmem:[%s1 + $0x7c] sm:$0xf]
  %v85 = vld [vmem:[%s1 + $0x80] sm:$0xf]
  %v86 = vld [vmem:[%s1 + $0x84] sm:$0xf]
  %v87 = vld [vmem:[%s1 + $0x88] sm:$0xf]
  %v88 = vld [vmem:[%s1 + $0x8c] sm:$0xf]
  %v89 = vld [vmem:[%s1 + $0x90] sm:$0xf]
  %v90 = vld [vmem:[%s1 + $0x94] sm:$0xf]
  %v91 = vld [vmem:[%s1 + $0x98] sm:$0xf]
  %v92 = vld [vmem:[%s1 + $0x9c] sm:$0xf]
  %v93 = vld [vmem:[%s1 + $0xa0] sm:$0xf]
  %v94 = vld [vmem:[%s1 + $0xa4] sm:$0xf]
  %v95 = vld [vmem:[%s1 + $0xa8] sm:$0xf]
  %v96 = vld [vmem:[%s1 + $0xac] sm:$0xf]
  %v97 = vld [vmem:[%s1 + $0xb0] sm:$0xf]
  %v98 = vld [vmem:[%s1 + $0xb4] sm:$0xf]
  %v99 = vld [vmem:[%s1 + $0xb8] sm:$0xf]
  %v100 = vld [vmem:[%s1 + $0xbc] sm:$0xf]
  %v101 = vld [vmem:[%s1 + $0xc0] sm:$0xf]
  %v102 = vld [vmem:[%s1 + $0xc4] sm:$0xf]
  %v103 = vld [vmem:[%s1 + $0xc8] sm:$0xf]
  %v104 = vld [vmem:[%s1 + $0xcc] sm:$0xf]
  %v105 = vld [vmem:[%s1 + $0xd0] sm:$0xf]
  %v106 = vld [vmem:[%s1 + $0xd4] sm:$0xf]
  %v107 = vld [vmem:[%s1 + $0xd8] sm:$0xf]
  %v108 = vld [vmem:[%s1 + $0xdc] sm:$0xf]
  %v109 = vld [vmem:[%s1 + $0xe0] sm:$0xf]
  %v110 = vld [vmem:[%s1 + $0xe4] sm:$0xf]
  %v111 = vld [vmem:[%s1 + $0xe8] sm:$0xf]
  %v112 = vld [vmem:[%s1 + $0xec] sm:$0xf]
  %v113 = vld [vmem:[%s1 + $0xf0] sm:$0xf]
  %v114 = vld [vmem:[%s1 + $0xf4] sm:$0xf]
  %v115 = vld [vmem:[%s1 + $0xf8] sm:$0xf]
  %v116 = vld [vmem:[%s1 + $0xfc] sm:$0xf]
  %v117 = vld [vmem:[%s2] sm:$0x1]
  %v119 = vlaneseq
  %v120 = vshrl.u32 %v119, 7
  %v121 = vsub.s32 0, %v120
  %v122 = vrot.slane %v117, %v121
  %v156 = vunpack.c.l.b16 %v21
  %v157 = vunpack.c.h.b16 %v21
  %v158 = vunpack.c.l.b16 %v22
  %v159 = vunpack.c.h.b16 %v22
  %v160 = vunpack.c.l.b16 %v23
  %v161 = vunpack.c.h.b16 %v23
  %v162 = vunpack.c.l.b16 %v24
  %v163 = vunpack.c.h.b16 %v24
  %v164 = vunpack.c.l.b16 %v25
  %v165 = vunpack.c.h.b16 %v25
  %v166 = vunpack.c.l.b16 %v26
  %v167 = vunpack.c.h.b16 %v26
  %v168 = vunpack.c.l.b16 %v27
  %v169 = vunpack.c.h.b16 %v27
  %v170 = vunpack.c.l.b16 %v28
  %v171 = vunpack.c.h.b16 %v28
  %v172 = vunpack.c.l.b16 %v29
  %v173 = vunpack.c.h.b16 %v29
  %v174 = vunpack.c.l.b16 %v30
  %v175 = vunpack.c.h.b16 %v30
  %v176 = vunpack.c.l.b16 %v31
  %v177 = vunpack.c.h.b16 %v31
  %v178 = vunpack.c.l.b16 %v32
  %v179 = vunpack.c.h.b16 %v32
  %v180 = vunpack.c.l.b16 %v33
  %v181 = vunpack.c.h.b16 %v33
  %v182 = vunpack.c.l.b16 %v34
  %v183 = vunpack.c.h.b16 %v34
  %v184 = vunpack.c.l.b16 %v35
  %v185 = vunpack.c.h.b16 %v35
  %v186 = vunpack.c.l.b16 %v36
  %v187 = vunpack.c.h.b16 %v36
  %v188 = vunpack.c.l.b16 %v37
  %v189 = vunpack.c.h.b16 %v37
  %v190 = vunpack.c.l.b16 %v38
  %v191 = vunpack.c.h.b16 %v38
  %v192 = vunpack.c.l.b16 %v39
  %v193 = vunpack.c.h.b16 %v39
  %v194 = vunpack.c.l.b16 %v40
  %v195 = vunpack.c.h.b16 %v40
  %v196 = vunpack.c.l.b16 %v41
  %v197 = vunpack.c.h.b16 %v41
  %v198 = vunpack.c.l.b16 %v42
  %v199 = vunpack.c.h.b16 %v42
  %v200 = vunpack.c.l.b16 %v43
  %v201 = vunpack.c.h.b16 %v43
  %v202 = vunpack.c.l.b16 %v44
  %v203 = vunpack.c.h.b16 %v44
  %v204 = vunpack.c.l.b16 %v45
  %v205 = vunpack.c.h.b16 %v45
  %v206 = vunpack.c.l.b16 %v46
  %v207 = vunpack.c.h.b16 %v46
  %v208 = vunpack.c.l.b16 %v47
  %v209 = vunpack.c.h.b16 %v47
  %v210 = vunpack.c.l.b16 %v48
  %v211 = vunpack.c.h.b16 %v48
  %v212 = vunpack.c.l.b16 %v49
  %v213 = vunpack.c.h.b16 %v49
  %v214 = vunpack.c.l.b16 %v50
  %v215 = vunpack.c.h.b16 %v50
  %v216 = vunpack.c.l.b16 %v51
  %v217 = vunpack.c.h.b16 %v51
  %v218 = vunpack.c.l.b16 %v52
  %v219 = vunpack.c.h.b16 %v52
  %v220 = vpack.c.b16 %v160, %v156
  %v221 = vpack.c.b16 %v161, %v157
  %v222 = vpack.c.b16 %v162, %v158
  %v223 = vpack.c.b16 %v163, %v159
  %v224 = vpack.c.b16 %v168, %v164
  %v225 = vpack.c.b16 %v169, %v165
  %v226 = vpack.c.b16 %v170, %v166
  %v227 = vpack.c.b16 %v171, %v167
  %v228 = vpack.c.b16 %v176, %v172
  %v229 = vpack.c.b16 %v177, %v173
  %v230 = vpack.c.b16 %v178, %v174
  %v231 = vpack.c.b16 %v179, %v175
  %v232 = vpack.c.b16 %v184, %v180
  %v233 = vpack.c.b16 %v185, %v181
  %v234 = vpack.c.b16 %v186, %v182
  %v235 = vpack.c.b16 %v187, %v183
  %v236 = vpack.c.b16 %v192, %v188
  %v237 = vpack.c.b16 %v193, %v189
  %v238 = vpack.c.b16 %v194, %v190
  %v239 = vpack.c.b16 %v195, %v191
  %v240 = vpack.c.b16 %v200, %v196
  %v241 = vpack.c.b16 %v201, %v197
  %v242 = vpack.c.b16 %v202, %v198
  %v243 = vpack.c.b16 %v203, %v199
  %v244 = vpack.c.b16 %v208, %v204
  %v245 = vpack.c.b16 %v209, %v205
  %v246 = vpack.c.b16 %v210, %v206
  %v247 = vpack.c.b16 %v211, %v207
  %v248 = vpack.c.b16 %v216, %v212
  %v249 = vpack.c.b16 %v217, %v213
  %v250 = vpack.c.b16 %v218, %v214
  %v251 = vpack.c.b16 %v219, %v215
  %v348 = vunpack.c.l.b16 %v53
  %v349 = vunpack.c.l.b16 %v54
  %v350 = vunpack.c.l.b16 %v55
  %v351 = vunpack.c.l.b16 %v56
  %v352 = vunpack.c.l.b16 %v57
  %v353 = vunpack.c.l.b16 %v58
  %v354 = vunpack.c.l.b16 %v59
  %v355 = vunpack.c.l.b16 %v60
  %v356 = vunpack.c.l.b16 %v61
  %v357 = vunpack.c.l.b16 %v62
  %v358 = vunpack.c.l.b16 %v63
  %v359 = vunpack.c.l.b16 %v64
  %v360 = vunpack.c.l.b16 %v65
  %v361 = vunpack.c.l.b16 %v66
  %v362 = vunpack.c.l.b16 %v67
  %v363 = vunpack.c.l.b16 %v68
  %v364 = vunpack.c.l.b16 %v69
  %v365 = vunpack.c.l.b16 %v70
  %v366 = vunpack.c.l.b16 %v71
  %v367 = vunpack.c.l.b16 %v72
  %v368 = vunpack.c.l.b16 %v73
  %v369 = vunpack.c.l.b16 %v74
  %v370 = vunpack.c.l.b16 %v75
  %v371 = vunpack.c.l.b16 %v76
  %v372 = vunpack.c.l.b16 %v77
  %v373 = vunpack.c.l.b16 %v78
  %v374 = vunpack.c.l.b16 %v79
  %v375 = vunpack.c.l.b16 %v80
  %v376 = vunpack.c.l.b16 %v81
  %v377 = vunpack.c.l.b16 %v82
  %v378 = vunpack.c.l.b16 %v83
  %v379 = vunpack.c.l.b16 %v84
  %v380 = vunpack.c.l.b16 %v85
  %v381 = vunpack.c.l.b16 %v86
  %v382 = vunpack.c.l.b16 %v87
  %v383 = vunpack.c.l.b16 %v88
  %v384 = vunpack.c.l.b16 %v89
  %v385 = vunpack.c.l.b16 %v90
  %v386 = vunpack.c.l.b16 %v91
  %v387 = vunpack.c.l.b16 %v92
  %v388 = vunpack.c.l.b16 %v93
  %v389 = vunpack.c.l.b16 %v94
  %v390 = vunpack.c.l.b16 %v95
  %v391 = vunpack.c.l.b16 %v96
  %v392 = vunpack.c.l.b16 %v97
  %v393 = vunpack.c.l.b16 %v98
  %v394 = vunpack.c.l.b16 %v99
  %v395 = vunpack.c.l.b16 %v100
  %v396 = vunpack.c.l.b16 %v101
  %v397 = vunpack.c.l.b16 %v102
  %v398 = vunpack.c.l.b16 %v103
  %v399 = vunpack.c.l.b16 %v104
  %v400 = vunpack.c.l.b16 %v105
  %v401 = vunpack.c.l.b16 %v106
  %v402 = vunpack.c.l.b16 %v107
  %v403 = vunpack.c.l.b16 %v108
  %v404 = vunpack.c.l.b16 %v109
  %v405 = vunpack.c.l.b16 %v110
  %v406 = vunpack.c.l.b16 %v111
  %v407 = vunpack.c.l.b16 %v112
  %v408 = vunpack.c.l.b16 %v113
  %v409 = vunpack.c.l.b16 %v114
  %v410 = vunpack.c.l.b16 %v115
  %v411 = vunpack.c.l.b16 %v116
  %v412 = vpack.c.b16 %v349, %v348
  %v413 = vpack.c.b16 %v351, %v350
  %v414 = vpack.c.b16 %v353, %v352
  %v415 = vpack.c.b16 %v355, %v354
  %v416 = vpack.c.b16 %v357, %v356
  %v417 = vpack.c.b16 %v359, %v358
  %v418 = vpack.c.b16 %v361, %v360
  %v419 = vpack.c.b16 %v363, %v362
  %v420 = vpack.c.b16 %v365, %v364
  %v421 = vpack.c.b16 %v367, %v366
  %v422 = vpack.c.b16 %v369, %v368
  %v423 = vpack.c.b16 %v371, %v370
  %v424 = vpack.c.b16 %v373, %v372
  %v425 = vpack.c.b16 %v375, %v374
  %v426 = vpack.c.b16 %v377, %v376
  %v427 = vpack.c.b16 %v379, %v378
  %v428 = vpack.c.b16 %v381, %v380
  %v429 = vpack.c.b16 %v383, %v382
  %v430 = vpack.c.b16 %v385, %v384
  %v431 = vpack.c.b16 %v387, %v386
  %v432 = vpack.c.b16 %v389, %v388
  %v433 = vpack.c.b16 %v391, %v390
  %v434 = vpack.c.b16 %v393, %v392
  %v435 = vpack.c.b16 %v395, %v394
  %v436 = vpack.c.b16 %v397, %v396
  %v437 = vpack.c.b16 %v399, %v398
  %v438 = vpack.c.b16 %v401, %v400
  %v439 = vpack.c.b16 %v403, %v402
  %v440 = vpack.c.b16 %v405, %v404
  %v441 = vpack.c.b16 %v407, %v406
  %v442 = vpack.c.b16 %v409, %v408
  %v443 = vpack.c.b16 %v411, %v410
  %476 = vmatprep.subr.bf16.mxu0 0
  %477 = vmatpush1.bf16.msra.mxu0 %v412
  %478 = vmatprep.subr.bf16.mxu0 0
  %479 = vmatpush1.bf16.msra.mxu0 %v413
  %480 = vmatprep.subr.bf16.mxu0 0
  %481 = vmatpush1.bf16.msra.mxu0 %v414
  %482 = vmatprep.subr.bf16.mxu0 0
  %483 = vmatpush1.bf16.msra.mxu0 %v415
  %484 = vmatprep.subr.bf16.mxu0 0
  %485 = vmatpush1.bf16.msra.mxu0 %v416
  %486 = vmatprep.subr.bf16.mxu0 0
  %487 = vmatpush1.bf16.msra.mxu0 %v417
  %488 = vmatprep.subr.bf16.mxu0 0
  %489 = vmatpush1.bf16.msra.mxu0 %v418
  %490 = vmatprep.subr.bf16.mxu0 0
  %491 = vmatpush1.bf16.msra.mxu0 %v419
  %492 = vmatprep.subr.bf16.mxu0 0
  %493 = vmatpush1.bf16.msra.mxu0 %v420
  %494 = vmatprep.subr.bf16.mxu0 0
  %495 = vmatpush1.bf16.msra.mxu0 %v421
  %496 = vmatprep.subr.bf16.mxu0 0
  %497 = vmatpush1.bf16.msra.mxu0 %v422
  %498 = vmatprep.subr.bf16.mxu0 0
  %499 = vmatpush1.bf16.msra.mxu0 %v423
  %500 = vmatprep.subr.bf16.mxu0 0
  %501 = vmatpush1.bf16.msra.mxu0 %v424
  %502 = vmatprep.subr.bf16.mxu0 0
  %503 = vmatpush1.bf16.msra.mxu0 %v425
  %504 = vmatprep.subr.bf16.mxu0 0
  %505 = vmatpush1.bf16.msra.mxu0 %v426
  %506 = vmatprep.subr.bf16.mxu0 0
  %507 = vmatpush1.bf16.msra.mxu0 %v427
  %508 = vmatprep.mubr.bf16.mxu0 %v221
  %509 = vmatmul.mubr.bf16.gmra.mrb[0].mxu0 %v220
  %v510 = vpop.f32.mrb[0].mxu0
  %v511 = vadd.f32 %v122, %v510
  %v512 = vpop.f32.mrb[0].mxu0
  %v513 = vpop.f32.mrb[0].mxu0
  %v514 = vadd.f32 %v122, %v513
  %v515 = vpop.f32.mrb[0].mxu0
  %516 = vmatprep.mubr.bf16.mxu0 %v225
  %517 = vmatmul.mubr.bf16.gmra.mrb[0].mxu0 %v224
  %v518 = vpop.f32.mrb[0].mxu0
  %v519 = vadd.f32 %v122, %v518
  %v520 = vpop.f32.mrb[0].mxu0
  %v521 = vpop.f32.mrb[0].mxu0
  %v522 = vadd.f32 %v122, %v521
  %v523 = vpop.f32.mrb[0].mxu0
  %524 = vmatprep.mubr.bf16.mxu0 %v229
  %525 = vmatmul.mubr.bf16.gmra.mrb[0].mxu0 %v228
  %v526 = vpop.f32.mrb[0].mxu0
  %v527 = vadd.f32 %v122, %v526
  %v528 = vpop.f32.mrb[0].mxu0
  %v529 = vpop.f32.mrb[0].mxu0
  %v530 = vadd.f32 %v122, %v529
  %v531 = vpop.f32.mrb[0].mxu0
  %532 = vmatprep.mubr.bf16.mxu0 %v233
  %533 = vmatmul.mubr.bf16.gmra.mrb[0].mxu0 %v232
  %v534 = vpop.f32.mrb[0].mxu0
  %v535 = vadd.f32 %v122, %v534
  %v536 = vpop.f32.mrb[0].mxu0
  %v537 = vpop.f32.mrb[0].mxu0
  %v538 = vadd.f32 %v122, %v537
  %v539 = vpop.f32.mrb[0].mxu0
  %540 = vmatprep.mubr.bf16.mxu0 %v237
  %541 = vmatmul.mubr.bf16.gmra.mrb[0].mxu0 %v236
  %v542 = vpop.f32.mrb[0].mxu0
  %v543 = vadd.f32 %v122, %v542
  %v544 = vpop.f32.mrb[0].mxu0
  %v545 = vpop.f32.mrb[0].mxu0
  %v546 = vadd.f32 %v122, %v545
  %v547 = vpop.f32.mrb[0].mxu0
  %548 = vmatprep.mubr.bf16.mxu0 %v241
  %549 = vmatmul.mubr.bf16.gmra.mrb[0].mxu0 %v240
  %v550 = vpop.f32.mrb[0].mxu0
  %v551 = vadd.f32 %v122, %v550
  %v552 = vpop.f32.mrb[0].mxu0
  %v553 = vpop.f32.mrb[0].mxu0
  %v554 = vadd.f32 %v122, %v553
  %v555 = vpop.f32.mrb[0].mxu0
  %556 = vmatprep.mubr.bf16.mxu0 %v245
  %557 = vmatmul.mubr.bf16.gmra.mrb[0].mxu0 %v244
  %v558 = vpop.f32.mrb[0].mxu0
  %v559 = vadd.f32 %v122, %v558
  %v560 = vpop.f32.mrb[0].mxu0
  %v561 = vpop.f32.mrb[0].mxu0
  %v562 = vadd.f32 %v122, %v561
  %v563 = vpop.f32.mrb[0].mxu0
  %564 = vmatprep.mubr.bf16.mxu0 %v249
  %565 = vmatmul.mubr.bf16.gmra.mrb[0].mxu0 %v248
  %v566 = vpop.f32.mrb[0].mxu0
  %v567 = vadd.f32 %v122, %v566
  %v568 = vpop.f32.mrb[0].mxu0
  %v569 = vpop.f32.mrb[0].mxu0
  %v570 = vadd.f32 %v122, %v569
  %v571 = vpop.f32.mrb[0].mxu0
  %572 = vdwg.mxu0
  %573 = vmatprep.subr.bf16.mxu0 0
  %574 = vmatpush1.bf16.msra.mxu0 %v428
  %575 = vmatprep.subr.bf16.mxu0 0
  %576 = vmatpush1.bf16.msra.mxu0 %v429
  %577 = vmatprep.subr.bf16.mxu0 0
  %578 = vmatpush1.bf16.msra.mxu0 %v430
  %579 = vmatprep.subr.bf16.mxu0 0
  %580 = vmatpush1.bf16.msra.mxu0 %v431
  %581 = vmatprep.subr.bf16.mxu0 0
  %582 = vmatpush1.bf16.msra.mxu0 %v432
  %583 = vmatprep.subr.bf16.mxu0 0
  %584 = vmatpush1.bf16.msra.mxu0 %v433
  %585 = vmatprep.subr.bf16.mxu0 0
  %586 = vmatpush1.bf16.msra.mxu0 %v434
  %587 = vmatprep.subr.bf16.mxu0 0
  %588 = vmatpush1.bf16.msra.mxu0 %v435
  %589 = vmatprep.subr.bf16.mxu0 0
  %590 = vmatpush1.bf16.msra.mxu0 %v436
  %591 = vmatprep.subr.bf16.mxu0 0
  %592 = vmatpush1.bf16.msra.mxu0 %v437
  %593 = vmatprep.subr.bf16.mxu0 0
  %594 = vmatpush1.bf16.msra.mxu0 %v438
  %595 = vmatprep.subr.bf16.mxu0 0
  %596 = vmatpush1.bf16.msra.mxu0 %v439
  %597 = vmatprep.subr.bf16.mxu0 0
  %598 = vmatpush1.bf16.msra.mxu0 %v440
  %599 = vmatprep.subr.bf16.mxu0 0
  %600 = vmatpush1.bf16.msra.mxu0 %v441
  %601 = vmatprep.subr.bf16.mxu0 0
  %602 = vmatpush1.bf16.msra.mxu0 %v442
  %603 = vmatprep.subr.bf16.mxu0 0
  %604 = vmatpush1.bf16.msra.mxu0 %v443
  %605 = vmatprep.mubr.bf16.mxu0 %v223
  %606 = vmatmul.mubr.bf16.gmra.mrb[0].mxu0 %v222
  %v607 = vpop.f32.mrb[0].mxu0
  %v608 = vadd.f32 %v511, %v607
  %v609 = vpop.f32.mrb[0].mxu0
  %v610 = vpop.f32.mrb[0].mxu0
  %v611 = vadd.f32 %v514, %v610
  %v612 = vpop.f32.mrb[0].mxu0
  %613 = vmatprep.mubr.bf16.mxu0 %v227
  %614 = vmatmul.mubr.bf16.gmra.mrb[0].mxu0 %v226
  %v615 = vpop.f32.mrb[0].mxu0
  %v616 = vadd.f32 %v519, %v615
  %v617 = vpop.f32.mrb[0].mxu0
  %v618 = vpop.f32.mrb[0].mxu0
  %v619 = vadd.f32 %v522, %v618
  %v620 = vpop.f32.mrb[0].mxu0
  %621 = vmatprep.mubr.bf16.mxu0 %v231
  %622 = vmatmul.mubr.bf16.gmra.mrb[0].mxu0 %v230
  %v623 = vpop.f32.mrb[0].mxu0
  %v624 = vadd.f32 %v527, %v623
  %v625 = vpop.f32.mrb[0].mxu0
  %v626 = vpop.f32.mrb[0].mxu0
  %v627 = vadd.f32 %v530, %v626
  %v628 = vpop.f32.mrb[0].mxu0
  %629 = vmatprep.mubr.bf16.mxu0 %v235
  %630 = vmatmul.mubr.bf16.gmra.mrb[0].mxu0 %v234
  %v631 = vpop.f32.mrb[0].mxu0
  %v632 = vadd.f32 %v535, %v631
  %v633 = vpop.f32.mrb[0].mxu0
  %v634 = vpop.f32.mrb[0].mxu0
  %v635 = vadd.f32 %v538, %v634
  %v636 = vpop.f32.mrb[0].mxu0
  %637 = vmatprep.mubr.bf16.mxu0 %v239
  %638 = vmatmul.mubr.bf16.gmra.mrb[0].mxu0 %v238
  %v639 = vpop.f32.mrb[0].mxu0
  %v640 = vadd.f32 %v543, %v639
  %v641 = vpop.f32.mrb[0].mxu0
  %v642 = vpop.f32.mrb[0].mxu0
  %v643 = vadd.f32 %v546, %v642
  %v644 = vpop.f32.mrb[0].mxu0
  %645 = vmatprep.mubr.bf16.mxu0 %v243
  %646 = vmatmul.mubr.bf16.gmra.mrb[0].mxu0 %v242
  %v647 = vpop.f32.mrb[0].mxu0
  %v648 = vadd.f32 %v551, %v647
  %v649 = vpop.f32.mrb[0].mxu0
  %v650 = vpop.f32.mrb[0].mxu0
  %v651 = vadd.f32 %v554, %v650
  %v652 = vpop.f32.mrb[0].mxu0
  %653 = vmatprep.mubr.bf16.mxu0 %v247
  %654 = vmatmul.mubr.bf16.gmra.mrb[0].mxu0 %v246
  %v655 = vpop.f32.mrb[0].mxu0
  %v656 = vadd.f32 %v559, %v655
  %v657 = vpop.f32.mrb[0].mxu0
  %v658 = vpop.f32.mrb[0].mxu0
  %v659 = vadd.f32 %v562, %v658
  %v660 = vpop.f32.mrb[0].mxu0
  %661 = vmatprep.mubr.bf16.mxu0 %v251
  %662 = vmatmul.mubr.bf16.gmra.mrb[0].mxu0 %v250
  %v663 = vpop.f32.mrb[0].mxu0
  %v664 = vadd.f32 %v567, %v663
  %v665 = vpop.f32.mrb[0].mxu0
  %v666 = vpop.f32.mrb[0].mxu0
  %v667 = vadd.f32 %v570, %v666
  %v668 = vpop.f32.mrb[0].mxu0
  %669 = vdwg.mxu0
  %vm670 = vcmask 130048
  %v671 = vsel %vm670, %v608, 0.0
  %v672 = vsel %vm670, %v611, 0.0
  %v673 = vadd.f32 %v671, %v672
  %v674 = vsel %vm670, %v616, 0.0
  %v675 = vadd.f32 %v673, %v674
  %v676 = vsel %vm670, %v619, 0.0
  %v677 = vadd.f32 %v675, %v676
  %v678 = vsel %vm670, %v624, 0.0
  %v679 = vadd.f32 %v677, %v678
  %v680 = vsel %vm670, %v627, 0.0
  %v681 = vadd.f32 %v679, %v680
  %v682 = vsel %vm670, %v632, 0.0
  %v683 = vadd.f32 %v681, %v682
  %v684 = vsel %vm670, %v635, 0.0
  %v685 = vadd.f32 %v683, %v684
  %v686 = vsel %vm670, %v640, 0.0
  %v687 = vadd.f32 %v685, %v686
  %v688 = vsel %vm670, %v643, 0.0
  %v689 = vadd.f32 %v687, %v688
  %v690 = vsel %vm670, %v648, 0.0
  %v691 = vadd.f32 %v689, %v690
  %v692 = vsel %vm670, %v651, 0.0
  %v693 = vadd.f32 %v691, %v692
  %v694 = vsel %vm670, %v656, 0.0
  %v695 = vadd.f32 %v693, %v694
  %v696 = vsel %vm670, %v659, 0.0
  %v697 = vadd.f32 %v695, %v696
  %v698 = vsel %vm670, %v664, 0.0
  %v699 = vadd.f32 %v697, %v698
  %v700 = vsel %vm670, %v667, 0.0
  %v701 = vadd.f32 %v699, %v700
  %v702 = vrot.slane %v701, 4
  %v703 = vadd.f32 %v701, %v702
  %v704 = vrot.slane %v703, 2
  %v705 = vadd.f32 %v703, %v704
  %v706 = vrot.slane %v705, 1
  %v707 = vadd.f32 %v705, %v706
  %v708 = vmul.f32 %v608, %v608
  %v709 = vmul.f32 %v611, %v611
  %v710 = vmul.f32 %v616, %v616
  %v711 = vmul.f32 %v619, %v619
  %v712 = vmul.f32 %v624, %v624
  %v713 = vmul.f32 %v627, %v627
  %v714 = vmul.f32 %v632, %v632
  %v715 = vmul.f32 %v635, %v635
  %v716 = vmul.f32 %v640, %v640
  %v717 = vmul.f32 %v643, %v643
  %v718 = vmul.f32 %v648, %v648
  %v719 = vmul.f32 %v651, %v651
  %v720 = vmul.f32 %v656, %v656
  %v721 = vmul.f32 %v659, %v659
  %v722 = vmul.f32 %v664, %v664
  %v723 = vmul.f32 %v667, %v667
  %v724 = vsel %vm670, %v708, 0.0
  %v725 = vsel %vm670, %v709, 0.0
  %v726 = vadd.f32 %v724, %v725
  %v727 = vsel %vm670, %v710, 0.0
  %v728 = vadd.f32 %v726, %v727
  %v729 = vsel %vm670, %v711, 0.0
  %v730 = vadd.f32 %v728, %v729
  %v731 = vsel %vm670, %v712, 0.0
  %v732 = vadd.f32 %v730, %v731
  %v733 = vsel %vm670, %v713, 0.0
  %v734 = vadd.f32 %v732, %v733
  %v735 = vsel %vm670, %v714, 0.0
  %v736 = vadd.f32 %v734, %v735
  %v737 = vsel %vm670, %v715, 0.0
  %v738 = vadd.f32 %v736, %v737
  %v739 = vsel %vm670, %v716, 0.0
  %v740 = vadd.f32 %v738, %v739
  %v741 = vsel %vm670, %v717, 0.0
  %v742 = vadd.f32 %v740, %v741
  %v743 = vsel %vm670, %v718, 0.0
  %v744 = vadd.f32 %v742, %v743
  %v745 = vsel %vm670, %v719, 0.0
  %v746 = vadd.f32 %v744, %v745
  %v747 = vsel %vm670, %v720, 0.0
  %v748 = vadd.f32 %v746, %v747
  %v749 = vsel %vm670, %v721, 0.0
  %v750 = vadd.f32 %v748, %v749
  %v751 = vsel %vm670, %v722, 0.0
  %v752 = vadd.f32 %v750, %v751
  %v753 = vsel %vm670, %v723, 0.0
  %v754 = vadd.f32 %v752, %v753
  %v755 = vrot.slane %v754, 4
  %v756 = vadd.f32 %v754, %v755
  %v757 = vrot.slane %v756, 2
  %v758 = vadd.f32 %v756, %v757
  %v759 = vrot.slane %v758, 1
  %v760 = vadd.f32 %v758, %v759
  %762 = vrot.lane.b32.xlu0 %v707, 124
  %v763 = vpop.permute.xlu0 %762
  %v765 = vadd.f32 %v707, %v763
  %766 = vrot.lane.b32.xlu0 %v707, 120
  %v767 = vpop.permute.xlu0 %766
  %v769 = vadd.f32 %v765, %v767
  %770 = vrot.lane.b32.xlu0 %v707, 116
  %v771 = vpop.permute.xlu0 %770
  %v773 = vadd.f32 %v769, %v771
  %775 = vrot.lane.b32.xlu0 %v760, 124
  %v776 = vpop.permute.xlu0 %775
  %v778 = vadd.f32 %v760, %v776
  %779 = vrot.lane.b32.xlu0 %v760, 120
  %v780 = vpop.permute.xlu0 %779
  %v782 = vadd.f32 %v778, %v780
  %783 = vrot.lane.b32.xlu0 %v760, 116
  %v784 = vpop.permute.xlu0 %783
  %v786 = vadd.f32 %v782, %v784
  %v787 = vrcp.pop 512.0
  %v788 = vmul.f32 %v773, %v787
  %v789 = vmul.f32 %v786, %v787
  %v790 = vmul.f32 %v788, %v788
  %v791 = vsub.f32 %v789, %v790
  %v792 = vld [vmem:[%s3] sm:$0x1]
  %v793 = vadd.f32 %v791, 1e-05
  %v794 = vrsqrt.pop %v793
  %v795 = vmul.f32 %v792, %v794
  %v796 = vld [vmem:[%s4] sm:$0x1]
  %v797 = vmul.f32 %v788, %v795
  %v798 = vsub.f32 %v796, %v797
  %v800 = vlaneseq
  %v801 = vshrl.u32 %v800, 7
  %v802 = vsub.s32 0, %v801
  %v803 = vrot.slane %v795, %v802
  %804 = vrot.lane.b32.xlu0 %v803, 4
  %v805 = vpop.permute.xlu0 %804
  %807 = vrot.lane.b32.xlu0 %v803, 8
  %v808 = vpop.permute.xlu0 %807
  %810 = vrot.lane.b32.xlu0 %v803, 12
  %v811 = vpop.permute.xlu0 %810
  %vm813 = vcmask 31744
  %v814 = vsel %vm813, %v795, %v805
  %vm815 = vcmask 64512
  %v816 = vsel %vm815, %v814, %v808
  %vm817 = vcmask 97280
  %v818 = vsel %vm817, %v816, %v811
  %v820 = vlaneseq
  %v821 = vshrl.u32 %v820, 7
  %v822 = vsub.s32 0, %v821
  %v823 = vrot.slane %v798, %v822
  %824 = vrot.lane.b32.xlu0 %v823, 4
  %v825 = vpop.permute.xlu0 %824
  %827 = vrot.lane.b32.xlu0 %v823, 8
  %v828 = vpop.permute.xlu0 %827
  %830 = vrot.lane.b32.xlu0 %v823, 12
  %v831 = vpop.permute.xlu0 %830
  %v833 = vsel %vm813, %v798, %v825
  %v834 = vsel %vm815, %v833, %v828
  %v835 = vsel %vm817, %v834, %v831
  %v836 = vlaneseq
  %v837 = vshrl.u32 %v836, 7
  %v838 = vsub.s32 0, %v837
  %v839 = vrot.slane %v818, %v838
  %v840 = vmul.f32 %v608, %v839
  %v841 = vmul.f32 %v611, %v839
  %v842 = vmul.f32 %v616, %v839
  %v843 = vmul.f32 %v619, %v839
  %v844 = vmul.f32 %v624, %v839
  %v845 = vmul.f32 %v627, %v839
  %v846 = vmul.f32 %v632, %v839
  %v847 = vmul.f32 %v635, %v839
  %v848 = vmul.f32 %v640, %v839
  %v849 = vmul.f32 %v643, %v839
  %v850 = vmul.f32 %v648, %v839
  %v851 = vmul.f32 %v651, %v839
  %v852 = vmul.f32 %v656, %v839
  %v853 = vmul.f32 %v659, %v839
  %v854 = vmul.f32 %v664, %v839
  %v855 = vmul.f32 %v667, %v839
  %v856 = vlaneseq
  %v857 = vshrl.u32 %v856, 7
  %v858 = vsub.s32 0, %v857
  %v859 = vrot.slane %v835, %v858
  %v860 = vadd.f32 %v840, %v859
  %v861 = vadd.f32 %v841, %v859
  %v862 = vadd.f32 %v842, %v859
  %v863 = vadd.f32 %v843, %v859
  %v864 = vadd.f32 %v844, %v859
  %v865 = vadd.f32 %v845, %v859
  %v866 = vadd.f32 %v846, %v859
  %v867 = vadd.f32 %v847, %v859
  %v868 = vadd.f32 %v848, %v859
  %v869 = vadd.f32 %v849, %v859
  %v870 = vadd.f32 %v850, %v859
  %v871 = vadd.f32 %v851, %v859
  %v872 = vadd.f32 %v852, %v859
  %v873 = vadd.f32 %v853, %v859
  %v874 = vadd.f32 %v854, %v859
  %v875 = vadd.f32 %v855, %v859
  %v876 = vmax.f32 %v860, 0.0
  %v877 = vmax.f32 %v861, 0.0
  %v878 = vmax.f32 %v862, 0.0
  %v879 = vmax.f32 %v863, 0.0
  %v880 = vmax.f32 %v864, 0.0
  %v881 = vmax.f32 %v865, 0.0
  %v882 = vmax.f32 %v866, 0.0
  %v883 = vmax.f32 %v867, 0.0
  %v884 = vmax.f32 %v868, 0.0
  %v885 = vmax.f32 %v869, 0.0
  %v886 = vmax.f32 %v870, 0.0
  %v887 = vmax.f32 %v871, 0.0
  %v888 = vmax.f32 %v872, 0.0
  %v889 = vmax.f32 %v873, 0.0
  %v890 = vmax.f32 %v874, 0.0
  %v891 = vmax.f32 %v875, 0.0
  %892 = vst.msk [vmem:[%s5] sm:$0xff] %vm670, %v876
  %893 = vst.msk [vmem:[%s5 + $0x8] sm:$0xff] %vm670, %v877
  %894 = vst.msk [vmem:[%s5 + $0x10] sm:$0xff] %vm670, %v878
  %895 = vst.msk [vmem:[%s5 + $0x18] sm:$0xff] %vm670, %v879
  %896 = vst.msk [vmem:[%s5 + $0x20] sm:$0xff] %vm670, %v880
  %897 = vst.msk [vmem:[%s5 + $0x28] sm:$0xff] %vm670, %v881
  %898 = vst.msk [vmem:[%s5 + $0x30] sm:$0xff] %vm670, %v882
  %899 = vst.msk [vmem:[%s5 + $0x38] sm:$0xff] %vm670, %v883
  %900 = vst.msk [vmem:[%s5 + $0x40] sm:$0xff] %vm670, %v884
  %901 = vst.msk [vmem:[%s5 + $0x48] sm:$0xff] %vm670, %v885
  %902 = vst.msk [vmem:[%s5 + $0x50] sm:$0xff] %vm670, %v886
  %903 = vst.msk [vmem:[%s5 + $0x58] sm:$0xff] %vm670, %v887
  %904 = vst.msk [vmem:[%s5 + $0x60] sm:$0xff] %vm670, %v888
  %905 = vst.msk [vmem:[%s5 + $0x68] sm:$0xff] %vm670, %v889
  %906 = vst.msk [vmem:[%s5 + $0x70] sm:$0xff] %vm670, %v890
  %907 = vst.msk [vmem:[%s5 + $0x78] sm:$0xff] %vm670, %v891
  // Predicated region
  $region22: #{gd_decoder_forward.21} parent=0 // pred_check
    _
  $region23: #{gd_decoder_forward.21} parent=0 // pred_check_branch
    %909 = sbr.rel (0) target = $region25
  $region24: #{gd_decoder_forward.21} parent=0 // pred_region
    _
  $region25: #{gd_decoder_forward.21} parent=0 // pred_fallthru
    _
  // Predicated region
  $region26: #{gd_decoder_forward.21} parent=0 // pred_check
    _
  $region27: #{gd_decoder_forward.21} parent=0 // pred_check_branch
    %911 = sbr.rel (0) target = $region29
  $region28: #{gd_decoder_forward.21} parent=0 // pred_region
    _
  $region29: #{gd_decoder_forward.21} parent=0 // pred_fallthru
    _

// kernel: gd_decoder_forward.22
$region0: #{gd_decoder_forward.22}
  #allocation0 [shape = 'u32[]', space=smem, size = 0x4, offset = 0x4, fixed_abs, tag = 'smem constant byte address 0x4 - core index']
  #allocation1 [shape = 'u32[144,128]{1,0:T(1,128)}', space=vmem, size = 0x12000, scoped, tag = 'internal scratch']
  %s0 = inlined_call_operand.vmem [shape: bf16[512,144], index: 0, kind: input, shape index: {}]
  %s1 = inlined_call_operand.vmem [shape: bf16[144,16], index: 1, kind: input, shape index: {}]
  %s2 = inlined_call_operand.vmem [shape: f32[1,16], index: 2, kind: input, shape index: {}]
  %s3 = inlined_call_operand.vmem [shape: bf16[16,4], index: 3, kind: input, shape index: {}]
  %s4 = inlined_call_operand.vmem [shape: f32[1,4], index: 4, kind: input, shape index: {}]
  %s5 = inlined_call_operand.vmem [shape: f32[512,4], index: 5, kind: output, shape index: {}]
  %s6 = sld [smem:[#allocation0]]
  $region53: #{gd_decoder_forward.22} parent=0
    _
  %s8 = ssub.s32 1, %s6
  %s9 = scalar_select 0, %s8, %s6
  loop: start=0, step=1, limit=4
  $region2: #{gd_decoder_forward.22} parent=0 // loop_pre_header
    _
  $region3: #{gd_decoder_forward.22} parent=0 // loop_header
    %s11 = sphi 0, %s15
    %p12 = scmp.ge.s32.totalorder %s11, 4
    %s21 = sphi 0, %s23
    %s24 = sphi 0, %s21
    %s25 = sphi 0, %s24
    %s41 = sphi 0, %s25
    %s45 = sphi 0, %s45
    %s47 = sphi 0, %s45
    %s48 = sphi 0, %s47
    %s62 = sphi 0, %s48
    %s66 = sphi 0, %s66
    %s68 = sphi 0, %s66
    %s69 = sphi 0, %s68
    %s83 = sphi 0, %s69
    %s87 = sphi 0, %s87
    %s89 = sphi 0, %s87
    %s90 = sphi 0, %s89
    %s104 = sphi 0, %s90
    %s108 = sphi 0, %s108
    %s110 = sphi 0, %s108
    %s111 = sphi 0, %s110
    %s125 = sphi 0, %s111
    %s131 = sphi 0, %s133
    %s134 = sphi 0, %s131
    %s135 = sphi 0, %s134
    %s151 = sphi 0, %s135
  $region4: #{gd_decoder_forward.22} parent=0 // loop_header_branch
    %14 = sbr.rel (%p12) target = $region8
  $region5: #{gd_decoder_forward.22} parent=0 // loop_body
    %s16 = ssub.s32 %s11, 1
    %s17 = ssub.s32 %s11, 2
    %s18 = sadd.s32 %s11, 1
    %s19 = ssub.s32 %s11, %s18
    %p20 = scmp.eq.s32.totalorder %s19, 0
    %s22 = sadd.s32 %s21, 1
    %s23 = scalar_select %p20, %s21, %s22
    %p26 = pneg %p20
    %p27 = scmp.eq.s32.totalorder %s11, 1
    %p28 = por %p26, %p27
    %p29 = scmp.ne.s32.totalorder %s21, %s24
    %p30 = scmp.eq.s32.totalorder %s11, 0
    %p31 = por %p29, %p30
    %p32 = scmp.ne.s32.totalorder %s21, %s24
    %p33 = scmp.eq.s32.totalorder %s16, 1
    %p34 = por %p32, %p33
    %p35 = scmp.ne.s32.totalorder %s24, %s25
    %p36 = scmp.eq.s32.totalorder %s16, 0
    %p37 = por %p35, %p36
    %p38 = scmp.ne.s32.totalorder %s24, %s25
    %p39 = scmp.eq.s32.totalorder %s17, 1
    %p40 = por %p38, %p39
    %p42 = scmp.ne.s32.totalorder %s25, %s41
    %p43 = scmp.eq.s32.totalorder %s17, 0
    %p44 = por %p42, %p43
    %s46 = sadd.s32 %s45, 1
    %p49 = scmp.eq.s32.totalorder %s11, 1
    %p50 = scmp.ne.s32.totalorder %s45, %s47
    %p51 = scmp.eq.s32.totalorder %s11, 0
    %p52 = por %p50, %p51
    %p53 = scmp.ne.s32.totalorder %s45, %s47
    %p54 = scmp.eq.s32.totalorder %s16, 1
    %p55 = por %p53, %p54
    %p56 = scmp.ne.s32.totalorder %s47, %s48
    %p57 = scmp.eq.s32.totalorder %s16, 0
    %p58 = por %p56, %p57
    %p59 = scmp.ne.s32.totalorder %s47, %s48
    %p60 = scmp.eq.s32.totalorder %s17, 1
    %p61 = por %p59, %p60
    %p63 = scmp.ne.s32.totalorder %s48, %s62
    %p64 = scmp.eq.s32.totalorder %s17, 0
    %p65 = por %p63, %p64
    %s67 = sadd.s32 %s66, 1
    %p70 = scmp.eq.s32.totalorder %s11, 1
    %p71 = scmp.ne.s32.totalorder %s66, %s68
    %p72 = scmp.eq.s32.totalorder %s11, 0
    %p73 = por %p71, %p72
    %p74 = scmp.ne.s32.totalorder %s66, %s68
    %p75 = scmp.eq.s32.totalorder %s16, 1
    %p76 = por %p74, %p75
    %p77 = scmp.ne.s32.totalorder %s68, %s69
    %p78 = scmp.eq.s32.totalorder %s16, 0
    %p79 = por %p77, %p78
    %p80 = scmp.ne.s32.totalorder %s68, %s69
    %p81 = scmp.eq.s32.totalorder %s17, 1
    %p82 = por %p80, %p81
    %p84 = scmp.ne.s32.totalorder %s69, %s83
    %p85 = scmp.eq.s32.totalorder %s17, 0
    %p86 = por %p84, %p85
    %s88 = sadd.s32 %s87, 1
    %p91 = scmp.eq.s32.totalorder %s11, 1
    %p92 = scmp.ne.s32.totalorder %s87, %s89
    %p93 = scmp.eq.s32.totalorder %s11, 0
    %p94 = por %p92, %p93
    %p95 = scmp.ne.s32.totalorder %s87, %s89
    %p96 = scmp.eq.s32.totalorder %s16, 1
    %p97 = por %p95, %p96
    %p98 = scmp.ne.s32.totalorder %s89, %s90
    %p99 = scmp.eq.s32.totalorder %s16, 0
    %p100 = por %p98, %p99
    %p101 = scmp.ne.s32.totalorder %s89, %s90
    %p102 = scmp.eq.s32.totalorder %s17, 1
    %p103 = por %p101, %p102
    %p105 = scmp.ne.s32.totalorder %s90, %s104
    %p106 = scmp.eq.s32.totalorder %s17, 0
    %p107 = por %p105, %p106
    %s109 = sadd.s32 %s108, 1
    %p112 = scmp.eq.s32.totalorder %s11, 1
    %p113 = scmp.ne.s32.totalorder %s108, %s110
    %p114 = scmp.eq.s32.totalorder %s11, 0
    %p115 = por %p113, %p114
    %p116 = scmp.ne.s32.totalorder %s108, %s110
    %p117 = scmp.eq.s32.totalorder %s16, 1
    %p118 = por %p116, %p117
    %p119 = scmp.ne.s32.totalorder %s110, %s111
    %p120 = scmp.eq.s32.totalorder %s16, 0
    %p121 = por %p119, %p120
    %p122 = scmp.ne.s32.totalorder %s110, %s111
    %p123 = scmp.eq.s32.totalorder %s17, 1
    %p124 = por %p122, %p123
    %p126 = scmp.ne.s32.totalorder %s111, %s125
    %p127 = scmp.eq.s32.totalorder %s17, 0
    %p128 = por %p126, %p127
    %s129 = ssub.s32 %s11, %s18
    %p130 = scmp.eq.s32.totalorder %s129, 0
    %s132 = sadd.s32 %s131, 1
    %s133 = scalar_select %p130, %s131, %s132
    %p136 = pneg %p130
    %p137 = scmp.eq.s32.totalorder %s11, 1
    %p138 = por %p136, %p137
    %p139 = scmp.ne.s32.totalorder %s131, %s134
    %p140 = scmp.eq.s32.totalorder %s11, 0
    %p141 = por %p139, %p140
    %p142 = scmp.ne.s32.totalorder %s131, %s134
    %p143 = scmp.eq.s32.totalorder %s16, 1
    %p144 = por %p142, %p143
    %p145 = scmp.ne.s32.totalorder %s134, %s135
    %p146 = scmp.eq.s32.totalorder %s16, 0
    %p147 = por %p145, %p146
    %p148 = scmp.ne.s32.totalorder %s134, %s135
    %p149 = scmp.eq.s32.totalorder %s17, 1
    %p150 = por %p148, %p149
    %p152 = scmp.ne.s32.totalorder %s135, %s151
    %p153 = scmp.eq.s32.totalorder %s17, 0
    %p154 = por %p152, %p153
    %p155 = scmp.le.s32.totalorder 1, %s11
    %p156 = scmp.lt.s32.totalorder %s11, 3
    %p157 = pnand %p155, %p156
    %p158 = pneg %p157
    // Predicated region
    $region9: #{gd_decoder_forward.22} parent=5 // pred_check
      _
    $region10: #{gd_decoder_forward.22} parent=5 // pred_check_branch
      %160 = sbr.rel (%p157) target = $region12
    $region11: #{gd_decoder_forward.22} parent=5 // pred_region
      %s161 = ssub.s32 %s11, 1
      // Predicated region
      $region13: #{gd_decoder_forward.22} parent=11 // pred_check
        %p162 = pneg %p58
      $region14: #{gd_decoder_forward.22} parent=11 // pred_check_branch
        %164 = sbr.rel (%p162) target = $region16
      $region15: #{gd_decoder_forward.22} parent=11 // pred_region
        _
      $region16: #{gd_decoder_forward.22} parent=11 // pred_fallthru
        _
      // Predicated region
      $region17: #{gd_decoder_forward.22} parent=11 // pred_check
        %p165 = pneg %p79
      $region18: #{gd_decoder_forward.22} parent=11 // pred_check_branch
        %167 = sbr.rel (%p165) target = $region20
      $region19: #{gd_decoder_forward.22} parent=11 // pred_region
        _
      $region20: #{gd_decoder_forward.22} parent=11 // pred_fallthru
        _
      // Predicated region
      $region21: #{gd_decoder_forward.22} parent=11 // pred_check
        %p168 = pneg %p100
      $region22: #{gd_decoder_forward.22} parent=11 // pred_check_branch
        %170 = sbr.rel (%p168) target = $region24
      $region23: #{gd_decoder_forward.22} parent=11 // pred_region
        _
      $region24: #{gd_decoder_forward.22} parent=11 // pred_fallthru
        _
      // Predicated region
      $region25: #{gd_decoder_forward.22} parent=11 // pred_check
        %p171 = pneg %p121
      $region26: #{gd_decoder_forward.22} parent=11 // pred_check_branch
        %173 = sbr.rel (%p171) target = $region28
      $region27: #{gd_decoder_forward.22} parent=11 // pred_region
        _
      $region28: #{gd_decoder_forward.22} parent=11 // pred_fallthru
        _
    $region12: #{gd_decoder_forward.22} parent=5 // pred_fallthru
      _
    %p174 = scmp.lt.s32.totalorder %s11, 2
    // Predicated region
    $region29: #{gd_decoder_forward.22} parent=5 // pred_check
      %p175 = pneg %p174
    $region30: #{gd_decoder_forward.22} parent=5 // pred_check_branch
      %177 = sbr.rel (%p175) target = $region32
    $region31: #{gd_decoder_forward.22} parent=5 // pred_region
      // Predicated region
      $region33: #{gd_decoder_forward.22} parent=31 // pred_check
        %p178 = pneg %p31
      $region34: #{gd_decoder_forward.22} parent=31 // pred_check_branch
        %180 = sbr.rel (%p178) target = $region36
      $region35: #{gd_decoder_forward.22} parent=31 // pred_region
        %s181 = smul.u32 32, %s11
        %p182 = scmp.lt.s32.totalorder %s181, 63
        %s183 = scalar_select %p182, %s181, 63
        %s184 = smul.addr %s183, 2
        %s185 = smul.addr %s184, 4
        %s186 = scalar_lea.vmem %s0, %s185
        %s187 = smul.u32 32, %s11
      $region36: #{gd_decoder_forward.22} parent=31 // pred_fallthru
        _
    $region32: #{gd_decoder_forward.22} parent=5 // pred_fallthru
      _
    %p188 = scmp.le.s32.totalorder 1, %s11
    %p189 = scmp.lt.s32.totalorder %s11, 3
    %p190 = pnand %p188, %p189
    %p191 = pneg %p190
    // Predicated region
    $region37: #{gd_decoder_forward.22} parent=5 // pred_check
      _
    $region38: #{gd_decoder_forward.22} parent=5 // pred_check_branch
      %193 = sbr.rel (%p190) target = $region40
    $region39: #{gd_decoder_forward.22} parent=5 // pred_region
      %s194 = ssub.s32 %s11, 1
      %s195 = smul.u32 32, %s16
      %p196 = scmp.lt.s32.totalorder %s195, 63
      %s197 = scalar_select %p196, %s195, 63
      %s198 = smul.addr %s197, 2
      %s199 = smul.addr %s198, 4
      %s200 = scalar_lea.vmem %s0, %s199
      %p201 = pneg %p37
      %p202 = pneg %p34
      %p203 = pneg %p58
      %p204 = pneg %p55
      %p205 = pneg %p79
      %p206 = pneg %p76
      %p207 = pneg %p100
      %p208 = pneg %p97
      %p209 = pneg %p121
      %p210 = pneg %p118
      %p211 = pneg %p147
      %p212 = pneg %p144
      %s213 = smul.u32 32, %s16
      %p214 = scmp.lt.s32.totalorder %s213, 63
      %s215 = scalar_select %p214, %s213, 63
      %s216 = smul.addr %s215, 8
      %s217 = scalar_lea.vmem %s5, %s216
      %s218 = smul.u32 32, %s16
      %p219 = scmp.lt.s32.totalorder %s218, 63
      %s220 = scalar_select %p219, %s218, 63
      %s221 = smul.addr %s220, 2
      %s222 = smul.addr %s221, 4
      %s223 = scalar_lea.vmem %s0, %s222
      %s224 = smul.u32 32, %s16
      %s225 = smul.u32 32, %s16
      %p226 = scmp.lt.s32.totalorder %s225, 63
      %s227 = scalar_select %p226, %s225, 63
      %s228 = smul.addr %s227, 8
      %s229 = scalar_lea.vmem %s5, %s228
      %s230 = smul.u32 32, %s16
      %v232 = vld [vmem:[%s223] sm:$0xff]
      %v233 = vld [vmem:[%s223 + $0x8] sm:$0xff]
      %v234 = vld [vmem:[%s223 + $0x10] sm:$0xff]
      %v235 = vld [vmem:[%s223 + $0x18] sm:$0xff]
      %v236 = vld [vmem:[%s223 + $0x20] sm:$0xff]
      %v237 = vld [vmem:[%s223 + $0x28] sm:$0xff]
      %v238 = vld [vmem:[%s223 + $0x30] sm:$0xff]
      %v239 = vld [vmem:[%s223 + $0x38] sm:$0xff]
      %v240 = vld [vmem:[%s223 + $0x40] sm:$0xff]
      %v241 = vld [vmem:[%s223 + $0x48] sm:$0xff]
      %v242 = vld [vmem:[%s223 + $0x50] sm:$0xff]
      %v243 = vld [vmem:[%s223 + $0x58] sm:$0xff]
      %v244 = vld [vmem:[%s223 + $0x60] sm:$0xff]
      %v245 = vld [vmem:[%s223 + $0x68] sm:$0xff]
      %v246 = vld [vmem:[%s223 + $0x70] sm:$0xff]
      %v247 = vld [vmem:[%s223 + $0x78] sm:$0xff]
      %v248 = vld [vmem:[%s223 + $0x80] sm:$0xff]
      %v249 = vld [vmem:[%s223 + $0x88] sm:$0xff]
      %v250 = vld [vmem:[%s223 + $0x90] sm:$0xff]
      %v251 = vld [vmem:[%s223 + $0x98] sm:$0xff]
      %v252 = vld [vmem:[%s223 + $0xa0] sm:$0xff]
      %v253 = vld [vmem:[%s223 + $0xa8] sm:$0xff]
      %v254 = vld [vmem:[%s223 + $0xb0] sm:$0xff]
      %v255 = vld [vmem:[%s223 + $0xb8] sm:$0xff]
      %v256 = vld [vmem:[%s223 + $0xc0] sm:$0xff]
      %v257 = vld [vmem:[%s223 + $0xc8] sm:$0xff]
      %v258 = vld [vmem:[%s223 + $0xd0] sm:$0xff]
      %v259 = vld [vmem:[%s223 + $0xd8] sm:$0xff]
      %v260 = vld [vmem:[%s223 + $0xe0] sm:$0xff]
      %v261 = vld [vmem:[%s223 + $0xe8] sm:$0xff]
      %v262 = vld [vmem:[%s223 + $0xf0] sm:$0xff]
      %v263 = vld [vmem:[%s223 + $0xf8] sm:$0xff]
      %v264 = vld [vmem:[%s1] sm:$0xf]
      %v265 = vld [vmem:[%s1 + $0x4] sm:$0xf]
      %v266 = vld [vmem:[%s1 + $0x8] sm:$0xf]
      %v267 = vld [vmem:[%s1 + $0xc] sm:$0xf]
      %v268 = vld [vmem:[%s1 + $0x10] sm:$0xf]
      %v269 = vld [vmem:[%s1 + $0x14] sm:$0xf]
      %v270 = vld [vmem:[%s1 + $0x18] sm:$0xf]
      %v271 = vld [vmem:[%s1 + $0x1c] sm:$0xf]
      %v272 = vld [vmem:[%s1 + $0x20] sm:$0xf]
      %v273 = vld [vmem:[%s1 + $0x24] sm:$0xf]
      %v274 = vld [vmem:[%s1 + $0x28] sm:$0xf]
      %v275 = vld [vmem:[%s1 + $0x2c] sm:$0xf]
      %v276 = vld [vmem:[%s1 + $0x30] sm:$0xf]
      %v277 = vld [vmem:[%s1 + $0x34] sm:$0xf]
      %v278 = vld [vmem:[%s1 + $0x38] sm:$0xf]
      %v279 = vld [vmem:[%s1 + $0x3c] sm:$0xf]
      %v280 = vld [vmem:[%s1 + $0x40] sm:$0xf]
      %v281 = vld [vmem:[%s1 + $0x44] sm:$0xf]
      %v282 = vld [vmem:[%s2] sm:$0x1]
      %v284 = vlaneseq
      %v285 = vshrl.u32 %v284, 7
      %v286 = vsub.s32 0, %v285
      %v287 = vrot.slane %v282, %v286
      %v321 = vunpack.c.l.b16 %v232
      %v322 = vunpack.c.h.b16 %v232
      %v323 = vunpack.c.l.b16 %v233
      %v324 = vunpack.c.h.b16 %v233
      %v325 = vunpack.c.l.b16 %v234
      %v326 = vunpack.c.h.b16 %v234
      %v327 = vunpack.c.l.b16 %v235
      %v328 = vunpack.c.h.b16 %v235
      %v329 = vunpack.c.l.b16 %v236
      %v330 = vunpack.c.h.b16 %v236
      %v331 = vunpack.c.l.b16 %v237
      %v332 = vunpack.c.h.b16 %v237
      %v333 = vunpack.c.l.b16 %v238
      %v334 = vunpack.c.h.b16 %v238
      %v335 = vunpack.c.l.b16 %v239
      %v336 = vunpack.c.h.b16 %v239
      %v337 = vunpack.c.l.b16 %v240
      %v338 = vunpack.c.h.b16 %v240
      %v339 = vunpack.c.l.b16 %v241
      %v340 = vunpack.c.h.b16 %v241
      %v341 = vunpack.c.l.b16 %v242
      %v342 = vunpack.c.h.b16 %v242
      %v343 = vunpack.c.l.b16 %v243
      %v344 = vunpack.c.h.b16 %v243
      %v345 = vunpack.c.l.b16 %v244
      %v346 = vunpack.c.h.b16 %v244
      %v347 = vunpack.c.l.b16 %v245
      %v348 = vunpack.c.h.b16 %v245
      %v349 = vunpack.c.l.b16 %v246
      %v350 = vunpack.c.h.b16 %v246
      %v351 = vunpack.c.l.b16 %v247
      %v352 = vunpack.c.h.b16 %v247
      %v353 = vunpack.c.l.b16 %v248
      %v354 = vunpack.c.h.b16 %v248
      %v355 = vunpack.c.l.b16 %v249
      %v356 = vunpack.c.h.b16 %v249
      %v357 = vunpack.c.l.b16 %v250
      %v358 = vunpack.c.h.b16 %v250
      %v359 = vunpack.c.l.b16 %v251
      %v360 = vunpack.c.h.b16 %v251
      %v361 = vunpack.c.l.b16 %v252
      %v362 = vunpack.c.h.b16 %v252
      %v363 = vunpack.c.l.b16 %v253
      %v364 = vunpack.c.h.b16 %v253
      %v365 = vunpack.c.l.b16 %v254
      %v366 = vunpack.c.h.b16 %v254
      %v367 = vunpack.c.l.b16 %v255
      %v368 = vunpack.c.h.b16 %v255
      %v369 = vunpack.c.l.b16 %v256
      %v370 = vunpack.c.h.b16 %v256
      %v371 = vunpack.c.l.b16 %v257
      %v372 = vunpack.c.h.b16 %v257
      %v373 = vunpack.c.l.b16 %v258
      %v374 = vunpack.c.h.b16 %v258
      %v375 = vunpack.c.l.b16 %v259
      %v376 = vunpack.c.h.b16 %v259
      %v377 = vunpack.c.l.b16 %v260
      %v378 = vunpack.c.h.b16 %v260
      %v379 = vunpack.c.l.b16 %v261
      %v380 = vunpack.c.h.b16 %v261
      %v381 = vunpack.c.l.b16 %v262
      %v382 = vunpack.c.h.b16 %v262
      %v383 = vunpack.c.l.b16 %v263
      %v384 = vunpack.c.h.b16 %v263
      %v385 = vpack.c.b16 %v323, %v321
      %v386 = vpack.c.b16 %v324, %v322
      %v387 = vpack.c.b16 %v327, %v325
      %v388 = vpack.c.b16 %v328, %v326
      %v389 = vpack.c.b16 %v331, %v329
      %v390 = vpack.c.b16 %v332, %v330
      %v391 = vpack.c.b16 %v335, %v333
      %v392 = vpack.c.b16 %v336, %v334
      %v393 = vpack.c.b16 %v339, %v337
      %v394 = vpack.c.b16 %v340, %v338
      %v395 = vpack.c.b16 %v343, %v341
      %v396 = vpack.c.b16 %v344, %v342
      %v397 = vpack.c.b16 %v347, %v345
      %v398 = vpack.c.b16 %v348, %v346
      %v399 = vpack.c.b16 %v351, %v349
      %v400 = vpack.c.b16 %v352, %v350
      %v401 = vpack.c.b16 %v355, %v353
      %v402 = vpack.c.b16 %v356, %v354
      %v403 = vpack.c.b16 %v359, %v357
      %v404 = vpack.c.b16 %v360, %v358
      %v405 = vpack.c.b16 %v363, %v361
      %v406 = vpack.c.b16 %v364, %v362
      %v407 = vpack.c.b16 %v367, %v365
      %v408 = vpack.c.b16 %v368, %v366
      %v409 = vpack.c.b16 %v371, %v369
      %v410 = vpack.c.b16 %v372, %v370
      %v411 = vpack.c.b16 %v375, %v373
      %v412 = vpack.c.b16 %v376, %v374
      %v413 = vpack.c.b16 %v379, %v377
      %v414 = vpack.c.b16 %v380, %v378
      %v415 = vpack.c.b16 %v383, %v381
      %v416 = vpack.c.b16 %v384, %v382
      %v451 = vunpack.c.l.b16 %v264
      %v452 = vunpack.c.l.b16 %v265
      %v453 = vunpack.c.l.b16 %v266
      %v454 = vunpack.c.l.b16 %v267
      %v455 = vunpack.c.l.b16 %v268
      %v456 = vunpack.c.l.b16 %v269
      %v457 = vunpack.c.l.b16 %v270
      %v458 = vunpack.c.l.b16 %v271
      %v459 = vunpack.c.l.b16 %v272
      %v460 = vunpack.c.l.b16 %v273
      %v461 = vunpack.c.l.b16 %v274
      %v462 = vunpack.c.l.b16 %v275
      %v463 = vunpack.c.l.b16 %v276
      %v464 = vunpack.c.l.b16 %v277
      %v465 = vunpack.c.l.b16 %v278
      %v466 = vunpack.c.l.b16 %v279
      %v467 = vunpack.c.l.b16 %v280
      %v468 = vunpack.c.l.b16 %v281
      %v469 = vpack.c.b16 %v452, %v451
      %v470 = vpack.c.b16 %v454, %v453
      %v471 = vpack.c.b16 %v456, %v455
      %v472 = vpack.c.b16 %v458, %v457
      %v473 = vpack.c.b16 %v460, %v459
      %v474 = vpack.c.b16 %v462, %v461
      %v475 = vpack.c.b16 %v464, %v463
      %v476 = vpack.c.b16 %v466, %v465
      %v477 = vpack.c.b16 %v468, %v467
      %vm487 = vcmask 130048
      %v489 = vsel %vm487, %v386, 0
      %v492 = vsel %vm487, %v388, 0
      %v495 = vsel %vm487, %v390, 0
      %v498 = vsel %vm487, %v392, 0
      %v501 = vsel %vm487, %v394, 0
      %v504 = vsel %vm487, %v396, 0
      %v507 = vsel %vm487, %v398, 0
      %v510 = vsel %vm487, %v400, 0
      %v513 = vsel %vm487, %v402, 0
      %v516 = vsel %vm487, %v404, 0
      %v519 = vsel %vm487, %v406, 0
      %v522 = vsel %vm487, %v408, 0
      %v525 = vsel %vm487, %v410, 0
      %v528 = vsel %vm487, %v412, 0
      %v531 = vsel %vm487, %v414, 0
      %v534 = vsel %vm487, %v416, 0
      %536 = vmatprep.subr.bf16.mxu0 0
      %537 = vmatpush1.bf16.msra.mxu0 %v469
      %538 = vmatprep.subr.bf16.mxu0 0
      %539 = vmatpush1.bf16.msra.mxu0 %v470
      %540 = vmatprep.subr.bf16.mxu0 0
      %541 = vmatpush1.bf16.msra.mxu0 %v471
      %542 = vmatprep.subr.bf16.mxu0 0
      %543 = vmatpush1.bf16.msra.mxu0 %v472
      %544 = vmatprep.subr.bf16.mxu0 0
      %545 = vmatpush1.bf16.msra.mxu0 %v473
      %546 = vmatprep.subr.bf16.mxu0 0
      %547 = vmatpush1.bf16.msra.mxu0 %v474
      %548 = vmatprep.subr.bf16.mxu0 0
      %549 = vmatpush1.bf16.msra.mxu0 %v475
      %550 = vmatprep.subr.bf16.mxu0 0
      %551 = vmatpush1.bf16.msra.mxu0 %v476
      %552 = vmatprep.subr.bf16.mxu0 0
      %553 = vmatpush1.bf16.msra.mxu0 %v477
      %554 = vmatprep.subr.bf16.mxu0 0
      %555 = vmatpush1.bf16.msra.mxu0 0
      %556 = vmatprep.subr.bf16.mxu0 0
      %557 = vmatpush1.bf16.msra.mxu0 0
      %558 = vmatprep.subr.bf16.mxu0 0
      %559 = vmatpush1.bf16.msra.mxu0 0
      %560 = vmatprep.subr.bf16.mxu0 0
      %561 = vmatpush1.bf16.msra.mxu0 0
      %562 = vmatprep.subr.bf16.mxu0 0
      %563 = vmatpush1.bf16.msra.mxu0 0
      %564 = vmatprep.subr.bf16.mxu0 0
      %565 = vmatpush1.bf16.msra.mxu0 0
      %566 = vmatprep.subr.bf16.mxu0 0
      %567 = vmatpush1.bf16.msra.mxu0 0
      %568 = vmatprep.mubr.bf16.mxu0 %v489
      %569 = vmatmul.mubr.bf16.gmra.mrb[0].mxu0 %v385
      %v570 = vpop.f32.mrb[0].mxu0
      %v571 = vadd.f32 %v287, %v570
      %v572 = vpop.f32.mrb[0].mxu0
      %v573 = vpop.f32.mrb[0].mxu0
      %v574 = vadd.f32 %v287, %v573
      %v575 = vpop.f32.mrb[0].mxu0
      %576 = vmatprep.mubr.bf16.mxu0 %v492
      %577 = vmatmul.mubr.bf16.gmra.mrb[0].mxu0 %v387
      %v578 = vpop.f32.mrb[0].mxu0
      %v579 = vadd.f32 %v287, %v578
      %v580 = vpop.f32.mrb[0].mxu0
      %v581 = vpop.f32.mrb[0].mxu0
      %v582 = vadd.f32 %v287, %v581
      %v583 = vpop.f32.mrb[0].mxu0
      %584 = vmatprep.mubr.bf16.mxu0 %v495
      %585 = vmatmul.mubr.bf16.gmra.mrb[0].mxu0 %v389
      %v586 = vpop.f32.mrb[0].mxu0
      %v587 = vadd.f32 %v287, %v586
      %v588 = vpop.f32.mrb[0].mxu0
      %v589 = vpop.f32.mrb[0].mxu0
      %v590 = vadd.f32 %v287, %v589
      %v591 = vpop.f32.mrb[0].mxu0
      %592 = vmatprep.mubr.bf16.mxu0 %v498
      %593 = vmatmul.mubr.bf16.gmra.mrb[0].mxu0 %v391
      %v594 = vpop.f32.mrb[0].mxu0
      %v595 = vadd.f32 %v287, %v594
      %v596 = vpop.f32.mrb[0].mxu0
      %v597 = vpop.f32.mrb[0].mxu0
      %v598 = vadd.f32 %v287, %v597
      %v599 = vpop.f32.mrb[0].mxu0
      %600 = vmatprep.mubr.bf16.mxu0 %v501
      %601 = vmatmul.mubr.bf16.gmra.mrb[0].mxu0 %v393
      %v602 = vpop.f32.mrb[0].mxu0
      %v603 = vadd.f32 %v287, %v602
      %v604 = vpop.f32.mrb[0].mxu0
      %v605 = vpop.f32.mrb[0].mxu0
      %v606 = vadd.f32 %v287, %v605
      %v607 = vpop.f32.mrb[0].mxu0
      %608 = vmatprep.mubr.bf16.mxu0 %v504
      %609 = vmatmul.mubr.bf16.gmra.mrb[0].mxu0 %v395
      %v610 = vpop.f32.mrb[0].mxu0
      %v611 = vadd.f32 %v287, %v610
      %v612 = vpop.f32.mrb[0].mxu0
      %v613 = vpop.f32.mrb[0].mxu0
      %v614 = vadd.f32 %v287, %v613
      %v615 = vpop.f32.mrb[0].mxu0
      %616 = vmatprep.mubr.bf16.mxu0 %v507
      %617 = vmatmul.mubr.bf16.gmra.mrb[0].mxu0 %v397
      %v618 = vpop.f32.mrb[0].mxu0
      %v619 = vadd.f32 %v287, %v618
      %v620 = vpop.f32.mrb[0].mxu0
      %v621 = vpop.f32.mrb[0].mxu0
      %v622 = vadd.f32 %v287, %v621
      %v623 = vpop.f32.mrb[0].mxu0
      %624 = vmatprep.mubr.bf16.mxu0 %v510
      %625 = vmatmul.mubr.bf16.gmra.mrb[0].mxu0 %v399
      %v626 = vpop.f32.mrb[0].mxu0
      %v627 = vadd.f32 %v287, %v626
      %v628 = vpop.f32.mrb[0].mxu0
      %v629 = vpop.f32.mrb[0].mxu0
      %v630 = vadd.f32 %v287, %v629
      %v631 = vpop.f32.mrb[0].mxu0
      %632 = vmatprep.mubr.bf16.mxu0 %v513
      %633 = vmatmul.mubr.bf16.gmra.mrb[0].mxu0 %v401
      %v634 = vpop.f32.mrb[0].mxu0
      %v635 = vadd.f32 %v287, %v634
      %v636 = vpop.f32.mrb[0].mxu0
      %v637 = vpop.f32.mrb[0].mxu0
      %v638 = vadd.f32 %v287, %v637
      %v639 = vpop.f32.mrb[0].mxu0
      %640 = vmatprep.mubr.bf16.mxu0 %v516
      %641 = vmatmul.mubr.bf16.gmra.mrb[0].mxu0 %v403
      %v642 = vpop.f32.mrb[0].mxu0
      %v643 = vadd.f32 %v287, %v642
      %v644 = vpop.f32.mrb[0].mxu0
      %v645 = vpop.f32.mrb[0].mxu0
      %v646 = vadd.f32 %v287, %v645
      %v647 = vpop.f32.mrb[0].mxu0
      %648 = vmatprep.mubr.bf16.mxu0 %v519
      %649 = vmatmul.mubr.bf16.gmra.mrb[0].mxu0 %v405
      %v650 = vpop.f32.mrb[0].mxu0
      %v651 = vadd.f32 %v287, %v650
      %v652 = vpop.f32.mrb[0].mxu0
      %v653 = vpop.f32.mrb[0].mxu0
      %v654 = vadd.f32 %v287, %v653
      %v655 = vpop.f32.mrb[0].mxu0
      %656 = vmatprep.mubr.bf16.mxu0 %v522
      %657 = vmatmul.mubr.bf16.gmra.mrb[0].mxu0 %v407
      %v658 = vpop.f32.mrb[0].mxu0
      %v659 = vadd.f32 %v287, %v658
      %v660 = vpop.f32.mrb[0].mxu0
      %v661 = vpop.f32.mrb[0].mxu0
      %v662 = vadd.f32 %v287, %v661
      %v663 = vpop.f32.mrb[0].mxu0
      %664 = vmatprep.mubr.bf16.mxu0 %v525
      %665 = vmatmul.mubr.bf16.gmra.mrb[0].mxu0 %v409
      %v666 = vpop.f32.mrb[0].mxu0
      %v667 = vadd.f32 %v287, %v666
      %v668 = vpop.f32.mrb[0].mxu0
      %v669 = vpop.f32.mrb[0].mxu0
      %v670 = vadd.f32 %v287, %v669
      %v671 = vpop.f32.mrb[0].mxu0
      %672 = vmatprep.mubr.bf16.mxu0 %v528
      %673 = vmatmul.mubr.bf16.gmra.mrb[0].mxu0 %v411
      %v674 = vpop.f32.mrb[0].mxu0
      %v675 = vadd.f32 %v287, %v674
      %v676 = vpop.f32.mrb[0].mxu0
      %v677 = vpop.f32.mrb[0].mxu0
      %v678 = vadd.f32 %v287, %v677
      %v679 = vpop.f32.mrb[0].mxu0
      %680 = vmatprep.mubr.bf16.mxu0 %v531
      %681 = vmatmul.mubr.bf16.gmra.mrb[0].mxu0 %v413
      %v682 = vpop.f32.mrb[0].mxu0
      %v683 = vadd.f32 %v287, %v682
      %v684 = vpop.f32.mrb[0].mxu0
      %v685 = vpop.f32.mrb[0].mxu0
      %v686 = vadd.f32 %v287, %v685
      %v687 = vpop.f32.mrb[0].mxu0
      %688 = vmatprep.mubr.bf16.mxu0 %v534
      %689 = vmatmul.mubr.bf16.gmra.mrb[0].mxu0 %v415
      %v690 = vpop.f32.mrb[0].mxu0
      %v691 = vadd.f32 %v287, %v690
      %v692 = vpop.f32.mrb[0].mxu0
      %v693 = vpop.f32.mrb[0].mxu0
      %v694 = vadd.f32 %v287, %v693
      %v695 = vpop.f32.mrb[0].mxu0
      %696 = vdwg.mxu0
      %v697 = vpack.c.bf16 %v574, %v571
      %v698 = vpack.c.bf16 %v582, %v579
      %v699 = vpack.c.bf16 %v590, %v587
      %v700 = vpack.c.bf16 %v598, %v595
      %v701 = vpack.c.bf16 %v606, %v603
      %v702 = vpack.c.bf16 %v614, %v611
      %v703 = vpack.c.bf16 %v622, %v619
      %v704 = vpack.c.bf16 %v630, %v627
      %v705 = vpack.c.bf16 %v638, %v635
      %v706 = vpack.c.bf16 %v646, %v643
      %v707 = vpack.c.bf16 %v654, %v651
      %v708 = vpack.c.bf16 %v662, %v659
      %v709 = vpack.c.bf16 %v670, %v667
      %v710 = vpack.c.bf16 %v678, %v675
      %v711 = vpack.c.bf16 %v686, %v683
      %v712 = vpack.c.bf16 %v694, %v691
      %v713 = vld [vmem:[%s3] sm:$0xf]
      %v714 = vld [vmem:[%s3 + $0x4] sm:$0xf]
      %v715 = vld [vmem:[%s4] sm:$0x1]
      %v717 = vlaneseq
      %v718 = vshrl.u32 %v717, 7
      %v719 = vsub.s32 0, %v718
      %v720 = vrot.slane %v715, %v719
      %v724 = vunpack.c.l.b16 %v713
      %v725 = vunpack.c.l.b16 %v714
      %v726 = vpack.c.b16 %v725, %v724
      %v729 = vsel %vm487, %v697, 0
      %v732 = vsel %vm487, %v698, 0
      %v735 = vsel %vm487, %v699, 0
      %v738 = vsel %vm487, %v700, 0
      %v741 = vsel %vm487, %v701, 0
      %v744 = vsel %vm487, %v702, 0
      %v747 = vsel %vm487, %v703, 0
      %v750 = vsel %vm487, %v704, 0
      %v753 = vsel %vm487, %v705, 0
      %v756 = vsel %vm487, %v706, 0
      %v759 = vsel %vm487, %v707, 0
      %v762 = vsel %vm487, %v708, 0
      %v765 = vsel %vm487, %v709, 0
      %v768 = vsel %vm487, %v710, 0
      %v771 = vsel %vm487, %v711, 0
      %v774 = vsel %vm487, %v712, 0
      %776 = vmatprep.subr.bf16.mxu0 0
      %777 = vmatpush1.bf16.msra.mxu0 %v726
      %778 = vmatprep.subr.bf16.mxu0 0
      %779 = vmatpush1.bf16.msra.mxu0 0
      %780 = vmatprep.subr.bf16.mxu0 0
      %781 = vmatpush1.bf16.msra.mxu0 0
      %782 = vmatprep.subr.bf16.mxu0 0
      %783 = vmatpush1.bf16.msra.mxu0 0
      %784 = vmatprep.subr.bf16.mxu0 0
      %785 = vmatpush1.bf16.msra.mxu0 0
      %786 = vmatprep.subr.bf16.mxu0 0
      %787 = vmatpush1.bf16.msra.mxu0 0
      %788 = vmatprep.subr.bf16.mxu0 0
      %789 = vmatpush1.bf16.msra.mxu0 0
      %790 = vmatprep.subr.bf16.mxu0 0
      %791 = vmatpush1.bf16.msra.mxu0 0
      %792 = vmatprep.subr.bf16.mxu0 0
      %793 = vmatpush1.bf16.msra.mxu0 0
      %794 = vmatprep.subr.bf16.mxu0 0
      %795 = vmatpush1.bf16.msra.mxu0 0
      %796 = vmatprep.subr.bf16.mxu0 0
      %797 = vmatpush1.bf16.msra.mxu0 0
      %798 = vmatprep.subr.bf16.mxu0 0
      %799 = vmatpush1.bf16.msra.mxu0 0
      %800 = vmatprep.subr.bf16.mxu0 0
      %801 = vmatpush1.bf16.msra.mxu0 0
      %802 = vmatprep.subr.bf16.mxu0 0
      %803 = vmatpush1.bf16.msra.mxu0 0
      %804 = vmatprep.subr.bf16.mxu0 0
      %805 = vmatpush1.bf16.msra.mxu0 0
      %806 = vmatprep.subr.bf16.mxu0 0
      %807 = vmatpush1.bf16.msra.mxu0 0
      %808 = vmatprep.mubr.bf16.mxu0 0
      %809 = vmatmul.mubr.bf16.gmra.mrb[0].mxu0 %v729
      %v810 = vpop.f32.mrb[0].mxu0
      %v811 = vadd.f32 %v720, %v810
      %v812 = vpop.f32.mrb[0].mxu0
      %v813 = vpop.f32.mrb[0].mxu0
      %v814 = vadd.f32 %v720, %v813
      %v815 = vpop.f32.mrb[0].mxu0
      %816 = vmatprep.mubr.bf16.mxu0 0
      %817 = vmatmul.mubr.bf16.gmra.mrb[0].mxu0 %v732
      %v818 = vpop.f32.mrb[0].mxu0
      %v819 = vadd.f32 %v720, %v818
      %v820 = vpop.f32.mrb[0].mxu0
      %v821 = vpop.f32.mrb[0].mxu0
      %v822 = vadd.f32 %v720, %v821
      %v823 = vpop.f32.mrb[0].mxu0
      %824 = vmatprep.mubr.bf16.mxu0 0
      %825 = vmatmul.mubr.bf16.gmra.mrb[0].mxu0 %v735
      %v826 = vpop.f32.mrb[0].mxu0
      %v827 = vadd.f32 %v720, %v826
      %v828 = vpop.f32.mrb[0].mxu0
      %v829 = vpop.f32.mrb[0].mxu0
      %v830 = vadd.f32 %v720, %v829
      %v831 = vpop.f32.mrb[0].mxu0
      %832 = vmatprep.mubr.bf16.mxu0 0
      %833 = vmatmul.mubr.bf16.gmra.mrb[0].mxu0 %v738
      %v834 = vpop.f32.mrb[0].mxu0
      %v835 = vadd.f32 %v720, %v834
      %v836 = vpop.f32.mrb[0].mxu0
      %v837 = vpop.f32.mrb[0].mxu0
      %v838 = vadd.f32 %v720, %v837
      %v839 = vpop.f32.mrb[0].mxu0
      %840 = vmatprep.mubr.bf16.mxu0 0
      %841 = vmatmul.mubr.bf16.gmra.mrb[0].mxu0 %v741
      %v842 = vpop.f32.mrb[0].mxu0
      %v843 = vadd.f32 %v720, %v842
      %v844 = vpop.f32.mrb[0].mxu0
      %v845 = vpop.f32.mrb[0].mxu0
      %v846 = vadd.f32 %v720, %v845
      %v847 = vpop.f32.mrb[0].mxu0
      %848 = vmatprep.mubr.bf16.mxu0 0
      %849 = vmatmul.mubr.bf16.gmra.mrb[0].mxu0 %v744
      %v850 = vpop.f32.mrb[0].mxu0
      %v851 = vadd.f32 %v720, %v850
      %v852 = vpop.f32.mrb[0].mxu0
      %v853 = vpop.f32.mrb[0].mxu0
      %v854 = vadd.f32 %v720, %v853
      %v855 = vpop.f32.mrb[0].mxu0
      %856 = vmatprep.mubr.bf16.mxu0 0
      %857 = vmatmul.mubr.bf16.gmra.mrb[0].mxu0 %v747
      %v858 = vpop.f32.mrb[0].mxu0
      %v859 = vadd.f32 %v720, %v858
      %v860 = vpop.f32.mrb[0].mxu0
      %v861 = vpop.f32.mrb[0].mxu0
      %v862 = vadd.f32 %v720, %v861
      %v863 = vpop.f32.mrb[0].mxu0
      %864 = vmatprep.mubr.bf16.mxu0 0
      %865 = vmatmul.mubr.bf16.gmra.mrb[0].mxu0 %v750
      %v866 = vpop.f32.mrb[0].mxu0
      %v867 = vadd.f32 %v720, %v866
      %v868 = vpop.f32.mrb[0].mxu0
      %v869 = vpop.f32.mrb[0].mxu0
      %v870 = vadd.f32 %v720, %v869
      %v871 = vpop.f32.mrb[0].mxu0
      %872 = vmatprep.mubr.bf16.mxu0 0
      %873 = vmatmul.mubr.bf16.gmra.mrb[0].mxu0 %v753
      %v874 = vpop.f32.mrb[0].mxu0
      %v875 = vadd.f32 %v720, %v874
      %v876 = vpop.f32.mrb[0].mxu0
      %v877 = vpop.f32.mrb[0].mxu0
      %v878 = vadd.f32 %v720, %v877
      %v879 = vpop.f32.mrb[0].mxu0
      %880 = vmatprep.mubr.bf16.mxu0 0
      %881 = vmatmul.mubr.bf16.gmra.mrb[0].mxu0 %v756
      %v882 = vpop.f32.mrb[0].mxu0
      %v883 = vadd.f32 %v720, %v882
      %v884 = vpop.f32.mrb[0].mxu0
      %v885 = vpop.f32.mrb[0].mxu0
      %v886 = vadd.f32 %v720, %v885
      %v887 = vpop.f32.mrb[0].mxu0
      %888 = vmatprep.mubr.bf16.mxu0 0
      %889 = vmatmul.mubr.bf16.gmra.mrb[0].mxu0 %v759
      %v890 = vpop.f32.mrb[0].mxu0
      %v891 = vadd.f32 %v720, %v890
      %v892 = vpop.f32.mrb[0].mxu0
      %v893 = vpop.f32.mrb[0].mxu0
      %v894 = vadd.f32 %v720, %v893
      %v895 = vpop.f32.mrb[0].mxu0
      %896 = vmatprep.mubr.bf16.mxu0 0
      %897 = vmatmul.mubr.bf16.gmra.mrb[0].mxu0 %v762
      %v898 = vpop.f32.mrb[0].mxu0
      %v899 = vadd.f32 %v720, %v898
      %v900 = vpop.f32.mrb[0].mxu0
      %v901 = vpop.f32.mrb[0].mxu0
      %v902 = vadd.f32 %v720, %v901
      %v903 = vpop.f32.mrb[0].mxu0
      %904 = vmatprep.mubr.bf16.mxu0 0
      %905 = vmatmul.mubr.bf16.gmra.mrb[0].mxu0 %v765
      %v906 = vpop.f32.mrb[0].mxu0
      %v907 = vadd.f32 %v720, %v906
      %v908 = vpop.f32.mrb[0].mxu0
      %v909 = vpop.f32.mrb[0].mxu0
      %v910 = vadd.f32 %v720, %v909
      %v911 = vpop.f32.mrb[0].mxu0
      %912 = vmatprep.mubr.bf16.mxu0 0
      %913 = vmatmul.mubr.bf16.gmra.mrb[0].mxu0 %v768
      %v914 = vpop.f32.mrb[0].mxu0
      %v915 = vadd.f32 %v720, %v914
      %v916 = vpop.f32.mrb[0].mxu0
      %v917 = vpop.f32.mrb[0].mxu0
      %v918 = vadd.f32 %v720, %v917
      %v919 = vpop.f32.mrb[0].mxu0
      %920 = vmatprep.mubr.bf16.mxu0 0
      %921 = vmatmul.mubr.bf16.gmra.mrb[0].mxu0 %v771
      %v922 = vpop.f32.mrb[0].mxu0
      %v923 = vadd.f32 %v720, %v922
      %v924 = vpop.f32.mrb[0].mxu0
      %v925 = vpop.f32.mrb[0].mxu0
      %v926 = vadd.f32 %v720, %v925
      %v927 = vpop.f32.mrb[0].mxu0
      %928 = vmatprep.mubr.bf16.mxu0 0
      %929 = vmatmul.mubr.bf16.gmra.mrb[0].mxu0 %v774
      %v930 = vpop.f32.mrb[0].mxu0
      %v931 = vadd.f32 %v720, %v930
      %v932 = vpop.f32.mrb[0].mxu0
      %v933 = vpop.f32.mrb[0].mxu0
      %v934 = vadd.f32 %v720, %v933
      %v935 = vpop.f32.mrb[0].mxu0
      %936 = vdwg.mxu0
      %vm937 = vcmask 31744
      %938 = vst.msk [vmem:[%s229] sm:$0xff] %vm937, %v811
      %939 = vst.msk [vmem:[%s229 + $0x8] sm:$0xff] %vm937, %v814
      %940 = vst.msk [vmem:[%s229 + $0x10] sm:$0xff] %vm937, %v819
      %941 = vst.msk [vmem:[%s229 + $0x18] sm:$0xff] %vm937, %v822
      %942 = vst.msk [vmem:[%s229 + $0x20] sm:$0xff] %vm937, %v827
      %943 = vst.msk [vmem:[%s229 + $0x28] sm:$0xff] %vm937, %v830
      %944 = vst.msk [vmem:[%s229 + $0x30] sm:$0xff] %vm937, %v835
      %945 = vst.msk [vmem:[%s229 + $0x38] sm:$0xff] %vm937, %v838
      %946 = vst.msk [vmem:[%s229 + $0x40] sm:$0xff] %vm937, %v843
      %947 = vst.msk [vmem:[%s229 + $0x48] sm:$0xff] %vm937, %v846
      %948 = vst.msk [vmem:[%s229 + $0x50] sm:$0xff] %vm937, %v851
      %949 = vst.msk [vmem:[%s229 + $0x58] sm:$0xff] %vm937, %v854
      %950 = vst.msk [vmem:[%s229 + $0x60] sm:$0xff] %vm937, %v859
      %951 = vst.msk [vmem:[%s229 + $0x68] sm:$0xff] %vm937, %v862
      %952 = vst.msk [vmem:[%s229 + $0x70] sm:$0xff] %vm937, %v867
      %953 = vst.msk [vmem:[%s229 + $0x78] sm:$0xff] %vm937, %v870
      %954 = vst.msk [vmem:[%s229 + $0x80] sm:$0xff] %vm937, %v875
      %955 = vst.msk [vmem:[%s229 + $0x88] sm:$0xff] %vm937, %v878
      %956 = vst.msk [vmem:[%s229 + $0x90] sm:$0xff] %vm937, %v883
      %957 = vst.msk [vmem:[%s229 + $0x98] sm:$0xff] %vm937, %v886
      %958 = vst.msk [vmem:[%s229 + $0xa0] sm:$0xff] %vm937, %v891
      %959 = vst.msk [vmem:[%s229 + $0xa8] sm:$0xff] %vm937, %v894
      %960 = vst.msk [vmem:[%s229 + $0xb0] sm:$0xff] %vm937, %v899
      %961 = vst.msk [vmem:[%s229 + $0xb8] sm:$0xff] %vm937, %v902
      %962 = vst.msk [vmem:[%s229 + $0xc0] sm:$0xff] %vm937, %v907
      %963 = vst.msk [vmem:[%s229 + $0xc8] sm:$0xff] %vm937, %v910
      %964 = vst.msk [vmem:[%s229 + $0xd0] sm:$0xff] %vm937, %v915
      %965 = vst.msk [vmem:[%s229 + $0xd8] sm:$0xff] %vm937, %v918
      %966 = vst.msk [vmem:[%s229 + $0xe0] sm:$0xff] %vm937, %v923
      %967 = vst.msk [vmem:[%s229 + $0xe8] sm:$0xff] %vm937, %v926
      %968 = vst.msk [vmem:[%s229 + $0xf0] sm:$0xff] %vm937, %v931
      %969 = vst.msk [vmem:[%s229 + $0xf8] sm:$0xff] %vm937, %v934
      %s970 = smul.u32 32, %s16
      %p971 = scmp.lt.s32.totalorder %s970, 63
      %s972 = scalar_select %p971, %s970, 63
      %s973 = smul.addr %s972, 8
      %s974 = scalar_lea.vmem %s5, %s973
      // Predicated region
      $region41: #{gd_decoder_forward.22} parent=39 // pred_check
        %p975 = pneg %p144
      $region42: #{gd_decoder_forward.22} parent=39 // pred_check_branch
        %977 = sbr.rel (%p975) target = $region44
      $region43: #{gd_decoder_forward.22} parent=39 // pred_region
        %s978 = smul.u32 32, %s16
      $region44: #{gd_decoder_forward.22} parent=39 // pred_fallthru
        _
    $region40: #{gd_decoder_forward.22} parent=5 // pred_fallthru
      _
    %p979 = scmp.le.s32.totalorder 2, %s11
    // Predicated region
    $region45: #{gd_decoder_forward.22} parent=5 // pred_check
      %p980 = pneg %p979
    $region46: #{gd_decoder_forward.22} parent=5 // pred_check_branch
      %982 = sbr.rel (%p980) target = $region48
    $region47: #{gd_decoder_forward.22} parent=5 // pred_region
      %s983 = ssub.s32 %s11, 2
      // Predicated region
      $region49: #{gd_decoder_forward.22} parent=47 // pred_check
        %p984 = pneg %p150
      $region50: #{gd_decoder_forward.22} parent=47 // pred_check_branch
        %986 = sbr.rel (%p984) target = $region52
      $region51: #{gd_decoder_forward.22} parent=47 // pred_region
        %s987 = smul.u32 32, %s17
        %p988 = scmp.lt.s32.totalorder %s987, 63
        %s989 = scalar_select %p988, %s987, 63
        %s990 = smul.addr %s989, 8
        %s991 = scalar_lea.vmem %s5, %s990
      $region52: #{gd_decoder_forward.22} parent=47 // pred_fallthru
        _
    $region48: #{gd_decoder_forward.22} parent=5 // pred_fallthru
      _
  $region6: #{gd_decoder_forward.22} parent=0 // loop_footer
    %s15 = sadd.s32 1, %s11
  $region7: #{gd_decoder_forward.22} parent=0 // loop_footer_branch
    %10 = sbr.rel target = $region3
  $region8: #{gd_decoder_forward.22} parent=0 // loop_exit
    _

// kernel: gd_decoder_forward.23
$region0: #{gd_decoder_forward.23}
  #allocation0 [shape = 'u32[]', space=smem, size = 0x4, offset = 0x4, fixed_abs, tag = 'smem constant byte address 0x4 - core index']
  #allocation1 [shape = 'u32[144,128]{1,0:T(1,128)}', space=vmem, size = 0x12000, scoped, tag = 'internal scratch']
  %s0 = inlined_call_operand.vmem [shape: bf16[512,144], index: 0, kind: input, shape index: {}]
  %s1 = inlined_call_operand.vmem [shape: bf16[144,16], index: 1, kind: input, shape index: {}]
  %s2 = inlined_call_operand.vmem [shape: f32[1,16], index: 2, kind: input, shape index: {}]
  %s3 = inlined_call_operand.vmem [shape: bf16[512,16], index: 3, kind: output, shape index: {}]
  %s4 = sld [smem:[#allocation0]]
  $region45: #{gd_decoder_forward.23} parent=0
    _
  %s6 = ssub.s32 1, %s4
  %s7 = scalar_select 0, %s6, %s4
  loop: start=0, step=1, limit=4
  $region2: #{gd_decoder_forward.23} parent=0 // loop_pre_header
    _
  $region3: #{gd_decoder_forward.23} parent=0 // loop_header
    %s9 = sphi 0, %s13
    %p10 = scmp.ge.s32.totalorder %s9, 4
    %s19 = sphi 0, %s21
    %s22 = sphi 0, %s19
    %s23 = sphi 0, %s22
    %s39 = sphi 0, %s23
    %s43 = sphi 0, %s43
    %s45 = sphi 0, %s43
    %s46 = sphi 0, %s45
    %s60 = sphi 0, %s46
    %s64 = sphi 0, %s64
    %s66 = sphi 0, %s64
    %s67 = sphi 0, %s66
    %s81 = sphi 0, %s67
    %s87 = sphi 0, %s89
    %s90 = sphi 0, %s87
    %s91 = sphi 0, %s90
    %s107 = sphi 0, %s91
  $region4: #{gd_decoder_forward.23} parent=0 // loop_header_branch
    %12 = sbr.rel (%p10) target = $region8
  $region5: #{gd_decoder_forward.23} parent=0 // loop_body
    %s14 = ssub.s32 %s9, 1
    %s15 = ssub.s32 %s9, 2
    %s16 = sadd.s32 %s9, 1
    %s17 = ssub.s32 %s9, %s16
    %p18 = scmp.eq.s32.totalorder %s17, 0
    %s20 = sadd.s32 %s19, 1
    %s21 = scalar_select %p18, %s19, %s20
    %p24 = pneg %p18
    %p25 = scmp.eq.s32.totalorder %s9, 1
    %p26 = por %p24, %p25
    %p27 = scmp.ne.s32.totalorder %s19, %s22
    %p28 = scmp.eq.s32.totalorder %s9, 0
    %p29 = por %p27, %p28
    %p30 = scmp.ne.s32.totalorder %s19, %s22
    %p31 = scmp.eq.s32.totalorder %s14, 1
    %p32 = por %p30, %p31
    %p33 = scmp.ne.s32.totalorder %s22, %s23
    %p34 = scmp.eq.s32.totalorder %s14, 0
    %p35 = por %p33, %p34
    %p36 = scmp.ne.s32.totalorder %s22, %s23
    %p37 = scmp.eq.s32.totalorder %s15, 1
    %p38 = por %p36, %p37
    %p40 = scmp.ne.s32.totalorder %s23, %s39
    %p41 = scmp.eq.s32.totalorder %s15, 0
    %p42 = por %p40, %p41
    %s44 = sadd.s32 %s43, 1
    %p47 = scmp.eq.s32.totalorder %s9, 1
    %p48 = scmp.ne.s32.totalorder %s43, %s45
    %p49 = scmp.eq.s32.totalorder %s9, 0
    %p50 = por %p48, %p49
    %p51 = scmp.ne.s32.totalorder %s43, %s45
    %p52 = scmp.eq.s32.totalorder %s14, 1
    %p53 = por %p51, %p52
    %p54 = scmp.ne.s32.totalorder %s45, %s46
    %p55 = scmp.eq.s32.totalorder %s14, 0
    %p56 = por %p54, %p55
    %p57 = scmp.ne.s32.totalorder %s45, %s46
    %p58 = scmp.eq.s32.totalorder %s15, 1
    %p59 = por %p57, %p58
    %p61 = scmp.ne.s32.totalorder %s46, %s60
    %p62 = scmp.eq.s32.totalorder %s15, 0
    %p63 = por %p61, %p62
    %s65 = sadd.s32 %s64, 1
    %p68 = scmp.eq.s32.totalorder %s9, 1
    %p69 = scmp.ne.s32.totalorder %s64, %s66
    %p70 = scmp.eq.s32.totalorder %s9, 0
    %p71 = por %p69, %p70
    %p72 = scmp.ne.s32.totalorder %s64, %s66
    %p73 = scmp.eq.s32.totalorder %s14, 1
    %p74 = por %p72, %p73
    %p75 = scmp.ne.s32.totalorder %s66, %s67
    %p76 = scmp.eq.s32.totalorder %s14, 0
    %p77 = por %p75, %p76
    %p78 = scmp.ne.s32.totalorder %s66, %s67
    %p79 = scmp.eq.s32.totalorder %s15, 1
    %p80 = por %p78, %p79
    %p82 = scmp.ne.s32.totalorder %s67, %s81
    %p83 = scmp.eq.s32.totalorder %s15, 0
    %p84 = por %p82, %p83
    %s85 = ssub.s32 %s9, %s16
    %p86 = scmp.eq.s32.totalorder %s85, 0
    %s88 = sadd.s32 %s87, 1
    %s89 = scalar_select %p86, %s87, %s88
    %p92 = pneg %p86
    %p93 = scmp.eq.s32.totalorder %s9, 1
    %p94 = por %p92, %p93
    %p95 = scmp.ne.s32.totalorder %s87, %s90
    %p96 = scmp.eq.s32.totalorder %s9, 0
    %p97 = por %p95, %p96
    %p98 = scmp.ne.s32.totalorder %s87, %s90
    %p99 = scmp.eq.s32.totalorder %s14, 1
    %p100 = por %p98, %p99
    %p101 = scmp.ne.s32.totalorder %s90, %s91
    %p102 = scmp.eq.s32.totalorder %s14, 0
    %p103 = por %p101, %p102
    %p104 = scmp.ne.s32.totalorder %s90, %s91
    %p105 = scmp.eq.s32.totalorder %s15, 1
    %p106 = por %p104, %p105
    %p108 = scmp.ne.s32.totalorder %s91, %s107
    %p109 = scmp.eq.s32.totalorder %s15, 0
    %p110 = por %p108, %p109
    %p111 = scmp.le.s32.totalorder 1, %s9
    %p112 = scmp.lt.s32.totalorder %s9, 3
    %p113 = pnand %p111, %p112
    %p114 = pneg %p113
    // Predicated region
    $region9: #{gd_decoder_forward.23} parent=5 // pred_check
      _
    $region10: #{gd_decoder_forward.23} parent=5 // pred_check_branch
      %116 = sbr.rel (%p113) target = $region12
    $region11: #{gd_decoder_forward.23} parent=5 // pred_region
      %s117 = ssub.s32 %s9, 1
      // Predicated region
      $region13: #{gd_decoder_forward.23} parent=11 // pred_check
        %p118 = pneg %p56
      $region14: #{gd_decoder_forward.23} parent=11 // pred_check_branch
        %120 = sbr.rel (%p118) target = $region16
      $region15: #{gd_decoder_forward.23} parent=11 // pred_region
        _
      $region16: #{gd_decoder_forward.23} parent=11 // pred_fallthru
        _
      // Predicated region
      $region17: #{gd_decoder_forward.23} parent=11 // pred_check
        %p121 = pneg %p77
      $region18: #{gd_decoder_forward.23} parent=11 // pred_check_branch
        %123 = sbr.rel (%p121) target = $region20
      $region19: #{gd_decoder_forward.23} parent=11 // pred_region
        _
      $region20: #{gd_decoder_forward.23} parent=11 // pred_fallthru
        _
    $region12: #{gd_decoder_forward.23} parent=5 // pred_fallthru
      _
    %p124 = scmp.lt.s32.totalorder %s9, 2
    // Predicated region
    $region21: #{gd_decoder_forward.23} parent=5 // pred_check
      %p125 = pneg %p124
    $region22: #{gd_decoder_forward.23} parent=5 // pred_check_branch
      %127 = sbr.rel (%p125) target = $region24
    $region23: #{gd_decoder_forward.23} parent=5 // pred_region
      // Predicated region
      $region25: #{gd_decoder_forward.23} parent=23 // pred_check
        %p128 = pneg %p29
      $region26: #{gd_decoder_forward.23} parent=23 // pred_check_branch
        %130 = sbr.rel (%p128) target = $region28
      $region27: #{gd_decoder_forward.23} parent=23 // pred_region
        %s131 = smul.u32 32, %s9
        %p132 = scmp.lt.s32.totalorder %s131, 63
        %s133 = scalar_select %p132, %s131, 63
        %s134 = smul.addr %s133, 2
        %s135 = smul.addr %s134, 4
        %s136 = scalar_lea.vmem %s0, %s135
        %s137 = smul.u32 32, %s9
      $region28: #{gd_decoder_forward.23} parent=23 // pred_fallthru
        _
    $region24: #{gd_decoder_forward.23} parent=5 // pred_fallthru
      _
    %p138 = scmp.le.s32.totalorder 1, %s9
    %p139 = scmp.lt.s32.totalorder %s9, 3
    %p140 = pnand %p138, %p139
    %p141 = pneg %p140
    // Predicated region
    $region29: #{gd_decoder_forward.23} parent=5 // pred_check
      _
    $region30: #{gd_decoder_forward.23} parent=5 // pred_check_branch
      %143 = sbr.rel (%p140) target = $region32
    $region31: #{gd_decoder_forward.23} parent=5 // pred_region
      %s144 = ssub.s32 %s9, 1
      %s145 = smul.u32 32, %s14
      %p146 = scmp.lt.s32.totalorder %s145, 63
      %s147 = scalar_select %p146, %s145, 63
      %s148 = smul.addr %s147, 2
      %s149 = smul.addr %s148, 4
      %s150 = scalar_lea.vmem %s0, %s149
      %p151 = pneg %p35
      %p152 = pneg %p32
      %p153 = pneg %p56
      %p154 = pneg %p53
      %p155 = pneg %p77
      %p156 = pneg %p74
      %p157 = pneg %p103
      %p158 = pneg %p100
      %s159 = smul.u32 32, %s14
      %p160 = scmp.lt.s32.totalorder %s159, 63
      %s161 = scalar_select %p160, %s159, 63
      %s162 = smul.addr %s161, 4
      %s163 = scalar_lea.vmem %s3, %s162
      %s164 = smul.u32 32, %s14
      %p165 = scmp.lt.s32.totalorder %s164, 63
      %s166 = scalar_select %p165, %s164, 63
      %s167 = smul.addr %s166, 2
      %s168 = smul.addr %s167, 4
      %s169 = scalar_lea.vmem %s0, %s168
      %s170 = smul.u32 32, %s14
      %s171 = smul.u32 32, %s14
      %p172 = scmp.lt.s32.totalorder %s171, 63
      %s173 = scalar_select %p172, %s171, 63
      %s174 = smul.addr %s173, 4
      %s175 = scalar_lea.vmem %s3, %s174
      %s176 = smul.u32 32, %s14
      %v178 = vld [vmem:[%s169] sm:$0xff]
      %v179 = vld [vmem:[%s169 + $0x8] sm:$0xff]
      %v180 = vld [vmem:[%s169 + $0x10] sm:$0xff]
      %v181 = vld [vmem:[%s169 + $0x18] sm:$0xff]
      %v182 = vld [vmem:[%s169 + $0x20] sm:$0xff]
      %v183 = vld [vmem:[%s169 + $0x28] sm:$0xff]
      %v184 = vld [vmem:[%s169 + $0x30] sm:$0xff]
      %v185 = vld [vmem:[%s169 + $0x38] sm:$0xff]
      %v186 = vld [vmem:[%s169 + $0x40] sm:$0xff]
      %v187 = vld [vmem:[%s169 + $0x48] sm:$0xff]
      %v188 = vld [vmem:[%s169 + $0x50] sm:$0xff]
      %v189 = vld [vmem:[%s169 + $0x58] sm:$0xff]
      %v190 = vld [vmem:[%s169 + $0x60] sm:$0xff]
      %v191 = vld [vmem:[%s169 + $0x68] sm:$0xff]
      %v192 = vld [vmem:[%s169 + $0x70] sm:$0xff]
      %v193 = vld [vmem:[%s169 + $0x78] sm:$0xff]
      %v194 = vld [vmem:[%s169 + $0x80] sm:$0xff]
      %v195 = vld [vmem:[%s169 + $0x88] sm:$0xff]
      %v196 = vld [vmem:[%s169 + $0x90] sm:$0xff]
      %v197 = vld [vmem:[%s169 + $0x98] sm:$0xff]
      %v198 = vld [vmem:[%s169 + $0xa0] sm:$0xff]
      %v199 = vld [vmem:[%s169 + $0xa8] sm:$0xff]
      %v200 = vld [vmem:[%s169 + $0xb0] sm:$0xff]
      %v201 = vld [vmem:[%s169 + $0xb8] sm:$0xff]
      %v202 = vld [vmem:[%s169 + $0xc0] sm:$0xff]
      %v203 = vld [vmem:[%s169 + $0xc8] sm:$0xff]
      %v204 = vld [vmem:[%s169 + $0xd0] sm:$0xff]
      %v205 = vld [vmem:[%s169 + $0xd8] sm:$0xff]
      %v206 = vld [vmem:[%s169 + $0xe0] sm:$0xff]
      %v207 = vld [vmem:[%s169 + $0xe8] sm:$0xff]
      %v208 = vld [vmem:[%s169 + $0xf0] sm:$0xff]
      %v209 = vld [vmem:[%s169 + $0xf8] sm:$0xff]
      %v210 = vld [vmem:[%s1] sm:$0xf]
      %v211 = vld [vmem:[%s1 + $0x4] sm:$0xf]
      %v212 = vld [vmem:[%s1 + $0x8] sm:$0xf]
      %v213 = vld [vmem:[%s1 + $0xc] sm:$0xf]
      %v214 = vld [vmem:[%s1 + $0x10] sm:$0xf]
      %v215 = vld [vmem:[%s1 + $0x14] sm:$0xf]
      %v216 = vld [vmem:[%s1 + $0x18] sm:$0xf]
      %v217 = vld [vmem:[%s1 + $0x1c] sm:$0xf]
      %v218 = vld [vmem:[%s1 + $0x20] sm:$0xf]
      %v219 = vld [vmem:[%s1 + $0x24] sm:$0xf]
      %v220 = vld [vmem:[%s1 + $0x28] sm:$0xf]
      %v221 = vld [vmem:[%s1 + $0x2c] sm:$0xf]
      %v222 = vld [vmem:[%s1 + $0x30] sm:$0xf]
      %v223 = vld [vmem:[%s1 + $0x34] sm:$0xf]
      %v224 = vld [vmem:[%s1 + $0x38] sm:$0xf]
      %v225 = vld [vmem:[%s1 + $0x3c] sm:$0xf]
      %v226 = vld [vmem:[%s1 + $0x40] sm:$0xf]
      %v227 = vld [vmem:[%s1 + $0x44] sm:$0xf]
      %v228 = vld [vmem:[%s2] sm:$0x1]
      %v230 = vlaneseq
      %v231 = vshrl.u32 %v230, 7
      %v232 = vsub.s32 0, %v231
      %v233 = vrot.slane %v228, %v232
      %v267 = vunpack.c.l.b16 %v178
      %v268 = vunpack.c.h.b16 %v178
      %v269 = vunpack.c.l.b16 %v179
      %v270 = vunpack.c.h.b16 %v179
      %v271 = vunpack.c.l.b16 %v180
      %v272 = vunpack.c.h.b16 %v180
      %v273 = vunpack.c.l.b16 %v181
      %v274 = vunpack.c.h.b16 %v181
      %v275 = vunpack.c.l.b16 %v182
      %v276 = vunpack.c.h.b16 %v182
      %v277 = vunpack.c.l.b16 %v183
      %v278 = vunpack.c.h.b16 %v183
      %v279 = vunpack.c.l.b16 %v184
      %v280 = vunpack.c.h.b16 %v184
      %v281 = vunpack.c.l.b16 %v185
      %v282 = vunpack.c.h.b16 %v185
      %v283 = vunpack.c.l.b16 %v186
      %v284 = vunpack.c.h.b16 %v186
      %v285 = vunpack.c.l.b16 %v187
      %v286 = vunpack.c.h.b16 %v187
      %v287 = vunpack.c.l.b16 %v188
      %v288 = vunpack.c.h.b16 %v188
      %v289 = vunpack.c.l.b16 %v189
      %v290 = vunpack.c.h.b16 %v189
      %v291 = vunpack.c.l.b16 %v190
      %v292 = vunpack.c.h.b16 %v190
      %v293 = vunpack.c.l.b16 %v191
      %v294 = vunpack.c.h.b16 %v191
      %v295 = vunpack.c.l.b16 %v192
      %v296 = vunpack.c.h.b16 %v192
      %v297 = vunpack.c.l.b16 %v193
      %v298 = vunpack.c.h.b16 %v193
      %v299 = vunpack.c.l.b16 %v194
      %v300 = vunpack.c.h.b16 %v194
      %v301 = vunpack.c.l.b16 %v195
      %v302 = vunpack.c.h.b16 %v195
      %v303 = vunpack.c.l.b16 %v196
      %v304 = vunpack.c.h.b16 %v196
      %v305 = vunpack.c.l.b16 %v197
      %v306 = vunpack.c.h.b16 %v197
      %v307 = vunpack.c.l.b16 %v198
      %v308 = vunpack.c.h.b16 %v198
      %v309 = vunpack.c.l.b16 %v199
      %v310 = vunpack.c.h.b16 %v199
      %v311 = vunpack.c.l.b16 %v200
      %v312 = vunpack.c.h.b16 %v200
      %v313 = vunpack.c.l.b16 %v201
      %v314 = vunpack.c.h.b16 %v201
      %v315 = vunpack.c.l.b16 %v202
      %v316 = vunpack.c.h.b16 %v202
      %v317 = vunpack.c.l.b16 %v203
      %v318 = vunpack.c.h.b16 %v203
      %v319 = vunpack.c.l.b16 %v204
      %v320 = vunpack.c.h.b16 %v204
      %v321 = vunpack.c.l.b16 %v205
      %v322 = vunpack.c.h.b16 %v205
      %v323 = vunpack.c.l.b16 %v206
      %v324 = vunpack.c.h.b16 %v206
      %v325 = vunpack.c.l.b16 %v207
      %v326 = vunpack.c.h.b16 %v207
      %v327 = vunpack.c.l.b16 %v208
      %v328 = vunpack.c.h.b16 %v208
      %v329 = vunpack.c.l.b16 %v209
      %v330 = vunpack.c.h.b16 %v209
      %v331 = vpack.c.b16 %v269, %v267
      %v332 = vpack.c.b16 %v270, %v268
      %v333 = vpack.c.b16 %v273, %v271
      %v334 = vpack.c.b16 %v274, %v272
      %v335 = vpack.c.b16 %v277, %v275
      %v336 = vpack.c.b16 %v278, %v276
      %v337 = vpack.c.b16 %v281, %v279
      %v338 = vpack.c.b16 %v282, %v280
      %v339 = vpack.c.b16 %v285, %v283
      %v340 = vpack.c.b16 %v286, %v284
      %v341 = vpack.c.b16 %v289, %v287
      %v342 = vpack.c.b16 %v290, %v288
      %v343 = vpack.c.b16 %v293, %v291
      %v344 = vpack.c.b16 %v294, %v292
      %v345 = vpack.c.b16 %v297, %v295
      %v346 = vpack.c.b16 %v298, %v296
      %v347 = vpack.c.b16 %v301, %v299
      %v348 = vpack.c.b16 %v302, %v300
      %v349 = vpack.c.b16 %v305, %v303
      %v350 = vpack.c.b16 %v306, %v304
      %v351 = vpack.c.b16 %v309, %v307
      %v352 = vpack.c.b16 %v310, %v308
      %v353 = vpack.c.b16 %v313, %v311
      %v354 = vpack.c.b16 %v314, %v312
      %v355 = vpack.c.b16 %v317, %v315
      %v356 = vpack.c.b16 %v318, %v316
      %v357 = vpack.c.b16 %v321, %v319
      %v358 = vpack.c.b16 %v322, %v320
      %v359 = vpack.c.b16 %v325, %v323
      %v360 = vpack.c.b16 %v326, %v324
      %v361 = vpack.c.b16 %v329, %v327
      %v362 = vpack.c.b16 %v330, %v328
      %v397 = vunpack.c.l.b16 %v210
      %v398 = vunpack.c.l.b16 %v211
      %v399 = vunpack.c.l.b16 %v212
      %v400 = vunpack.c.l.b16 %v213
      %v401 = vunpack.c.l.b16 %v214
      %v402 = vunpack.c.l.b16 %v215
      %v403 = vunpack.c.l.b16 %v216
      %v404 = vunpack.c.l.b16 %v217
      %v405 = vunpack.c.l.b16 %v218
      %v406 = vunpack.c.l.b16 %v219
      %v407 = vunpack.c.l.b16 %v220
      %v408 = vunpack.c.l.b16 %v221
      %v409 = vunpack.c.l.b16 %v222
      %v410 = vunpack.c.l.b16 %v223
      %v411 = vunpack.c.l.b16 %v224
      %v412 = vunpack.c.l.b16 %v225
      %v413 = vunpack.c.l.b16 %v226
      %v414 = vunpack.c.l.b16 %v227
      %v415 = vpack.c.b16 %v398, %v397
      %v416 = vpack.c.b16 %v400, %v399
      %v417 = vpack.c.b16 %v402, %v401
      %v418 = vpack.c.b16 %v404, %v403
      %v419 = vpack.c.b16 %v406, %v405
      %v420 = vpack.c.b16 %v408, %v407
      %v421 = vpack.c.b16 %v410, %v409
      %v422 = vpack.c.b16 %v412, %v411
      %v423 = vpack.c.b16 %v414, %v413
      %vm433 = vcmask 130048
      %v435 = vsel %vm433, %v332, 0
      %v438 = vsel %vm433, %v334, 0
      %v441 = vsel %vm433, %v336, 0
      %v444 = vsel %vm433, %v338, 0
      %v447 = vsel %vm433, %v340, 0
      %v450 = vsel %vm433, %v342, 0
      %v453 = vsel %vm433, %v344, 0
      %v456 = vsel %vm433, %v346, 0
      %v459 = vsel %vm433, %v348, 0
      %v462 = vsel %vm433, %v350, 0
      %v465 = vsel %vm433, %v352, 0
      %v468 = vsel %vm433, %v354, 0
      %v471 = vsel %vm433, %v356, 0
      %v474 = vsel %vm433, %v358, 0
      %v477 = vsel %vm433, %v360, 0
      %v480 = vsel %vm433, %v362, 0
      %482 = vmatprep.subr.bf16.mxu0 0
      %483 = vmatpush1.bf16.msra.mxu0 %v415
      %484 = vmatprep.subr.bf16.mxu0 0
      %485 = vmatpush1.bf16.msra.mxu0 %v416
      %486 = vmatprep.subr.bf16.mxu0 0
      %487 = vmatpush1.bf16.msra.mxu0 %v417
      %488 = vmatprep.subr.bf16.mxu0 0
      %489 = vmatpush1.bf16.msra.mxu0 %v418
      %490 = vmatprep.subr.bf16.mxu0 0
      %491 = vmatpush1.bf16.msra.mxu0 %v419
      %492 = vmatprep.subr.bf16.mxu0 0
      %493 = vmatpush1.bf16.msra.mxu0 %v420
      %494 = vmatprep.subr.bf16.mxu0 0
      %495 = vmatpush1.bf16.msra.mxu0 %v421
      %496 = vmatprep.subr.bf16.mxu0 0
      %497 = vmatpush1.bf16.msra.mxu0 %v422
      %498 = vmatprep.subr.bf16.mxu0 0
      %499 = vmatpush1.bf16.msra.mxu0 %v423
      %500 = vmatprep.subr.bf16.mxu0 0
      %501 = vmatpush1.bf16.msra.mxu0 0
      %502 = vmatprep.subr.bf16.mxu0 0
      %503 = vmatpush1.bf16.msra.mxu0 0
      %504 = vmatprep.subr.bf16.mxu0 0
      %505 = vmatpush1.bf16.msra.mxu0 0
      %506 = vmatprep.subr.bf16.mxu0 0
      %507 = vmatpush1.bf16.msra.mxu0 0
      %508 = vmatprep.subr.bf16.mxu0 0
      %509 = vmatpush1.bf16.msra.mxu0 0
      %510 = vmatprep.subr.bf16.mxu0 0
      %511 = vmatpush1.bf16.msra.mxu0 0
      %512 = vmatprep.subr.bf16.mxu0 0
      %513 = vmatpush1.bf16.msra.mxu0 0
      %514 = vmatprep.mubr.bf16.mxu0 %v435
      %515 = vmatmul.mubr.bf16.gmra.mrb[0].mxu0 %v331
      %v516 = vpop.f32.mrb[0].mxu0
      %v517 = vadd.f32 %v233, %v516
      %v518 = vpop.f32.mrb[0].mxu0
      %v519 = vpop.f32.mrb[0].mxu0
      %v520 = vadd.f32 %v233, %v519
      %v521 = vpop.f32.mrb[0].mxu0
      %522 = vmatprep.mubr.bf16.mxu0 %v438
      %523 = vmatmul.mubr.bf16.gmra.mrb[0].mxu0 %v333
      %v524 = vpop.f32.mrb[0].mxu0
      %v525 = vadd.f32 %v233, %v524
      %v526 = vpop.f32.mrb[0].mxu0
      %v527 = vpop.f32.mrb[0].mxu0
      %v528 = vadd.f32 %v233, %v527
      %v529 = vpop.f32.mrb[0].mxu0
      %530 = vmatprep.mubr.bf16.mxu0 %v441
      %531 = vmatmul.mubr.bf16.gmra.mrb[0].mxu0 %v335
      %v532 = vpop.f32.mrb[0].mxu0
      %v533 = vadd.f32 %v233, %v532
      %v534 = vpop.f32.mrb[0].mxu0
      %v535 = vpop.f32.mrb[0].mxu0
      %v536 = vadd.f32 %v233, %v535
      %v537 = vpop.f32.mrb[0].mxu0
      %538 = vmatprep.mubr.bf16.mxu0 %v444
      %539 = vmatmul.mubr.bf16.gmra.mrb[0].mxu0 %v337
      %v540 = vpop.f32.mrb[0].mxu0
      %v541 = vadd.f32 %v233, %v540
      %v542 = vpop.f32.mrb[0].mxu0
      %v543 = vpop.f32.mrb[0].mxu0
      %v544 = vadd.f32 %v233, %v543
      %v545 = vpop.f32.mrb[0].mxu0
      %546 = vmatprep.mubr.bf16.mxu0 %v447
      %547 = vmatmul.mubr.bf16.gmra.mrb[0].mxu0 %v339
      %v548 = vpop.f32.mrb[0].mxu0
      %v549 = vadd.f32 %v233, %v548
      %v550 = vpop.f32.mrb[0].mxu0
      %v551 = vpop.f32.mrb[0].mxu0
      %v552 = vadd.f32 %v233, %v551
      %v553 = vpop.f32.mrb[0].mxu0
      %554 = vmatprep.mubr.bf16.mxu0 %v450
      %555 = vmatmul.mubr.bf16.gmra.mrb[0].mxu0 %v341
      %v556 = vpop.f32.mrb[0].mxu0
      %v557 = vadd.f32 %v233, %v556
      %v558 = vpop.f32.mrb[0].mxu0
      %v559 = vpop.f32.mrb[0].mxu0
      %v560 = vadd.f32 %v233, %v559
      %v561 = vpop.f32.mrb[0].mxu0
      %562 = vmatprep.mubr.bf16.mxu0 %v453
      %563 = vmatmul.mubr.bf16.gmra.mrb[0].mxu0 %v343
      %v564 = vpop.f32.mrb[0].mxu0
      %v565 = vadd.f32 %v233, %v564
      %v566 = vpop.f32.mrb[0].mxu0
      %v567 = vpop.f32.mrb[0].mxu0
      %v568 = vadd.f32 %v233, %v567
      %v569 = vpop.f32.mrb[0].mxu0
      %570 = vmatprep.mubr.bf16.mxu0 %v456
      %571 = vmatmul.mubr.bf16.gmra.mrb[0].mxu0 %v345
      %v572 = vpop.f32.mrb[0].mxu0
      %v573 = vadd.f32 %v233, %v572
      %v574 = vpop.f32.mrb[0].mxu0
      %v575 = vpop.f32.mrb[0].mxu0
      %v576 = vadd.f32 %v233, %v575
      %v577 = vpop.f32.mrb[0].mxu0
      %578 = vmatprep.mubr.bf16.mxu0 %v459
      %579 = vmatmul.mubr.bf16.gmra.mrb[0].mxu0 %v347
      %v580 = vpop.f32.mrb[0].mxu0
      %v581 = vadd.f32 %v233, %v580
      %v582 = vpop.f32.mrb[0].mxu0
      %v583 = vpop.f32.mrb[0].mxu0
      %v584 = vadd.f32 %v233, %v583
      %v585 = vpop.f32.mrb[0].mxu0
      %586 = vmatprep.mubr.bf16.mxu0 %v462
      %587 = vmatmul.mubr.bf16.gmra.mrb[0].mxu0 %v349
      %v588 = vpop.f32.mrb[0].mxu0
      %v589 = vadd.f32 %v233, %v588
      %v590 = vpop.f32.mrb[0].mxu0
      %v591 = vpop.f32.mrb[0].mxu0
      %v592 = vadd.f32 %v233, %v591
      %v593 = vpop.f32.mrb[0].mxu0
      %594 = vmatprep.mubr.bf16.mxu0 %v465
      %595 = vmatmul.mubr.bf16.gmra.mrb[0].mxu0 %v351
      %v596 = vpop.f32.mrb[0].mxu0
      %v597 = vadd.f32 %v233, %v596
      %v598 = vpop.f32.mrb[0].mxu0
      %v599 = vpop.f32.mrb[0].mxu0
      %v600 = vadd.f32 %v233, %v599
      %v601 = vpop.f32.mrb[0].mxu0
      %602 = vmatprep.mubr.bf16.mxu0 %v468
      %603 = vmatmul.mubr.bf16.gmra.mrb[0].mxu0 %v353
      %v604 = vpop.f32.mrb[0].mxu0
      %v605 = vadd.f32 %v233, %v604
      %v606 = vpop.f32.mrb[0].mxu0
      %v607 = vpop.f32.mrb[0].mxu0
      %v608 = vadd.f32 %v233, %v607
      %v609 = vpop.f32.mrb[0].mxu0
      %610 = vmatprep.mubr.bf16.mxu0 %v471
      %611 = vmatmul.mubr.bf16.gmra.mrb[0].mxu0 %v355
      %v612 = vpop.f32.mrb[0].mxu0
      %v613 = vadd.f32 %v233, %v612
      %v614 = vpop.f32.mrb[0].mxu0
      %v615 = vpop.f32.mrb[0].mxu0
      %v616 = vadd.f32 %v233, %v615
      %v617 = vpop.f32.mrb[0].mxu0
      %618 = vmatprep.mubr.bf16.mxu0 %v474
      %619 = vmatmul.mubr.bf16.gmra.mrb[0].mxu0 %v357
      %v620 = vpop.f32.mrb[0].mxu0
      %v621 = vadd.f32 %v233, %v620
      %v622 = vpop.f32.mrb[0].mxu0
      %v623 = vpop.f32.mrb[0].mxu0
      %v624 = vadd.f32 %v233, %v623
      %v625 = vpop.f32.mrb[0].mxu0
      %626 = vmatprep.mubr.bf16.mxu0 %v477
      %627 = vmatmul.mubr.bf16.gmra.mrb[0].mxu0 %v359
      %v628 = vpop.f32.mrb[0].mxu0
      %v629 = vadd.f32 %v233, %v628
      %v630 = vpop.f32.mrb[0].mxu0
      %v631 = vpop.f32.mrb[0].mxu0
      %v632 = vadd.f32 %v233, %v631
      %v633 = vpop.f32.mrb[0].mxu0
      %634 = vmatprep.mubr.bf16.mxu0 %v480
      %635 = vmatmul.mubr.bf16.gmra.mrb[0].mxu0 %v361
      %v636 = vpop.f32.mrb[0].mxu0
      %v637 = vadd.f32 %v233, %v636
      %v638 = vpop.f32.mrb[0].mxu0
      %v639 = vpop.f32.mrb[0].mxu0
      %v640 = vadd.f32 %v233, %v639
      %v641 = vpop.f32.mrb[0].mxu0
      %642 = vdwg.mxu0
      %v643 = vpack.c.bf16 %v520, %v517
      %v644 = vpack.c.bf16 %v528, %v525
      %v645 = vpack.c.bf16 %v536, %v533
      %v646 = vpack.c.bf16 %v544, %v541
      %v647 = vpack.c.bf16 %v552, %v549
      %v648 = vpack.c.bf16 %v560, %v557
      %v649 = vpack.c.bf16 %v568, %v565
      %v650 = vpack.c.bf16 %v576, %v573
      %v651 = vpack.c.bf16 %v584, %v581
      %v652 = vpack.c.bf16 %v592, %v589
      %v653 = vpack.c.bf16 %v600, %v597
      %v654 = vpack.c.bf16 %v608, %v605
      %v655 = vpack.c.bf16 %v616, %v613
      %v656 = vpack.c.bf16 %v624, %v621
      %v657 = vpack.c.bf16 %v632, %v629
      %v658 = vpack.c.bf16 %v640, %v637
      %v675 = vunpack.c.l.b16 %v643
      %v676 = vunpack.c.h.b16 %v643
      %v677 = vunpack.c.l.b16 %v644
      %v678 = vunpack.c.h.b16 %v644
      %v679 = vunpack.c.l.b16 %v645
      %v680 = vunpack.c.h.b16 %v645
      %v681 = vunpack.c.l.b16 %v646
      %v682 = vunpack.c.h.b16 %v646
      %v683 = vunpack.c.l.b16 %v647
      %v684 = vunpack.c.h.b16 %v647
      %v685 = vunpack.c.l.b16 %v648
      %v686 = vunpack.c.h.b16 %v648
      %v687 = vunpack.c.l.b16 %v649
      %v688 = vunpack.c.h.b16 %v649
      %v689 = vunpack.c.l.b16 %v650
      %v690 = vunpack.c.h.b16 %v650
      %v691 = vunpack.c.l.b16 %v651
      %v692 = vunpack.c.h.b16 %v651
      %v693 = vunpack.c.l.b16 %v652
      %v694 = vunpack.c.h.b16 %v652
      %v695 = vunpack.c.l.b16 %v653
      %v696 = vunpack.c.h.b16 %v653
      %v697 = vunpack.c.l.b16 %v654
      %v698 = vunpack.c.h.b16 %v654
      %v699 = vunpack.c.l.b16 %v655
      %v700 = vunpack.c.h.b16 %v655
      %v701 = vunpack.c.l.b16 %v656
      %v702 = vunpack.c.h.b16 %v656
      %v703 = vunpack.c.l.b16 %v657
      %v704 = vunpack.c.h.b16 %v657
      %v705 = vunpack.c.l.b16 %v658
      %v706 = vunpack.c.h.b16 %v658
      %v707 = vpack.c.b16 %v675, %v675
      %v708 = vpack.c.b16 %v676, %v676
      %v709 = vpack.c.b16 %v677, %v677
      %v710 = vpack.c.b16 %v678, %v678
      %v711 = vpack.c.b16 %v679, %v679
      %v712 = vpack.c.b16 %v680, %v680
      %v713 = vpack.c.b16 %v681, %v681
      %v714 = vpack.c.b16 %v682, %v682
      %v715 = vpack.c.b16 %v683, %v683
      %v716 = vpack.c.b16 %v684, %v684
      %v717 = vpack.c.b16 %v685, %v685
      %v718 = vpack.c.b16 %v686, %v686
      %v719 = vpack.c.b16 %v687, %v687
      %v720 = vpack.c.b16 %v688, %v688
      %v721 = vpack.c.b16 %v689, %v689
      %v722 = vpack.c.b16 %v690, %v690
      %v723 = vpack.c.b16 %v691, %v691
      %v724 = vpack.c.b16 %v692, %v692
      %v725 = vpack.c.b16 %v693, %v693
      %v726 = vpack.c.b16 %v694, %v694
      %v727 = vpack.c.b16 %v695, %v695
      %v728 = vpack.c.b16 %v696, %v696
      %v729 = vpack.c.b16 %v697, %v697
      %v730 = vpack.c.b16 %v698, %v698
      %v731 = vpack.c.b16 %v699, %v699
      %v732 = vpack.c.b16 %v700, %v700
      %v733 = vpack.c.b16 %v701, %v701
      %v734 = vpack.c.b16 %v702, %v702
      %v735 = vpack.c.b16 %v703, %v703
      %v736 = vpack.c.b16 %v704, %v704
      %v737 = vpack.c.b16 %v705, %v705
      %v738 = vpack.c.b16 %v706, %v706
      %vm771 = vcmask 125952
      %772 = vst.msk [vmem:[%s175] sm:$0xf] %vm771, %v707
      %773 = vst.msk [vmem:[%s175 + $0x4] sm:$0xf] %vm771, %v708
      %774 = vst.msk [vmem:[%s175 + $0x8] sm:$0xf] %vm771, %v709
      %775 = vst.msk [vmem:[%s175 + $0xc] sm:$0xf] %vm771, %v710
      %776 = vst.msk [vmem:[%s175 + $0x10] sm:$0xf] %vm771, %v711
      %777 = vst.msk [vmem:[%s175 + $0x14] sm:$0xf] %vm771, %v712
      %778 = vst.msk [vmem:[%s175 + $0x18] sm:$0xf] %vm771, %v713
      %779 = vst.msk [vmem:[%s175 + $0x1c] sm:$0xf] %vm771, %v714
      %780 = vst.msk [vmem:[%s175 + $0x20] sm:$0xf] %vm771, %v715
      %781 = vst.msk [vmem:[%s175 + $0x24] sm:$0xf] %vm771, %v716
      %782 = vst.msk [vmem:[%s175 + $0x28] sm:$0xf] %vm771, %v717
      %783 = vst.msk [vmem:[%s175 + $0x2c] sm:$0xf] %vm771, %v718
      %784 = vst.msk [vmem:[%s175 + $0x30] sm:$0xf] %vm771, %v719
      %785 = vst.msk [vmem:[%s175 + $0x34] sm:$0xf] %vm771, %v720
      %786 = vst.msk [vmem:[%s175 + $0x38] sm:$0xf] %vm771, %v721
      %787 = vst.msk [vmem:[%s175 + $0x3c] sm:$0xf] %vm771, %v722
      %788 = vst.msk [vmem:[%s175 + $0x40] sm:$0xf] %vm771, %v723
      %789 = vst.msk [vmem:[%s175 + $0x44] sm:$0xf] %vm771, %v724
      %790 = vst.msk [vmem:[%s175 + $0x48] sm:$0xf] %vm771, %v725
      %791 = vst.msk [vmem:[%s175 + $0x4c] sm:$0xf] %vm771, %v726
      %792 = vst.msk [vmem:[%s175 + $0x50] sm:$0xf] %vm771, %v727
      %793 = vst.msk [vmem:[%s175 + $0x54] sm:$0xf] %vm771, %v728
      %794 = vst.msk [vmem:[%s175 + $0x58] sm:$0xf] %vm771, %v729
      %795 = vst.msk [vmem:[%s175 + $0x5c] sm:$0xf] %vm771, %v730
      %796 = vst.msk [vmem:[%s175 + $0x60] sm:$0xf] %vm771, %v731
      %797 = vst.msk [vmem:[%s175 + $0x64] sm:$0xf] %vm771, %v732
      %798 = vst.msk [vmem:[%s175 + $0x68] sm:$0xf] %vm771, %v733
      %799 = vst.msk [vmem:[%s175 + $0x6c] sm:$0xf] %vm771, %v734
      %800 = vst.msk [vmem:[%s175 + $0x70] sm:$0xf] %vm771, %v735
      %801 = vst.msk [vmem:[%s175 + $0x74] sm:$0xf] %vm771, %v736
      %802 = vst.msk [vmem:[%s175 + $0x78] sm:$0xf] %vm771, %v737
      %803 = vst.msk [vmem:[%s175 + $0x7c] sm:$0xf] %vm771, %v738
      %s804 = smul.u32 32, %s14
      %p805 = scmp.lt.s32.totalorder %s804, 63
      %s806 = scalar_select %p805, %s804, 63
      %s807 = smul.addr %s806, 4
      %s808 = scalar_lea.vmem %s3, %s807
      // Predicated region
      $region33: #{gd_decoder_forward.23} parent=31 // pred_check
        %p809 = pneg %p100
      $region34: #{gd_decoder_forward.23} parent=31 // pred_check_branch
        %811 = sbr.rel (%p809) target = $region36
      $region35: #{gd_decoder_forward.23} parent=31 // pred_region
        %s812 = smul.u32 32, %s14
      $region36: #{gd_decoder_forward.23} parent=31 // pred_fallthru
        _
    $region32: #{gd_decoder_forward.23} parent=5 // pred_fallthru
      _
    %p813 = scmp.le.s32.totalorder 2, %s9
    // Predicated region
    $region37: #{gd_decoder_forward.23} parent=5 // pred_check
      %p814 = pneg %p813
    $region38: #{gd_decoder_forward.23} parent=5 // pred_check_branch
      %816 = sbr.rel (%p814) target = $region40
    $region39: #{gd_decoder_forward.23} parent=5 // pred_region
      %s817 = ssub.s32 %s9, 2
      // Predicated region
      $region41: #{gd_decoder_forward.23} parent=39 // pred_check
        %p818 = pneg %p106
      $region42: #{gd_decoder_forward.23} parent=39 // pred_check_branch
        %820 = sbr.rel (%p818) target = $region44
      $region43: #{gd_decoder_forward.23} parent=39 // pred_region
        %s821 = smul.u32 32, %s15
        %p822 = scmp.lt.s32.totalorder %s821, 63
        %s823 = scalar_select %p822, %s821, 63
        %s824 = smul.addr %s823, 4
        %s825 = scalar_lea.vmem %s3, %s824
      $region44: #{gd_decoder_forward.23} parent=39 // pred_fallthru
        _
    $region40: #{gd_decoder_forward.23} parent=5 // pred_fallthru
      _
  $region6: #{gd_decoder_forward.23} parent=0 // loop_footer
    %s13 = sadd.s32 1, %s9
  $region7: #{gd_decoder_forward.23} parent=0 // loop_footer_branch
    %8 = sbr.rel target = $region3
  $region8: #{gd_decoder_forward.23} parent=0 // loop_exit
    _

// kernel: squeeze.2
$region0: #{squeeze.2}
  %s0 = inlined_call_operand.vmem [shape: f32[16], index: 0, kind: input, shape index: {}]
  %s1 = inlined_call_operand.vmem [shape: f32[4,4], index: 1, kind: output, shape index: {}]
  $region1: #{squeeze.2} parent=0
    #allocation0 [shape = 'u8[4096]{0}', space=vmem, size = 0x1000, scoped, tag = 'scoped mem for output reshape']
    #allocation1 [shape = 'u8[4096]{0}', space=vmem, size = 0x1000, scoped, tag = 'scoped mem for input reshape']
    %s3 = sshllo.u32 0, 1
    %v4 = vld [vmem:[%s0] sm:%s3]
    %5 = vst [vmem:[#allocation1] sm:%s3] %v4
    %v6 = vld [vmem:[#allocation1] sm:$0x1]
    %vm7 = vcmask 31744
    %8 = vst.msk [vmem:[#allocation0] sm:$0x1] %vm7, %v6
    %v9 = vld [vmem:[#allocation1] sm:$0x1]
    %10 = vrot.lane.b32.xlu0 %v9, 124
    %v11 = vpop.permute.xlu0 %10
    %vm12 = vcmask 31744
    %s13 = scalar_lea.vmem [#allocation0], 1
    %14 = vst.msk [vmem:[%s13] sm:$0x1] %vm12, %v11
    %v15 = vld [vmem:[#allocation1] sm:$0x1]
    %16 = vrot.lane.b32.xlu0 %v15, 120
    %v17 = vpop.permute.xlu0 %16
    %vm18 = vcmask 31744
    %s19 = scalar_lea.vmem [#allocation0], 2
    %20 = vst.msk [vmem:[%s19] sm:$0x1] %vm18, %v17
    %v21 = vld [vmem:[#allocation1] sm:$0x1]
    %22 = vrot.lane.b32.xlu0 %v21, 116
    %v23 = vpop.permute.xlu0 %22
    %vm24 = vcmask 31744
    %s25 = scalar_lea.vmem [#allocation0], 3
    %26 = vst.msk [vmem:[%s25] sm:$0x1] %vm24, %v23
    %s28 = sshllo.u32 0, 4
    %v30 = vld [vmem:[#allocation0] sm:%s28]
    %s31 = sshllo.u32 0, 4
    %32 = vst [vmem:[%s1] sm:%s31] %v30

// kernel: gd_decoder_forward.24
$region0: #{gd_decoder_forward.24}
  #allocation0 [shape = 'u32[]', space=smem, size = 0x4, offset = 0x4, fixed_abs, tag = 'smem constant byte address 0x4 - core index']
  #allocation1 [shape = 'u32[144,128]{1,0:T(1,128)}', space=vmem, size = 0x12000, scoped, tag = 'internal scratch']
  %s0 = inlined_call_operand.vmem [shape: bf16[512,256], index: 0, kind: input, shape index: {}]
  %s1 = inlined_call_operand.vmem [shape: bf16[256,16], index: 1, kind: input, shape index: {}]
  %s2 = inlined_call_operand.vmem [shape: f32[1,16], index: 2, kind: input, shape index: {}]
  %s3 = inlined_call_operand.vmem [shape: f32[512,16], index: 3, kind: output, shape index: {0}]
  %s4 = inlined_call_operand.vmem [shape: f32[2,2,16], index: 4, kind: output, shape index: {1}]
  %5 = xla_tuple %s3, %s4
  %s6 = sld [smem:[#allocation0]]
  $region53: #{gd_decoder_forward.24} parent=0
    _
  %s8 = ssub.s32 1, %s6
  %s9 = scalar_select 0, %s8, %s6
  loop: start=0, step=1, limit=4
  $region2: #{gd_decoder_forward.24} parent=0 // loop_pre_header
    _
  $region3: #{gd_decoder_forward.24} parent=0 // loop_header
    %s11 = sphi 0, %s15
    %p12 = scmp.ge.s32.totalorder %s11, 4
    %s21 = sphi 0, %s23
    %s24 = sphi 0, %s21
    %s25 = sphi 0, %s24
    %s41 = sphi 0, %s25
    %s45 = sphi 0, %s45
    %s47 = sphi 0, %s45
    %s48 = sphi 0, %s47
    %s62 = sphi 0, %s48
    %s66 = sphi 0, %s66
    %s68 = sphi 0, %s66
    %s69 = sphi 0, %s68
    %s83 = sphi 0, %s69
    %s89 = sphi 0, %s91
    %s92 = sphi 0, %s89
    %s93 = sphi 0, %s92
    %s109 = sphi 0, %s93
    %s115 = sphi 0, %s117
    %s118 = sphi 0, %s115
    %s119 = sphi 0, %s118
    %s135 = sphi 0, %s119
  $region4: #{gd_decoder_forward.24} parent=0 // loop_header_branch
    %14 = sbr.rel (%p12) target = $region8
  $region5: #{gd_decoder_forward.24} parent=0 // loop_body
    %s16 = ssub.s32 %s11, 1
    %s17 = ssub.s32 %s11, 2
    %s18 = sadd.s32 %s11, 1
    %s19 = ssub.s32 %s11, %s18
    %p20 = scmp.eq.s32.totalorder %s19, 0
    %s22 = sadd.s32 %s21, 1
    %s23 = scalar_select %p20, %s21, %s22
    %p26 = pneg %p20
    %p27 = scmp.eq.s32.totalorder %s11, 1
    %p28 = por %p26, %p27
    %p29 = scmp.ne.s32.totalorder %s21, %s24
    %p30 = scmp.eq.s32.totalorder %s11, 0
    %p31 = por %p29, %p30
    %p32 = scmp.ne.s32.totalorder %s21, %s24
    %p33 = scmp.eq.s32.totalorder %s16, 1
    %p34 = por %p32, %p33
    %p35 = scmp.ne.s32.totalorder %s24, %s25
    %p36 = scmp.eq.s32.totalorder %s16, 0
    %p37 = por %p35, %p36
    %p38 = scmp.ne.s32.totalorder %s24, %s25
    %p39 = scmp.eq.s32.totalorder %s17, 1
    %p40 = por %p38, %p39
    %p42 = scmp.ne.s32.totalorder %s25, %s41
    %p43 = scmp.eq.s32.totalorder %s17, 0
    %p44 = por %p42, %p43
    %s46 = sadd.s32 %s45, 1
    %p49 = scmp.eq.s32.totalorder %s11, 1
    %p50 = scmp.ne.s32.totalorder %s45, %s47
    %p51 = scmp.eq.s32.totalorder %s11, 0
    %p52 = por %p50, %p51
    %p53 = scmp.ne.s32.totalorder %s45, %s47
    %p54 = scmp.eq.s32.totalorder %s16, 1
    %p55 = por %p53, %p54
    %p56 = scmp.ne.s32.totalorder %s47, %s48
    %p57 = scmp.eq.s32.totalorder %s16, 0
    %p58 = por %p56, %p57
    %p59 = scmp.ne.s32.totalorder %s47, %s48
    %p60 = scmp.eq.s32.totalorder %s17, 1
    %p61 = por %p59, %p60
    %p63 = scmp.ne.s32.totalorder %s48, %s62
    %p64 = scmp.eq.s32.totalorder %s17, 0
    %p65 = por %p63, %p64
    %s67 = sadd.s32 %s66, 1
    %p70 = scmp.eq.s32.totalorder %s11, 1
    %p71 = scmp.ne.s32.totalorder %s66, %s68
    %p72 = scmp.eq.s32.totalorder %s11, 0
    %p73 = por %p71, %p72
    %p74 = scmp.ne.s32.totalorder %s66, %s68
    %p75 = scmp.eq.s32.totalorder %s16, 1
    %p76 = por %p74, %p75
    %p77 = scmp.ne.s32.totalorder %s68, %s69
    %p78 = scmp.eq.s32.totalorder %s16, 0
    %p79 = por %p77, %p78
    %p80 = scmp.ne.s32.totalorder %s68, %s69
    %p81 = scmp.eq.s32.totalorder %s17, 1
    %p82 = por %p80, %p81
    %p84 = scmp.ne.s32.totalorder %s69, %s83
    %p85 = scmp.eq.s32.totalorder %s17, 0
    %p86 = por %p84, %p85
    %s87 = ssub.s32 %s11, %s18
    %p88 = scmp.eq.s32.totalorder %s87, 0
    %s90 = sadd.s32 %s89, 1
    %s91 = scalar_select %p88, %s89, %s90
    %p94 = pneg %p88
    %p95 = scmp.eq.s32.totalorder %s11, 1
    %p96 = por %p94, %p95
    %p97 = scmp.ne.s32.totalorder %s89, %s92
    %p98 = scmp.eq.s32.totalorder %s11, 0
    %p99 = por %p97, %p98
    %p100 = scmp.ne.s32.totalorder %s89, %s92
    %p101 = scmp.eq.s32.totalorder %s16, 1
    %p102 = por %p100, %p101
    %p103 = scmp.ne.s32.totalorder %s92, %s93
    %p104 = scmp.eq.s32.totalorder %s16, 0
    %p105 = por %p103, %p104
    %p106 = scmp.ne.s32.totalorder %s92, %s93
    %p107 = scmp.eq.s32.totalorder %s17, 1
    %p108 = por %p106, %p107
    %p110 = scmp.ne.s32.totalorder %s93, %s109
    %p111 = scmp.eq.s32.totalorder %s17, 0
    %p112 = por %p110, %p111
    %s113 = ssub.s32 %s11, %s18
    %p114 = scmp.eq.s32.totalorder %s113, 0
    %s116 = sadd.s32 %s115, 1
    %s117 = scalar_select %p114, %s115, %s116
    %p120 = pneg %p114
    %p121 = scmp.eq.s32.totalorder %s11, 1
    %p122 = por %p120, %p121
    %p123 = scmp.ne.s32.totalorder %s115, %s118
    %p124 = scmp.eq.s32.totalorder %s11, 0
    %p125 = por %p123, %p124
    %p126 = scmp.ne.s32.totalorder %s115, %s118
    %p127 = scmp.eq.s32.totalorder %s16, 1
    %p128 = por %p126, %p127
    %p129 = scmp.ne.s32.totalorder %s118, %s119
    %p130 = scmp.eq.s32.totalorder %s16, 0
    %p131 = por %p129, %p130
    %p132 = scmp.ne.s32.totalorder %s118, %s119
    %p133 = scmp.eq.s32.totalorder %s17, 1
    %p134 = por %p132, %p133
    %p136 = scmp.ne.s32.totalorder %s119, %s135
    %p137 = scmp.eq.s32.totalorder %s17, 0
    %p138 = por %p136, %p137
    %p139 = scmp.le.s32.totalorder 1, %s11
    %p140 = scmp.lt.s32.totalorder %s11, 3
    %p141 = pnand %p139, %p140
    %p142 = pneg %p141
    // Predicated region
    $region9: #{gd_decoder_forward.24} parent=5 // pred_check
      _
    $region10: #{gd_decoder_forward.24} parent=5 // pred_check_branch
      %144 = sbr.rel (%p141) target = $region12
    $region11: #{gd_decoder_forward.24} parent=5 // pred_region
      %s145 = ssub.s32 %s11, 1
      // Predicated region
      $region13: #{gd_decoder_forward.24} parent=11 // pred_check
        %p146 = pneg %p58
      $region14: #{gd_decoder_forward.24} parent=11 // pred_check_branch
        %148 = sbr.rel (%p146) target = $region16
      $region15: #{gd_decoder_forward.24} parent=11 // pred_region
        _
      $region16: #{gd_decoder_forward.24} parent=11 // pred_fallthru
        _
      // Predicated region
      $region17: #{gd_decoder_forward.24} parent=11 // pred_check
        %p149 = pneg %p79
      $region18: #{gd_decoder_forward.24} parent=11 // pred_check_branch
        %151 = sbr.rel (%p149) target = $region20
      $region19: #{gd_decoder_forward.24} parent=11 // pred_region
        _
      $region20: #{gd_decoder_forward.24} parent=11 // pred_fallthru
        _
    $region12: #{gd_decoder_forward.24} parent=5 // pred_fallthru
      _
    %p152 = scmp.lt.s32.totalorder %s11, 2
    // Predicated region
    $region21: #{gd_decoder_forward.24} parent=5 // pred_check
      %p153 = pneg %p152
    $region22: #{gd_decoder_forward.24} parent=5 // pred_check_branch
      %155 = sbr.rel (%p153) target = $region24
    $region23: #{gd_decoder_forward.24} parent=5 // pred_region
      // Predicated region
      $region25: #{gd_decoder_forward.24} parent=23 // pred_check
        %p156 = pneg %p31
      $region26: #{gd_decoder_forward.24} parent=23 // pred_check_branch
        %158 = sbr.rel (%p156) target = $region28
      $region27: #{gd_decoder_forward.24} parent=23 // pred_region
        %s159 = smul.u32 32, %s11
        %p160 = scmp.lt.s32.totalorder %s159, 63
        %s161 = scalar_select %p160, %s159, 63
        %s162 = smul.addr %s161, 2
        %s163 = smul.addr %s162, 4
        %s164 = scalar_lea.vmem %s0, %s163
        %s165 = smul.u32 32, %s11
      $region28: #{gd_decoder_forward.24} parent=23 // pred_fallthru
        _
    $region24: #{gd_decoder_forward.24} parent=5 // pred_fallthru
      _
    %p166 = scmp.le.s32.totalorder 1, %s11
    %p167 = scmp.lt.s32.totalorder %s11, 3
    %p168 = pnand %p166, %p167
    %p169 = pneg %p168
    // Predicated region
    $region29: #{gd_decoder_forward.24} parent=5 // pred_check
      _
    $region30: #{gd_decoder_forward.24} parent=5 // pred_check_branch
      %171 = sbr.rel (%p168) target = $region32
    $region31: #{gd_decoder_forward.24} parent=5 // pred_region
      %s172 = ssub.s32 %s11, 1
      %s173 = smul.u32 32, %s16
      %p174 = scmp.lt.s32.totalorder %s173, 63
      %s175 = scalar_select %p174, %s173, 63
      %s176 = smul.addr %s175, 2
      %s177 = smul.addr %s176, 4
      %s178 = scalar_lea.vmem %s0, %s177
      %p179 = pneg %p37
      %p180 = pneg %p34
      %p181 = pneg %p58
      %p182 = pneg %p55
      %p183 = pneg %p79
      %p184 = pneg %p76
      %p185 = pneg %p105
      %p186 = pneg %p102
      %s187 = smul.u32 32, %s16
      %p188 = scmp.lt.s32.totalorder %s187, 63
      %s189 = scalar_select %p188, %s187, 63
      %s190 = smul.addr %s189, 8
      %s191 = scalar_lea.vmem %s3, %s190
      %p192 = pneg %p131
      %p193 = pneg %p128
      %p194 = scmp.lt.s32.totalorder %s16, 1
      %s195 = scalar_select %p194, %s16, 1
      %s196 = smul.addr %s195, 2
      %s197 = scalar_lea.vmem %s4, %s196
      %s198 = smul.u32 32, %s16
      %p199 = scmp.lt.s32.totalorder %s198, 63
      %s200 = scalar_select %p199, %s198, 63
      %s201 = smul.addr %s200, 2
      %s202 = smul.addr %s201, 4
      %s203 = scalar_lea.vmem %s0, %s202
      %s204 = smul.u32 32, %s16
      %s205 = smul.u32 32, %s16
      %p206 = scmp.lt.s32.totalorder %s205, 63
      %s207 = scalar_select %p206, %s205, 63
      %s208 = smul.addr %s207, 8
      %s209 = scalar_lea.vmem %s3, %s208
      %s210 = smul.u32 32, %s16
      %p211 = scmp.lt.s32.totalorder %s16, 1
      %s212 = scalar_select %p211, %s16, 1
      %s213 = smul.addr %s212, 2
      %s214 = scalar_lea.vmem %s4, %s213
      %v216 = vld [vmem:[%s203] sm:$0xff]
      %v217 = vld [vmem:[%s203 + $0x8] sm:$0xff]
      %v218 = vld [vmem:[%s203 + $0x10] sm:$0xff]
      %v219 = vld [vmem:[%s203 + $0x18] sm:$0xff]
      %v220 = vld [vmem:[%s203 + $0x20] sm:$0xff]
      %v221 = vld [vmem:[%s203 + $0x28] sm:$0xff]
      %v222 = vld [vmem:[%s203 + $0x30] sm:$0xff]
      %v223 = vld [vmem:[%s203 + $0x38] sm:$0xff]
      %v224 = vld [vmem:[%s203 + $0x40] sm:$0xff]
      %v225 = vld [vmem:[%s203 + $0x48] sm:$0xff]
      %v226 = vld [vmem:[%s203 + $0x50] sm:$0xff]
      %v227 = vld [vmem:[%s203 + $0x58] sm:$0xff]
      %v228 = vld [vmem:[%s203 + $0x60] sm:$0xff]
      %v229 = vld [vmem:[%s203 + $0x68] sm:$0xff]
      %v230 = vld [vmem:[%s203 + $0x70] sm:$0xff]
      %v231 = vld [vmem:[%s203 + $0x78] sm:$0xff]
      %v232 = vld [vmem:[%s203 + $0x80] sm:$0xff]
      %v233 = vld [vmem:[%s203 + $0x88] sm:$0xff]
      %v234 = vld [vmem:[%s203 + $0x90] sm:$0xff]
      %v235 = vld [vmem:[%s203 + $0x98] sm:$0xff]
      %v236 = vld [vmem:[%s203 + $0xa0] sm:$0xff]
      %v237 = vld [vmem:[%s203 + $0xa8] sm:$0xff]
      %v238 = vld [vmem:[%s203 + $0xb0] sm:$0xff]
      %v239 = vld [vmem:[%s203 + $0xb8] sm:$0xff]
      %v240 = vld [vmem:[%s203 + $0xc0] sm:$0xff]
      %v241 = vld [vmem:[%s203 + $0xc8] sm:$0xff]
      %v242 = vld [vmem:[%s203 + $0xd0] sm:$0xff]
      %v243 = vld [vmem:[%s203 + $0xd8] sm:$0xff]
      %v244 = vld [vmem:[%s203 + $0xe0] sm:$0xff]
      %v245 = vld [vmem:[%s203 + $0xe8] sm:$0xff]
      %v246 = vld [vmem:[%s203 + $0xf0] sm:$0xff]
      %v247 = vld [vmem:[%s203 + $0xf8] sm:$0xff]
      %v248 = vld [vmem:[%s1] sm:$0xf]
      %v249 = vld [vmem:[%s1 + $0x4] sm:$0xf]
      %v250 = vld [vmem:[%s1 + $0x8] sm:$0xf]
      %v251 = vld [vmem:[%s1 + $0xc] sm:$0xf]
      %v252 = vld [vmem:[%s1 + $0x10] sm:$0xf]
      %v253 = vld [vmem:[%s1 + $0x14] sm:$0xf]
      %v254 = vld [vmem:[%s1 + $0x18] sm:$0xf]
      %v255 = vld [vmem:[%s1 + $0x1c] sm:$0xf]
      %v256 = vld [vmem:[%s1 + $0x20] sm:$0xf]
      %v257 = vld [vmem:[%s1 + $0x24] sm:$0xf]
      %v258 = vld [vmem:[%s1 + $0x28] sm:$0xf]
      %v259 = vld [vmem:[%s1 + $0x2c] sm:$0xf]
      %v260 = vld [vmem:[%s1 + $0x30] sm:$0xf]
      %v261 = vld [vmem:[%s1 + $0x34] sm:$0xf]
      %v262 = vld [vmem:[%s1 + $0x38] sm:$0xf]
      %v263 = vld [vmem:[%s1 + $0x3c] sm:$0xf]
      %v264 = vld [vmem:[%s1 + $0x40] sm:$0xf]
      %v265 = vld [vmem:[%s1 + $0x44] sm:$0xf]
      %v266 = vld [vmem:[%s1 + $0x48] sm:$0xf]
      %v267 = vld [vmem:[%s1 + $0x4c] sm:$0xf]
      %v268 = vld [vmem:[%s1 + $0x50] sm:$0xf]
      %v269 = vld [vmem:[%s1 + $0x54] sm:$0xf]
      %v270 = vld [vmem:[%s1 + $0x58] sm:$0xf]
      %v271 = vld [vmem:[%s1 + $0x5c] sm:$0xf]
      %v272 = vld [vmem:[%s1 + $0x60] sm:$0xf]
      %v273 = vld [vmem:[%s1 + $0x64] sm:$0xf]
      %v274 = vld [vmem:[%s1 + $0x68] sm:$0xf]
      %v275 = vld [vmem:[%s1 + $0x6c] sm:$0xf]
      %v276 = vld [vmem:[%s1 + $0x70] sm:$0xf]
      %v277 = vld [vmem:[%s1 + $0x74] sm:$0xf]
      %v278 = vld [vmem:[%s1 + $0x78] sm:$0xf]
      %v279 = vld [vmem:[%s1 + $0x7c] sm:$0xf]
      %v280 = vld [vmem:[%s2] sm:$0x1]
      %v282 = vlaneseq
      %v283 = vshrl.u32 %v282, 7
      %v284 = vsub.s32 0, %v283
      %v285 = vrot.slane %v280, %v284
      %v319 = vunpack.c.l.b16 %v216
      %v320 = vunpack.c.h.b16 %v216
      %v321 = vunpack.c.l.b16 %v217
      %v322 = vunpack.c.h.b16 %v217
      %v323 = vunpack.c.l.b16 %v218
      %v324 = vunpack.c.h.b16 %v218
      %v325 = vunpack.c.l.b16 %v219
      %v326 = vunpack.c.h.b16 %v219
      %v327 = vunpack.c.l.b16 %v220
      %v328 = vunpack.c.h.b16 %v220
      %v329 = vunpack.c.l.b16 %v221
      %v330 = vunpack.c.h.b16 %v221
      %v331 = vunpack.c.l.b16 %v222
      %v332 = vunpack.c.h.b16 %v222
      %v333 = vunpack.c.l.b16 %v223
      %v334 = vunpack.c.h.b16 %v223
      %v335 = vunpack.c.l.b16 %v224
      %v336 = vunpack.c.h.b16 %v224
      %v337 = vunpack.c.l.b16 %v225
      %v338 = vunpack.c.h.b16 %v225
      %v339 = vunpack.c.l.b16 %v226
      %v340 = vunpack.c.h.b16 %v226
      %v341 = vunpack.c.l.b16 %v227
      %v342 = vunpack.c.h.b16 %v227
      %v343 = vunpack.c.l.b16 %v228
      %v344 = vunpack.c.h.b16 %v228
      %v345 = vunpack.c.l.b16 %v229
      %v346 = vunpack.c.h.b16 %v229
      %v347 = vunpack.c.l.b16 %v230
      %v348 = vunpack.c.h.b16 %v230
      %v349 = vunpack.c.l.b16 %v231
      %v350 = vunpack.c.h.b16 %v231
      %v351 = vunpack.c.l.b16 %v232
      %v352 = vunpack.c.h.b16 %v232
      %v353 = vunpack.c.l.b16 %v233
      %v354 = vunpack.c.h.b16 %v233
      %v355 = vunpack.c.l.b16 %v234
      %v356 = vunpack.c.h.b16 %v234
      %v357 = vunpack.c.l.b16 %v235
      %v358 = vunpack.c.h.b16 %v235
      %v359 = vunpack.c.l.b16 %v236
      %v360 = vunpack.c.h.b16 %v236
      %v361 = vunpack.c.l.b16 %v237
      %v362 = vunpack.c.h.b16 %v237
      %v363 = vunpack.c.l.b16 %v238
      %v364 = vunpack.c.h.b16 %v238
      %v365 = vunpack.c.l.b16 %v239
      %v366 = vunpack.c.h.b16 %v239
      %v367 = vunpack.c.l.b16 %v240
      %v368 = vunpack.c.h.b16 %v240
      %v369 = vunpack.c.l.b16 %v241
      %v370 = vunpack.c.h.b16 %v241
      %v371 = vunpack.c.l.b16 %v242
      %v372 = vunpack.c.h.b16 %v242
      %v373 = vunpack.c.l.b16 %v243
      %v374 = vunpack.c.h.b16 %v243
      %v375 = vunpack.c.l.b16 %v244
      %v376 = vunpack.c.h.b16 %v244
      %v377 = vunpack.c.l.b16 %v245
      %v378 = vunpack.c.h.b16 %v245
      %v379 = vunpack.c.l.b16 %v246
      %v380 = vunpack.c.h.b16 %v246
      %v381 = vunpack.c.l.b16 %v247
      %v382 = vunpack.c.h.b16 %v247
      %v383 = vpack.c.b16 %v321, %v319
      %v384 = vpack.c.b16 %v322, %v320
      %v385 = vpack.c.b16 %v325, %v323
      %v386 = vpack.c.b16 %v326, %v324
      %v387 = vpack.c.b16 %v329, %v327
      %v388 = vpack.c.b16 %v330, %v328
      %v389 = vpack.c.b16 %v333, %v331
      %v390 = vpack.c.b16 %v334, %v332
      %v391 = vpack.c.b16 %v337, %v335
      %v392 = vpack.c.b16 %v338, %v336
      %v393 = vpack.c.b16 %v341, %v339
      %v394 = vpack.c.b16 %v342, %v340
      %v395 = vpack.c.b16 %v345, %v343
      %v396 = vpack.c.b16 %v346, %v344
      %v397 = vpack.c.b16 %v349, %v347
      %v398 = vpack.c.b16 %v350, %v348
      %v399 = vpack.c.b16 %v353, %v351
      %v400 = vpack.c.b16 %v354, %v352
      %v401 = vpack.c.b16 %v357, %v355
      %v402 = vpack.c.b16 %v358, %v356
      %v403 = vpack.c.b16 %v361, %v359
      %v404 = vpack.c.b16 %v362, %v360
      %v405 = vpack.c.b16 %v365, %v363
      %v406 = vpack.c.b16 %v366, %v364
      %v407 = vpack.c.b16 %v369, %v367
      %v408 = vpack.c.b16 %v370, %v368
      %v409 = vpack.c.b16 %v373, %v371
      %v410 = vpack.c.b16 %v374, %v372
      %v411 = vpack.c.b16 %v377, %v375
      %v412 = vpack.c.b16 %v378, %v376
      %v413 = vpack.c.b16 %v381, %v379
      %v414 = vpack.c.b16 %v382, %v380
      %v479 = vunpack.c.l.b16 %v248
      %v480 = vunpack.c.l.b16 %v249
      %v481 = vunpack.c.l.b16 %v250
      %v482 = vunpack.c.l.b16 %v251
      %v483 = vunpack.c.l.b16 %v252
      %v484 = vunpack.c.l.b16 %v253
      %v485 = vunpack.c.l.b16 %v254
      %v486 = vunpack.c.l.b16 %v255
      %v487 = vunpack.c.l.b16 %v256
      %v488 = vunpack.c.l.b16 %v257
      %v489 = vunpack.c.l.b16 %v258
      %v490 = vunpack.c.l.b16 %v259
      %v491 = vunpack.c.l.b16 %v260
      %v492 = vunpack.c.l.b16 %v261
      %v493 = vunpack.c.l.b16 %v262
      %v494 = vunpack.c.l.b16 %v263
      %v495 = vunpack.c.l.b16 %v264
      %v496 = vunpack.c.l.b16 %v265
      %v497 = vunpack.c.l.b16 %v266
      %v498 = vunpack.c.l.b16 %v267
      %v499 = vunpack.c.l.b16 %v268
      %v500 = vunpack.c.l.b16 %v269
      %v501 = vunpack.c.l.b16 %v270
      %v502 = vunpack.c.l.b16 %v271
      %v503 = vunpack.c.l.b16 %v272
      %v504 = vunpack.c.l.b16 %v273
      %v505 = vunpack.c.l.b16 %v274
      %v506 = vunpack.c.l.b16 %v275
      %v507 = vunpack.c.l.b16 %v276
      %v508 = vunpack.c.l.b16 %v277
      %v509 = vunpack.c.l.b16 %v278
      %v510 = vunpack.c.l.b16 %v279
      %v511 = vpack.c.b16 %v480, %v479
      %v512 = vpack.c.b16 %v482, %v481
      %v513 = vpack.c.b16 %v484, %v483
      %v514 = vpack.c.b16 %v486, %v485
      %v515 = vpack.c.b16 %v488, %v487
      %v516 = vpack.c.b16 %v490, %v489
      %v517 = vpack.c.b16 %v492, %v491
      %v518 = vpack.c.b16 %v494, %v493
      %v519 = vpack.c.b16 %v496, %v495
      %v520 = vpack.c.b16 %v498, %v497
      %v521 = vpack.c.b16 %v500, %v499
      %v522 = vpack.c.b16 %v502, %v501
      %v523 = vpack.c.b16 %v504, %v503
      %v524 = vpack.c.b16 %v506, %v505
      %v525 = vpack.c.b16 %v508, %v507
      %v526 = vpack.c.b16 %v510, %v509
      %543 = vmatprep.subr.bf16.mxu0 0
      %544 = vmatpush1.bf16.msra.mxu0 %v511
      %545 = vmatprep.subr.bf16.mxu0 0
      %546 = vmatpush1.bf16.msra.mxu0 %v512
      %547 = vmatprep.subr.bf16.mxu0 0
      %548 = vmatpush1.bf16.msra.mxu0 %v513
      %549 = vmatprep.subr.bf16.mxu0 0
      %550 = vmatpush1.bf16.msra.mxu0 %v514
      %551 = vmatprep.subr.bf16.mxu0 0
      %552 = vmatpush1.bf16.msra.mxu0 %v515
      %553 = vmatprep.subr.bf16.mxu0 0
      %554 = vmatpush1.bf16.msra.mxu0 %v516
      %555 = vmatprep.subr.bf16.mxu0 0
      %556 = vmatpush1.bf16.msra.mxu0 %v517
      %557 = vmatprep.subr.bf16.mxu0 0
      %558 = vmatpush1.bf16.msra.mxu0 %v518
      %559 = vmatprep.subr.bf16.mxu0 0
      %560 = vmatpush1.bf16.msra.mxu0 %v519
      %561 = vmatprep.subr.bf16.mxu0 0
      %562 = vmatpush1.bf16.msra.mxu0 %v520
      %563 = vmatprep.subr.bf16.mxu0 0
      %564 = vmatpush1.bf16.msra.mxu0 %v521
      %565 = vmatprep.subr.bf16.mxu0 0
      %566 = vmatpush1.bf16.msra.mxu0 %v522
      %567 = vmatprep.subr.bf16.mxu0 0
      %568 = vmatpush1.bf16.msra.mxu0 %v523
      %569 = vmatprep.subr.bf16.mxu0 0
      %570 = vmatpush1.bf16.msra.mxu0 %v524
      %571 = vmatprep.subr.bf16.mxu0 0
      %572 = vmatpush1.bf16.msra.mxu0 %v525
      %573 = vmatprep.subr.bf16.mxu0 0
      %574 = vmatpush1.bf16.msra.mxu0 %v526
      %575 = vmatprep.mubr.bf16.mxu0 %v384
      %576 = vmatmul.mubr.bf16.gmra.mrb[0].mxu0 %v383
      %v577 = vpop.f32.mrb[0].mxu0
      %v578 = vadd.f32 %v285, %v577
      %v579 = vpop.f32.mrb[0].mxu0
      %v580 = vpop.f32.mrb[0].mxu0
      %v581 = vadd.f32 %v285, %v580
      %v582 = vpop.f32.mrb[0].mxu0
      %583 = vmatprep.mubr.bf16.mxu0 %v386
      %584 = vmatmul.mubr.bf16.gmra.mrb[0].mxu0 %v385
      %v585 = vpop.f32.mrb[0].mxu0
      %v586 = vadd.f32 %v285, %v585
      %v587 = vpop.f32.mrb[0].mxu0
      %v588 = vpop.f32.mrb[0].mxu0
      %v589 = vadd.f32 %v285, %v588
      %v590 = vpop.f32.mrb[0].mxu0
      %591 = vmatprep.mubr.bf16.mxu0 %v388
      %592 = vmatmul.mubr.bf16.gmra.mrb[0].mxu0 %v387
      %v593 = vpop.f32.mrb[0].mxu0
      %v594 = vadd.f32 %v285, %v593
      %v595 = vpop.f32.mrb[0].mxu0
      %v596 = vpop.f32.mrb[0].mxu0
      %v597 = vadd.f32 %v285, %v596
      %v598 = vpop.f32.mrb[0].mxu0
      %599 = vmatprep.mubr.bf16.mxu0 %v390
      %600 = vmatmul.mubr.bf16.gmra.mrb[0].mxu0 %v389
      %v601 = vpop.f32.mrb[0].mxu0
      %v602 = vadd.f32 %v285, %v601
      %v603 = vpop.f32.mrb[0].mxu0
      %v604 = vpop.f32.mrb[0].mxu0
      %v605 = vadd.f32 %v285, %v604
      %v606 = vpop.f32.mrb[0].mxu0
      %607 = vmatprep.mubr.bf16.mxu0 %v392
      %608 = vmatmul.mubr.bf16.gmra.mrb[0].mxu0 %v391
      %v609 = vpop.f32.mrb[0].mxu0
      %v610 = vadd.f32 %v285, %v609
      %v611 = vpop.f32.mrb[0].mxu0
      %v612 = vpop.f32.mrb[0].mxu0
      %v613 = vadd.f32 %v285, %v612
      %v614 = vpop.f32.mrb[0].mxu0
      %615 = vmatprep.mubr.bf16.mxu0 %v394
      %616 = vmatmul.mubr.bf16.gmra.mrb[0].mxu0 %v393
      %v617 = vpop.f32.mrb[0].mxu0
      %v618 = vadd.f32 %v285, %v617
      %v619 = vpop.f32.mrb[0].mxu0
      %v620 = vpop.f32.mrb[0].mxu0
      %v621 = vadd.f32 %v285, %v620
      %v622 = vpop.f32.mrb[0].mxu0
      %623 = vmatprep.mubr.bf16.mxu0 %v396
      %624 = vmatmul.mubr.bf16.gmra.mrb[0].mxu0 %v395
      %v625 = vpop.f32.mrb[0].mxu0
      %v626 = vadd.f32 %v285, %v625
      %v627 = vpop.f32.mrb[0].mxu0
      %v628 = vpop.f32.mrb[0].mxu0
      %v629 = vadd.f32 %v285, %v628
      %v630 = vpop.f32.mrb[0].mxu0
      %631 = vmatprep.mubr.bf16.mxu0 %v398
      %632 = vmatmul.mubr.bf16.gmra.mrb[0].mxu0 %v397
      %v633 = vpop.f32.mrb[0].mxu0
      %v634 = vadd.f32 %v285, %v633
      %v635 = vpop.f32.mrb[0].mxu0
      %v636 = vpop.f32.mrb[0].mxu0
      %v637 = vadd.f32 %v285, %v636
      %v638 = vpop.f32.mrb[0].mxu0
      %639 = vmatprep.mubr.bf16.mxu0 %v400
      %640 = vmatmul.mubr.bf16.gmra.mrb[0].mxu0 %v399
      %v641 = vpop.f32.mrb[0].mxu0
      %v642 = vadd.f32 %v285, %v641
      %v643 = vpop.f32.mrb[0].mxu0
      %v644 = vpop.f32.mrb[0].mxu0
      %v645 = vadd.f32 %v285, %v644
      %v646 = vpop.f32.mrb[0].mxu0
      %647 = vmatprep.mubr.bf16.mxu0 %v402
      %648 = vmatmul.mubr.bf16.gmra.mrb[0].mxu0 %v401
      %v649 = vpop.f32.mrb[0].mxu0
      %v650 = vadd.f32 %v285, %v649
      %v651 = vpop.f32.mrb[0].mxu0
      %v652 = vpop.f32.mrb[0].mxu0
      %v653 = vadd.f32 %v285, %v652
      %v654 = vpop.f32.mrb[0].mxu0
      %655 = vmatprep.mubr.bf16.mxu0 %v404
      %656 = vmatmul.mubr.bf16.gmra.mrb[0].mxu0 %v403
      %v657 = vpop.f32.mrb[0].mxu0
      %v658 = vadd.f32 %v285, %v657
      %v659 = vpop.f32.mrb[0].mxu0
      %v660 = vpop.f32.mrb[0].mxu0
      %v661 = vadd.f32 %v285, %v660
      %v662 = vpop.f32.mrb[0].mxu0
      %663 = vmatprep.mubr.bf16.mxu0 %v406
      %664 = vmatmul.mubr.bf16.gmra.mrb[0].mxu0 %v405
      %v665 = vpop.f32.mrb[0].mxu0
      %v666 = vadd.f32 %v285, %v665
      %v667 = vpop.f32.mrb[0].mxu0
      %v668 = vpop.f32.mrb[0].mxu0
      %v669 = vadd.f32 %v285, %v668
      %v670 = vpop.f32.mrb[0].mxu0
      %671 = vmatprep.mubr.bf16.mxu0 %v408
      %672 = vmatmul.mubr.bf16.gmra.mrb[0].mxu0 %v407
      %v673 = vpop.f32.mrb[0].mxu0
      %v674 = vadd.f32 %v285, %v673
      %v675 = vpop.f32.mrb[0].mxu0
      %v676 = vpop.f32.mrb[0].mxu0
      %v677 = vadd.f32 %v285, %v676
      %v678 = vpop.f32.mrb[0].mxu0
      %679 = vmatprep.mubr.bf16.mxu0 %v410
      %680 = vmatmul.mubr.bf16.gmra.mrb[0].mxu0 %v409
      %v681 = vpop.f32.mrb[0].mxu0
      %v682 = vadd.f32 %v285, %v681
      %v683 = vpop.f32.mrb[0].mxu0
      %v684 = vpop.f32.mrb[0].mxu0
      %v685 = vadd.f32 %v285, %v684
      %v686 = vpop.f32.mrb[0].mxu0
      %687 = vmatprep.mubr.bf16.mxu0 %v412
      %688 = vmatmul.mubr.bf16.gmra.mrb[0].mxu0 %v411
      %v689 = vpop.f32.mrb[0].mxu0
      %v690 = vadd.f32 %v285, %v689
      %v691 = vpop.f32.mrb[0].mxu0
      %v692 = vpop.f32.mrb[0].mxu0
      %v693 = vadd.f32 %v285, %v692
      %v694 = vpop.f32.mrb[0].mxu0
      %695 = vmatprep.mubr.bf16.mxu0 %v414
      %696 = vmatmul.mubr.bf16.gmra.mrb[0].mxu0 %v413
      %v697 = vpop.f32.mrb[0].mxu0
      %v698 = vadd.f32 %v285, %v697
      %v699 = vpop.f32.mrb[0].mxu0
      %v700 = vpop.f32.mrb[0].mxu0
      %v701 = vadd.f32 %v285, %v700
      %v702 = vpop.f32.mrb[0].mxu0
      %703 = vdwg.mxu0
      %vm704 = vcmask 130048
      %705 = vst.msk [vmem:[%s209] sm:$0xff] %vm704, %v578
      %706 = vst.msk [vmem:[%s209 + $0x8] sm:$0xff] %vm704, %v581
      %707 = vst.msk [vmem:[%s209 + $0x10] sm:$0xff] %vm704, %v586
      %708 = vst.msk [vmem:[%s209 + $0x18] sm:$0xff] %vm704, %v589
      %709 = vst.msk [vmem:[%s209 + $0x20] sm:$0xff] %vm704, %v594
      %710 = vst.msk [vmem:[%s209 + $0x28] sm:$0xff] %vm704, %v597
      %711 = vst.msk [vmem:[%s209 + $0x30] sm:$0xff] %vm704, %v602
      %712 = vst.msk [vmem:[%s209 + $0x38] sm:$0xff] %vm704, %v605
      %713 = vst.msk [vmem:[%s209 + $0x40] sm:$0xff] %vm704, %v610
      %714 = vst.msk [vmem:[%s209 + $0x48] sm:$0xff] %vm704, %v613
      %715 = vst.msk [vmem:[%s209 + $0x50] sm:$0xff] %vm704, %v618
      %716 = vst.msk [vmem:[%s209 + $0x58] sm:$0xff] %vm704, %v621
      %717 = vst.msk [vmem:[%s209 + $0x60] sm:$0xff] %vm704, %v626
      %718 = vst.msk [vmem:[%s209 + $0x68] sm:$0xff] %vm704, %v629
      %719 = vst.msk [vmem:[%s209 + $0x70] sm:$0xff] %vm704, %v634
      %720 = vst.msk [vmem:[%s209 + $0x78] sm:$0xff] %vm704, %v637
      %721 = vst.msk [vmem:[%s209 + $0x80] sm:$0xff] %vm704, %v642
      %722 = vst.msk [vmem:[%s209 + $0x88] sm:$0xff] %vm704, %v645
      %723 = vst.msk [vmem:[%s209 + $0x90] sm:$0xff] %vm704, %v650
      %724 = vst.msk [vmem:[%s209 + $0x98] sm:$0xff] %vm704, %v653
      %725 = vst.msk [vmem:[%s209 + $0xa0] sm:$0xff] %vm704, %v658
      %726 = vst.msk [vmem:[%s209 + $0xa8] sm:$0xff] %vm704, %v661
      %727 = vst.msk [vmem:[%s209 + $0xb0] sm:$0xff] %vm704, %v666
      %728 = vst.msk [vmem:[%s209 + $0xb8] sm:$0xff] %vm704, %v669
      %729 = vst.msk [vmem:[%s209 + $0xc0] sm:$0xff] %vm704, %v674
      %730 = vst.msk [vmem:[%s209 + $0xc8] sm:$0xff] %vm704, %v677
      %731 = vst.msk [vmem:[%s209 + $0xd0] sm:$0xff] %vm704, %v682
      %732 = vst.msk [vmem:[%s209 + $0xd8] sm:$0xff] %vm704, %v685
      %733 = vst.msk [vmem:[%s209 + $0xe0] sm:$0xff] %vm704, %v690
      %734 = vst.msk [vmem:[%s209 + $0xe8] sm:$0xff] %vm704, %v693
      %735 = vst.msk [vmem:[%s209 + $0xf0] sm:$0xff] %vm704, %v698
      %736 = vst.msk [vmem:[%s209 + $0xf8] sm:$0xff] %vm704, %v701
      %v737 = vsel %vm704, %v578, 0.0
      %v738 = vsel %vm704, %v581, 0.0
      %v739 = vadd.f32 %v737, %v738
      %v740 = vsel %vm704, %v586, 0.0
      %v741 = vadd.f32 %v739, %v740
      %v742 = vsel %vm704, %v589, 0.0
      %v743 = vadd.f32 %v741, %v742
      %v744 = vsel %vm704, %v594, 0.0
      %v745 = vadd.f32 %v743, %v744
      %v746 = vsel %vm704, %v597, 0.0
      %v747 = vadd.f32 %v745, %v746
      %v748 = vsel %vm704, %v602, 0.0
      %v749 = vadd.f32 %v747, %v748
      %v750 = vsel %vm704, %v605, 0.0
      %v751 = vadd.f32 %v749, %v750
      %v752 = vsel %vm704, %v610, 0.0
      %v753 = vadd.f32 %v751, %v752
      %v754 = vsel %vm704, %v613, 0.0
      %v755 = vadd.f32 %v753, %v754
      %v756 = vsel %vm704, %v618, 0.0
      %v757 = vadd.f32 %v755, %v756
      %v758 = vsel %vm704, %v621, 0.0
      %v759 = vadd.f32 %v757, %v758
      %v760 = vsel %vm704, %v626, 0.0
      %v761 = vadd.f32 %v759, %v760
      %v762 = vsel %vm704, %v629, 0.0
      %v763 = vadd.f32 %v761, %v762
      %v764 = vsel %vm704, %v634, 0.0
      %v765 = vadd.f32 %v763, %v764
      %v766 = vsel %vm704, %v637, 0.0
      %v767 = vadd.f32 %v765, %v766
      %v768 = vsel %vm704, %v642, 0.0
      %v769 = vadd.f32 %v767, %v768
      %v770 = vsel %vm704, %v645, 0.0
      %v771 = vadd.f32 %v769, %v770
      %v772 = vsel %vm704, %v650, 0.0
      %v773 = vadd.f32 %v771, %v772
      %v774 = vsel %vm704, %v653, 0.0
      %v775 = vadd.f32 %v773, %v774
      %v776 = vsel %vm704, %v658, 0.0
      %v777 = vadd.f32 %v775, %v776
      %v778 = vsel %vm704, %v661, 0.0
      %v779 = vadd.f32 %v777, %v778
      %v780 = vsel %vm704, %v666, 0.0
      %v781 = vadd.f32 %v779, %v780
      %v782 = vsel %vm704, %v669, 0.0
      %v783 = vadd.f32 %v781, %v782
      %v784 = vsel %vm704, %v674, 0.0
      %v785 = vadd.f32 %v783, %v784
      %v786 = vsel %vm704, %v677, 0.0
      %v787 = vadd.f32 %v785, %v786
      %v788 = vsel %vm704, %v682, 0.0
      %v789 = vadd.f32 %v787, %v788
      %v790 = vsel %vm704, %v685, 0.0
      %v791 = vadd.f32 %v789, %v790
      %v792 = vsel %vm704, %v690, 0.0
      %v793 = vadd.f32 %v791, %v792
      %v794 = vsel %vm704, %v693, 0.0
      %v795 = vadd.f32 %v793, %v794
      %v796 = vsel %vm704, %v698, 0.0
      %v797 = vadd.f32 %v795, %v796
      %v798 = vsel %vm704, %v701, 0.0
      %v799 = vadd.f32 %v797, %v798
      %v800 = vrot.slane %v799, 4
      %v801 = vadd.f32 %v799, %v800
      %v802 = vrot.slane %v801, 2
      %v803 = vadd.f32 %v801, %v802
      %v804 = vrot.slane %v803, 1
      %v805 = vadd.f32 %v803, %v804
      %vm806 = vcmask 122880
      %807 = vst.msk [vmem:[%s214] sm:$0x1] %vm806, %v805
      %v808 = vmul.f32 %v578, %v578
      %v809 = vmul.f32 %v581, %v581
      %v810 = vmul.f32 %v586, %v586
      %v811 = vmul.f32 %v589, %v589
      %v812 = vmul.f32 %v594, %v594
      %v813 = vmul.f32 %v597, %v597
      %v814 = vmul.f32 %v602, %v602
      %v815 = vmul.f32 %v605, %v605
      %v816 = vmul.f32 %v610, %v610
      %v817 = vmul.f32 %v613, %v613
      %v818 = vmul.f32 %v618, %v618
      %v819 = vmul.f32 %v621, %v621
      %v820 = vmul.f32 %v626, %v626
      %v821 = vmul.f32 %v629, %v629
      %v822 = vmul.f32 %v634, %v634
      %v823 = vmul.f32 %v637, %v637
      %v824 = vmul.f32 %v642, %v642
      %v825 = vmul.f32 %v645, %v645
      %v826 = vmul.f32 %v650, %v650
      %v827 = vmul.f32 %v653, %v653
      %v828 = vmul.f32 %v658, %v658
      %v829 = vmul.f32 %v661, %v661
      %v830 = vmul.f32 %v666, %v666
      %v831 = vmul.f32 %v669, %v669
      %v832 = vmul.f32 %v674, %v674
      %v833 = vmul.f32 %v677, %v677
      %v834 = vmul.f32 %v682, %v682
      %v835 = vmul.f32 %v685, %v685
      %v836 = vmul.f32 %v690, %v690
      %v837 = vmul.f32 %v693, %v693
      %v838 = vmul.f32 %v698, %v698
      %v839 = vmul.f32 %v701, %v701
      %v840 = vsel %vm704, %v808, 0.0
      %v841 = vsel %vm704, %v809, 0.0
      %v842 = vadd.f32 %v840, %v841
      %v843 = vsel %vm704, %v810, 0.0
      %v844 = vadd.f32 %v842, %v843
      %v845 = vsel %vm704, %v811, 0.0
      %v846 = vadd.f32 %v844, %v845
      %v847 = vsel %vm704, %v812, 0.0
      %v848 = vadd.f32 %v846, %v847
      %v849 = vsel %vm704, %v813, 0.0
      %v850 = vadd.f32 %v848, %v849
      %v851 = vsel %vm704, %v814, 0.0
      %v852 = vadd.f32 %v850, %v851
      %v853 = vsel %vm704, %v815, 0.0
      %v854 = vadd.f32 %v852, %v853
      %v855 = vsel %vm704, %v816, 0.0
      %v856 = vadd.f32 %v854, %v855
      %v857 = vsel %vm704, %v817, 0.0
      %v858 = vadd.f32 %v856, %v857
      %v859 = vsel %vm704, %v818, 0.0
      %v860 = vadd.f32 %v858, %v859
      %v861 = vsel %vm704, %v819, 0.0
      %v862 = vadd.f32 %v860, %v861
      %v863 = vsel %vm704, %v820, 0.0
      %v864 = vadd.f32 %v862, %v863
      %v865 = vsel %vm704, %v821, 0.0
      %v866 = vadd.f32 %v864, %v865
      %v867 = vsel %vm704, %v822, 0.0
      %v868 = vadd.f32 %v866, %v867
      %v869 = vsel %vm704, %v823, 0.0
      %v870 = vadd.f32 %v868, %v869
      %v871 = vsel %vm704, %v824, 0.0
      %v872 = vadd.f32 %v870, %v871
      %v873 = vsel %vm704, %v825, 0.0
      %v874 = vadd.f32 %v872, %v873
      %v875 = vsel %vm704, %v826, 0.0
      %v876 = vadd.f32 %v874, %v875
      %v877 = vsel %vm704, %v827, 0.0
      %v878 = vadd.f32 %v876, %v877
      %v879 = vsel %vm704, %v828, 0.0
      %v880 = vadd.f32 %v878, %v879
      %v881 = vsel %vm704, %v829, 0.0
      %v882 = vadd.f32 %v880, %v881
      %v883 = vsel %vm704, %v830, 0.0
      %v884 = vadd.f32 %v882, %v883
      %v885 = vsel %vm704, %v831, 0.0
      %v886 = vadd.f32 %v884, %v885
      %v887 = vsel %vm704, %v832, 0.0
      %v888 = vadd.f32 %v886, %v887
      %v889 = vsel %vm704, %v833, 0.0
      %v890 = vadd.f32 %v888, %v889
      %v891 = vsel %vm704, %v834, 0.0
      %v892 = vadd.f32 %v890, %v891
      %v893 = vsel %vm704, %v835, 0.0
      %v894 = vadd.f32 %v892, %v893
      %v895 = vsel %vm704, %v836, 0.0
      %v896 = vadd.f32 %v894, %v895
      %v897 = vsel %vm704, %v837, 0.0
      %v898 = vadd.f32 %v896, %v897
      %v899 = vsel %vm704, %v838, 0.0
      %v900 = vadd.f32 %v898, %v899
      %v901 = vsel %vm704, %v839, 0.0
      %v902 = vadd.f32 %v900, %v901
      %v903 = vrot.slane %v902, 4
      %v904 = vadd.f32 %v902, %v903
      %v905 = vrot.slane %v904, 2
      %v906 = vadd.f32 %v904, %v905
      %v907 = vrot.slane %v906, 1
      %v908 = vadd.f32 %v906, %v907
      %909 = vst.msk [vmem:[%s214 + $0x1] sm:$0x1] %vm806, %v908
      %s910 = smul.u32 32, %s16
      %p911 = scmp.lt.s32.totalorder %s910, 63
      %s912 = scalar_select %p911, %s910, 63
      %s913 = smul.addr %s912, 8
      %s914 = scalar_lea.vmem %s3, %s913
      %p915 = scmp.lt.s32.totalorder %s16, 1
      %s916 = scalar_select %p915, %s16, 1
      %s917 = smul.addr %s916, 2
      %s918 = scalar_lea.vmem %s4, %s917
      // Predicated region
      $region33: #{gd_decoder_forward.24} parent=31 // pred_check
        %p919 = pneg %p102
      $region34: #{gd_decoder_forward.24} parent=31 // pred_check_branch
        %921 = sbr.rel (%p919) target = $region36
      $region35: #{gd_decoder_forward.24} parent=31 // pred_region
        %s922 = smul.u32 32, %s16
      $region36: #{gd_decoder_forward.24} parent=31 // pred_fallthru
        _
      // Predicated region
      $region37: #{gd_decoder_forward.24} parent=31 // pred_check
        %p923 = pneg %p128
      $region38: #{gd_decoder_forward.24} parent=31 // pred_check_branch
        %925 = sbr.rel (%p923) target = $region40
      $region39: #{gd_decoder_forward.24} parent=31 // pred_region
        _
      $region40: #{gd_decoder_forward.24} parent=31 // pred_fallthru
        _
    $region32: #{gd_decoder_forward.24} parent=5 // pred_fallthru
      _
    %p926 = scmp.le.s32.totalorder 2, %s11
    // Predicated region
    $region41: #{gd_decoder_forward.24} parent=5 // pred_check
      %p927 = pneg %p926
    $region42: #{gd_decoder_forward.24} parent=5 // pred_check_branch
      %929 = sbr.rel (%p927) target = $region44
    $region43: #{gd_decoder_forward.24} parent=5 // pred_region
      %s930 = ssub.s32 %s11, 2
      // Predicated region
      $region45: #{gd_decoder_forward.24} parent=43 // pred_check
        %p931 = pneg %p108
      $region46: #{gd_decoder_forward.24} parent=43 // pred_check_branch
        %933 = sbr.rel (%p931) target = $region48
      $region47: #{gd_decoder_forward.24} parent=43 // pred_region
        %s934 = smul.u32 32, %s17
        %p935 = scmp.lt.s32.totalorder %s934, 63
        %s936 = scalar_select %p935, %s934, 63
        %s937 = smul.addr %s936, 8
        %s938 = scalar_lea.vmem %s3, %s937
      $region48: #{gd_decoder_forward.24} parent=43 // pred_fallthru
        _
      // Predicated region
      $region49: #{gd_decoder_forward.24} parent=43 // pred_check
        %p939 = pneg %p134
      $region50: #{gd_decoder_forward.24} parent=43 // pred_check_branch
        %941 = sbr.rel (%p939) target = $region52
      $region51: #{gd_decoder_forward.24} parent=43 // pred_region
        %p942 = scmp.lt.s32.totalorder %s17, 1
        %s943 = scalar_select %p942, %s17, 1
        %s944 = smul.addr %s943, 2
        %s945 = scalar_lea.vmem %s4, %s944
      $region52: #{gd_decoder_forward.24} parent=43 // pred_fallthru
        _
    $region44: #{gd_decoder_forward.24} parent=5 // pred_fallthru
      _
  $region6: #{gd_decoder_forward.24} parent=0 // loop_footer
    %s15 = sadd.s32 1, %s11
  $region7: #{gd_decoder_forward.24} parent=0 // loop_footer_branch
    %10 = sbr.rel target = $region3
  $region8: #{gd_decoder_forward.24} parent=0 // loop_exit
    _

// kernel: tile.13
$region0: #{tile.13}
  #allocation0 [shape = 's32[1]{0}', space=sflag, size = 0x4, scoped, tag = 'scoped memory for tile.13']
  %s0 = inlined_call_operand.vmem [shape: f32[4], index: 0, kind: input, shape index: {}]
  %s1 = inlined_call_operand.vmem [shape: f32[4,4], index: 1, kind: output, shape index: {}]
  // Predicated region
  $region2: #{tile.13} parent=0 // pred_check
    _
  $region3: #{tile.13} parent=0 // pred_check_branch
    %3 = sbr.rel (0) target = $region5
  $region4: #{tile.13} parent=0 // pred_region
    _
  $region5: #{tile.13} parent=0 // pred_fallthru
    _
  %v4 = vld [vmem:[%s0] ss:$0 sm:$0xff]
  %5 = vst [vmem:[%s1] sm:$0xf] %v4

// kernel: tile.14
$region0: #{tile.14}
  %s0 = inlined_call_operand.vmem [shape: f32[4,4], index: 0, kind: input, shape index: {}]
  %s1 = inlined_call_operand.vmem [shape: f32[1,16], index: 1, kind: output, shape index: {}]
  $region1: #{tile.14} parent=0
    #allocation0 [shape = 'u8[4096]{0}', space=vmem, size = 0x1000, scoped, tag = 'scoped mem for output reshape']
    #allocation1 [shape = 'u8[4096]{0}', space=vmem, size = 0x1000, scoped, tag = 'scoped mem for input reshape']
    %s3 = sshllo.u32 0, 4
    %v4 = vld [vmem:[%s0] sm:%s3]
    %5 = vst [vmem:[#allocation1] sm:%s3] %v4
    %v6 = vld [vmem:[#allocation1] sm:$0x1]
    %vm7 = vcmask 31744
    %8 = vst.msk [vmem:[#allocation0] sm:$0x1] %vm7, %v6
    %s9 = scalar_lea.vmem [#allocation1], 3
    %v10 = vld [vmem:[%s9] sm:$0x1]
    %11 = vrot.lane.b32.xlu0 %v10, 12
    %v12 = vpop.permute.xlu0 %11
    %vm13 = vcmask 130144
    %14 = vst.msk [vmem:[#allocation0] sm:$0x1] %vm13, %v12
    %s15 = scalar_lea.vmem [#allocation1], 2
    %v16 = vld [vmem:[%s15] sm:$0x1]
    %17 = vrot.lane.b32.xlu0 %v16, 8
    %v18 = vpop.permute.xlu0 %17
    %vm19 = vcmask 97344
    %20 = vst.msk [vmem:[#allocation0] sm:$0x1] %vm19, %v18
    %s21 = scalar_lea.vmem [#allocation1], 1
    %v22 = vld [vmem:[%s21] sm:$0x1]
    %23 = vrot.lane.b32.xlu0 %v22, 4
    %v24 = vpop.permute.xlu0 %23
    %vm25 = vcmask 64544
    %26 = vst.msk [vmem:[#allocation0] sm:$0x1] %vm25, %v24
    %s28 = sshllo.u32 0, 1
    %v30 = vld [vmem:[#allocation0] sm:%s28]
    %s31 = sshllo.u32 0, 1
    %32 = vst [vmem:[%s1] sm:%s31] %v30

// kernel: gd_decoder_forward.25
$region0: #{gd_decoder_forward.25}
  #allocation0 [shape = 'u32[]', space=smem, size = 0x4, offset = 0x4, fixed_abs, tag = 'smem constant byte address 0x4 - core index']
  #allocation1 [shape = 'u32[144,128]{1,0:T(1,128)}', space=vmem, size = 0x12000, scoped, tag = 'internal scratch']
  %s0 = inlined_call_operand.vmem [shape: f32[512,16], index: 0, kind: input, shape index: {}]
  %s1 = inlined_call_operand.vmem [shape: f32[1,16], index: 1, kind: input, shape index: {}]
  %s2 = inlined_call_operand.vmem [shape: f32[1,16], index: 2, kind: input, shape index: {}]
  %s3 = inlined_call_operand.vmem [shape: f32[512,16], index: 3, kind: output, shape index: {}]
  %s4 = sld [smem:[#allocation0]]
  $region45: #{gd_decoder_forward.25} parent=0
    _
  %s6 = ssub.s32 1, %s4
  %s7 = scalar_select 0, %s6, %s4
  loop: start=0, step=1, limit=4
  $region2: #{gd_decoder_forward.25} parent=0 // loop_pre_header
    _
  $region3: #{gd_decoder_forward.25} parent=0 // loop_header
    %s9 = sphi 0, %s13
    %p10 = scmp.ge.s32.totalorder %s9, 4
    %s19 = sphi 0, %s21
    %s22 = sphi 0, %s19
    %s23 = sphi 0, %s22
    %s39 = sphi 0, %s23
    %s43 = sphi 0, %s43
    %s45 = sphi 0, %s43
    %s46 = sphi 0, %s45
    %s60 = sphi 0, %s46
    %s64 = sphi 0, %s64
    %s66 = sphi 0, %s64
    %s67 = sphi 0, %s66
    %s81 = sphi 0, %s67
    %s87 = sphi 0, %s89
    %s90 = sphi 0, %s87
    %s91 = sphi 0, %s90
    %s107 = sphi 0, %s91
  $region4: #{gd_decoder_forward.25} parent=0 // loop_header_branch
    %12 = sbr.rel (%p10) target = $region8
  $region5: #{gd_decoder_forward.25} parent=0 // loop_body
    %s14 = ssub.s32 %s9, 1
    %s15 = ssub.s32 %s9, 2
    %s16 = sadd.s32 %s9, 1
    %s17 = ssub.s32 %s9, %s16
    %p18 = scmp.eq.s32.totalorder %s17, 0
    %s20 = sadd.s32 %s19, 1
    %s21 = scalar_select %p18, %s19, %s20
    %p24 = pneg %p18
    %p25 = scmp.eq.s32.totalorder %s9, 1
    %p26 = por %p24, %p25
    %p27 = scmp.ne.s32.totalorder %s19, %s22
    %p28 = scmp.eq.s32.totalorder %s9, 0
    %p29 = por %p27, %p28
    %p30 = scmp.ne.s32.totalorder %s19, %s22
    %p31 = scmp.eq.s32.totalorder %s14, 1
    %p32 = por %p30, %p31
    %p33 = scmp.ne.s32.totalorder %s22, %s23
    %p34 = scmp.eq.s32.totalorder %s14, 0
    %p35 = por %p33, %p34
    %p36 = scmp.ne.s32.totalorder %s22, %s23
    %p37 = scmp.eq.s32.totalorder %s15, 1
    %p38 = por %p36, %p37
    %p40 = scmp.ne.s32.totalorder %s23, %s39
    %p41 = scmp.eq.s32.totalorder %s15, 0
    %p42 = por %p40, %p41
    %s44 = sadd.s32 %s43, 1
    %p47 = scmp.eq.s32.totalorder %s9, 1
    %p48 = scmp.ne.s32.totalorder %s43, %s45
    %p49 = scmp.eq.s32.totalorder %s9, 0
    %p50 = por %p48, %p49
    %p51 = scmp.ne.s32.totalorder %s43, %s45
    %p52 = scmp.eq.s32.totalorder %s14, 1
    %p53 = por %p51, %p52
    %p54 = scmp.ne.s32.totalorder %s45, %s46
    %p55 = scmp.eq.s32.totalorder %s14, 0
    %p56 = por %p54, %p55
    %p57 = scmp.ne.s32.totalorder %s45, %s46
    %p58 = scmp.eq.s32.totalorder %s15, 1
    %p59 = por %p57, %p58
    %p61 = scmp.ne.s32.totalorder %s46, %s60
    %p62 = scmp.eq.s32.totalorder %s15, 0
    %p63 = por %p61, %p62
    %s65 = sadd.s32 %s64, 1
    %p68 = scmp.eq.s32.totalorder %s9, 1
    %p69 = scmp.ne.s32.totalorder %s64, %s66
    %p70 = scmp.eq.s32.totalorder %s9, 0
    %p71 = por %p69, %p70
    %p72 = scmp.ne.s32.totalorder %s64, %s66
    %p73 = scmp.eq.s32.totalorder %s14, 1
    %p74 = por %p72, %p73
    %p75 = scmp.ne.s32.totalorder %s66, %s67
    %p76 = scmp.eq.s32.totalorder %s14, 0
    %p77 = por %p75, %p76
    %p78 = scmp.ne.s32.totalorder %s66, %s67
    %p79 = scmp.eq.s32.totalorder %s15, 1
    %p80 = por %p78, %p79
    %p82 = scmp.ne.s32.totalorder %s67, %s81
    %p83 = scmp.eq.s32.totalorder %s15, 0
    %p84 = por %p82, %p83
    %s85 = ssub.s32 %s9, %s16
    %p86 = scmp.eq.s32.totalorder %s85, 0
    %s88 = sadd.s32 %s87, 1
    %s89 = scalar_select %p86, %s87, %s88
    %p92 = pneg %p86
    %p93 = scmp.eq.s32.totalorder %s9, 1
    %p94 = por %p92, %p93
    %p95 = scmp.ne.s32.totalorder %s87, %s90
    %p96 = scmp.eq.s32.totalorder %s9, 0
    %p97 = por %p95, %p96
    %p98 = scmp.ne.s32.totalorder %s87, %s90
    %p99 = scmp.eq.s32.totalorder %s14, 1
    %p100 = por %p98, %p99
    %p101 = scmp.ne.s32.totalorder %s90, %s91
    %p102 = scmp.eq.s32.totalorder %s14, 0
    %p103 = por %p101, %p102
    %p104 = scmp.ne.s32.totalorder %s90, %s91
    %p105 = scmp.eq.s32.totalorder %s15, 1
    %p106 = por %p104, %p105
    %p108 = scmp.ne.s32.totalorder %s91, %s107
    %p109 = scmp.eq.s32.totalorder %s15, 0
    %p110 = por %p108, %p109
    %p111 = scmp.le.s32.totalorder 1, %s9
    %p112 = scmp.lt.s32.totalorder %s9, 3
    %p113 = pnand %p111, %p112
    %p114 = pneg %p113
    // Predicated region
    $region9: #{gd_decoder_forward.25} parent=5 // pred_check
      _
    $region10: #{gd_decoder_forward.25} parent=5 // pred_check_branch
      %116 = sbr.rel (%p113) target = $region12
    $region11: #{gd_decoder_forward.25} parent=5 // pred_region
      %s117 = ssub.s32 %s9, 1
      // Predicated region
      $region13: #{gd_decoder_forward.25} parent=11 // pred_check
        %p118 = pneg %p56
      $region14: #{gd_decoder_forward.25} parent=11 // pred_check_branch
        %120 = sbr.rel (%p118) target = $region16
      $region15: #{gd_decoder_forward.25} parent=11 // pred_region
        _
      $region16: #{gd_decoder_forward.25} parent=11 // pred_fallthru
        _
      // Predicated region
      $region17: #{gd_decoder_forward.25} parent=11 // pred_check
        %p121 = pneg %p77
      $region18: #{gd_decoder_forward.25} parent=11 // pred_check_branch
        %123 = sbr.rel (%p121) target = $region20
      $region19: #{gd_decoder_forward.25} parent=11 // pred_region
        _
      $region20: #{gd_decoder_forward.25} parent=11 // pred_fallthru
        _
    $region12: #{gd_decoder_forward.25} parent=5 // pred_fallthru
      _
    %p124 = scmp.lt.s32.totalorder %s9, 2
    // Predicated region
    $region21: #{gd_decoder_forward.25} parent=5 // pred_check
      %p125 = pneg %p124
    $region22: #{gd_decoder_forward.25} parent=5 // pred_check_branch
      %127 = sbr.rel (%p125) target = $region24
    $region23: #{gd_decoder_forward.25} parent=5 // pred_region
      // Predicated region
      $region25: #{gd_decoder_forward.25} parent=23 // pred_check
        %p128 = pneg %p29
      $region26: #{gd_decoder_forward.25} parent=23 // pred_check_branch
        %130 = sbr.rel (%p128) target = $region28
      $region27: #{gd_decoder_forward.25} parent=23 // pred_region
        %s131 = smul.u32 32, %s9
        %p132 = scmp.lt.s32.totalorder %s131, 63
        %s133 = scalar_select %p132, %s131, 63
        %s134 = smul.addr %s133, 8
        %s135 = scalar_lea.vmem %s0, %s134
        %s136 = smul.u32 32, %s9
      $region28: #{gd_decoder_forward.25} parent=23 // pred_fallthru
        _
    $region24: #{gd_decoder_forward.25} parent=5 // pred_fallthru
      _
    %p137 = scmp.le.s32.totalorder 1, %s9
    %p138 = scmp.lt.s32.totalorder %s9, 3
    %p139 = pnand %p137, %p138
    %p140 = pneg %p139
    // Predicated region
    $region29: #{gd_decoder_forward.25} parent=5 // pred_check
      _
    $region30: #{gd_decoder_forward.25} parent=5 // pred_check_branch
      %142 = sbr.rel (%p139) target = $region32
    $region31: #{gd_decoder_forward.25} parent=5 // pred_region
      %s143 = ssub.s32 %s9, 1
      %s144 = smul.u32 32, %s14
      %p145 = scmp.lt.s32.totalorder %s144, 63
      %s146 = scalar_select %p145, %s144, 63
      %s147 = smul.addr %s146, 8
      %s148 = scalar_lea.vmem %s0, %s147
      %p149 = pneg %p35
      %p150 = pneg %p32
      %p151 = pneg %p56
      %p152 = pneg %p53
      %p153 = pneg %p77
      %p154 = pneg %p74
      %p155 = pneg %p103
      %p156 = pneg %p100
      %s157 = smul.u32 32, %s14
      %p158 = scmp.lt.s32.totalorder %s157, 63
      %s159 = scalar_select %p158, %s157, 63
      %s160 = smul.addr %s159, 8
      %s161 = scalar_lea.vmem %s3, %s160
      %s162 = smul.u32 32, %s14
      %p163 = scmp.lt.s32.totalorder %s162, 63
      %s164 = scalar_select %p163, %s162, 63
      %s165 = smul.addr %s164, 8
      %s166 = scalar_lea.vmem %s0, %s165
      %s167 = smul.u32 32, %s14
      %s168 = smul.u32 32, %s14
      %p169 = scmp.lt.s32.totalorder %s168, 63
      %s170 = scalar_select %p169, %s168, 63
      %s171 = smul.addr %s170, 8
      %s172 = scalar_lea.vmem %s3, %s171
      %s173 = smul.u32 32, %s14
      %v174 = vld [vmem:[%s166] sm:$0xff]
      %v175 = vld [vmem:[%s166 + $0x8] sm:$0xff]
      %v176 = vld [vmem:[%s166 + $0x10] sm:$0xff]
      %v177 = vld [vmem:[%s166 + $0x18] sm:$0xff]
      %v178 = vld [vmem:[%s166 + $0x20] sm:$0xff]
      %v179 = vld [vmem:[%s166 + $0x28] sm:$0xff]
      %v180 = vld [vmem:[%s166 + $0x30] sm:$0xff]
      %v181 = vld [vmem:[%s166 + $0x38] sm:$0xff]
      %v182 = vld [vmem:[%s166 + $0x40] sm:$0xff]
      %v183 = vld [vmem:[%s166 + $0x48] sm:$0xff]
      %v184 = vld [vmem:[%s166 + $0x50] sm:$0xff]
      %v185 = vld [vmem:[%s166 + $0x58] sm:$0xff]
      %v186 = vld [vmem:[%s166 + $0x60] sm:$0xff]
      %v187 = vld [vmem:[%s166 + $0x68] sm:$0xff]
      %v188 = vld [vmem:[%s166 + $0x70] sm:$0xff]
      %v189 = vld [vmem:[%s166 + $0x78] sm:$0xff]
      %v190 = vld [vmem:[%s166 + $0x80] sm:$0xff]
      %v191 = vld [vmem:[%s166 + $0x88] sm:$0xff]
      %v192 = vld [vmem:[%s166 + $0x90] sm:$0xff]
      %v193 = vld [vmem:[%s166 + $0x98] sm:$0xff]
      %v194 = vld [vmem:[%s166 + $0xa0] sm:$0xff]
      %v195 = vld [vmem:[%s166 + $0xa8] sm:$0xff]
      %v196 = vld [vmem:[%s166 + $0xb0] sm:$0xff]
      %v197 = vld [vmem:[%s166 + $0xb8] sm:$0xff]
      %v198 = vld [vmem:[%s166 + $0xc0] sm:$0xff]
      %v199 = vld [vmem:[%s166 + $0xc8] sm:$0xff]
      %v200 = vld [vmem:[%s166 + $0xd0] sm:$0xff]
      %v201 = vld [vmem:[%s166 + $0xd8] sm:$0xff]
      %v202 = vld [vmem:[%s166 + $0xe0] sm:$0xff]
      %v203 = vld [vmem:[%s166 + $0xe8] sm:$0xff]
      %v204 = vld [vmem:[%s166 + $0xf0] sm:$0xff]
      %v205 = vld [vmem:[%s166 + $0xf8] sm:$0xff]
      %v206 = vld [vmem:[%s1] sm:$0x1]
      %v208 = vlaneseq
      %v209 = vshrl.u32 %v208, 7
      %v210 = vsub.s32 0, %v209
      %v211 = vrot.slane %v206, %v210
      %v213 = vmul.f32 %v174, %v211
      %v214 = vmul.f32 %v175, %v211
      %v215 = vmul.f32 %v176, %v211
      %v216 = vmul.f32 %v177, %v211
      %v217 = vmul.f32 %v178, %v211
      %v218 = vmul.f32 %v179, %v211
      %v219 = vmul.f32 %v180, %v211
      %v220 = vmul.f32 %v181, %v211
      %v221 = vmul.f32 %v182, %v211
      %v222 = vmul.f32 %v183, %v211
      %v223 = vmul.f32 %v184, %v211
      %v224 = vmul.f32 %v185, %v211
      %v225 = vmul.f32 %v186, %v211
      %v226 = vmul.f32 %v187, %v211
      %v227 = vmul.f32 %v188, %v211
      %v228 = vmul.f32 %v189, %v211
      %v229 = vmul.f32 %v190, %v211
      %v230 = vmul.f32 %v191, %v211
      %v231 = vmul.f32 %v192, %v211
      %v232 = vmul.f32 %v193, %v211
      %v233 = vmul.f32 %v194, %v211
      %v234 = vmul.f32 %v195, %v211
      %v235 = vmul.f32 %v196, %v211
      %v236 = vmul.f32 %v197, %v211
      %v237 = vmul.f32 %v198, %v211
      %v238 = vmul.f32 %v199, %v211
      %v239 = vmul.f32 %v200, %v211
      %v240 = vmul.f32 %v201, %v211
      %v241 = vmul.f32 %v202, %v211
      %v242 = vmul.f32 %v203, %v211
      %v243 = vmul.f32 %v204, %v211
      %v244 = vmul.f32 %v205, %v211
      %v245 = vld [vmem:[%s2] sm:$0x1]
      %v247 = vlaneseq
      %v248 = vshrl.u32 %v247, 7
      %v249 = vsub.s32 0, %v248
      %v250 = vrot.slane %v245, %v249
      %v252 = vadd.f32 %v213, %v250
      %v253 = vadd.f32 %v214, %v250
      %v254 = vadd.f32 %v215, %v250
      %v255 = vadd.f32 %v216, %v250
      %v256 = vadd.f32 %v217, %v250
      %v257 = vadd.f32 %v218, %v250
      %v258 = vadd.f32 %v219, %v250
      %v259 = vadd.f32 %v220, %v250
      %v260 = vadd.f32 %v221, %v250
      %v261 = vadd.f32 %v222, %v250
      %v262 = vadd.f32 %v223, %v250
      %v263 = vadd.f32 %v224, %v250
      %v264 = vadd.f32 %v225, %v250
      %v265 = vadd.f32 %v226, %v250
      %v266 = vadd.f32 %v227, %v250
      %v267 = vadd.f32 %v228, %v250
      %v268 = vadd.f32 %v229, %v250
      %v269 = vadd.f32 %v230, %v250
      %v270 = vadd.f32 %v231, %v250
      %v271 = vadd.f32 %v232, %v250
      %v272 = vadd.f32 %v233, %v250
      %v273 = vadd.f32 %v234, %v250
      %v274 = vadd.f32 %v235, %v250
      %v275 = vadd.f32 %v236, %v250
      %v276 = vadd.f32 %v237, %v250
      %v277 = vadd.f32 %v238, %v250
      %v278 = vadd.f32 %v239, %v250
      %v279 = vadd.f32 %v240, %v250
      %v280 = vadd.f32 %v241, %v250
      %v281 = vadd.f32 %v242, %v250
      %v282 = vadd.f32 %v243, %v250
      %v283 = vadd.f32 %v244, %v250
      %v284 = vmax.f32 %v252, 0.0
      %v285 = vmax.f32 %v253, 0.0
      %v286 = vmax.f32 %v254, 0.0
      %v287 = vmax.f32 %v255, 0.0
      %v288 = vmax.f32 %v256, 0.0
      %v289 = vmax.f32 %v257, 0.0
      %v290 = vmax.f32 %v258, 0.0
      %v291 = vmax.f32 %v259, 0.0
      %v292 = vmax.f32 %v260, 0.0
      %v293 = vmax.f32 %v261, 0.0
      %v294 = vmax.f32 %v262, 0.0
      %v295 = vmax.f32 %v263, 0.0
      %v296 = vmax.f32 %v264, 0.0
      %v297 = vmax.f32 %v265, 0.0
      %v298 = vmax.f32 %v266, 0.0
      %v299 = vmax.f32 %v267, 0.0
      %v300 = vmax.f32 %v268, 0.0
      %v301 = vmax.f32 %v269, 0.0
      %v302 = vmax.f32 %v270, 0.0
      %v303 = vmax.f32 %v271, 0.0
      %v304 = vmax.f32 %v272, 0.0
      %v305 = vmax.f32 %v273, 0.0
      %v306 = vmax.f32 %v274, 0.0
      %v307 = vmax.f32 %v275, 0.0
      %v308 = vmax.f32 %v276, 0.0
      %v309 = vmax.f32 %v277, 0.0
      %v310 = vmax.f32 %v278, 0.0
      %v311 = vmax.f32 %v279, 0.0
      %v312 = vmax.f32 %v280, 0.0
      %v313 = vmax.f32 %v281, 0.0
      %v314 = vmax.f32 %v282, 0.0
      %v315 = vmax.f32 %v283, 0.0
      %vm316 = vcmask 130048
      %317 = vst.msk [vmem:[%s172] sm:$0xff] %vm316, %v284
      %318 = vst.msk [vmem:[%s172 + $0x8] sm:$0xff] %vm316, %v285
      %319 = vst.msk [vmem:[%s172 + $0x10] sm:$0xff] %vm316, %v286
      %320 = vst.msk [vmem:[%s172 + $0x18] sm:$0xff] %vm316, %v287
      %321 = vst.msk [vmem:[%s172 + $0x20] sm:$0xff] %vm316, %v288
      %322 = vst.msk [vmem:[%s172 + $0x28] sm:$0xff] %vm316, %v289
      %323 = vst.msk [vmem:[%s172 + $0x30] sm:$0xff] %vm316, %v290
      %324 = vst.msk [vmem:[%s172 + $0x38] sm:$0xff] %vm316, %v291
      %325 = vst.msk [vmem:[%s172 + $0x40] sm:$0xff] %vm316, %v292
      %326 = vst.msk [vmem:[%s172 + $0x48] sm:$0xff] %vm316, %v293
      %327 = vst.msk [vmem:[%s172 + $0x50] sm:$0xff] %vm316, %v294
      %328 = vst.msk [vmem:[%s172 + $0x58] sm:$0xff] %vm316, %v295
      %329 = vst.msk [vmem:[%s172 + $0x60] sm:$0xff] %vm316, %v296
      %330 = vst.msk [vmem:[%s172 + $0x68] sm:$0xff] %vm316, %v297
      %331 = vst.msk [vmem:[%s172 + $0x70] sm:$0xff] %vm316, %v298
      %332 = vst.msk [vmem:[%s172 + $0x78] sm:$0xff] %vm316, %v299
      %333 = vst.msk [vmem:[%s172 + $0x80] sm:$0xff] %vm316, %v300
      %334 = vst.msk [vmem:[%s172 + $0x88] sm:$0xff] %vm316, %v301
      %335 = vst.msk [vmem:[%s172 + $0x90] sm:$0xff] %vm316, %v302
      %336 = vst.msk [vmem:[%s172 + $0x98] sm:$0xff] %vm316, %v303
      %337 = vst.msk [vmem:[%s172 + $0xa0] sm:$0xff] %vm316, %v304
      %338 = vst.msk [vmem:[%s172 + $0xa8] sm:$0xff] %vm316, %v305
      %339 = vst.msk [vmem:[%s172 + $0xb0] sm:$0xff] %vm316, %v306
      %340 = vst.msk [vmem:[%s172 + $0xb8] sm:$0xff] %vm316, %v307
      %341 = vst.msk [vmem:[%s172 + $0xc0] sm:$0xff] %vm316, %v308
      %342 = vst.msk [vmem:[%s172 + $0xc8] sm:$0xff] %vm316, %v309
      %343 = vst.msk [vmem:[%s172 + $0xd0] sm:$0xff] %vm316, %v310
      %344 = vst.msk [vmem:[%s172 + $0xd8] sm:$0xff] %vm316, %v311
      %345 = vst.msk [vmem:[%s172 + $0xe0] sm:$0xff] %vm316, %v312
      %346 = vst.msk [vmem:[%s172 + $0xe8] sm:$0xff] %vm316, %v313
      %347 = vst.msk [vmem:[%s172 + $0xf0] sm:$0xff] %vm316, %v314
      %348 = vst.msk [vmem:[%s172 + $0xf8] sm:$0xff] %vm316, %v315
      %s349 = smul.u32 32, %s14
      %p350 = scmp.lt.s32.totalorder %s349, 63
      %s351 = scalar_select %p350, %s349, 63
      %s352 = smul.addr %s351, 8
      %s353 = scalar_lea.vmem %s3, %s352
      // Predicated region
      $region33: #{gd_decoder_forward.25} parent=31 // pred_check
        %p354 = pneg %p100
      $region34: #{gd_decoder_forward.25} parent=31 // pred_check_branch
        %356 = sbr.rel (%p354) target = $region36
      $region35: #{gd_decoder_forward.25} parent=31 // pred_region
        %s357 = smul.u32 32, %s14
      $region36: #{gd_decoder_forward.25} parent=31 // pred_fallthru
        _
    $region32: #{gd_decoder_forward.25} parent=5 // pred_fallthru
      _
    %p358 = scmp.le.s32.totalorder 2, %s9
    // Predicated region
    $region37: #{gd_decoder_forward.25} parent=5 // pred_check
      %p359 = pneg %p358
    $region38: #{gd_decoder_forward.25} parent=5 // pred_check_branch
      %361 = sbr.rel (%p359) target = $region40
    $region39: #{gd_decoder_forward.25} parent=5 // pred_region
      %s362 = ssub.s32 %s9, 2
      // Predicated region
      $region41: #{gd_decoder_forward.25} parent=39 // pred_check
        %p363 = pneg %p106
      $region42: #{gd_decoder_forward.25} parent=39 // pred_check_branch
        %365 = sbr.rel (%p363) target = $region44
      $region43: #{gd_decoder_forward.25} parent=39 // pred_region
        %s366 = smul.u32 32, %s15
        %p367 = scmp.lt.s32.totalorder %s366, 63
        %s368 = scalar_select %p367, %s366, 63
        %s369 = smul.addr %s368, 8
        %s370 = scalar_lea.vmem %s3, %s369
      $region44: #{gd_decoder_forward.25} parent=39 // pred_fallthru
        _
    $region40: #{gd_decoder_forward.25} parent=5 // pred_fallthru
      _
  $region6: #{gd_decoder_forward.25} parent=0 // loop_footer
    %s13 = sadd.s32 1, %s9
  $region7: #{gd_decoder_forward.25} parent=0 // loop_footer_branch
    %8 = sbr.rel target = $region3
  $region8: #{gd_decoder_forward.25} parent=0 // loop_exit
    _

</llo_original>
